<compile_context>
chip_gen: v6e
topology: v6e:2x2x1
jax: 0.10.0
libtpu: 0.0.40
codegen_flags: <defaults>
</compile_context>

<pallas_src>
import functools

import jax
import jax.numpy as jnp
from jax import lax
from jax.experimental import pallas as pl
from jax.experimental.pallas import tpu as pltpu

C_CONV = 16   # out_channels of both conv layers
K_CONV = 3    # kernel_size of both conv layers
H_DENSE = 40  # hidden units of dense_1_layer


def _deepant_kernel(x_ref, wc1_ref, bc1_ref, wc2_ref, bc2_ref,
                    s1e_ref, wd1e_ref, bd1_ref, wd2_ref, bd2_ref, out_ref):
    G, DTB, L = x_ref.shape
    CTB = wc1_ref.shape[0]
    K = wc1_ref.shape[1] // DTB
    C, _, H = wd1e_ref.shape
    TB = CTB // C
    T1 = L - (K - 1)                 # conv1 valid length
    P1 = s1e_ref.shape[1]            # pool1 output length
    T2 = P1 - (K - 1)                # conv2 valid length

    bf16 = jnp.bfloat16
    f32 = jnp.float32

    # Weights / biases loaded once per grid step (hoisted out of the per-block loop).
    wc1 = wc1_ref[...]               # (C*TB, K*D*TB)  bf16, taps stacked along columns
    wc2 = wc2_ref[...]               # (C*TB, K*C*TB)  bf16
    s1e = s1e_ref[...]               # (T1-1, P1)      bf16 0/1 even-column selector
    wd2 = wd2_ref[...]               # (H, D)          bf16
    bc1 = bc1_ref[...]               # (C*TB, 1)       f32
    bc2 = bc2_ref[...]               # (C*TB, 1)       f32
    bd1 = bd1_ref[...]               # (1, H)          f32
    bd2 = bd2_ref[...]               # (1, D)          f32

    for g in range(G):               # static unroll over the TB-sample blocks of this step
        x = x_ref[g]                 # (D*TB, L) f32, rows ordered d*TB + b

        # ---- conv1d_1: K taps folded into the contraction dim -> ONE MXU matmul ------
        xs = jnp.concatenate([x[:, k:k + T1] for k in range(K)], axis=0).astype(bf16)
        y = jnp.dot(wc1, xs, preferred_element_type=f32)
        y = jnp.maximum(y + bc1, 0.0)                                # (C*TB, T1)

        # ---- maxpool_1 (kernel=2, stride=2): pairwise max (VPU) + ONE even-column
        #      selection matmul (the odd-selector matmul is gone) ----------------------
        m = jnp.maximum(y[:, :T1 - 1], y[:, 1:T1]).astype(bf16)      # (C*TB, T1-1)
        p = jnp.dot(m, s1e, preferred_element_type=f32)              # (C*TB, P1)

        # ---- conv1d_2: stacked-tap single matmul --------------------------------------
        ps = jnp.concatenate([p[:, k:k + T2] for k in range(K)], axis=0).astype(bf16)
        y = jnp.dot(wc2, ps, preferred_element_type=f32)
        y = jnp.maximum(y + bc2, 0.0)                                # (C*TB, T2)

        # ---- maxpool_2: pairwise max only — the even-column selection is folded into
        #      the dense_1 weights (zero rows at odd positions): no selection matmul ----
        m = jnp.maximum(y[:, :T2 - 1], y[:, 1:T2])                   # (C*TB, T2-1) f32

        # ---- flatten + dense_1 + ReLU: per-channel, sublane-tile-aligned row slabs ----
        # (C small matmuls with M = TB; <5% of the MXU MACs of this kernel.)
        h = jnp.zeros((TB, H), f32)
        for c in range(C):
            slab = m[c * TB:(c + 1) * TB, :].astype(bf16)            # (TB, T2-1)
            h = h + jnp.dot(slab, wd1e_ref[c], preferred_element_type=f32)
        h = jnp.maximum(h + bd1, 0.0)                                # (TB, H)

        # ---- dropout(p=0.25): inference mode -> identity -------------------------------
        # TODO(synk): training-mode stochastic dropout (pltpu.prng_*) not implemented.

        # ---- dense_2: one (TB, D) slab store per block ---------------------------------
        out_ref[0, g * TB:(g + 1) * TB, :] = (
            jnp.dot(h.astype(bf16), wd2, preferred_element_type=f32) + bd2)


def init_params(key, dimension):
    """Deterministic synthetic parameters with the PyTorch module's shapes."""
    ks = jax.random.split(key, 8)
    s = 0.05
    u = lambda k, shape: jax.random.uniform(k, shape, jnp.float32, -s, s)
    return dict(
        W_c1=u(ks[0], (C_CONV, dimension, K_CONV)),  # Conv1d(D -> 16, k=3)
        b_c1=u(ks[1], (C_CONV,)),
        W_c2=u(ks[2], (C_CONV, C_CONV, K_CONV)),     # Conv1d(16 -> 16, k=3)
        b_c2=u(ks[3], (C_CONV,)),
        W_d1=u(ks[4], (H_DENSE, 1408)),              # Linear(1408 -> 40)
        b_d1=u(ks[5], (H_DENSE,)),
        W_d2=u(ks[6], (dimension, H_DENSE)),         # Linear(40 -> D)
        b_d2=u(ks[7], (dimension,)),
    )


def _default_block_batch():
    """TB=16 on 256-wide-MXU parts (v6e / v7x), TB=8 on 128-wide parts (v5e etc.)."""
    try:
        kind = jax.devices()[0].device_kind.lower()
    except Exception:
        return 8
    for tag in ("v6", "trillium", "v7", "tpu7", "7x"):
        if tag in kind:
            return 16
    return 8


@functools.partial(jax.jit, static_argnames=("block_batch", "blocks_per_step"))
def deepant_forward_pallas(x, params, block_batch=8, blocks_per_step=4):
    """x: (B, seq_len, features) float32 -> (B, features) float32."""
    B, L, D = x.shape
    K, C, H = K_CONV, C_CONV, H_DENSE
    T1 = L - (K - 1)
    P1 = T1 // 2
    T2 = P1 - (K - 1)
    P2 = T2 // 2
    assert C * P2 == params["W_d1"].shape[1], "seq_len inconsistent with dense_1 (1408)"

    TB = block_batch
    nblk = -(-B // TB)                        # TB-sample blocks
    G = max(1, min(blocks_per_step, nblk))    # blocks per grid step
    nsteps = -(-nblk // G)
    nblk_p = nsteps * G
    Bp = nblk_p * TB

    # -------- input relayout (fused into this jit): (B, L, D) -> (nblk_p, D*TB, L) ------
    # Rows within a block are ordered d*TB + b (sample b of the block).
    xp = jnp.pad(x, ((0, Bp - B), (0, 0), (0, 0)))
    xg = jnp.transpose(xp, (2, 0, 1)).reshape(D, nblk_p, TB, L)
    xg = xg.transpose(1, 0, 2, 3).reshape(nblk_p, D * TB, L)

    # -------- parameter relayout: bf16 weights (single-pass MXU), f32 biases ------------
    eye = jnp.eye(TB, dtype=jnp.float32)
    # conv taps stacked along the contraction dim; batch is block-diagonal (kron with I_TB)
    wc1 = jnp.concatenate([jnp.kron(params["W_c1"][:, :, k], eye) for k in range(K)],
                          axis=1).astype(jnp.bfloat16)               # (C*TB, K*D*TB)
    wc2 = jnp.concatenate([jnp.kron(params["W_c2"][:, :, k], eye) for k in range(K)],
                          axis=1).astype(jnp.bfloat16)               # (C*TB, K*C*TB)
    bc1 = jnp.repeat(params["b_c1"], TB).reshape(C * TB, 1)
    bc2 = jnp.repeat(params["b_c2"], TB).reshape(C * TB, 1)

    # pool-1 even-column selector (applied after the pairwise max)
    s1e = (jnp.arange(T1 - 1)[:, None] == 2 * jnp.arange(P1)[None, :]
           ).astype(jnp.bfloat16)                                     # (T1-1, P1)

    # dense_1 weight per channel, expanded onto the pre-selection pool-2 axis:
    # row 2t carries W_d1[:, c*P2+t], odd rows are zero  -> pool-2 selection is folded in.
    wd1 = jnp.transpose(params["W_d1"]).reshape(C, P2, H)             # (C, P2, H)
    wd1e = jnp.zeros((C, T2 - 1, H), jnp.float32).at[:, ::2, :].set(wd1).astype(jnp.bfloat16)
    bd1 = params["b_d1"].reshape(1, H)
    wd2 = jnp.transpose(params["W_d2"]).astype(jnp.bfloat16)          # (H, D)
    bd2 = params["b_d2"].reshape(1, D)

    def _full(a):
        return pl.BlockSpec(a.shape, lambda i, _nd=a.ndim: (0,) * _nd)

    out = pl.pallas_call(
        _deepant_kernel,
        out_shape=jax.ShapeDtypeStruct((nsteps, G * TB, D), jnp.float32),
        grid=(nsteps,),
        in_specs=[
            pl.BlockSpec((G, D * TB, L), lambda i: (i, 0, 0)),        # G*TB samples / step
            _full(wc1), _full(bc1), _full(wc2), _full(bc2),
            _full(s1e), _full(wd1e), _full(bd1), _full(wd2), _full(bd2),
        ],
        out_specs=pl.BlockSpec((1, G * TB, D), lambda i: (i, 0, 0)),
        compiler_params=pltpu.CompilerParams(dimension_semantics=("parallel",)),
    )(xg, wc1, bc1, wc2, bc2, s1e, wd1e, bd1, wd2, bd2)

    return out.reshape(Bp, D)[:B]


def deepant_reference(x, params):
    """Pure-JAX/XLA f32 reference of the PyTorch forward (eval mode)."""
    prec = lax.Precision.HIGHEST
    y = jnp.transpose(x, (0, 2, 1))
    y = lax.conv_general_dilated(y, params["W_c1"], (1,), "VALID",
                                 dimension_numbers=("NCH", "OIH", "NCH"), precision=prec)
    y = jax.nn.relu(y + params["b_c1"][None, :, None])
    y = lax.reduce_window(y, -jnp.inf, lax.max, (1, 1, 2), (1, 1, 2), "VALID")
    y = lax.conv_general_dilated(y, params["W_c2"], (1,), "VALID",
                                 dimension_numbers=("NCH", "OIH", "NCH"), precision=prec)
    y = jax.nn.relu(y + params["b_c2"][None, :, None])
    y = lax.reduce_window(y, -jnp.inf, lax.max, (1, 1, 2), (1, 1, 2), "VALID")
    y = y.reshape(y.shape[0], -1)
    y = jax.nn.relu(jnp.dot(y, params["W_d1"].T, precision=prec) + params["b_d1"])
    return jnp.dot(y, params["W_d2"].T, precision=prec) + params["b_d2"]


if __name__ == "__main__":
    DIMENSION = 4     # feature dimension (in/out channels of the model)
    LOOKBACK = 358    # forced by dense_1: flatten size 16 * 88 = 1408
    BATCH = 10        # exercises block batching plus batch padding

    key = jax.random.PRNGKey(0)
    kx, kp = jax.random.split(key)
    x = jax.random.uniform(kx, (BATCH, LOOKBACK, DIMENSION), jnp.float32, -1.0, 1.0)
    params = init_params(kp, DIMENSION)

    tb = _default_block_batch()
    out = jax.block_until_ready(
        deepant_forward_pallas(x, params, block_batch=tb, blocks_per_step=4))
    ref = jax.block_until_ready(deepant_reference(x, params))

    assert out.shape == (BATCH, DIMENSION), out.shape
    # Tolerance accounts for single-pass bf16 MXU matmuls vs. the f32 reference
    # (observed error is ~1e-4 at these activation magnitudes).
    assert jnp.allclose(out, ref, rtol=1e-2, atol=2e-3), (out, ref)
    print("KERNEL_OK")
</pallas_src>

<mosaic_0001>
module attributes {stable_mosaic.version = 11 : i64} {
  func.func @_deepant_kernel(%arg0: i32, %arg1: memref<2x32x358xf32, #tpu.memory_space<vmem>>, %arg2: memref<128x96xbf16, #tpu.memory_space<vmem>>, %arg3: memref<128x1xf32, #tpu.memory_space<vmem>>, %arg4: memref<128x384xbf16, #tpu.memory_space<vmem>>, %arg5: memref<128x1xf32, #tpu.memory_space<vmem>>, %arg6: memref<355x178xbf16, #tpu.memory_space<vmem>>, %arg7: memref<16x175x40xbf16, #tpu.memory_space<vmem>>, %arg8: memref<1x40xf32, #tpu.memory_space<vmem>>, %arg9: memref<40x4xbf16, #tpu.memory_space<vmem>>, %arg10: memref<1x4xf32, #tpu.memory_space<vmem>>, %arg11: memref<1x16x4xf32, #tpu.memory_space<vmem>>) attributes {dimension_semantics = [#tpu.dimension_semantics<parallel>], iteration_bounds = array<i64: 1>, scalar_prefetch = 0 : i64, scratch_operands = 0 : i64, tpu.core_type = #tpu.core_type<tc>, window_params = [{transform_indices = @transform_0, window_bounds = array<i64: 2, 32, 358>}, {pipeline_mode = #tpu.pipeline_mode<synchronous>, transform_indices = @transform_1, window_bounds = array<i64: 128, 96>}, {pipeline_mode = #tpu.pipeline_mode<synchronous>, transform_indices = @transform_2, window_bounds = array<i64: 128, 1>}, {pipeline_mode = #tpu.pipeline_mode<synchronous>, transform_indices = @transform_3, window_bounds = array<i64: 128, 384>}, {pipeline_mode = #tpu.pipeline_mode<synchronous>, transform_indices = @transform_4, window_bounds = array<i64: 128, 1>}, {pipeline_mode = #tpu.pipeline_mode<synchronous>, transform_indices = @transform_5, window_bounds = array<i64: 355, 178>}, {pipeline_mode = #tpu.pipeline_mode<synchronous>, transform_indices = @transform_6, window_bounds = array<i64: 16, 175, 40>}, {pipeline_mode = #tpu.pipeline_mode<synchronous>, transform_indices = @transform_7, window_bounds = array<i64: 1, 40>}, {pipeline_mode = #tpu.pipeline_mode<synchronous>, transform_indices = @transform_8, window_bounds = array<i64: 40, 4>}, {pipeline_mode = #tpu.pipeline_mode<synchronous>, transform_indices = @transform_9, window_bounds = array<i64: 1, 4>}, {transform_indices = @transform_10, window_bounds = array<i64: 1, 16, 4>}]} {
    %c0 = arith.constant 0 : index
    %c0_0 = arith.constant 0 : index
    %0 = vector.load %arg2[%c0, %c0_0] : memref<128x96xbf16, #tpu.memory_space<vmem>>, vector<128x96xbf16>
    %c0_1 = arith.constant 0 : index
    %c0_2 = arith.constant 0 : index
    %1 = vector.load %arg4[%c0_1, %c0_2] : memref<128x384xbf16, #tpu.memory_space<vmem>>, vector<128x384xbf16>
    %c0_3 = arith.constant 0 : index
    %c0_4 = arith.constant 0 : index
    %2 = vector.load %arg6[%c0_3, %c0_4] : memref<355x178xbf16, #tpu.memory_space<vmem>>, vector<355x178xbf16>
    %c0_5 = arith.constant 0 : index
    %c0_6 = arith.constant 0 : index
    %3 = vector.load %arg9[%c0_5, %c0_6] : memref<40x4xbf16, #tpu.memory_space<vmem>>, vector<40x4xbf16>
    %c0_7 = arith.constant 0 : index
    %c0_8 = arith.constant 0 : index
    %4 = vector.load %arg3[%c0_7, %c0_8] : memref<128x1xf32, #tpu.memory_space<vmem>>, vector<128x1xf32>
    %c0_9 = arith.constant 0 : index
    %c0_10 = arith.constant 0 : index
    %5 = vector.load %arg5[%c0_9, %c0_10] : memref<128x1xf32, #tpu.memory_space<vmem>>, vector<128x1xf32>
    %c0_11 = arith.constant 0 : index
    %c0_12 = arith.constant 0 : index
    %6 = vector.load %arg8[%c0_11, %c0_12] : memref<1x40xf32, #tpu.memory_space<vmem>>, vector<1x40xf32>
    %c0_13 = arith.constant 0 : index
    %c0_14 = arith.constant 0 : index
    %7 = vector.load %arg10[%c0_13, %c0_14] : memref<1x4xf32, #tpu.memory_space<vmem>>, vector<1x4xf32>
    %c0_15 = arith.constant 0 : index
    %c0_16 = arith.constant 0 : index
    %c0_17 = arith.constant 0 : index
    %8 = vector.load %arg1[%c0_15, %c0_16, %c0_17] : memref<2x32x358xf32, #tpu.memory_space<vmem>>, vector<1x32x358xf32>
    %9 = vector.shape_cast %8 : vector<1x32x358xf32> to vector<32x358xf32>
    %10 = vector.extract_strided_slice %9 {offsets = [0, 0], sizes = [32, 356], strides = [1, 1]} : vector<32x358xf32> to vector<32x356xf32>
    %11 = vector.extract_strided_slice %9 {offsets = [0, 1], sizes = [32, 356], strides = [1, 1]} : vector<32x358xf32> to vector<32x356xf32>
    %12 = vector.extract_strided_slice %9 {offsets = [0, 2], sizes = [32, 356], strides = [1, 1]} : vector<32x358xf32> to vector<32x356xf32>
    %13 = tpu.concatenate %10, %11, %12 in 0 : vector<32x356xf32>, vector<32x356xf32>, vector<32x356xf32> -> vector<96x356xf32>
    %14 = arith.truncf %13 : vector<96x356xf32> to vector<96x356xbf16>
    %cst = arith.constant dense<0.000000e+00> : vector<128x356xf32>
    %15 = tpu.matmul %0, %14, %cst {dimension_numbers = #tpu.dot_dimension_numbers<[1], [0], [0], [1], [0, 0, 1, 1], [], []>} : vector<128x96xbf16>, vector<96x356xbf16>, vector<128x356xf32> -> vector<128x356xf32>
    %16 = vector.broadcast %4 : vector<128x1xf32> to vector<128x356xf32>
    %17 = arith.addf %15, %16 : vector<128x356xf32>
    %cst_18 = arith.constant 0.000000e+00 : f32
    %18 = vector.broadcast %cst_18 : f32 to vector<128x356xf32>
    %19 = arith.maximumf %17, %18 : vector<128x356xf32>
    %20 = vector.extract_strided_slice %19 {offsets = [0, 0], sizes = [128, 355], strides = [1, 1]} : vector<128x356xf32> to vector<128x355xf32>
    %21 = vector.extract_strided_slice %19 {offsets = [0, 1], sizes = [128, 355], strides = [1, 1]} : vector<128x356xf32> to vector<128x355xf32>
    %22 = arith.maximumf %20, %21 : vector<128x355xf32>
    %23 = arith.truncf %22 : vector<128x355xf32> to vector<128x355xbf16>
    %cst_19 = arith.constant dense<0.000000e+00> : vector<128x178xf32>
    %24 = tpu.matmul %23, %2, %cst_19 {dimension_numbers = #tpu.dot_dimension_numbers<[1], [0], [0], [1], [0, 0, 1, 1], [], []>} : vector<128x355xbf16>, vector<355x178xbf16>, vector<128x178xf32> -> vector<128x178xf32>
    %25 = vector.extract_strided_slice %24 {offsets = [0, 0], sizes = [128, 176], strides = [1, 1]} : vector<128x178xf32> to vector<128x176xf32>
    %26 = vector.extract_strided_slice %24 {offsets = [0, 1], sizes = [128, 176], strides = [1, 1]} : vector<128x178xf32> to vector<128x176xf32>
    %27 = vector.extract_strided_slice %24 {offsets = [0, 2], sizes = [128, 176], strides = [1, 1]} : vector<128x178xf32> to vector<128x176xf32>
    %28 = tpu.concatenate %25, %26, %27 in 0 : vector<128x176xf32>, vector<128x176xf32>, vector<128x176xf32> -> vector<384x176xf32>
    %29 = arith.truncf %28 : vector<384x176xf32> to vector<384x176xbf16>
    %cst_20 = arith.constant dense<0.000000e+00> : vector<128x176xf32>
    %30 = tpu.matmul %1, %29, %cst_20 {dimension_numbers = #tpu.dot_dimension_numbers<[1], [0], [0], [1], [0, 0, 1, 1], [], []>} : vector<128x384xbf16>, vector<384x176xbf16>, vector<128x176xf32> -> vector<128x176xf32>
    %31 = vector.broadcast %5 : vector<128x1xf32> to vector<128x176xf32>
    %32 = arith.addf %30, %31 : vector<128x176xf32>
    %cst_21 = arith.constant 0.000000e+00 : f32
    %33 = vector.broadcast %cst_21 : f32 to vector<128x176xf32>
    %34 = arith.maximumf %32, %33 : vector<128x176xf32>
    %35 = vector.extract_strided_slice %34 {offsets = [0, 0], sizes = [128, 175], strides = [1, 1]} : vector<128x176xf32> to vector<128x175xf32>
    %36 = vector.extract_strided_slice %34 {offsets = [0, 1], sizes = [128, 175], strides = [1, 1]} : vector<128x176xf32> to vector<128x175xf32>
    %37 = arith.maximumf %35, %36 : vector<128x175xf32>
    %cst_22 = arith.constant 0.000000e+00 : f32
    %38 = vector.broadcast %cst_22 : f32 to vector<8x40xf32>
    %39 = vector.extract_strided_slice %37 {offsets = [0, 0], sizes = [8, 175], strides = [1, 1]} : vector<128x175xf32> to vector<8x175xf32>
    %40 = arith.truncf %39 : vector<8x175xf32> to vector<8x175xbf16>
    %c0_23 = arith.constant 0 : index
    %c0_24 = arith.constant 0 : index
    %c0_25 = arith.constant 0 : index
    %41 = vector.load %arg7[%c0_23, %c0_24, %c0_25] : memref<16x175x40xbf16, #tpu.memory_space<vmem>>, vector<1x175x40xbf16>
    %42 = vector.shape_cast %41 : vector<1x175x40xbf16> to vector<175x40xbf16>
    %cst_26 = arith.constant dense<0.000000e+00> : vector<8x40xf32>
    %43 = tpu.matmul %40, %42, %cst_26 {dimension_numbers = #tpu.dot_dimension_numbers<[1], [0], [0], [1], [0, 0, 1, 1], [], []>} : vector<8x175xbf16>, vector<175x40xbf16>, vector<8x40xf32> -> vector<8x40xf32>
    %44 = arith.addf %38, %43 : vector<8x40xf32>
    %45 = vector.extract_strided_slice %37 {offsets = [8, 0], sizes = [8, 175], strides = [1, 1]} : vector<128x175xf32> to vector<8x175xf32>
    %46 = arith.truncf %45 : vector<8x175xf32> to vector<8x175xbf16>
    %c1 = arith.constant 1 : index
    %c0_27 = arith.constant 0 : index
    %c0_28 = arith.constant 0 : index
    %47 = vector.load %arg7[%c1, %c0_27, %c0_28] : memref<16x175x40xbf16, #tpu.memory_space<vmem>>, vector<1x175x40xbf16>
    %48 = vector.shape_cast %47 : vector<1x175x40xbf16> to vector<175x40xbf16>
    %cst_29 = arith.constant dense<0.000000e+00> : vector<8x40xf32>
    %49 = tpu.matmul %46, %48, %cst_29 {dimension_numbers = #tpu.dot_dimension_numbers<[1], [0], [0], [1], [0, 0, 1, 1], [], []>} : vector<8x175xbf16>, vector<175x40xbf16>, vector<8x40xf32> -> vector<8x40xf32>
    %50 = arith.addf %44, %49 : vector<8x40xf32>
    %51 = vector.extract_strided_slice %37 {offsets = [16, 0], sizes = [8, 175], strides = [1, 1]} : vector<128x175xf32> to vector<8x175xf32>
    %52 = arith.truncf %51 : vector<8x175xf32> to vector<8x175xbf16>
    %c2 = arith.constant 2 : index
    %c0_30 = arith.constant 0 : index
    %c0_31 = arith.constant 0 : index
    %53 = vector.load %arg7[%c2, %c0_30, %c0_31] : memref<16x175x40xbf16, #tpu.memory_space<vmem>>, vector<1x175x40xbf16>
    %54 = vector.shape_cast %53 : vector<1x175x40xbf16> to vector<175x40xbf16>
    %cst_32 = arith.constant dense<0.000000e+00> : vector<8x40xf32>
    %55 = tpu.matmul %52, %54, %cst_32 {dimension_numbers = #tpu.dot_dimension_numbers<[1], [0], [0], [1], [0, 0, 1, 1], [], []>} : vector<8x175xbf16>, vector<175x40xbf16>, vector<8x40xf32> -> vector<8x40xf32>
    %56 = arith.addf %50, %55 : vector<8x40xf32>
    %57 = vector.extract_strided_slice %37 {offsets = [24, 0], sizes = [8, 175], strides = [1, 1]} : vector<128x175xf32> to vector<8x175xf32>
    %58 = arith.truncf %57 : vector<8x175xf32> to vector<8x175xbf16>
    %c3 = arith.constant 3 : index
    %c0_33 = arith.constant 0 : index
    %c0_34 = arith.constant 0 : index
    %59 = vector.load %arg7[%c3, %c0_33, %c0_34] : memref<16x175x40xbf16, #tpu.memory_space<vmem>>, vector<1x175x40xbf16>
    %60 = vector.shape_cast %59 : vector<1x175x40xbf16> to vector<175x40xbf16>
    %cst_35 = arith.constant dense<0.000000e+00> : vector<8x40xf32>
    %61 = tpu.matmul %58, %60, %cst_35 {dimension_numbers = #tpu.dot_dimension_numbers<[1], [0], [0], [1], [0, 0, 1, 1], [], []>} : vector<8x175xbf16>, vector<175x40xbf16>, vector<8x40xf32> -> vector<8x40xf32>
    %62 = arith.addf %56, %61 : vector<8x40xf32>
    %63 = vector.extract_strided_slice %37 {offsets = [32, 0], sizes = [8, 175], strides = [1, 1]} : vector<128x175xf32> to vector<8x175xf32>
    %64 = arith.truncf %63 : vector<8x175xf32> to vector<8x175xbf16>
    %c4 = arith.constant 4 : index
    %c0_36 = arith.constant 0 : index
    %c0_37 = arith.constant 0 : index
    %65 = vector.load %arg7[%c4, %c0_36, %c0_37] : memref<16x175x40xbf16, #tpu.memory_space<vmem>>, vector<1x175x40xbf16>
    %66 = vector.shape_cast %65 : vector<1x175x40xbf16> to vector<175x40xbf16>
    %cst_38 = arith.constant dense<0.000000e+00> : vector<8x40xf32>
    %67 = tpu.matmul %64, %66, %cst_38 {dimension_numbers = #tpu.dot_dimension_numbers<[1], [0], [0], [1], [0, 0, 1, 1], [], []>} : vector<8x175xbf16>, vector<175x40xbf16>, vector<8x40xf32> -> vector<8x40xf32>
    %68 = arith.addf %62, %67 : vector<8x40xf32>
    %69 = vector.extract_strided_slice %37 {offsets = [40, 0], sizes = [8, 175], strides = [1, 1]} : vector<128x175xf32> to vector<8x175xf32>
    %70 = arith.truncf %69 : vector<8x175xf32> to vector<8x175xbf16>
    %c5 = arith.constant 5 : index
    %c0_39 = arith.constant 0 : index
    %c0_40 = arith.constant 0 : index
    %71 = vector.load %arg7[%c5, %c0_39, %c0_40] : memref<16x175x40xbf16, #tpu.memory_space<vmem>>, vector<1x175x40xbf16>
    %72 = vector.shape_cast %71 : vector<1x175x40xbf16> to vector<175x40xbf16>
    %cst_41 = arith.constant dense<0.000000e+00> : vector<8x40xf32>
    %73 = tpu.matmul %70, %72, %cst_41 {dimension_numbers = #tpu.dot_dimension_numbers<[1], [0], [0], [1], [0, 0, 1, 1], [], []>} : vector<8x175xbf16>, vector<175x40xbf16>, vector<8x40xf32> -> vector<8x40xf32>
    %74 = arith.addf %68, %73 : vector<8x40xf32>
    %75 = vector.extract_strided_slice %37 {offsets = [48, 0], sizes = [8, 175], strides = [1, 1]} : vector<128x175xf32> to vector<8x175xf32>
    %76 = arith.truncf %75 : vector<8x175xf32> to vector<8x175xbf16>
    %c6 = arith.constant 6 : index
    %c0_42 = arith.constant 0 : index
    %c0_43 = arith.constant 0 : index
    %77 = vector.load %arg7[%c6, %c0_42, %c0_43] : memref<16x175x40xbf16, #tpu.memory_space<vmem>>, vector<1x175x40xbf16>
    %78 = vector.shape_cast %77 : vector<1x175x40xbf16> to vector<175x40xbf16>
    %cst_44 = arith.constant dense<0.000000e+00> : vector<8x40xf32>
    %79 = tpu.matmul %76, %78, %cst_44 {dimension_numbers = #tpu.dot_dimension_numbers<[1], [0], [0], [1], [0, 0, 1, 1], [], []>} : vector<8x175xbf16>, vector<175x40xbf16>, vector<8x40xf32> -> vector<8x40xf32>
    %80 = arith.addf %74, %79 : vector<8x40xf32>
    %81 = vector.extract_strided_slice %37 {offsets = [56, 0], sizes = [8, 175], strides = [1, 1]} : vector<128x175xf32> to vector<8x175xf32>
    %82 = arith.truncf %81 : vector<8x175xf32> to vector<8x175xbf16>
    %c7 = arith.constant 7 : index
    %c0_45 = arith.constant 0 : index
    %c0_46 = arith.constant 0 : index
    %83 = vector.load %arg7[%c7, %c0_45, %c0_46] : memref<16x175x40xbf16, #tpu.memory_space<vmem>>, vector<1x175x40xbf16>
    %84 = vector.shape_cast %83 : vector<1x175x40xbf16> to vector<175x40xbf16>
    %cst_47 = arith.constant dense<0.000000e+00> : vector<8x40xf32>
    %85 = tpu.matmul %82, %84, %cst_47 {dimension_numbers = #tpu.dot_dimension_numbers<[1], [0], [0], [1], [0, 0, 1, 1], [], []>} : vector<8x175xbf16>, vector<175x40xbf16>, vector<8x40xf32> -> vector<8x40xf32>
    %86 = arith.addf %80, %85 : vector<8x40xf32>
    %87 = vector.extract_strided_slice %37 {offsets = [64, 0], sizes = [8, 175], strides = [1, 1]} : vector<128x175xf32> to vector<8x175xf32>
    %88 = arith.truncf %87 : vector<8x175xf32> to vector<8x175xbf16>
    %c8 = arith.constant 8 : index
    %c0_48 = arith.constant 0 : index
    %c0_49 = arith.constant 0 : index
    %89 = vector.load %arg7[%c8, %c0_48, %c0_49] : memref<16x175x40xbf16, #tpu.memory_space<vmem>>, vector<1x175x40xbf16>
    %90 = vector.shape_cast %89 : vector<1x175x40xbf16> to vector<175x40xbf16>
    %cst_50 = arith.constant dense<0.000000e+00> : vector<8x40xf32>
    %91 = tpu.matmul %88, %90, %cst_50 {dimension_numbers = #tpu.dot_dimension_numbers<[1], [0], [0], [1], [0, 0, 1, 1], [], []>} : vector<8x175xbf16>, vector<175x40xbf16>, vector<8x40xf32> -> vector<8x40xf32>
    %92 = arith.addf %86, %91 : vector<8x40xf32>
    %93 = vector.extract_strided_slice %37 {offsets = [72, 0], sizes = [8, 175], strides = [1, 1]} : vector<128x175xf32> to vector<8x175xf32>
    %94 = arith.truncf %93 : vector<8x175xf32> to vector<8x175xbf16>
    %c9 = arith.constant 9 : index
    %c0_51 = arith.constant 0 : index
    %c0_52 = arith.constant 0 : index
    %95 = vector.load %arg7[%c9, %c0_51, %c0_52] : memref<16x175x40xbf16, #tpu.memory_space<vmem>>, vector<1x175x40xbf16>
    %96 = vector.shape_cast %95 : vector<1x175x40xbf16> to vector<175x40xbf16>
    %cst_53 = arith.constant dense<0.000000e+00> : vector<8x40xf32>
    %97 = tpu.matmul %94, %96, %cst_53 {dimension_numbers = #tpu.dot_dimension_numbers<[1], [0], [0], [1], [0, 0, 1, 1], [], []>} : vector<8x175xbf16>, vector<175x40xbf16>, vector<8x40xf32> -> vector<8x40xf32>
    %98 = arith.addf %92, %97 : vector<8x40xf32>
    %99 = vector.extract_strided_slice %37 {offsets = [80, 0], sizes = [8, 175], strides = [1, 1]} : vector<128x175xf32> to vector<8x175xf32>
    %100 = arith.truncf %99 : vector<8x175xf32> to vector<8x175xbf16>
    %c10 = arith.constant 10 : index
    %c0_54 = arith.constant 0 : index
    %c0_55 = arith.constant 0 : index
    %101 = vector.load %arg7[%c10, %c0_54, %c0_55] : memref<16x175x40xbf16, #tpu.memory_space<vmem>>, vector<1x175x40xbf16>
    %102 = vector.shape_cast %101 : vector<1x175x40xbf16> to vector<175x40xbf16>
    %cst_56 = arith.constant dense<0.000000e+00> : vector<8x40xf32>
    %103 = tpu.matmul %100, %102, %cst_56 {dimension_numbers = #tpu.dot_dimension_numbers<[1], [0], [0], [1], [0, 0, 1, 1], [], []>} : vector<8x175xbf16>, vector<175x40xbf16>, vector<8x40xf32> -> vector<8x40xf32>
    %104 = arith.addf %98, %103 : vector<8x40xf32>
    %105 = vector.extract_strided_slice %37 {offsets = [88, 0], sizes = [8, 175], strides = [1, 1]} : vector<128x175xf32> to vector<8x175xf32>
    %106 = arith.truncf %105 : vector<8x175xf32> to vector<8x175xbf16>
    %c11 = arith.constant 11 : index
    %c0_57 = arith.constant 0 : index
    %c0_58 = arith.constant 0 : index
    %107 = vector.load %arg7[%c11, %c0_57, %c0_58] : memref<16x175x40xbf16, #tpu.memory_space<vmem>>, vector<1x175x40xbf16>
    %108 = vector.shape_cast %107 : vector<1x175x40xbf16> to vector<175x40xbf16>
    %cst_59 = arith.constant dense<0.000000e+00> : vector<8x40xf32>
    %109 = tpu.matmul %106, %108, %cst_59 {dimension_numbers = #tpu.dot_dimension_numbers<[1], [0], [0], [1], [0, 0, 1, 1], [], []>} : vector<8x175xbf16>, vector<175x40xbf16>, vector<8x40xf32> -> vector<8x40xf32>
    %110 = arith.addf %104, %109 : vector<8x40xf32>
    %111 = vector.extract_strided_slice %37 {offsets = [96, 0], sizes = [8, 175], strides = [1, 1]} : vector<128x175xf32> to vector<8x175xf32>
    %112 = arith.truncf %111 : vector<8x175xf32> to vector<8x175xbf16>
    %c12 = arith.constant 12 : index
    %c0_60 = arith.constant 0 : index
    %c0_61 = arith.constant 0 : index
    %113 = vector.load %arg7[%c12, %c0_60, %c0_61] : memref<16x175x40xbf16, #tpu.memory_space<vmem>>, vector<1x175x40xbf16>
    %114 = vector.shape_cast %113 : vector<1x175x40xbf16> to vector<175x40xbf16>
    %cst_62 = arith.constant dense<0.000000e+00> : vector<8x40xf32>
    %115 = tpu.matmul %112, %114, %cst_62 {dimension_numbers = #tpu.dot_dimension_numbers<[1], [0], [0], [1], [0, 0, 1, 1], [], []>} : vector<8x175xbf16>, vector<175x40xbf16>, vector<8x40xf32> -> vector<8x40xf32>
    %116 = arith.addf %110, %115 : vector<8x40xf32>
    %117 = vector.extract_strided_slice %37 {offsets = [104, 0], sizes = [8, 175], strides = [1, 1]} : vector<128x175xf32> to vector<8x175xf32>
    %118 = arith.truncf %117 : vector<8x175xf32> to vector<8x175xbf16>
    %c13 = arith.constant 13 : index
    %c0_63 = arith.constant 0 : index
    %c0_64 = arith.constant 0 : index
    %119 = vector.load %arg7[%c13, %c0_63, %c0_64] : memref<16x175x40xbf16, #tpu.memory_space<vmem>>, vector<1x175x40xbf16>
    %120 = vector.shape_cast %119 : vector<1x175x40xbf16> to vector<175x40xbf16>
    %cst_65 = arith.constant dense<0.000000e+00> : vector<8x40xf32>
    %121 = tpu.matmul %118, %120, %cst_65 {dimension_numbers = #tpu.dot_dimension_numbers<[1], [0], [0], [1], [0, 0, 1, 1], [], []>} : vector<8x175xbf16>, vector<175x40xbf16>, vector<8x40xf32> -> vector<8x40xf32>
    %122 = arith.addf %116, %121 : vector<8x40xf32>
    %123 = vector.extract_strided_slice %37 {offsets = [112, 0], sizes = [8, 175], strides = [1, 1]} : vector<128x175xf32> to vector<8x175xf32>
    %124 = arith.truncf %123 : vector<8x175xf32> to vector<8x175xbf16>
    %c14 = arith.constant 14 : index
    %c0_66 = arith.constant 0 : index
    %c0_67 = arith.constant 0 : index
    %125 = vector.load %arg7[%c14, %c0_66, %c0_67] : memref<16x175x40xbf16, #tpu.memory_space<vmem>>, vector<1x175x40xbf16>
    %126 = vector.shape_cast %125 : vector<1x175x40xbf16> to vector<175x40xbf16>
    %cst_68 = arith.constant dense<0.000000e+00> : vector<8x40xf32>
    %127 = tpu.matmul %124, %126, %cst_68 {dimension_numbers = #tpu.dot_dimension_numbers<[1], [0], [0], [1], [0, 0, 1, 1], [], []>} : vector<8x175xbf16>, vector<175x40xbf16>, vector<8x40xf32> -> vector<8x40xf32>
    %128 = arith.addf %122, %127 : vector<8x40xf32>
    %129 = vector.extract_strided_slice %37 {offsets = [120, 0], sizes = [8, 175], strides = [1, 1]} : vector<128x175xf32> to vector<8x175xf32>
    %130 = arith.truncf %129 : vector<8x175xf32> to vector<8x175xbf16>
    %c15 = arith.constant 15 : index
    %c0_69 = arith.constant 0 : index
    %c0_70 = arith.constant 0 : index
    %131 = vector.load %arg7[%c15, %c0_69, %c0_70] : memref<16x175x40xbf16, #tpu.memory_space<vmem>>, vector<1x175x40xbf16>
    %132 = vector.shape_cast %131 : vector<1x175x40xbf16> to vector<175x40xbf16>
    %cst_71 = arith.constant dense<0.000000e+00> : vector<8x40xf32>
    %133 = tpu.matmul %130, %132, %cst_71 {dimension_numbers = #tpu.dot_dimension_numbers<[1], [0], [0], [1], [0, 0, 1, 1], [], []>} : vector<8x175xbf16>, vector<175x40xbf16>, vector<8x40xf32> -> vector<8x40xf32>
    %134 = arith.addf %128, %133 : vector<8x40xf32>
    %135 = vector.broadcast %6 : vector<1x40xf32> to vector<8x40xf32>
    %136 = arith.addf %134, %135 : vector<8x40xf32>
    %cst_72 = arith.constant 0.000000e+00 : f32
    %137 = vector.broadcast %cst_72 : f32 to vector<8x40xf32>
    %138 = arith.maximumf %136, %137 : vector<8x40xf32>
    %139 = arith.truncf %138 : vector<8x40xf32> to vector<8x40xbf16>
    %cst_73 = arith.constant dense<0.000000e+00> : vector<8x4xf32>
    %140 = tpu.matmul %139, %3, %cst_73 {dimension_numbers = #tpu.dot_dimension_numbers<[1], [0], [0], [1], [0, 0, 1, 1], [], []>} : vector<8x40xbf16>, vector<40x4xbf16>, vector<8x4xf32> -> vector<8x4xf32>
    %141 = vector.broadcast %7 : vector<1x4xf32> to vector<8x4xf32>
    %142 = arith.addf %140, %141 : vector<8x4xf32>
    %c0_74 = arith.constant 0 : index
    %c0_75 = arith.constant 0 : index
    %c0_76 = arith.constant 0 : index
    %143 = vector.load %arg11[%c0_74, %c0_75, %c0_76] : memref<1x16x4xf32, #tpu.memory_space<vmem>>, vector<1x8x4xf32>
    %144 = vector.shape_cast %143 : vector<1x8x4xf32> to vector<8x4xf32>
    %145 = vector.shape_cast %142 : vector<8x4xf32> to vector<1x8x4xf32>
    tpu.vector_store %arg11[%c0_74, %c0_75, %c0_76], %145 {strides = array<i32>} : memref<1x16x4xf32, #tpu.memory_space<vmem>>, vector<1x8x4xf32>,
    %c1_77 = arith.constant 1 : index
    %c0_78 = arith.constant 0 : index
    %c0_79 = arith.constant 0 : index
    %146 = vector.load %arg1[%c1_77, %c0_78, %c0_79] : memref<2x32x358xf32, #tpu.memory_space<vmem>>, vector<1x32x358xf32>
    %147 = vector.shape_cast %146 : vector<1x32x358xf32> to vector<32x358xf32>
    %148 = vector.extract_strided_slice %147 {offsets = [0, 0], sizes = [32, 356], strides = [1, 1]} : vector<32x358xf32> to vector<32x356xf32>
    %149 = vector.extract_strided_slice %147 {offsets = [0, 1], sizes = [32, 356], strides = [1, 1]} : vector<32x358xf32> to vector<32x356xf32>
    %150 = vector.extract_strided_slice %147 {offsets = [0, 2], sizes = [32, 356], strides = [1, 1]} : vector<32x358xf32> to vector<32x356xf32>
    %151 = tpu.concatenate %148, %149, %150 in 0 : vector<32x356xf32>, vector<32x356xf32>, vector<32x356xf32> -> vector<96x356xf32>
    %152 = arith.truncf %151 : vector<96x356xf32> to vector<96x356xbf16>
    %cst_80 = arith.constant dense<0.000000e+00> : vector<128x356xf32>
    %153 = tpu.matmul %0, %152, %cst_80 {dimension_numbers = #tpu.dot_dimension_numbers<[1], [0], [0], [1], [0, 0, 1, 1], [], []>} : vector<128x96xbf16>, vector<96x356xbf16>, vector<128x356xf32> -> vector<128x356xf32>
    %154 = vector.broadcast %4 : vector<128x1xf32> to vector<128x356xf32>
    %155 = arith.addf %153, %154 : vector<128x356xf32>
    %cst_81 = arith.constant 0.000000e+00 : f32
    %156 = vector.broadcast %cst_81 : f32 to vector<128x356xf32>
    %157 = arith.maximumf %155, %156 : vector<128x356xf32>
    %158 = vector.extract_strided_slice %157 {offsets = [0, 0], sizes = [128, 355], strides = [1, 1]} : vector<128x356xf32> to vector<128x355xf32>
    %159 = vector.extract_strided_slice %157 {offsets = [0, 1], sizes = [128, 355], strides = [1, 1]} : vector<128x356xf32> to vector<128x355xf32>
    %160 = arith.maximumf %158, %159 : vector<128x355xf32>
    %161 = arith.truncf %160 : vector<128x355xf32> to vector<128x355xbf16>
    %cst_82 = arith.constant dense<0.000000e+00> : vector<128x178xf32>
    %162 = tpu.matmul %161, %2, %cst_82 {dimension_numbers = #tpu.dot_dimension_numbers<[1], [0], [0], [1], [0, 0, 1, 1], [], []>} : vector<128x355xbf16>, vector<355x178xbf16>, vector<128x178xf32> -> vector<128x178xf32>
    %163 = vector.extract_strided_slice %162 {offsets = [0, 0], sizes = [128, 176], strides = [1, 1]} : vector<128x178xf32> to vector<128x176xf32>
    %164 = vector.extract_strided_slice %162 {offsets = [0, 1], sizes = [128, 176], strides = [1, 1]} : vector<128x178xf32> to vector<128x176xf32>
    %165 = vector.extract_strided_slice %162 {offsets = [0, 2], sizes = [128, 176], strides = [1, 1]} : vector<128x178xf32> to vector<128x176xf32>
    %166 = tpu.concatenate %163, %164, %165 in 0 : vector<128x176xf32>, vector<128x176xf32>, vector<128x176xf32> -> vector<384x176xf32>
    %167 = arith.truncf %166 : vector<384x176xf32> to vector<384x176xbf16>
    %cst_83 = arith.constant dense<0.000000e+00> : vector<128x176xf32>
    %168 = tpu.matmul %1, %167, %cst_83 {dimension_numbers = #tpu.dot_dimension_numbers<[1], [0], [0], [1], [0, 0, 1, 1], [], []>} : vector<128x384xbf16>, vector<384x176xbf16>, vector<128x176xf32> -> vector<128x176xf32>
    %169 = vector.broadcast %5 : vector<128x1xf32> to vector<128x176xf32>
    %170 = arith.addf %168, %169 : vector<128x176xf32>
    %cst_84 = arith.constant 0.000000e+00 : f32
    %171 = vector.broadcast %cst_84 : f32 to vector<128x176xf32>
    %172 = arith.maximumf %170, %171 : vector<128x176xf32>
    %173 = vector.extract_strided_slice %172 {offsets = [0, 0], sizes = [128, 175], strides = [1, 1]} : vector<128x176xf32> to vector<128x175xf32>
    %174 = vector.extract_strided_slice %172 {offsets = [0, 1], sizes = [128, 175], strides = [1, 1]} : vector<128x176xf32> to vector<128x175xf32>
    %175 = arith.maximumf %173, %174 : vector<128x175xf32>
    %cst_85 = arith.constant 0.000000e+00 : f32
    %176 = vector.broadcast %cst_85 : f32 to vector<8x40xf32>
    %177 = vector.extract_strided_slice %175 {offsets = [0, 0], sizes = [8, 175], strides = [1, 1]} : vector<128x175xf32> to vector<8x175xf32>
    %178 = arith.truncf %177 : vector<8x175xf32> to vector<8x175xbf16>
    %c0_86 = arith.constant 0 : index
    %c0_87 = arith.constant 0 : index
    %c0_88 = arith.constant 0 : index
    %179 = vector.load %arg7[%c0_86, %c0_87, %c0_88] : memref<16x175x40xbf16, #tpu.memory_space<vmem>>, vector<1x175x40xbf16>
    %180 = vector.shape_cast %179 : vector<1x175x40xbf16> to vector<175x40xbf16>
    %cst_89 = arith.constant dense<0.000000e+00> : vector<8x40xf32>
    %181 = tpu.matmul %178, %180, %cst_89 {dimension_numbers = #tpu.dot_dimension_numbers<[1], [0], [0], [1], [0, 0, 1, 1], [], []>} : vector<8x175xbf16>, vector<175x40xbf16>, vector<8x40xf32> -> vector<8x40xf32>
    %182 = arith.addf %176, %181 : vector<8x40xf32>
    %183 = vector.extract_strided_slice %175 {offsets = [8, 0], sizes = [8, 175], strides = [1, 1]} : vector<128x175xf32> to vector<8x175xf32>
    %184 = arith.truncf %183 : vector<8x175xf32> to vector<8x175xbf16>
    %c1_90 = arith.constant 1 : index
    %c0_91 = arith.constant 0 : index
    %c0_92 = arith.constant 0 : index
    %185 = vector.load %arg7[%c1_90, %c0_91, %c0_92] : memref<16x175x40xbf16, #tpu.memory_space<vmem>>, vector<1x175x40xbf16>
    %186 = vector.shape_cast %185 : vector<1x175x40xbf16> to vector<175x40xbf16>
    %cst_93 = arith.constant dense<0.000000e+00> : vector<8x40xf32>
    %187 = tpu.matmul %184, %186, %cst_93 {dimension_numbers = #tpu.dot_dimension_numbers<[1], [0], [0], [1], [0, 0, 1, 1], [], []>} : vector<8x175xbf16>, vector<175x40xbf16>, vector<8x40xf32> -> vector<8x40xf32>
    %188 = arith.addf %182, %187 : vector<8x40xf32>
    %189 = vector.extract_strided_slice %175 {offsets = [16, 0], sizes = [8, 175], strides = [1, 1]} : vector<128x175xf32> to vector<8x175xf32>
    %190 = arith.truncf %189 : vector<8x175xf32> to vector<8x175xbf16>
    %c2_94 = arith.constant 2 : index
    %c0_95 = arith.constant 0 : index
    %c0_96 = arith.constant 0 : index
    %191 = vector.load %arg7[%c2_94, %c0_95, %c0_96] : memref<16x175x40xbf16, #tpu.memory_space<vmem>>, vector<1x175x40xbf16>
    %192 = vector.shape_cast %191 : vector<1x175x40xbf16> to vector<175x40xbf16>
    %cst_97 = arith.constant dense<0.000000e+00> : vector<8x40xf32>
    %193 = tpu.matmul %190, %192, %cst_97 {dimension_numbers = #tpu.dot_dimension_numbers<[1], [0], [0], [1], [0, 0, 1, 1], [], []>} : vector<8x175xbf16>, vector<175x40xbf16>, vector<8x40xf32> -> vector<8x40xf32>
    %194 = arith.addf %188, %193 : vector<8x40xf32>
    %195 = vector.extract_strided_slice %175 {offsets = [24, 0], sizes = [8, 175], strides = [1, 1]} : vector<128x175xf32> to vector<8x175xf32>
    %196 = arith.truncf %195 : vector<8x175xf32> to vector<8x175xbf16>
    %c3_98 = arith.constant 3 : index
    %c0_99 = arith.constant 0 : index
    %c0_100 = arith.constant 0 : index
    %197 = vector.load %arg7[%c3_98, %c0_99, %c0_100] : memref<16x175x40xbf16, #tpu.memory_space<vmem>>, vector<1x175x40xbf16>
    %198 = vector.shape_cast %197 : vector<1x175x40xbf16> to vector<175x40xbf16>
    %cst_101 = arith.constant dense<0.000000e+00> : vector<8x40xf32>
    %199 = tpu.matmul %196, %198, %cst_101 {dimension_numbers = #tpu.dot_dimension_numbers<[1], [0], [0], [1], [0, 0, 1, 1], [], []>} : vector<8x175xbf16>, vector<175x40xbf16>, vector<8x40xf32> -> vector<8x40xf32>
    %200 = arith.addf %194, %199 : vector<8x40xf32>
    %201 = vector.extract_strided_slice %175 {offsets = [32, 0], sizes = [8, 175], strides = [1, 1]} : vector<128x175xf32> to vector<8x175xf32>
    %202 = arith.truncf %201 : vector<8x175xf32> to vector<8x175xbf16>
    %c4_102 = arith.constant 4 : index
    %c0_103 = arith.constant 0 : index
    %c0_104 = arith.constant 0 : index
    %203 = vector.load %arg7[%c4_102, %c0_103, %c0_104] : memref<16x175x40xbf16, #tpu.memory_space<vmem>>, vector<1x175x40xbf16>
    %204 = vector.shape_cast %203 : vector<1x175x40xbf16> to vector<175x40xbf16>
    %cst_105 = arith.constant dense<0.000000e+00> : vector<8x40xf32>
    %205 = tpu.matmul %202, %204, %cst_105 {dimension_numbers = #tpu.dot_dimension_numbers<[1], [0], [0], [1], [0, 0, 1, 1], [], []>} : vector<8x175xbf16>, vector<175x40xbf16>, vector<8x40xf32> -> vector<8x40xf32>
    %206 = arith.addf %200, %205 : vector<8x40xf32>
    %207 = vector.extract_strided_slice %175 {offsets = [40, 0], sizes = [8, 175], strides = [1, 1]} : vector<128x175xf32> to vector<8x175xf32>
    %208 = arith.truncf %207 : vector<8x175xf32> to vector<8x175xbf16>
    %c5_106 = arith.constant 5 : index
    %c0_107 = arith.constant 0 : index
    %c0_108 = arith.constant 0 : index
    %209 = vector.load %arg7[%c5_106, %c0_107, %c0_108] : memref<16x175x40xbf16, #tpu.memory_space<vmem>>, vector<1x175x40xbf16>
    %210 = vector.shape_cast %209 : vector<1x175x40xbf16> to vector<175x40xbf16>
    %cst_109 = arith.constant dense<0.000000e+00> : vector<8x40xf32>
    %211 = tpu.matmul %208, %210, %cst_109 {dimension_numbers = #tpu.dot_dimension_numbers<[1], [0], [0], [1], [0, 0, 1, 1], [], []>} : vector<8x175xbf16>, vector<175x40xbf16>, vector<8x40xf32> -> vector<8x40xf32>
    %212 = arith.addf %206, %211 : vector<8x40xf32>
    %213 = vector.extract_strided_slice %175 {offsets = [48, 0], sizes = [8, 175], strides = [1, 1]} : vector<128x175xf32> to vector<8x175xf32>
    %214 = arith.truncf %213 : vector<8x175xf32> to vector<8x175xbf16>
    %c6_110 = arith.constant 6 : index
    %c0_111 = arith.constant 0 : index
    %c0_112 = arith.constant 0 : index
    %215 = vector.load %arg7[%c6_110, %c0_111, %c0_112] : memref<16x175x40xbf16, #tpu.memory_space<vmem>>, vector<1x175x40xbf16>
    %216 = vector.shape_cast %215 : vector<1x175x40xbf16> to vector<175x40xbf16>
    %cst_113 = arith.constant dense<0.000000e+00> : vector<8x40xf32>
    %217 = tpu.matmul %214, %216, %cst_113 {dimension_numbers = #tpu.dot_dimension_numbers<[1], [0], [0], [1], [0, 0, 1, 1], [], []>} : vector<8x175xbf16>, vector<175x40xbf16>, vector<8x40xf32> -> vector<8x40xf32>
    %218 = arith.addf %212, %217 : vector<8x40xf32>
    %219 = vector.extract_strided_slice %175 {offsets = [56, 0], sizes = [8, 175], strides = [1, 1]} : vector<128x175xf32> to vector<8x175xf32>
    %220 = arith.truncf %219 : vector<8x175xf32> to vector<8x175xbf16>
    %c7_114 = arith.constant 7 : index
    %c0_115 = arith.constant 0 : index
    %c0_116 = arith.constant 0 : index
    %221 = vector.load %arg7[%c7_114, %c0_115, %c0_116] : memref<16x175x40xbf16, #tpu.memory_space<vmem>>, vector<1x175x40xbf16>
    %222 = vector.shape_cast %221 : vector<1x175x40xbf16> to vector<175x40xbf16>
    %cst_117 = arith.constant dense<0.000000e+00> : vector<8x40xf32>
    %223 = tpu.matmul %220, %222, %cst_117 {dimension_numbers = #tpu.dot_dimension_numbers<[1], [0], [0], [1], [0, 0, 1, 1], [], []>} : vector<8x175xbf16>, vector<175x40xbf16>, vector<8x40xf32> -> vector<8x40xf32>
    %224 = arith.addf %218, %223 : vector<8x40xf32>
    %225 = vector.extract_strided_slice %175 {offsets = [64, 0], sizes = [8, 175], strides = [1, 1]} : vector<128x175xf32> to vector<8x175xf32>
    %226 = arith.truncf %225 : vector<8x175xf32> to vector<8x175xbf16>
    %c8_118 = arith.constant 8 : index
    %c0_119 = arith.constant 0 : index
    %c0_120 = arith.constant 0 : index
    %227 = vector.load %arg7[%c8_118, %c0_119, %c0_120] : memref<16x175x40xbf16, #tpu.memory_space<vmem>>, vector<1x175x40xbf16>
    %228 = vector.shape_cast %227 : vector<1x175x40xbf16> to vector<175x40xbf16>
    %cst_121 = arith.constant dense<0.000000e+00> : vector<8x40xf32>
    %229 = tpu.matmul %226, %228, %cst_121 {dimension_numbers = #tpu.dot_dimension_numbers<[1], [0], [0], [1], [0, 0, 1, 1], [], []>} : vector<8x175xbf16>, vector<175x40xbf16>, vector<8x40xf32> -> vector<8x40xf32>
    %230 = arith.addf %224, %229 : vector<8x40xf32>
    %231 = vector.extract_strided_slice %175 {offsets = [72, 0], sizes = [8, 175], strides = [1, 1]} : vector<128x175xf32> to vector<8x175xf32>
    %232 = arith.truncf %231 : vector<8x175xf32> to vector<8x175xbf16>
    %c9_122 = arith.constant 9 : index
    %c0_123 = arith.constant 0 : index
    %c0_124 = arith.constant 0 : index
    %233 = vector.load %arg7[%c9_122, %c0_123, %c0_124] : memref<16x175x40xbf16, #tpu.memory_space<vmem>>, vector<1x175x40xbf16>
    %234 = vector.shape_cast %233 : vector<1x175x40xbf16> to vector<175x40xbf16>
    %cst_125 = arith.constant dense<0.000000e+00> : vector<8x40xf32>
    %235 = tpu.matmul %232, %234, %cst_125 {dimension_numbers = #tpu.dot_dimension_numbers<[1], [0], [0], [1], [0, 0, 1, 1], [], []>} : vector<8x175xbf16>, vector<175x40xbf16>, vector<8x40xf32> -> vector<8x40xf32>
    %236 = arith.addf %230, %235 : vector<8x40xf32>
    %237 = vector.extract_strided_slice %175 {offsets = [80, 0], sizes = [8, 175], strides = [1, 1]} : vector<128x175xf32> to vector<8x175xf32>
    %238 = arith.truncf %237 : vector<8x175xf32> to vector<8x175xbf16>
    %c10_126 = arith.constant 10 : index
    %c0_127 = arith.constant 0 : index
    %c0_128 = arith.constant 0 : index
    %239 = vector.load %arg7[%c10_126, %c0_127, %c0_128] : memref<16x175x40xbf16, #tpu.memory_space<vmem>>, vector<1x175x40xbf16>
    %240 = vector.shape_cast %239 : vector<1x175x40xbf16> to vector<175x40xbf16>
    %cst_129 = arith.constant dense<0.000000e+00> : vector<8x40xf32>
    %241 = tpu.matmul %238, %240, %cst_129 {dimension_numbers = #tpu.dot_dimension_numbers<[1], [0], [0], [1], [0, 0, 1, 1], [], []>} : vector<8x175xbf16>, vector<175x40xbf16>, vector<8x40xf32> -> vector<8x40xf32>
    %242 = arith.addf %236, %241 : vector<8x40xf32>
    %243 = vector.extract_strided_slice %175 {offsets = [88, 0], sizes = [8, 175], strides = [1, 1]} : vector<128x175xf32> to vector<8x175xf32>
    %244 = arith.truncf %243 : vector<8x175xf32> to vector<8x175xbf16>
    %c11_130 = arith.constant 11 : index
    %c0_131 = arith.constant 0 : index
    %c0_132 = arith.constant 0 : index
    %245 = vector.load %arg7[%c11_130, %c0_131, %c0_132] : memref<16x175x40xbf16, #tpu.memory_space<vmem>>, vector<1x175x40xbf16>
    %246 = vector.shape_cast %245 : vector<1x175x40xbf16> to vector<175x40xbf16>
    %cst_133 = arith.constant dense<0.000000e+00> : vector<8x40xf32>
    %247 = tpu.matmul %244, %246, %cst_133 {dimension_numbers = #tpu.dot_dimension_numbers<[1], [0], [0], [1], [0, 0, 1, 1], [], []>} : vector<8x175xbf16>, vector<175x40xbf16>, vector<8x40xf32> -> vector<8x40xf32>
    %248 = arith.addf %242, %247 : vector<8x40xf32>
    %249 = vector.extract_strided_slice %175 {offsets = [96, 0], sizes = [8, 175], strides = [1, 1]} : vector<128x175xf32> to vector<8x175xf32>
    %250 = arith.truncf %249 : vector<8x175xf32> to vector<8x175xbf16>
    %c12_134 = arith.constant 12 : index
    %c0_135 = arith.constant 0 : index
    %c0_136 = arith.constant 0 : index
    %251 = vector.load %arg7[%c12_134, %c0_135, %c0_136] : memref<16x175x40xbf16, #tpu.memory_space<vmem>>, vector<1x175x40xbf16>
    %252 = vector.shape_cast %251 : vector<1x175x40xbf16> to vector<175x40xbf16>
    %cst_137 = arith.constant dense<0.000000e+00> : vector<8x40xf32>
    %253 = tpu.matmul %250, %252, %cst_137 {dimension_numbers = #tpu.dot_dimension_numbers<[1], [0], [0], [1], [0, 0, 1, 1], [], []>} : vector<8x175xbf16>, vector<175x40xbf16>, vector<8x40xf32> -> vector<8x40xf32>
    %254 = arith.addf %248, %253 : vector<8x40xf32>
    %255 = vector.extract_strided_slice %175 {offsets = [104, 0], sizes = [8, 175], strides = [1, 1]} : vector<128x175xf32> to vector<8x175xf32>
    %256 = arith.truncf %255 : vector<8x175xf32> to vector<8x175xbf16>
    %c13_138 = arith.constant 13 : index
    %c0_139 = arith.constant 0 : index
    %c0_140 = arith.constant 0 : index
    %257 = vector.load %arg7[%c13_138, %c0_139, %c0_140] : memref<16x175x40xbf16, #tpu.memory_space<vmem>>, vector<1x175x40xbf16>
    %258 = vector.shape_cast %257 : vector<1x175x40xbf16> to vector<175x40xbf16>
    %cst_141 = arith.constant dense<0.000000e+00> : vector<8x40xf32>
    %259 = tpu.matmul %256, %258, %cst_141 {dimension_numbers = #tpu.dot_dimension_numbers<[1], [0], [0], [1], [0, 0, 1, 1], [], []>} : vector<8x175xbf16>, vector<175x40xbf16>, vector<8x40xf32> -> vector<8x40xf32>
    %260 = arith.addf %254, %259 : vector<8x40xf32>
    %261 = vector.extract_strided_slice %175 {offsets = [112, 0], sizes = [8, 175], strides = [1, 1]} : vector<128x175xf32> to vector<8x175xf32>
    %262 = arith.truncf %261 : vector<8x175xf32> to vector<8x175xbf16>
    %c14_142 = arith.constant 14 : index
    %c0_143 = arith.constant 0 : index
    %c0_144 = arith.constant 0 : index
    %263 = vector.load %arg7[%c14_142, %c0_143, %c0_144] : memref<16x175x40xbf16, #tpu.memory_space<vmem>>, vector<1x175x40xbf16>
    %264 = vector.shape_cast %263 : vector<1x175x40xbf16> to vector<175x40xbf16>
    %cst_145 = arith.constant dense<0.000000e+00> : vector<8x40xf32>
    %265 = tpu.matmul %262, %264, %cst_145 {dimension_numbers = #tpu.dot_dimension_numbers<[1], [0], [0], [1], [0, 0, 1, 1], [], []>} : vector<8x175xbf16>, vector<175x40xbf16>, vector<8x40xf32> -> vector<8x40xf32>
    %266 = arith.addf %260, %265 : vector<8x40xf32>
    %267 = vector.extract_strided_slice %175 {offsets = [120, 0], sizes = [8, 175], strides = [1, 1]} : vector<128x175xf32> to vector<8x175xf32>
    %268 = arith.truncf %267 : vector<8x175xf32> to vector<8x175xbf16>
    %c15_146 = arith.constant 15 : index
    %c0_147 = arith.constant 0 : index
    %c0_148 = arith.constant 0 : index
    %269 = vector.load %arg7[%c15_146, %c0_147, %c0_148] : memref<16x175x40xbf16, #tpu.memory_space<vmem>>, vector<1x175x40xbf16>
    %270 = vector.shape_cast %269 : vector<1x175x40xbf16> to vector<175x40xbf16>
    %cst_149 = arith.constant dense<0.000000e+00> : vector<8x40xf32>
    %271 = tpu.matmul %268, %270, %cst_149 {dimension_numbers = #tpu.dot_dimension_numbers<[1], [0], [0], [1], [0, 0, 1, 1], [], []>} : vector<8x175xbf16>, vector<175x40xbf16>, vector<8x40xf32> -> vector<8x40xf32>
    %272 = arith.addf %266, %271 : vector<8x40xf32>
    %273 = vector.broadcast %6 : vector<1x40xf32> to vector<8x40xf32>
    %274 = arith.addf %272, %273 : vector<8x40xf32>
    %cst_150 = arith.constant 0.000000e+00 : f32
    %275 = vector.broadcast %cst_150 : f32 to vector<8x40xf32>
    %276 = arith.maximumf %274, %275 : vector<8x40xf32>
    %277 = arith.truncf %276 : vector<8x40xf32> to vector<8x40xbf16>
    %cst_151 = arith.constant dense<0.000000e+00> : vector<8x4xf32>
    %278 = tpu.matmul %277, %3, %cst_151 {dimension_numbers = #tpu.dot_dimension_numbers<[1], [0], [0], [1], [0, 0, 1, 1], [], []>} : vector<8x40xbf16>, vector<40x4xbf16>, vector<8x4xf32> -> vector<8x4xf32>
    %279 = vector.broadcast %7 : vector<1x4xf32> to vector<8x4xf32>
    %280 = arith.addf %278, %279 : vector<8x4xf32>
    %c0_152 = arith.constant 0 : index
    %c8_153 = arith.constant 8 : index
    %c0_154 = arith.constant 0 : index
    %281 = vector.load %arg11[%c0_152, %c8_153, %c0_154] : memref<1x16x4xf32, #tpu.memory_space<vmem>>, vector<1x8x4xf32>
    %282 = vector.shape_cast %281 : vector<1x8x4xf32> to vector<8x4xf32>
    %283 = vector.shape_cast %280 : vector<8x4xf32> to vector<1x8x4xf32>
    tpu.vector_store %arg11[%c0_152, %c8_153, %c0_154], %283 {strides = array<i32>} : memref<1x16x4xf32, #tpu.memory_space<vmem>>, vector<1x8x4xf32>,
    return
  }
  func.func @transform_0(%arg0: i32) -> (i32, i32, i32) {
    %c0_i32 = arith.constant 0 : i32
    %c0_i32_0 = arith.constant 0 : i32
    %c0_i32_1 = arith.constant 0 : i32
    return %arg0, %c0_i32, %c0_i32_0 : i32, i32, i32
  }
  func.func @transform_1(%arg0: i32) -> (i32, i32) {
    %c0_i32 = arith.constant 0 : i32
    %c0_i32_0 = arith.constant 0 : i32
    %c0_i32_1 = arith.constant 0 : i32
    return %c0_i32, %c0_i32_0 : i32, i32
  }
  func.func @transform_2(%arg0: i32) -> (i32, i32) {
    %c0_i32 = arith.constant 0 : i32
    %c0_i32_0 = arith.constant 0 : i32
    %c0_i32_1 = arith.constant 0 : i32
    return %c0_i32, %c0_i32_0 : i32, i32
  }
  func.func @transform_3(%arg0: i32) -> (i32, i32) {
    %c0_i32 = arith.constant 0 : i32
    %c0_i32_0 = arith.constant 0 : i32
    %c0_i32_1 = arith.constant 0 : i32
    return %c0_i32, %c0_i32_0 : i32, i32
  }
  func.func @transform_4(%arg0: i32) -> (i32, i32) {
    %c0_i32 = arith.constant 0 : i32
    %c0_i32_0 = arith.constant 0 : i32
    %c0_i32_1 = arith.constant 0 : i32
    return %c0_i32, %c0_i32_0 : i32, i32
  }
  func.func @transform_5(%arg0: i32) -> (i32, i32) {
    %c0_i32 = arith.constant 0 : i32
    %c0_i32_0 = arith.constant 0 : i32
    %c0_i32_1 = arith.constant 0 : i32
    return %c0_i32, %c0_i32_0 : i32, i32
  }
  func.func @transform_6(%arg0: i32) -> (i32, i32, i32) {
    %c0_i32 = arith.constant 0 : i32
    %c0_i32_0 = arith.constant 0 : i32
    %c0_i32_1 = arith.constant 0 : i32
    %c0_i32_2 = arith.constant 0 : i32
    return %c0_i32, %c0_i32_0, %c0_i32_1 : i32, i32, i32
  }
  func.func @transform_7(%arg0: i32) -> (i32, i32) {
    %c0_i32 = arith.constant 0 : i32
    %c0_i32_0 = arith.constant 0 : i32
    %c0_i32_1 = arith.constant 0 : i32
    return %c0_i32, %c0_i32_0 : i32, i32
  }
  func.func @transform_8(%arg0: i32) -> (i32, i32) {
    %c0_i32 = arith.constant 0 : i32
    %c0_i32_0 = arith.constant 0 : i32
    %c0_i32_1 = arith.constant 0 : i32
    return %c0_i32, %c0_i32_0 : i32, i32
  }
  func.func @transform_9(%arg0: i32) -> (i32, i32) {
    %c0_i32 = arith.constant 0 : i32
    %c0_i32_0 = arith.constant 0 : i32
    %c0_i32_1 = arith.constant 0 : i32
    return %c0_i32, %c0_i32_0 : i32, i32
  }
  func.func @transform_10(%arg0: i32) -> (i32, i32, i32) {
    %c0_i32 = arith.constant 0 : i32
    %c0_i32_0 = arith.constant 0 : i32
    %c0_i32_1 = arith.constant 0 : i32
    return %arg0, %c0_i32, %c0_i32_0 : i32, i32, i32
  }
}

</mosaic_0001>

<llo_original>
// kernel: deepant_forward_pallas.1
$region0: #{deepant_forward_pallas.1}
  #allocation0 [shape = 'u32[]', space=smem, size = 0x4, offset = 0x4, fixed_abs, tag = 'smem constant byte address 0x4 - core index']
  #allocation1 [shape = 'u32[144,128]{1,0:T(1,128)}', space=vmem, size = 0x12000, scoped, tag = 'internal scratch']
  %s0 = inlined_call_operand.vmem [shape: f32[2,32,358], index: 0, kind: input, shape index: {}]
  %s1 = inlined_call_operand.vmem [shape: bf16[128,96], index: 1, kind: input, shape index: {}]
  %s2 = inlined_call_operand.vmem [shape: f32[128,1], index: 2, kind: input, shape index: {}]
  %s3 = inlined_call_operand.vmem [shape: bf16[128,384], index: 3, kind: input, shape index: {}]
  %s4 = inlined_call_operand.vmem [shape: f32[128,1], index: 4, kind: input, shape index: {}]
  %s5 = inlined_call_operand.vmem [shape: bf16[355,178], index: 5, kind: input, shape index: {}]
  %s6 = inlined_call_operand.vmem [shape: bf16[16,175,40], index: 6, kind: input, shape index: {}]
  %s7 = inlined_call_operand.vmem [shape: f32[1,40], index: 7, kind: input, shape index: {}]
  %s8 = inlined_call_operand.vmem [shape: bf16[40,4], index: 8, kind: input, shape index: {}]
  %s9 = inlined_call_operand.vmem [shape: f32[1,4], index: 9, kind: input, shape index: {}]
  %s10 = inlined_call_operand.vmem [shape: f32[1,16,4], index: 10, kind: output, shape index: {}]
  %s11 = sld [smem:[#allocation0]]
  $region50: #{deepant_forward_pallas.1} parent=0
    _
  %s13 = ssub.s32 1, %s11
  %s14 = scalar_select 0, %s13, %s11
  // Predicated region
  $region2: #{deepant_forward_pallas.1} parent=0 // pred_check
    _
  $region3: #{deepant_forward_pallas.1} parent=0 // pred_check_branch
    %16 = sbr.rel (0) target = $region5
  $region4: #{deepant_forward_pallas.1} parent=0 // pred_region
    _
  $region5: #{deepant_forward_pallas.1} parent=0 // pred_fallthru
    _
  // Predicated region
  $region6: #{deepant_forward_pallas.1} parent=0 // pred_check
    _
  $region7: #{deepant_forward_pallas.1} parent=0 // pred_check_branch
    %18 = sbr.rel (0) target = $region9
  $region8: #{deepant_forward_pallas.1} parent=0 // pred_region
    _
  $region9: #{deepant_forward_pallas.1} parent=0 // pred_fallthru
    _
  // Predicated region
  $region10: #{deepant_forward_pallas.1} parent=0 // pred_check
    _
  $region11: #{deepant_forward_pallas.1} parent=0 // pred_check_branch
    %20 = sbr.rel (0) target = $region13
  $region12: #{deepant_forward_pallas.1} parent=0 // pred_region
    _
  $region13: #{deepant_forward_pallas.1} parent=0 // pred_fallthru
    _
  // Predicated region
  $region14: #{deepant_forward_pallas.1} parent=0 // pred_check
    _
  $region15: #{deepant_forward_pallas.1} parent=0 // pred_check_branch
    %22 = sbr.rel (0) target = $region17
  $region16: #{deepant_forward_pallas.1} parent=0 // pred_region
    _
  $region17: #{deepant_forward_pallas.1} parent=0 // pred_fallthru
    _
  // Predicated region
  $region18: #{deepant_forward_pallas.1} parent=0 // pred_check
    _
  $region19: #{deepant_forward_pallas.1} parent=0 // pred_check_branch
    %24 = sbr.rel (0) target = $region21
  $region20: #{deepant_forward_pallas.1} parent=0 // pred_region
    _
  $region21: #{deepant_forward_pallas.1} parent=0 // pred_fallthru
    _
  // Predicated region
  $region22: #{deepant_forward_pallas.1} parent=0 // pred_check
    _
  $region23: #{deepant_forward_pallas.1} parent=0 // pred_check_branch
    %26 = sbr.rel (0) target = $region25
  $region24: #{deepant_forward_pallas.1} parent=0 // pred_region
    _
  $region25: #{deepant_forward_pallas.1} parent=0 // pred_fallthru
    _
  // Predicated region
  $region26: #{deepant_forward_pallas.1} parent=0 // pred_check
    _
  $region27: #{deepant_forward_pallas.1} parent=0 // pred_check_branch
    %28 = sbr.rel (0) target = $region29
  $region28: #{deepant_forward_pallas.1} parent=0 // pred_region
    _
  $region29: #{deepant_forward_pallas.1} parent=0 // pred_fallthru
    _
  // Predicated region
  $region30: #{deepant_forward_pallas.1} parent=0 // pred_check
    _
  $region31: #{deepant_forward_pallas.1} parent=0 // pred_check_branch
    %30 = sbr.rel (0) target = $region33
  $region32: #{deepant_forward_pallas.1} parent=0 // pred_region
    _
  $region33: #{deepant_forward_pallas.1} parent=0 // pred_fallthru
    _
  // Predicated region
  $region34: #{deepant_forward_pallas.1} parent=0 // pred_check
    _
  $region35: #{deepant_forward_pallas.1} parent=0 // pred_check_branch
    %32 = sbr.rel (0) target = $region37
  $region36: #{deepant_forward_pallas.1} parent=0 // pred_region
    _
  $region37: #{deepant_forward_pallas.1} parent=0 // pred_fallthru
    _
  // Predicated region
  $region38: #{deepant_forward_pallas.1} parent=0 // pred_check
    _
  $region39: #{deepant_forward_pallas.1} parent=0 // pred_check_branch
    %34 = sbr.rel (0) target = $region41
  $region40: #{deepant_forward_pallas.1} parent=0 // pred_region
    _
  $region41: #{deepant_forward_pallas.1} parent=0 // pred_fallthru
    _
  %v36 = vld [vmem:[%s1] sm:$0xf]
  %v37 = vld [vmem:[%s1 + $0x4] sm:$0xf]
  %v38 = vld [vmem:[%s1 + $0x8] sm:$0xf]
  %v39 = vld [vmem:[%s1 + $0xc] sm:$0xf]
  %v40 = vld [vmem:[%s1 + $0x10] sm:$0xf]
  %v41 = vld [vmem:[%s1 + $0x14] sm:$0xf]
  %v42 = vld [vmem:[%s1 + $0x18] sm:$0xf]
  %v43 = vld [vmem:[%s1 + $0x1c] sm:$0xf]
  %v44 = vld [vmem:[%s1 + $0x20] sm:$0xf]
  %v45 = vld [vmem:[%s1 + $0x24] sm:$0xf]
  %v46 = vld [vmem:[%s1 + $0x28] sm:$0xf]
  %v47 = vld [vmem:[%s1 + $0x2c] sm:$0xf]
  %v48 = vld [vmem:[%s1 + $0x30] sm:$0xf]
  %v49 = vld [vmem:[%s1 + $0x34] sm:$0xf]
  %v50 = vld [vmem:[%s1 + $0x38] sm:$0xf]
  %v51 = vld [vmem:[%s1 + $0x3c] sm:$0xf]
  %v52 = vld [vmem:[%s3] sm:$0xff]
  %v53 = vld [vmem:[%s3 + $0x8] sm:$0xf]
  %v54 = vld [vmem:[%s3 + $0xc] sm:$0xff]
  %v55 = vld [vmem:[%s3 + $0x14] sm:$0xf]
  %v56 = vld [vmem:[%s3 + $0x18] sm:$0xff]
  %v57 = vld [vmem:[%s3 + $0x20] sm:$0xf]
  %v58 = vld [vmem:[%s3 + $0x24] sm:$0xff]
  %v59 = vld [vmem:[%s3 + $0x2c] sm:$0xf]
  %v60 = vld [vmem:[%s3 + $0x30] sm:$0xff]
  %v61 = vld [vmem:[%s3 + $0x38] sm:$0xf]
  %v62 = vld [vmem:[%s3 + $0x3c] sm:$0xff]
  %v63 = vld [vmem:[%s3 + $0x44] sm:$0xf]
  %v64 = vld [vmem:[%s3 + $0x48] sm:$0xff]
  %v65 = vld [vmem:[%s3 + $0x50] sm:$0xf]
  %v66 = vld [vmem:[%s3 + $0x54] sm:$0xff]
  %v67 = vld [vmem:[%s3 + $0x5c] sm:$0xf]
  %v68 = vld [vmem:[%s3 + $0x60] sm:$0xff]
  %v69 = vld [vmem:[%s3 + $0x68] sm:$0xf]
  %v70 = vld [vmem:[%s3 + $0x6c] sm:$0xff]
  %v71 = vld [vmem:[%s3 + $0x74] sm:$0xf]
  %v72 = vld [vmem:[%s3 + $0x78] sm:$0xff]
  %v73 = vld [vmem:[%s3 + $0x80] sm:$0xf]
  %v74 = vld [vmem:[%s3 + $0x84] sm:$0xff]
  %v75 = vld [vmem:[%s3 + $0x8c] sm:$0xf]
  %v76 = vld [vmem:[%s3 + $0x90] sm:$0xff]
  %v77 = vld [vmem:[%s3 + $0x98] sm:$0xf]
  %v78 = vld [vmem:[%s3 + $0x9c] sm:$0xff]
  %v79 = vld [vmem:[%s3 + $0xa4] sm:$0xf]
  %v80 = vld [vmem:[%s3 + $0xa8] sm:$0xff]
  %v81 = vld [vmem:[%s3 + $0xb0] sm:$0xf]
  %v82 = vld [vmem:[%s3 + $0xb4] sm:$0xff]
  %v83 = vld [vmem:[%s3 + $0xbc] sm:$0xf]
  %v84 = vld [vmem:[%s5] sm:$0xff]
  %v85 = vld [vmem:[%s5 + $0x8] sm:$0xff]
  %v86 = vld [vmem:[%s5 + $0x10] sm:$0xff]
  %v87 = vld [vmem:[%s5 + $0x18] sm:$0xff]
  %v88 = vld [vmem:[%s5 + $0x20] sm:$0xff]
  %v89 = vld [vmem:[%s5 + $0x28] sm:$0xff]
  %v90 = vld [vmem:[%s5 + $0x30] sm:$0xff]
  %v91 = vld [vmem:[%s5 + $0x38] sm:$0xff]
  %v92 = vld [vmem:[%s5 + $0x40] sm:$0xff]
  %v93 = vld [vmem:[%s5 + $0x48] sm:$0xff]
  %v94 = vld [vmem:[%s5 + $0x50] sm:$0xff]
  %v95 = vld [vmem:[%s5 + $0x58] sm:$0xff]
  %v96 = vld [vmem:[%s5 + $0x60] sm:$0xff]
  %v97 = vld [vmem:[%s5 + $0x68] sm:$0xff]
  %v98 = vld [vmem:[%s5 + $0x70] sm:$0xff]
  %v99 = vld [vmem:[%s5 + $0x78] sm:$0xff]
  %v100 = vld [vmem:[%s5 + $0x80] sm:$0xff]
  %v101 = vld [vmem:[%s5 + $0x88] sm:$0xff]
  %v102 = vld [vmem:[%s5 + $0x90] sm:$0xff]
  %v103 = vld [vmem:[%s5 + $0x98] sm:$0xff]
  %v104 = vld [vmem:[%s5 + $0xa0] sm:$0xff]
  %v105 = vld [vmem:[%s5 + $0xa8] sm:$0xff]
  %v106 = vld [vmem:[%s5 + $0xb0] sm:$0xff]
  %v107 = vld [vmem:[%s5 + $0xb8] sm:$0xff]
  %v108 = vld [vmem:[%s5 + $0xc0] sm:$0xff]
  %v109 = vld [vmem:[%s5 + $0xc8] sm:$0xff]
  %v110 = vld [vmem:[%s5 + $0xd0] sm:$0xff]
  %v111 = vld [vmem:[%s5 + $0xd8] sm:$0xff]
  %v112 = vld [vmem:[%s5 + $0xe0] sm:$0xff]
  %v113 = vld [vmem:[%s5 + $0xe8] sm:$0xff]
  %v114 = vld [vmem:[%s5 + $0xf0] sm:$0xff]
  %v115 = vld [vmem:[%s5 + $0xf8] sm:$0xff]
  %v116 = vld [vmem:[%s5 + $0x100] sm:$0xff]
  %v117 = vld [vmem:[%s5 + $0x108] sm:$0xff]
  %v118 = vld [vmem:[%s5 + $0x110] sm:$0xff]
  %v119 = vld [vmem:[%s5 + $0x118] sm:$0xff]
  %v120 = vld [vmem:[%s5 + $0x120] sm:$0xff]
  %v121 = vld [vmem:[%s5 + $0x128] sm:$0xff]
  %v122 = vld [vmem:[%s5 + $0x130] sm:$0xff]
  %v123 = vld [vmem:[%s5 + $0x138] sm:$0xff]
  %v124 = vld [vmem:[%s5 + $0x140] sm:$0xff]
  %v125 = vld [vmem:[%s5 + $0x148] sm:$0xff]
  %v126 = vld [vmem:[%s5 + $0x150] sm:$0xff]
  %v127 = vld [vmem:[%s5 + $0x158] sm:$0xff]
  %v128 = vld [vmem:[%s5 + $0x160] sm:$0x33]
  %v129 = vld [vmem:[%s8] sm:$0xf]
  %v130 = vld [vmem:[%s8 + $0x4] sm:$0xf]
  %v131 = vld [vmem:[%s8 + $0x8] sm:$0xf]
  %v132 = vld [vmem:[%s8 + $0xc] sm:$0xf]
  %v133 = vld [vmem:[%s8 + $0x10] sm:$0xf]
  %v134 = vld [vmem:[%s2] sm:$0xff]
  %v135 = vld [vmem:[%s2 + $0x8] sm:$0xff]
  %v136 = vld [vmem:[%s2 + $0x10] sm:$0xff]
  %v137 = vld [vmem:[%s2 + $0x18] sm:$0xff]
  %v138 = vld [vmem:[%s2 + $0x20] sm:$0xff]
  %v139 = vld [vmem:[%s2 + $0x28] sm:$0xff]
  %v140 = vld [vmem:[%s2 + $0x30] sm:$0xff]
  %v141 = vld [vmem:[%s2 + $0x38] sm:$0xff]
  %v142 = vld [vmem:[%s2 + $0x40] sm:$0xff]
  %v143 = vld [vmem:[%s2 + $0x48] sm:$0xff]
  %v144 = vld [vmem:[%s2 + $0x50] sm:$0xff]
  %v145 = vld [vmem:[%s2 + $0x58] sm:$0xff]
  %v146 = vld [vmem:[%s2 + $0x60] sm:$0xff]
  %v147 = vld [vmem:[%s2 + $0x68] sm:$0xff]
  %v148 = vld [vmem:[%s2 + $0x70] sm:$0xff]
  %v149 = vld [vmem:[%s2 + $0x78] sm:$0xff]
  %v150 = vld [vmem:[%s4] sm:$0xff]
  %v151 = vld [vmem:[%s4 + $0x8] sm:$0xff]
  %v152 = vld [vmem:[%s4 + $0x10] sm:$0xff]
  %v153 = vld [vmem:[%s4 + $0x18] sm:$0xff]
  %v154 = vld [vmem:[%s4 + $0x20] sm:$0xff]
  %v155 = vld [vmem:[%s4 + $0x28] sm:$0xff]
  %v156 = vld [vmem:[%s4 + $0x30] sm:$0xff]
  %v157 = vld [vmem:[%s4 + $0x38] sm:$0xff]
  %v158 = vld [vmem:[%s4 + $0x40] sm:$0xff]
  %v159 = vld [vmem:[%s4 + $0x48] sm:$0xff]
  %v160 = vld [vmem:[%s4 + $0x50] sm:$0xff]
  %v161 = vld [vmem:[%s4 + $0x58] sm:$0xff]
  %v162 = vld [vmem:[%s4 + $0x60] sm:$0xff]
  %v163 = vld [vmem:[%s4 + $0x68] sm:$0xff]
  %v164 = vld [vmem:[%s4 + $0x70] sm:$0xff]
  %v165 = vld [vmem:[%s4 + $0x78] sm:$0xff]
  %v166 = vld [vmem:[%s7] sm:$0x1]
  %v167 = vld [vmem:[%s9] sm:$0x1]
  %v168 = vld [vmem:[%s0] sm:$0xff]
  %v169 = vld [vmem:[%s0 + $0x8] sm:$0xff]
  %v170 = vld [vmem:[%s0 + $0x10] sm:$0xff]
  %v171 = vld [vmem:[%s0 + $0x18] sm:$0xff]
  %v172 = vld [vmem:[%s0 + $0x20] sm:$0xff]
  %v173 = vld [vmem:[%s0 + $0x28] sm:$0xff]
  %v174 = vld [vmem:[%s0 + $0x30] sm:$0xff]
  %v175 = vld [vmem:[%s0 + $0x38] sm:$0xff]
  %v176 = vld [vmem:[%s0 + $0x40] sm:$0xff]
  %v177 = vld [vmem:[%s0 + $0x48] sm:$0xff]
  %v178 = vld [vmem:[%s0 + $0x50] sm:$0xff]
  %v179 = vld [vmem:[%s0 + $0x58] sm:$0xff]
  %192 = vrot.lane.b32.xlu0 %v168, 127
  %v193 = vpop.permute.xlu0 %192
  %194 = vrot.lane.b32.xlu0 %v169, 127
  %v195 = vpop.permute.xlu0 %194
  %196 = vrot.lane.b32.xlu0 %v170, 127
  %v197 = vpop.permute.xlu0 %196
  %198 = vrot.lane.b32.xlu0 %v171, 127
  %v199 = vpop.permute.xlu0 %198
  %200 = vrot.lane.b32.xlu0 %v172, 127
  %v201 = vpop.permute.xlu0 %200
  %202 = vrot.lane.b32.xlu0 %v173, 127
  %v203 = vpop.permute.xlu0 %202
  %204 = vrot.lane.b32.xlu0 %v174, 127
  %v205 = vpop.permute.xlu0 %204
  %206 = vrot.lane.b32.xlu0 %v175, 127
  %v207 = vpop.permute.xlu0 %206
  %208 = vrot.lane.b32.xlu0 %v176, 127
  %v209 = vpop.permute.xlu0 %208
  %210 = vrot.lane.b32.xlu0 %v177, 127
  %v211 = vpop.permute.xlu0 %210
  %212 = vrot.lane.b32.xlu0 %v178, 127
  %v213 = vpop.permute.xlu0 %212
  %214 = vrot.lane.b32.xlu0 %v179, 127
  %v215 = vpop.permute.xlu0 %214
  %vm216 = vcmask 1039360
  %v217 = vsel %vm216, %v193, %v195
  %v218 = vsel %vm216, %v195, %v197
  %v219 = vsel %vm216, %v199, %v201
  %v220 = vsel %vm216, %v201, %v203
  %v221 = vsel %vm216, %v205, %v207
  %v222 = vsel %vm216, %v207, %v209
  %v223 = vsel %vm216, %v211, %v213
  %v224 = vsel %vm216, %v213, %v215
  %237 = vrot.lane.b32.xlu0 %v168, 126
  %v238 = vpop.permute.xlu0 %237
  %239 = vrot.lane.b32.xlu0 %v169, 126
  %v240 = vpop.permute.xlu0 %239
  %241 = vrot.lane.b32.xlu0 %v170, 126
  %v242 = vpop.permute.xlu0 %241
  %243 = vrot.lane.b32.xlu0 %v171, 126
  %v244 = vpop.permute.xlu0 %243
  %245 = vrot.lane.b32.xlu0 %v172, 126
  %v246 = vpop.permute.xlu0 %245
  %247 = vrot.lane.b32.xlu0 %v173, 126
  %v248 = vpop.permute.xlu0 %247
  %249 = vrot.lane.b32.xlu0 %v174, 126
  %v250 = vpop.permute.xlu0 %249
  %251 = vrot.lane.b32.xlu0 %v175, 126
  %v252 = vpop.permute.xlu0 %251
  %253 = vrot.lane.b32.xlu0 %v176, 126
  %v254 = vpop.permute.xlu0 %253
  %255 = vrot.lane.b32.xlu0 %v177, 126
  %v256 = vpop.permute.xlu0 %255
  %257 = vrot.lane.b32.xlu0 %v178, 126
  %v258 = vpop.permute.xlu0 %257
  %259 = vrot.lane.b32.xlu0 %v179, 126
  %v260 = vpop.permute.xlu0 %259
  %vm261 = vcmask 1031168
  %v262 = vsel %vm261, %v238, %v240
  %v263 = vsel %vm261, %v240, %v242
  %v264 = vsel %vm261, %v244, %v246
  %v265 = vsel %vm261, %v246, %v248
  %v266 = vsel %vm261, %v250, %v252
  %v267 = vsel %vm261, %v252, %v254
  %v268 = vsel %vm261, %v256, %v258
  %v269 = vsel %vm261, %v258, %v260
  %v282 = vpack.c.bf16 %v171, %v168
  %v283 = vpack.c.bf16 %v172, %v169
  %v284 = vpack.c.bf16 %v173, %v170
  %v285 = vpack.c.bf16 %v177, %v174
  %v286 = vpack.c.bf16 %v178, %v175
  %v287 = vpack.c.bf16 %v179, %v176
  %v288 = vpack.c.bf16 %v219, %v217
  %v289 = vpack.c.bf16 %v220, %v218
  %v290 = vpack.c.bf16 %v203, %v197
  %v291 = vpack.c.bf16 %v223, %v221
  %v292 = vpack.c.bf16 %v224, %v222
  %v293 = vpack.c.bf16 %v215, %v209
  %v294 = vpack.c.bf16 %v264, %v262
  %v295 = vpack.c.bf16 %v265, %v263
  %v296 = vpack.c.bf16 %v248, %v242
  %v297 = vpack.c.bf16 %v268, %v266
  %v298 = vpack.c.bf16 %v269, %v267
  %v299 = vpack.c.bf16 %v260, %v254
  %301 = vset.pattern.permute.xlu0 0
  %302 = vperm.xlu0 %301, %v134
  %v303 = vpop.permute.xlu0 %302
  %306 = vset.pattern.permute.xlu0 0
  %307 = vperm.xlu0 %306, %v135
  %v308 = vpop.permute.xlu0 %307
  %311 = vset.pattern.permute.xlu0 0
  %312 = vperm.xlu0 %311, %v136
  %v313 = vpop.permute.xlu0 %312
  %316 = vset.pattern.permute.xlu0 0
  %317 = vperm.xlu0 %316, %v137
  %v318 = vpop.permute.xlu0 %317
  %321 = vset.pattern.permute.xlu0 0
  %322 = vperm.xlu0 %321, %v138
  %v323 = vpop.permute.xlu0 %322
  %326 = vset.pattern.permute.xlu0 0
  %327 = vperm.xlu0 %326, %v139
  %v328 = vpop.permute.xlu0 %327
  %331 = vset.pattern.permute.xlu0 0
  %332 = vperm.xlu0 %331, %v140
  %v333 = vpop.permute.xlu0 %332
  %336 = vset.pattern.permute.xlu0 0
  %337 = vperm.xlu0 %336, %v141
  %v338 = vpop.permute.xlu0 %337
  %341 = vset.pattern.permute.xlu0 0
  %342 = vperm.xlu0 %341, %v142
  %v343 = vpop.permute.xlu0 %342
  %346 = vset.pattern.permute.xlu0 0
  %347 = vperm.xlu0 %346, %v143
  %v348 = vpop.permute.xlu0 %347
  %351 = vset.pattern.permute.xlu0 0
  %352 = vperm.xlu0 %351, %v144
  %v353 = vpop.permute.xlu0 %352
  %356 = vset.pattern.permute.xlu0 0
  %357 = vperm.xlu0 %356, %v145
  %v358 = vpop.permute.xlu0 %357
  %361 = vset.pattern.permute.xlu0 0
  %362 = vperm.xlu0 %361, %v146
  %v363 = vpop.permute.xlu0 %362
  %366 = vset.pattern.permute.xlu0 0
  %367 = vperm.xlu0 %366, %v147
  %v368 = vpop.permute.xlu0 %367
  %371 = vset.pattern.permute.xlu0 0
  %372 = vperm.xlu0 %371, %v148
  %v373 = vpop.permute.xlu0 %372
  %376 = vset.pattern.permute.xlu0 0
  %377 = vperm.xlu0 %376, %v149
  %v378 = vpop.permute.xlu0 %377
  %v396 = vunpack.c.l.b16 %v36
  %v397 = vunpack.c.l.b16 %v37
  %v398 = vunpack.c.l.b16 %v38
  %v399 = vunpack.c.l.b16 %v39
  %v400 = vunpack.c.l.b16 %v40
  %v401 = vunpack.c.l.b16 %v41
  %v402 = vunpack.c.l.b16 %v42
  %v403 = vunpack.c.l.b16 %v43
  %v404 = vunpack.c.l.b16 %v44
  %v405 = vunpack.c.l.b16 %v45
  %v406 = vunpack.c.l.b16 %v46
  %v407 = vunpack.c.l.b16 %v47
  %v408 = vunpack.c.l.b16 %v48
  %v409 = vunpack.c.l.b16 %v49
  %v410 = vunpack.c.l.b16 %v50
  %v411 = vunpack.c.l.b16 %v51
  %v412 = vpack.c.b16 %v397, %v396
  %v413 = vpack.c.b16 %v399, %v398
  %v414 = vpack.c.b16 %v401, %v400
  %v415 = vpack.c.b16 %v403, %v402
  %v416 = vpack.c.b16 %v405, %v404
  %v417 = vpack.c.b16 %v407, %v406
  %v418 = vpack.c.b16 %v409, %v408
  %v419 = vpack.c.b16 %v411, %v410
  %vm420 = vcmask 785408
  %v422 = vsel %vm420, %v412, 0
  %v425 = vsel %vm420, %v413, 0
  %v428 = vsel %vm420, %v414, 0
  %v431 = vsel %vm420, %v415, 0
  %v434 = vsel %vm420, %v416, 0
  %v437 = vsel %vm420, %v417, 0
  %v440 = vsel %vm420, %v418, 0
  %v443 = vsel %vm420, %v419, 0
  %445 = vmatprep.subr.bf16.mxu0 0
  %446 = vmatpush1.bf16.msra.mxu0 0
  %447 = vmatprep.subr.bf16.mxu0 0
  %448 = vmatpush1.bf16.msra.mxu0 0
  %449 = vmatprep.subr.bf16.mxu0 %v298
  %450 = vmatpush1.bf16.msra.mxu0 %v297
  %451 = vmatprep.subr.bf16.mxu0 %v295
  %452 = vmatpush1.bf16.msra.mxu0 %v294
  %453 = vmatprep.subr.bf16.mxu0 %v292
  %454 = vmatpush1.bf16.msra.mxu0 %v291
  %455 = vmatprep.subr.bf16.mxu0 %v289
  %456 = vmatpush1.bf16.msra.mxu0 %v288
  %457 = vmatprep.subr.bf16.mxu0 %v286
  %458 = vmatpush1.bf16.msra.mxu0 %v285
  %459 = vmatprep.subr.bf16.mxu0 %v283
  %460 = vmatpush1.bf16.msra.mxu0 %v282
  %461 = vmatprep.subr.bf16.mxu0 0
  %462 = vmatpush2.bf16.msra.mxu0 0
  %463 = vmatprep.subr.bf16.mxu0 0
  %464 = vmatpush2.bf16.msra.mxu0 0
  %465 = vmatprep.subr.bf16.mxu0 0
  %466 = vmatpush2.bf16.msra.mxu0 0
  %467 = vmatprep.subr.bf16.mxu0 0
  %468 = vmatpush2.bf16.msra.mxu0 0
  %469 = vmatprep.subr.bf16.mxu0 0
  %470 = vmatpush2.bf16.msra.mxu0 0
  %471 = vmatprep.subr.bf16.mxu0 0
  %472 = vmatpush2.bf16.msra.mxu0 0
  %473 = vmatprep.subr.bf16.mxu0 0
  %474 = vmatpush2.bf16.msra.mxu0 0
  %475 = vmatprep.subr.bf16.mxu0 0
  %476 = vmatpush2.bf16.msra.mxu0 0
  %477 = vmatprep.mubr.bf16.mxu0 0
  %478 = vmatmul.mubr.bf16.gmra.mxu0 %v422
  %v479 = vpop.f32.mrf.mxu0
  %v480 = vadd.f32 %v303, %v479
  %v481 = vpop.f32.mrf.mxu0
  %v482 = vadd.f32 %v303, %v481
  %v483 = vpop.f32.mrf.mxu0
  %v484 = vadd.f32 %v308, %v483
  %v485 = vpop.f32.mrf.mxu0
  %v486 = vadd.f32 %v308, %v485
  %487 = vmatprep.mubr.bf16.mxu0 0
  %488 = vmatmul.mubr.bf16.gmra.mxu0 %v425
  %v489 = vpop.f32.mrf.mxu0
  %v490 = vadd.f32 %v313, %v489
  %v491 = vpop.f32.mrf.mxu0
  %v492 = vadd.f32 %v313, %v491
  %v493 = vpop.f32.mrf.mxu0
  %v494 = vadd.f32 %v318, %v493
  %v495 = vpop.f32.mrf.mxu0
  %v496 = vadd.f32 %v318, %v495
  %497 = vmatprep.mubr.bf16.mxu0 0
  %498 = vmatmul.mubr.bf16.gmra.mxu0 %v428
  %v499 = vpop.f32.mrf.mxu0
  %v500 = vadd.f32 %v323, %v499
  %v501 = vpop.f32.mrf.mxu0
  %v502 = vadd.f32 %v323, %v501
  %v503 = vpop.f32.mrf.mxu0
  %v504 = vadd.f32 %v328, %v503
  %v505 = vpop.f32.mrf.mxu0
  %v506 = vadd.f32 %v328, %v505
  %507 = vmatprep.mubr.bf16.mxu0 0
  %508 = vmatmul.mubr.bf16.gmra.mxu0 %v431
  %v509 = vpop.f32.mrf.mxu0
  %v510 = vadd.f32 %v333, %v509
  %v511 = vpop.f32.mrf.mxu0
  %v512 = vadd.f32 %v333, %v511
  %v513 = vpop.f32.mrf.mxu0
  %v514 = vadd.f32 %v338, %v513
  %v515 = vpop.f32.mrf.mxu0
  %v516 = vadd.f32 %v338, %v515
  %517 = vmatprep.mubr.bf16.mxu0 0
  %518 = vmatmul.mubr.bf16.gmra.mxu0 %v434
  %v519 = vpop.f32.mrf.mxu0
  %v520 = vadd.f32 %v343, %v519
  %v521 = vpop.f32.mrf.mxu0
  %v522 = vadd.f32 %v343, %v521
  %v523 = vpop.f32.mrf.mxu0
  %v524 = vadd.f32 %v348, %v523
  %v525 = vpop.f32.mrf.mxu0
  %v526 = vadd.f32 %v348, %v525
  %527 = vmatprep.mubr.bf16.mxu0 0
  %528 = vmatmul.mubr.bf16.gmra.mxu0 %v437
  %v529 = vpop.f32.mrf.mxu0
  %v530 = vadd.f32 %v353, %v529
  %v531 = vpop.f32.mrf.mxu0
  %v532 = vadd.f32 %v353, %v531
  %v533 = vpop.f32.mrf.mxu0
  %v534 = vadd.f32 %v358, %v533
  %v535 = vpop.f32.mrf.mxu0
  %v536 = vadd.f32 %v358, %v535
  %537 = vmatprep.mubr.bf16.mxu0 0
  %538 = vmatmul.mubr.bf16.gmra.mxu0 %v440
  %v539 = vpop.f32.mrf.mxu0
  %v540 = vadd.f32 %v363, %v539
  %v541 = vpop.f32.mrf.mxu0
  %v542 = vadd.f32 %v363, %v541
  %v543 = vpop.f32.mrf.mxu0
  %v544 = vadd.f32 %v368, %v543
  %v545 = vpop.f32.mrf.mxu0
  %v546 = vadd.f32 %v368, %v545
  %547 = vmatprep.mubr.bf16.mxu0 0
  %548 = vmatmul.mubr.bf16.gmra.mxu0 %v443
  %v549 = vpop.f32.mrf.mxu0
  %v550 = vadd.f32 %v373, %v549
  %v551 = vpop.f32.mrf.mxu0
  %v552 = vadd.f32 %v373, %v551
  %v553 = vpop.f32.mrf.mxu0
  %v554 = vadd.f32 %v378, %v553
  %v555 = vpop.f32.mrf.mxu0
  %v556 = vadd.f32 %v378, %v555
  %557 = vdwg.mxu0
  %558 = vmatprep.subr.bf16.mxu0 0
  %559 = vmatpush1.bf16.msra.mxu0 0
  %560 = vmatprep.subr.bf16.mxu0 0
  %561 = vmatpush1.bf16.msra.mxu0 0
  %562 = vmatprep.subr.bf16.mxu0 0
  %563 = vmatpush1.bf16.msra.mxu0 %v299
  %564 = vmatprep.subr.bf16.mxu0 0
  %565 = vmatpush1.bf16.msra.mxu0 %v296
  %566 = vmatprep.subr.bf16.mxu0 0
  %567 = vmatpush1.bf16.msra.mxu0 %v293
  %568 = vmatprep.subr.bf16.mxu0 0
  %569 = vmatpush1.bf16.msra.mxu0 %v290
  %570 = vmatprep.subr.bf16.mxu0 0
  %571 = vmatpush1.bf16.msra.mxu0 %v287
  %572 = vmatprep.subr.bf16.mxu0 0
  %573 = vmatpush1.bf16.msra.mxu0 %v284
  %574 = vmatprep.subr.bf16.mxu0 0
  %575 = vmatpush2.bf16.msra.mxu0 0
  %576 = vmatprep.subr.bf16.mxu0 0
  %577 = vmatpush2.bf16.msra.mxu0 0
  %578 = vmatprep.subr.bf16.mxu0 0
  %579 = vmatpush2.bf16.msra.mxu0 0
  %580 = vmatprep.subr.bf16.mxu0 0
  %581 = vmatpush2.bf16.msra.mxu0 0
  %582 = vmatprep.subr.bf16.mxu0 0
  %583 = vmatpush2.bf16.msra.mxu0 0
  %584 = vmatprep.subr.bf16.mxu0 0
  %585 = vmatpush2.bf16.msra.mxu0 0
  %586 = vmatprep.subr.bf16.mxu0 0
  %587 = vmatpush2.bf16.msra.mxu0 0
  %588 = vmatprep.subr.bf16.mxu0 0
  %589 = vmatpush2.bf16.msra.mxu0 0
  %590 = vmatprep.mubr.bf16.mxu0 0
  %591 = vmatmul.mubr.bf16.gmra.mxu0 %v422
  %v592 = vpop.f32.mrf.mxu0
  %v593 = vadd.f32 %v303, %v592
  %v594 = vpop.f32.mrf.mxu0
  %v595 = vpop.f32.mrf.mxu0
  %v596 = vadd.f32 %v308, %v595
  %v597 = vpop.f32.mrf.mxu0
  %598 = vmatprep.mubr.bf16.mxu0 0
  %599 = vmatmul.mubr.bf16.gmra.mxu0 %v425
  %v600 = vpop.f32.mrf.mxu0
  %v601 = vadd.f32 %v313, %v600
  %v602 = vpop.f32.mrf.mxu0
  %v603 = vpop.f32.mrf.mxu0
  %v604 = vadd.f32 %v318, %v603
  %v605 = vpop.f32.mrf.mxu0
  %606 = vmatprep.mubr.bf16.mxu0 0
  %607 = vmatmul.mubr.bf16.gmra.mxu0 %v428
  %v608 = vpop.f32.mrf.mxu0
  %v609 = vadd.f32 %v323, %v608
  %v610 = vpop.f32.mrf.mxu0
  %v611 = vpop.f32.mrf.mxu0
  %v612 = vadd.f32 %v328, %v611
  %v613 = vpop.f32.mrf.mxu0
  %614 = vmatprep.mubr.bf16.mxu0 0
  %615 = vmatmul.mubr.bf16.gmra.mxu0 %v431
  %v616 = vpop.f32.mrf.mxu0
  %v617 = vadd.f32 %v333, %v616
  %v618 = vpop.f32.mrf.mxu0
  %v619 = vpop.f32.mrf.mxu0
  %v620 = vadd.f32 %v338, %v619
  %v621 = vpop.f32.mrf.mxu0
  %622 = vmatprep.mubr.bf16.mxu0 0
  %623 = vmatmul.mubr.bf16.gmra.mxu0 %v434
  %v624 = vpop.f32.mrf.mxu0
  %v625 = vadd.f32 %v343, %v624
  %v626 = vpop.f32.mrf.mxu0
  %v627 = vpop.f32.mrf.mxu0
  %v628 = vadd.f32 %v348, %v627
  %v629 = vpop.f32.mrf.mxu0
  %630 = vmatprep.mubr.bf16.mxu0 0
  %631 = vmatmul.mubr.bf16.gmra.mxu0 %v437
  %v632 = vpop.f32.mrf.mxu0
  %v633 = vadd.f32 %v353, %v632
  %v634 = vpop.f32.mrf.mxu0
  %v635 = vpop.f32.mrf.mxu0
  %v636 = vadd.f32 %v358, %v635
  %v637 = vpop.f32.mrf.mxu0
  %638 = vmatprep.mubr.bf16.mxu0 0
  %639 = vmatmul.mubr.bf16.gmra.mxu0 %v440
  %v640 = vpop.f32.mrf.mxu0
  %v641 = vadd.f32 %v363, %v640
  %v642 = vpop.f32.mrf.mxu0
  %v643 = vpop.f32.mrf.mxu0
  %v644 = vadd.f32 %v368, %v643
  %v645 = vpop.f32.mrf.mxu0
  %646 = vmatprep.mubr.bf16.mxu0 0
  %647 = vmatmul.mubr.bf16.gmra.mxu0 %v443
  %v648 = vpop.f32.mrf.mxu0
  %v649 = vadd.f32 %v373, %v648
  %v650 = vpop.f32.mrf.mxu0
  %v651 = vpop.f32.mrf.mxu0
  %v652 = vadd.f32 %v378, %v651
  %v653 = vpop.f32.mrf.mxu0
  %654 = vdwg.mxu0
  %v655 = vmax.f32 %v480, 0.0
  %v656 = vmax.f32 %v482, 0.0
  %v657 = vmax.f32 %v593, 0.0
  %v658 = vmax.f32 %v484, 0.0
  %v659 = vmax.f32 %v486, 0.0
  %v660 = vmax.f32 %v596, 0.0
  %v661 = vmax.f32 %v490, 0.0
  %v662 = vmax.f32 %v492, 0.0
  %v663 = vmax.f32 %v601, 0.0
  %v664 = vmax.f32 %v494, 0.0
  %v665 = vmax.f32 %v496, 0.0
  %v666 = vmax.f32 %v604, 0.0
  %v667 = vmax.f32 %v500, 0.0
  %v668 = vmax.f32 %v502, 0.0
  %v669 = vmax.f32 %v609, 0.0
  %v670 = vmax.f32 %v504, 0.0
  %v671 = vmax.f32 %v506, 0.0
  %v672 = vmax.f32 %v612, 0.0
  %v673 = vmax.f32 %v510, 0.0
  %v674 = vmax.f32 %v512, 0.0
  %v675 = vmax.f32 %v617, 0.0
  %v676 = vmax.f32 %v514, 0.0
  %v677 = vmax.f32 %v516, 0.0
  %v678 = vmax.f32 %v620, 0.0
  %v679 = vmax.f32 %v520, 0.0
  %v680 = vmax.f32 %v522, 0.0
  %v681 = vmax.f32 %v625, 0.0
  %v682 = vmax.f32 %v524, 0.0
  %v683 = vmax.f32 %v526, 0.0
  %v684 = vmax.f32 %v628, 0.0
  %v685 = vmax.f32 %v530, 0.0
  %v686 = vmax.f32 %v532, 0.0
  %v687 = vmax.f32 %v633, 0.0
  %v688 = vmax.f32 %v534, 0.0
  %v689 = vmax.f32 %v536, 0.0
  %v690 = vmax.f32 %v636, 0.0
  %v691 = vmax.f32 %v540, 0.0
  %v692 = vmax.f32 %v542, 0.0
  %v693 = vmax.f32 %v641, 0.0
  %v694 = vmax.f32 %v544, 0.0
  %v695 = vmax.f32 %v546, 0.0
  %v696 = vmax.f32 %v644, 0.0
  %v697 = vmax.f32 %v550, 0.0
  %v698 = vmax.f32 %v552, 0.0
  %v699 = vmax.f32 %v649, 0.0
  %v700 = vmax.f32 %v554, 0.0
  %v701 = vmax.f32 %v556, 0.0
  %v702 = vmax.f32 %v652, 0.0
  %751 = vrot.lane.b32.xlu0 %v655, 127
  %v752 = vpop.permute.xlu0 %751
  %753 = vrot.lane.b32.xlu0 %v656, 127
  %v754 = vpop.permute.xlu0 %753
  %755 = vrot.lane.b32.xlu0 %v657, 127
  %v756 = vpop.permute.xlu0 %755
  %757 = vrot.lane.b32.xlu0 %v658, 127
  %v758 = vpop.permute.xlu0 %757
  %759 = vrot.lane.b32.xlu0 %v659, 127
  %v760 = vpop.permute.xlu0 %759
  %761 = vrot.lane.b32.xlu0 %v660, 127
  %v762 = vpop.permute.xlu0 %761
  %763 = vrot.lane.b32.xlu0 %v661, 127
  %v764 = vpop.permute.xlu0 %763
  %765 = vrot.lane.b32.xlu0 %v662, 127
  %v766 = vpop.permute.xlu0 %765
  %767 = vrot.lane.b32.xlu0 %v663, 127
  %v768 = vpop.permute.xlu0 %767
  %769 = vrot.lane.b32.xlu0 %v664, 127
  %v770 = vpop.permute.xlu0 %769
  %771 = vrot.lane.b32.xlu0 %v665, 127
  %v772 = vpop.permute.xlu0 %771
  %773 = vrot.lane.b32.xlu0 %v666, 127
  %v774 = vpop.permute.xlu0 %773
  %775 = vrot.lane.b32.xlu0 %v667, 127
  %v776 = vpop.permute.xlu0 %775
  %777 = vrot.lane.b32.xlu0 %v668, 127
  %v778 = vpop.permute.xlu0 %777
  %779 = vrot.lane.b32.xlu0 %v669, 127
  %v780 = vpop.permute.xlu0 %779
  %781 = vrot.lane.b32.xlu0 %v670, 127
  %v782 = vpop.permute.xlu0 %781
  %783 = vrot.lane.b32.xlu0 %v671, 127
  %v784 = vpop.permute.xlu0 %783
  %785 = vrot.lane.b32.xlu0 %v672, 127
  %v786 = vpop.permute.xlu0 %785
  %787 = vrot.lane.b32.xlu0 %v673, 127
  %v788 = vpop.permute.xlu0 %787
  %789 = vrot.lane.b32.xlu0 %v674, 127
  %v790 = vpop.permute.xlu0 %789
  %791 = vrot.lane.b32.xlu0 %v675, 127
  %v792 = vpop.permute.xlu0 %791
  %793 = vrot.lane.b32.xlu0 %v676, 127
  %v794 = vpop.permute.xlu0 %793
  %795 = vrot.lane.b32.xlu0 %v677, 127
  %v796 = vpop.permute.xlu0 %795
  %797 = vrot.lane.b32.xlu0 %v678, 127
  %v798 = vpop.permute.xlu0 %797
  %799 = vrot.lane.b32.xlu0 %v679, 127
  %v800 = vpop.permute.xlu0 %799
  %801 = vrot.lane.b32.xlu0 %v680, 127
  %v802 = vpop.permute.xlu0 %801
  %803 = vrot.lane.b32.xlu0 %v681, 127
  %v804 = vpop.permute.xlu0 %803
  %805 = vrot.lane.b32.xlu0 %v682, 127
  %v806 = vpop.permute.xlu0 %805
  %807 = vrot.lane.b32.xlu0 %v683, 127
  %v808 = vpop.permute.xlu0 %807
  %809 = vrot.lane.b32.xlu0 %v684, 127
  %v810 = vpop.permute.xlu0 %809
  %811 = vrot.lane.b32.xlu0 %v685, 127
  %v812 = vpop.permute.xlu0 %811
  %813 = vrot.lane.b32.xlu0 %v686, 127
  %v814 = vpop.permute.xlu0 %813
  %815 = vrot.lane.b32.xlu0 %v687, 127
  %v816 = vpop.permute.xlu0 %815
  %817 = vrot.lane.b32.xlu0 %v688, 127
  %v818 = vpop.permute.xlu0 %817
  %819 = vrot.lane.b32.xlu0 %v689, 127
  %v820 = vpop.permute.xlu0 %819
  %821 = vrot.lane.b32.xlu0 %v690, 127
  %v822 = vpop.permute.xlu0 %821
  %823 = vrot.lane.b32.xlu0 %v691, 127
  %v824 = vpop.permute.xlu0 %823
  %825 = vrot.lane.b32.xlu0 %v692, 127
  %v826 = vpop.permute.xlu0 %825
  %827 = vrot.lane.b32.xlu0 %v693, 127
  %v828 = vpop.permute.xlu0 %827
  %829 = vrot.lane.b32.xlu0 %v694, 127
  %v830 = vpop.permute.xlu0 %829
  %831 = vrot.lane.b32.xlu0 %v695, 127
  %v832 = vpop.permute.xlu0 %831
  %833 = vrot.lane.b32.xlu0 %v696, 127
  %v834 = vpop.permute.xlu0 %833
  %835 = vrot.lane.b32.xlu0 %v697, 127
  %v836 = vpop.permute.xlu0 %835
  %837 = vrot.lane.b32.xlu0 %v698, 127
  %v838 = vpop.permute.xlu0 %837
  %839 = vrot.lane.b32.xlu0 %v699, 127
  %v840 = vpop.permute.xlu0 %839
  %841 = vrot.lane.b32.xlu0 %v700, 127
  %v842 = vpop.permute.xlu0 %841
  %843 = vrot.lane.b32.xlu0 %v701, 127
  %v844 = vpop.permute.xlu0 %843
  %845 = vrot.lane.b32.xlu0 %v702, 127
  %v846 = vpop.permute.xlu0 %845
  %v847 = vsel %vm216, %v752, %v754
  %v848 = vsel %vm216, %v754, %v756
  %v849 = vsel %vm216, %v758, %v760
  %v850 = vsel %vm216, %v760, %v762
  %v851 = vsel %vm216, %v764, %v766
  %v852 = vsel %vm216, %v766, %v768
  %v853 = vsel %vm216, %v770, %v772
  %v854 = vsel %vm216, %v772, %v774
  %v855 = vsel %vm216, %v776, %v778
  %v856 = vsel %vm216, %v778, %v780
  %v857 = vsel %vm216, %v782, %v784
  %v858 = vsel %vm216, %v784, %v786
  %v859 = vsel %vm216, %v788, %v790
  %v860 = vsel %vm216, %v790, %v792
  %v861 = vsel %vm216, %v794, %v796
  %v862 = vsel %vm216, %v796, %v798
  %v863 = vsel %vm216, %v800, %v802
  %v864 = vsel %vm216, %v802, %v804
  %v865 = vsel %vm216, %v806, %v808
  %v866 = vsel %vm216, %v808, %v810
  %v867 = vsel %vm216, %v812, %v814
  %v868 = vsel %vm216, %v814, %v816
  %v869 = vsel %vm216, %v818, %v820
  %v870 = vsel %vm216, %v820, %v822
  %v871 = vsel %vm216, %v824, %v826
  %v872 = vsel %vm216, %v826, %v828
  %v873 = vsel %vm216, %v830, %v832
  %v874 = vsel %vm216, %v832, %v834
  %v875 = vsel %vm216, %v836, %v838
  %v876 = vsel %vm216, %v838, %v840
  %v877 = vsel %vm216, %v842, %v844
  %v878 = vsel %vm216, %v844, %v846
  %v927 = vmax.f32 %v655, %v847
  %v928 = vmax.f32 %v656, %v848
  %v929 = vmax.f32 %v657, %v756
  %v930 = vmax.f32 %v658, %v849
  %v931 = vmax.f32 %v659, %v850
  %v932 = vmax.f32 %v660, %v762
  %v933 = vmax.f32 %v661, %v851
  %v934 = vmax.f32 %v662, %v852
  %v935 = vmax.f32 %v663, %v768
  %v936 = vmax.f32 %v664, %v853
  %v937 = vmax.f32 %v665, %v854
  %v938 = vmax.f32 %v666, %v774
  %v939 = vmax.f32 %v667, %v855
  %v940 = vmax.f32 %v668, %v856
  %v941 = vmax.f32 %v669, %v780
  %v942 = vmax.f32 %v670, %v857
  %v943 = vmax.f32 %v671, %v858
  %v944 = vmax.f32 %v672, %v786
  %v945 = vmax.f32 %v673, %v859
  %v946 = vmax.f32 %v674, %v860
  %v947 = vmax.f32 %v675, %v792
  %v948 = vmax.f32 %v676, %v861
  %v949 = vmax.f32 %v677, %v862
  %v950 = vmax.f32 %v678, %v798
  %v951 = vmax.f32 %v679, %v863
  %v952 = vmax.f32 %v680, %v864
  %v953 = vmax.f32 %v681, %v804
  %v954 = vmax.f32 %v682, %v865
  %v955 = vmax.f32 %v683, %v866
  %v956 = vmax.f32 %v684, %v810
  %v957 = vmax.f32 %v685, %v867
  %v958 = vmax.f32 %v686, %v868
  %v959 = vmax.f32 %v687, %v816
  %v960 = vmax.f32 %v688, %v869
  %v961 = vmax.f32 %v689, %v870
  %v962 = vmax.f32 %v690, %v822
  %v963 = vmax.f32 %v691, %v871
  %v964 = vmax.f32 %v692, %v872
  %v965 = vmax.f32 %v693, %v828
  %v966 = vmax.f32 %v694, %v873
  %v967 = vmax.f32 %v695, %v874
  %v968 = vmax.f32 %v696, %v834
  %v969 = vmax.f32 %v697, %v875
  %v970 = vmax.f32 %v698, %v876
  %v971 = vmax.f32 %v699, %v840
  %v972 = vmax.f32 %v700, %v877
  %v973 = vmax.f32 %v701, %v878
  %v974 = vmax.f32 %v702, %v846
  %v975 = vpack.c.bf16 %v930, %v927
  %v976 = vpack.c.bf16 %v931, %v928
  %v977 = vpack.c.bf16 %v932, %v929
  %v978 = vpack.c.bf16 %v936, %v933
  %v979 = vpack.c.bf16 %v937, %v934
  %v980 = vpack.c.bf16 %v938, %v935
  %v981 = vpack.c.bf16 %v942, %v939
  %v982 = vpack.c.bf16 %v943, %v940
  %v983 = vpack.c.bf16 %v944, %v941
  %v984 = vpack.c.bf16 %v948, %v945
  %v985 = vpack.c.bf16 %v949, %v946
  %v986 = vpack.c.bf16 %v950, %v947
  %v987 = vpack.c.bf16 %v954, %v951
  %v988 = vpack.c.bf16 %v955, %v952
  %v989 = vpack.c.bf16 %v956, %v953
  %v990 = vpack.c.bf16 %v960, %v957
  %v991 = vpack.c.bf16 %v961, %v958
  %v992 = vpack.c.bf16 %v962, %v959
  %v993 = vpack.c.bf16 %v966, %v963
  %v994 = vpack.c.bf16 %v967, %v964
  %v995 = vpack.c.bf16 %v968, %v965
  %v996 = vpack.c.bf16 %v972, %v969
  %v997 = vpack.c.bf16 %v973, %v970
  %v998 = vpack.c.bf16 %v974, %v971
  %v1044 = vunpack.c.l.b16 %v84
  %v1045 = vunpack.c.h.b16 %v84
  %v1046 = vunpack.c.l.b16 %v85
  %v1047 = vunpack.c.h.b16 %v85
  %v1048 = vunpack.c.l.b16 %v86
  %v1049 = vunpack.c.h.b16 %v86
  %v1050 = vunpack.c.l.b16 %v87
  %v1051 = vunpack.c.h.b16 %v87
  %v1052 = vunpack.c.l.b16 %v88
  %v1053 = vunpack.c.h.b16 %v88
  %v1054 = vunpack.c.l.b16 %v89
  %v1055 = vunpack.c.h.b16 %v89
  %v1056 = vunpack.c.l.b16 %v90
  %v1057 = vunpack.c.h.b16 %v90
  %v1058 = vunpack.c.l.b16 %v91
  %v1059 = vunpack.c.h.b16 %v91
  %v1060 = vunpack.c.l.b16 %v92
  %v1061 = vunpack.c.h.b16 %v92
  %v1062 = vunpack.c.l.b16 %v93
  %v1063 = vunpack.c.h.b16 %v93
  %v1064 = vunpack.c.l.b16 %v94
  %v1065 = vunpack.c.h.b16 %v94
  %v1066 = vunpack.c.l.b16 %v95
  %v1067 = vunpack.c.h.b16 %v95
  %v1068 = vunpack.c.l.b16 %v96
  %v1069 = vunpack.c.h.b16 %v96
  %v1070 = vunpack.c.l.b16 %v97
  %v1071 = vunpack.c.h.b16 %v97
  %v1072 = vunpack.c.l.b16 %v98
  %v1073 = vunpack.c.h.b16 %v98
  %v1074 = vunpack.c.l.b16 %v99
  %v1075 = vunpack.c.h.b16 %v99
  %v1076 = vunpack.c.l.b16 %v100
  %v1077 = vunpack.c.h.b16 %v100
  %v1078 = vunpack.c.l.b16 %v101
  %v1079 = vunpack.c.h.b16 %v101
  %v1080 = vunpack.c.l.b16 %v102
  %v1081 = vunpack.c.h.b16 %v102
  %v1082 = vunpack.c.l.b16 %v103
  %v1083 = vunpack.c.h.b16 %v103
  %v1084 = vunpack.c.l.b16 %v104
  %v1085 = vunpack.c.h.b16 %v104
  %v1086 = vunpack.c.l.b16 %v105
  %v1087 = vunpack.c.h.b16 %v105
  %v1088 = vunpack.c.l.b16 %v106
  %v1089 = vunpack.c.h.b16 %v106
  %v1090 = vunpack.c.l.b16 %v107
  %v1091 = vunpack.c.h.b16 %v107
  %v1092 = vunpack.c.l.b16 %v108
  %v1093 = vunpack.c.h.b16 %v108
  %v1094 = vunpack.c.l.b16 %v109
  %v1095 = vunpack.c.h.b16 %v109
  %v1096 = vunpack.c.l.b16 %v110
  %v1097 = vunpack.c.h.b16 %v110
  %v1098 = vunpack.c.l.b16 %v111
  %v1099 = vunpack.c.h.b16 %v111
  %v1100 = vunpack.c.l.b16 %v112
  %v1101 = vunpack.c.h.b16 %v112
  %v1102 = vunpack.c.l.b16 %v113
  %v1103 = vunpack.c.h.b16 %v113
  %v1104 = vunpack.c.l.b16 %v114
  %v1105 = vunpack.c.h.b16 %v114
  %v1106 = vunpack.c.l.b16 %v115
  %v1107 = vunpack.c.h.b16 %v115
  %v1108 = vunpack.c.l.b16 %v116
  %v1109 = vunpack.c.h.b16 %v116
  %v1110 = vunpack.c.l.b16 %v117
  %v1111 = vunpack.c.h.b16 %v117
  %v1112 = vunpack.c.l.b16 %v118
  %v1113 = vunpack.c.h.b16 %v118
  %v1114 = vunpack.c.l.b16 %v119
  %v1115 = vunpack.c.h.b16 %v119
  %v1116 = vunpack.c.l.b16 %v120
  %v1117 = vunpack.c.h.b16 %v120
  %v1118 = vunpack.c.l.b16 %v121
  %v1119 = vunpack.c.h.b16 %v121
  %v1120 = vunpack.c.l.b16 %v122
  %v1121 = vunpack.c.h.b16 %v122
  %v1122 = vunpack.c.l.b16 %v123
  %v1123 = vunpack.c.h.b16 %v123
  %v1124 = vunpack.c.l.b16 %v124
  %v1125 = vunpack.c.h.b16 %v124
  %v1126 = vunpack.c.l.b16 %v125
  %v1127 = vunpack.c.h.b16 %v125
  %v1128 = vunpack.c.l.b16 %v126
  %v1129 = vunpack.c.h.b16 %v126
  %v1130 = vunpack.c.l.b16 %v127
  %v1131 = vunpack.c.h.b16 %v127
  %v1132 = vunpack.c.l.b16 %v128
  %v1133 = vunpack.c.h.b16 %v128
  %v1134 = vpack.c.b16 %v1046, %v1044
  %v1135 = vpack.c.b16 %v1047, %v1045
  %v1136 = vpack.c.b16 %v1050, %v1048
  %v1137 = vpack.c.b16 %v1051, %v1049
  %v1138 = vpack.c.b16 %v1054, %v1052
  %v1139 = vpack.c.b16 %v1055, %v1053
  %v1140 = vpack.c.b16 %v1058, %v1056
  %v1141 = vpack.c.b16 %v1059, %v1057
  %v1142 = vpack.c.b16 %v1062, %v1060
  %v1143 = vpack.c.b16 %v1063, %v1061
  %v1144 = vpack.c.b16 %v1066, %v1064
  %v1145 = vpack.c.b16 %v1067, %v1065
  %v1146 = vpack.c.b16 %v1070, %v1068
  %v1147 = vpack.c.b16 %v1071, %v1069
  %v1148 = vpack.c.b16 %v1074, %v1072
  %v1149 = vpack.c.b16 %v1075, %v1073
  %v1150 = vpack.c.b16 %v1078, %v1076
  %v1151 = vpack.c.b16 %v1079, %v1077
  %v1152 = vpack.c.b16 %v1082, %v1080
  %v1153 = vpack.c.b16 %v1083, %v1081
  %v1154 = vpack.c.b16 %v1086, %v1084
  %v1155 = vpack.c.b16 %v1087, %v1085
  %v1156 = vpack.c.b16 %v1090, %v1088
  %v1157 = vpack.c.b16 %v1091, %v1089
  %v1158 = vpack.c.b16 %v1094, %v1092
  %v1159 = vpack.c.b16 %v1095, %v1093
  %v1160 = vpack.c.b16 %v1098, %v1096
  %v1161 = vpack.c.b16 %v1099, %v1097
  %v1162 = vpack.c.b16 %v1102, %v1100
  %v1163 = vpack.c.b16 %v1103, %v1101
  %v1164 = vpack.c.b16 %v1106, %v1104
  %v1165 = vpack.c.b16 %v1107, %v1105
  %v1166 = vpack.c.b16 %v1110, %v1108
  %v1167 = vpack.c.b16 %v1111, %v1109
  %v1168 = vpack.c.b16 %v1114, %v1112
  %v1169 = vpack.c.b16 %v1115, %v1113
  %v1170 = vpack.c.b16 %v1118, %v1116
  %v1171 = vpack.c.b16 %v1119, %v1117
  %v1172 = vpack.c.b16 %v1122, %v1120
  %v1173 = vpack.c.b16 %v1123, %v1121
  %v1174 = vpack.c.b16 %v1126, %v1124
  %v1175 = vpack.c.b16 %v1127, %v1125
  %v1176 = vpack.c.b16 %v1130, %v1128
  %v1177 = vpack.c.b16 %v1131, %v1129
  %v1178 = vpack.c.b16 %v1132, %v1132
  %v1179 = vpack.c.b16 %v1133, %v1133
  %vm1224 = vcmask 809984
  %v1226 = vsel %vm1224, %v977, 0
  %v1229 = vsel %vm1224, %v980, 0
  %v1232 = vsel %vm1224, %v983, 0
  %v1235 = vsel %vm1224, %v986, 0
  %v1238 = vsel %vm1224, %v989, 0
  %v1241 = vsel %vm1224, %v992, 0
  %v1244 = vsel %vm1224, %v995, 0
  %v1247 = vsel %vm1224, %v998, 0
  %vm1249 = vcmask 1040384
  %vm1250 = vcmask 1041408
  %v1251 = vsel %vm1249, 4294967295, 65535
  %v1252 = vsel %vm1250, %v1251, 0
  %v1254 = vand.u32 %v1178, %v1252
  %v1257 = vand.u32 %v1179, %v1252
  %1259 = vmatprep.subr.bf16.mxu0 %v1149
  %1260 = vmatpush1.bf16.msra.mxu0 %v1148
  %1261 = vmatprep.subr.bf16.mxu0 %v1147
  %1262 = vmatpush1.bf16.msra.mxu0 %v1146
  %1263 = vmatprep.subr.bf16.mxu0 %v1145
  %1264 = vmatpush1.bf16.msra.mxu0 %v1144
  %1265 = vmatprep.subr.bf16.mxu0 %v1143
  %1266 = vmatpush1.bf16.msra.mxu0 %v1142
  %1267 = vmatprep.subr.bf16.mxu0 %v1141
  %1268 = vmatpush1.bf16.msra.mxu0 %v1140
  %1269 = vmatprep.subr.bf16.mxu0 %v1139
  %1270 = vmatpush1.bf16.msra.mxu0 %v1138
  %1271 = vmatprep.subr.bf16.mxu0 %v1137
  %1272 = vmatpush1.bf16.msra.mxu0 %v1136
  %1273 = vmatprep.subr.bf16.mxu0 %v1135
  %1274 = vmatpush1.bf16.msra.mxu0 %v1134
  %1275 = vmatprep.subr.bf16.mxu0 %v1165
  %1276 = vmatpush2.bf16.msra.mxu0 %v1164
  %1277 = vmatprep.subr.bf16.mxu0 %v1163
  %1278 = vmatpush2.bf16.msra.mxu0 %v1162
  %1279 = vmatprep.subr.bf16.mxu0 %v1161
  %1280 = vmatpush2.bf16.msra.mxu0 %v1160
  %1281 = vmatprep.subr.bf16.mxu0 %v1159
  %1282 = vmatpush2.bf16.msra.mxu0 %v1158
  %1283 = vmatprep.subr.bf16.mxu0 %v1157
  %1284 = vmatpush2.bf16.msra.mxu0 %v1156
  %1285 = vmatprep.subr.bf16.mxu0 %v1155
  %1286 = vmatpush2.bf16.msra.mxu0 %v1154
  %1287 = vmatprep.subr.bf16.mxu0 %v1153
  %1288 = vmatpush2.bf16.msra.mxu0 %v1152
  %1289 = vmatprep.subr.bf16.mxu0 %v1151
  %1290 = vmatpush2.bf16.msra.mxu0 %v1150
  %1291 = vmatprep.mubr.bf16.mxu0 %v976
  %1292 = vmatmul.mubr.bf16.gmra.mxu0 %v975
  %v1293 = vpop.f32.mrf.mxu0
  %v1294 = vadd.f32 0.0, %v1293
  %v1295 = vpop.f32.mrf.mxu0
  %v1296 = vadd.f32 0.0, %v1295
  %v1297 = vpop.f32.mrf.mxu0
  %v1298 = vadd.f32 0.0, %v1297
  %v1299 = vpop.f32.mrf.mxu0
  %v1300 = vadd.f32 0.0, %v1299
  %1301 = vmatprep.mubr.bf16.mxu0 %v979
  %1302 = vmatmul.mubr.bf16.gmra.mxu0 %v978
  %v1303 = vpop.f32.mrf.mxu0
  %v1304 = vadd.f32 0.0, %v1303
  %v1305 = vpop.f32.mrf.mxu0
  %v1306 = vadd.f32 0.0, %v1305
  %v1307 = vpop.f32.mrf.mxu0
  %v1308 = vadd.f32 0.0, %v1307
  %v1309 = vpop.f32.mrf.mxu0
  %v1310 = vadd.f32 0.0, %v1309
  %1311 = vmatprep.mubr.bf16.mxu0 %v982
  %1312 = vmatmul.mubr.bf16.gmra.mxu0 %v981
  %v1313 = vpop.f32.mrf.mxu0
  %v1314 = vadd.f32 0.0, %v1313
  %v1315 = vpop.f32.mrf.mxu0
  %v1316 = vadd.f32 0.0, %v1315
  %v1317 = vpop.f32.mrf.mxu0
  %v1318 = vadd.f32 0.0, %v1317
  %v1319 = vpop.f32.mrf.mxu0
  %v1320 = vadd.f32 0.0, %v1319
  %1321 = vmatprep.mubr.bf16.mxu0 %v985
  %1322 = vmatmul.mubr.bf16.gmra.mxu0 %v984
  %v1323 = vpop.f32.mrf.mxu0
  %v1324 = vadd.f32 0.0, %v1323
  %v1325 = vpop.f32.mrf.mxu0
  %v1326 = vadd.f32 0.0, %v1325
  %v1327 = vpop.f32.mrf.mxu0
  %v1328 = vadd.f32 0.0, %v1327
  %v1329 = vpop.f32.mrf.mxu0
  %v1330 = vadd.f32 0.0, %v1329
  %1331 = vmatprep.mubr.bf16.mxu0 %v988
  %1332 = vmatmul.mubr.bf16.gmra.mxu0 %v987
  %v1333 = vpop.f32.mrf.mxu0
  %v1334 = vadd.f32 0.0, %v1333
  %v1335 = vpop.f32.mrf.mxu0
  %v1336 = vadd.f32 0.0, %v1335
  %v1337 = vpop.f32.mrf.mxu0
  %v1338 = vadd.f32 0.0, %v1337
  %v1339 = vpop.f32.mrf.mxu0
  %v1340 = vadd.f32 0.0, %v1339
  %1341 = vmatprep.mubr.bf16.mxu0 %v991
  %1342 = vmatmul.mubr.bf16.gmra.mxu0 %v990
  %v1343 = vpop.f32.mrf.mxu0
  %v1344 = vadd.f32 0.0, %v1343
  %v1345 = vpop.f32.mrf.mxu0
  %v1346 = vadd.f32 0.0, %v1345
  %v1347 = vpop.f32.mrf.mxu0
  %v1348 = vadd.f32 0.0, %v1347
  %v1349 = vpop.f32.mrf.mxu0
  %v1350 = vadd.f32 0.0, %v1349
  %1351 = vmatprep.mubr.bf16.mxu0 %v994
  %1352 = vmatmul.mubr.bf16.gmra.mxu0 %v993
  %v1353 = vpop.f32.mrf.mxu0
  %v1354 = vadd.f32 0.0, %v1353
  %v1355 = vpop.f32.mrf.mxu0
  %v1356 = vadd.f32 0.0, %v1355
  %v1357 = vpop.f32.mrf.mxu0
  %v1358 = vadd.f32 0.0, %v1357
  %v1359 = vpop.f32.mrf.mxu0
  %v1360 = vadd.f32 0.0, %v1359
  %1361 = vmatprep.mubr.bf16.mxu0 %v997
  %1362 = vmatmul.mubr.bf16.gmra.mxu0 %v996
  %v1363 = vpop.f32.mrf.mxu0
  %v1364 = vadd.f32 0.0, %v1363
  %v1365 = vpop.f32.mrf.mxu0
  %v1366 = vadd.f32 0.0, %v1365
  %v1367 = vpop.f32.mrf.mxu0
  %v1368 = vadd.f32 0.0, %v1367
  %v1369 = vpop.f32.mrf.mxu0
  %v1370 = vadd.f32 0.0, %v1369
  %1371 = vdwg.mxu0
  %1372 = vmatprep.subr.bf16.mxu0 0
  %1373 = vmatpush1.bf16.msra.mxu0 0
  %1374 = vmatprep.subr.bf16.mxu0 %v1257
  %1375 = vmatpush1.bf16.msra.mxu0 %v1254
  %1376 = vmatprep.subr.bf16.mxu0 %v1177
  %1377 = vmatpush1.bf16.msra.mxu0 %v1176
  %1378 = vmatprep.subr.bf16.mxu0 %v1175
  %1379 = vmatpush1.bf16.msra.mxu0 %v1174
  %1380 = vmatprep.subr.bf16.mxu0 %v1173
  %1381 = vmatpush1.bf16.msra.mxu0 %v1172
  %1382 = vmatprep.subr.bf16.mxu0 %v1171
  %1383 = vmatpush1.bf16.msra.mxu0 %v1170
  %1384 = vmatprep.subr.bf16.mxu0 %v1169
  %1385 = vmatpush1.bf16.msra.mxu0 %v1168
  %1386 = vmatprep.subr.bf16.mxu0 %v1167
  %1387 = vmatpush1.bf16.msra.mxu0 %v1166
  %1388 = vmatprep.subr.bf16.mxu0 0
  %1389 = vmatpush2.bf16.msra.mxu0 0
  %1390 = vmatprep.subr.bf16.mxu0 0
  %1391 = vmatpush2.bf16.msra.mxu0 0
  %1392 = vmatprep.subr.bf16.mxu0 0
  %1393 = vmatpush2.bf16.msra.mxu0 0
  %1394 = vmatprep.subr.bf16.mxu0 0
  %1395 = vmatpush2.bf16.msra.mxu0 0
  %1396 = vmatprep.subr.bf16.mxu0 0
  %1397 = vmatpush2.bf16.msra.mxu0 0
  %1398 = vmatprep.subr.bf16.mxu0 0
  %1399 = vmatpush2.bf16.msra.mxu0 0
  %1400 = vmatprep.subr.bf16.mxu0 0
  %1401 = vmatpush2.bf16.msra.mxu0 0
  %1402 = vmatprep.subr.bf16.mxu0 0
  %1403 = vmatpush2.bf16.msra.mxu0 0
  %1404 = vmatprep.mubr.bf16.mxu0 0
  %1405 = vmatmul.mubr.bf16.gmra.mxu0 %v1226
  %v1406 = vpop.f32.mrf.mxu0
  %v1407 = vadd.f32 %v1294, %v1406
  %v1408 = vpop.f32.mrf.mxu0
  %v1409 = vadd.f32 %v1296, %v1408
  %v1410 = vpop.f32.mrf.mxu0
  %v1411 = vadd.f32 %v1298, %v1410
  %v1412 = vpop.f32.mrf.mxu0
  %v1413 = vadd.f32 %v1300, %v1412
  %1414 = vmatprep.mubr.bf16.mxu0 0
  %1415 = vmatmul.mubr.bf16.gmra.mxu0 %v1229
  %v1416 = vpop.f32.mrf.mxu0
  %v1417 = vadd.f32 %v1304, %v1416
  %v1418 = vpop.f32.mrf.mxu0
  %v1419 = vadd.f32 %v1306, %v1418
  %v1420 = vpop.f32.mrf.mxu0
  %v1421 = vadd.f32 %v1308, %v1420
  %v1422 = vpop.f32.mrf.mxu0
  %v1423 = vadd.f32 %v1310, %v1422
  %1424 = vmatprep.mubr.bf16.mxu0 0
  %1425 = vmatmul.mubr.bf16.gmra.mxu0 %v1232
  %v1426 = vpop.f32.mrf.mxu0
  %v1427 = vadd.f32 %v1314, %v1426
  %v1428 = vpop.f32.mrf.mxu0
  %v1429 = vadd.f32 %v1316, %v1428
  %v1430 = vpop.f32.mrf.mxu0
  %v1431 = vadd.f32 %v1318, %v1430
  %v1432 = vpop.f32.mrf.mxu0
  %v1433 = vadd.f32 %v1320, %v1432
  %1434 = vmatprep.mubr.bf16.mxu0 0
  %1435 = vmatmul.mubr.bf16.gmra.mxu0 %v1235
  %v1436 = vpop.f32.mrf.mxu0
  %v1437 = vadd.f32 %v1324, %v1436
  %v1438 = vpop.f32.mrf.mxu0
  %v1439 = vadd.f32 %v1326, %v1438
  %v1440 = vpop.f32.mrf.mxu0
  %v1441 = vadd.f32 %v1328, %v1440
  %v1442 = vpop.f32.mrf.mxu0
  %v1443 = vadd.f32 %v1330, %v1442
  %1444 = vmatprep.mubr.bf16.mxu0 0
  %1445 = vmatmul.mubr.bf16.gmra.mxu0 %v1238
  %v1446 = vpop.f32.mrf.mxu0
  %v1447 = vadd.f32 %v1334, %v1446
  %v1448 = vpop.f32.mrf.mxu0
  %v1449 = vadd.f32 %v1336, %v1448
  %v1450 = vpop.f32.mrf.mxu0
  %v1451 = vadd.f32 %v1338, %v1450
  %v1452 = vpop.f32.mrf.mxu0
  %v1453 = vadd.f32 %v1340, %v1452
  %1454 = vmatprep.mubr.bf16.mxu0 0
  %1455 = vmatmul.mubr.bf16.gmra.mxu0 %v1241
  %v1456 = vpop.f32.mrf.mxu0
  %v1457 = vadd.f32 %v1344, %v1456
  %v1458 = vpop.f32.mrf.mxu0
  %v1459 = vadd.f32 %v1346, %v1458
  %v1460 = vpop.f32.mrf.mxu0
  %v1461 = vadd.f32 %v1348, %v1460
  %v1462 = vpop.f32.mrf.mxu0
  %v1463 = vadd.f32 %v1350, %v1462
  %1464 = vmatprep.mubr.bf16.mxu0 0
  %1465 = vmatmul.mubr.bf16.gmra.mxu0 %v1244
  %v1466 = vpop.f32.mrf.mxu0
  %v1467 = vadd.f32 %v1354, %v1466
  %v1468 = vpop.f32.mrf.mxu0
  %v1469 = vadd.f32 %v1356, %v1468
  %v1470 = vpop.f32.mrf.mxu0
  %v1471 = vadd.f32 %v1358, %v1470
  %v1472 = vpop.f32.mrf.mxu0
  %v1473 = vadd.f32 %v1360, %v1472
  %1474 = vmatprep.mubr.bf16.mxu0 0
  %1475 = vmatmul.mubr.bf16.gmra.mxu0 %v1247
  %v1476 = vpop.f32.mrf.mxu0
  %v1477 = vadd.f32 %v1364, %v1476
  %v1478 = vpop.f32.mrf.mxu0
  %v1479 = vadd.f32 %v1366, %v1478
  %v1480 = vpop.f32.mrf.mxu0
  %v1481 = vadd.f32 %v1368, %v1480
  %v1482 = vpop.f32.mrf.mxu0
  %v1483 = vadd.f32 %v1370, %v1482
  %1484 = vdwg.mxu0
  %1517 = vrot.lane.b32.xlu0 %v1407, 127
  %v1518 = vpop.permute.xlu0 %1517
  %1519 = vrot.lane.b32.xlu0 %v1409, 127
  %v1520 = vpop.permute.xlu0 %1519
  %1521 = vrot.lane.b32.xlu0 %v1411, 127
  %v1522 = vpop.permute.xlu0 %1521
  %1523 = vrot.lane.b32.xlu0 %v1413, 127
  %v1524 = vpop.permute.xlu0 %1523
  %1525 = vrot.lane.b32.xlu0 %v1417, 127
  %v1526 = vpop.permute.xlu0 %1525
  %1527 = vrot.lane.b32.xlu0 %v1419, 127
  %v1528 = vpop.permute.xlu0 %1527
  %1529 = vrot.lane.b32.xlu0 %v1421, 127
  %v1530 = vpop.permute.xlu0 %1529
  %1531 = vrot.lane.b32.xlu0 %v1423, 127
  %v1532 = vpop.permute.xlu0 %1531
  %1533 = vrot.lane.b32.xlu0 %v1427, 127
  %v1534 = vpop.permute.xlu0 %1533
  %1535 = vrot.lane.b32.xlu0 %v1429, 127
  %v1536 = vpop.permute.xlu0 %1535
  %1537 = vrot.lane.b32.xlu0 %v1431, 127
  %v1538 = vpop.permute.xlu0 %1537
  %1539 = vrot.lane.b32.xlu0 %v1433, 127
  %v1540 = vpop.permute.xlu0 %1539
  %1541 = vrot.lane.b32.xlu0 %v1437, 127
  %v1542 = vpop.permute.xlu0 %1541
  %1543 = vrot.lane.b32.xlu0 %v1439, 127
  %v1544 = vpop.permute.xlu0 %1543
  %1545 = vrot.lane.b32.xlu0 %v1441, 127
  %v1546 = vpop.permute.xlu0 %1545
  %1547 = vrot.lane.b32.xlu0 %v1443, 127
  %v1548 = vpop.permute.xlu0 %1547
  %1549 = vrot.lane.b32.xlu0 %v1447, 127
  %v1550 = vpop.permute.xlu0 %1549
  %1551 = vrot.lane.b32.xlu0 %v1449, 127
  %v1552 = vpop.permute.xlu0 %1551
  %1553 = vrot.lane.b32.xlu0 %v1451, 127
  %v1554 = vpop.permute.xlu0 %1553
  %1555 = vrot.lane.b32.xlu0 %v1453, 127
  %v1556 = vpop.permute.xlu0 %1555
  %1557 = vrot.lane.b32.xlu0 %v1457, 127
  %v1558 = vpop.permute.xlu0 %1557
  %1559 = vrot.lane.b32.xlu0 %v1459, 127
  %v1560 = vpop.permute.xlu0 %1559
  %1561 = vrot.lane.b32.xlu0 %v1461, 127
  %v1562 = vpop.permute.xlu0 %1561
  %1563 = vrot.lane.b32.xlu0 %v1463, 127
  %v1564 = vpop.permute.xlu0 %1563
  %1565 = vrot.lane.b32.xlu0 %v1467, 127
  %v1566 = vpop.permute.xlu0 %1565
  %1567 = vrot.lane.b32.xlu0 %v1469, 127
  %v1568 = vpop.permute.xlu0 %1567
  %1569 = vrot.lane.b32.xlu0 %v1471, 127
  %v1570 = vpop.permute.xlu0 %1569
  %1571 = vrot.lane.b32.xlu0 %v1473, 127
  %v1572 = vpop.permute.xlu0 %1571
  %1573 = vrot.lane.b32.xlu0 %v1477, 127
  %v1574 = vpop.permute.xlu0 %1573
  %1575 = vrot.lane.b32.xlu0 %v1479, 127
  %v1576 = vpop.permute.xlu0 %1575
  %1577 = vrot.lane.b32.xlu0 %v1481, 127
  %v1578 = vpop.permute.xlu0 %1577
  %1579 = vrot.lane.b32.xlu0 %v1483, 127
  %v1580 = vpop.permute.xlu0 %1579
  %v1581 = vsel %vm216, %v1518, %v1520
  %v1582 = vsel %vm216, %v1522, %v1524
  %v1583 = vsel %vm216, %v1526, %v1528
  %v1584 = vsel %vm216, %v1530, %v1532
  %v1585 = vsel %vm216, %v1534, %v1536
  %v1586 = vsel %vm216, %v1538, %v1540
  %v1587 = vsel %vm216, %v1542, %v1544
  %v1588 = vsel %vm216, %v1546, %v1548
  %v1589 = vsel %vm216, %v1550, %v1552
  %v1590 = vsel %vm216, %v1554, %v1556
  %v1591 = vsel %vm216, %v1558, %v1560
  %v1592 = vsel %vm216, %v1562, %v1564
  %v1593 = vsel %vm216, %v1566, %v1568
  %v1594 = vsel %vm216, %v1570, %v1572
  %v1595 = vsel %vm216, %v1574, %v1576
  %v1596 = vsel %vm216, %v1578, %v1580
  %1629 = vrot.lane.b32.xlu0 %v1407, 126
  %v1630 = vpop.permute.xlu0 %1629
  %1631 = vrot.lane.b32.xlu0 %v1409, 126
  %v1632 = vpop.permute.xlu0 %1631
  %1633 = vrot.lane.b32.xlu0 %v1411, 126
  %v1634 = vpop.permute.xlu0 %1633
  %1635 = vrot.lane.b32.xlu0 %v1413, 126
  %v1636 = vpop.permute.xlu0 %1635
  %1637 = vrot.lane.b32.xlu0 %v1417, 126
  %v1638 = vpop.permute.xlu0 %1637
  %1639 = vrot.lane.b32.xlu0 %v1419, 126
  %v1640 = vpop.permute.xlu0 %1639
  %1641 = vrot.lane.b32.xlu0 %v1421, 126
  %v1642 = vpop.permute.xlu0 %1641
  %1643 = vrot.lane.b32.xlu0 %v1423, 126
  %v1644 = vpop.permute.xlu0 %1643
  %1645 = vrot.lane.b32.xlu0 %v1427, 126
  %v1646 = vpop.permute.xlu0 %1645
  %1647 = vrot.lane.b32.xlu0 %v1429, 126
  %v1648 = vpop.permute.xlu0 %1647
  %1649 = vrot.lane.b32.xlu0 %v1431, 126
  %v1650 = vpop.permute.xlu0 %1649
  %1651 = vrot.lane.b32.xlu0 %v1433, 126
  %v1652 = vpop.permute.xlu0 %1651
  %1653 = vrot.lane.b32.xlu0 %v1437, 126
  %v1654 = vpop.permute.xlu0 %1653
  %1655 = vrot.lane.b32.xlu0 %v1439, 126
  %v1656 = vpop.permute.xlu0 %1655
  %1657 = vrot.lane.b32.xlu0 %v1441, 126
  %v1658 = vpop.permute.xlu0 %1657
  %1659 = vrot.lane.b32.xlu0 %v1443, 126
  %v1660 = vpop.permute.xlu0 %1659
  %1661 = vrot.lane.b32.xlu0 %v1447, 126
  %v1662 = vpop.permute.xlu0 %1661
  %1663 = vrot.lane.b32.xlu0 %v1449, 126
  %v1664 = vpop.permute.xlu0 %1663
  %1665 = vrot.lane.b32.xlu0 %v1451, 126
  %v1666 = vpop.permute.xlu0 %1665
  %1667 = vrot.lane.b32.xlu0 %v1453, 126
  %v1668 = vpop.permute.xlu0 %1667
  %1669 = vrot.lane.b32.xlu0 %v1457, 126
  %v1670 = vpop.permute.xlu0 %1669
  %1671 = vrot.lane.b32.xlu0 %v1459, 126
  %v1672 = vpop.permute.xlu0 %1671
  %1673 = vrot.lane.b32.xlu0 %v1461, 126
  %v1674 = vpop.permute.xlu0 %1673
  %1675 = vrot.lane.b32.xlu0 %v1463, 126
  %v1676 = vpop.permute.xlu0 %1675
  %1677 = vrot.lane.b32.xlu0 %v1467, 126
  %v1678 = vpop.permute.xlu0 %1677
  %1679 = vrot.lane.b32.xlu0 %v1469, 126
  %v1680 = vpop.permute.xlu0 %1679
  %1681 = vrot.lane.b32.xlu0 %v1471, 126
  %v1682 = vpop.permute.xlu0 %1681
  %1683 = vrot.lane.b32.xlu0 %v1473, 126
  %v1684 = vpop.permute.xlu0 %1683
  %1685 = vrot.lane.b32.xlu0 %v1477, 126
  %v1686 = vpop.permute.xlu0 %1685
  %1687 = vrot.lane.b32.xlu0 %v1479, 126
  %v1688 = vpop.permute.xlu0 %1687
  %1689 = vrot.lane.b32.xlu0 %v1481, 126
  %v1690 = vpop.permute.xlu0 %1689
  %1691 = vrot.lane.b32.xlu0 %v1483, 126
  %v1692 = vpop.permute.xlu0 %1691
  %v1693 = vsel %vm261, %v1630, %v1632
  %v1694 = vsel %vm261, %v1634, %v1636
  %v1695 = vsel %vm261, %v1638, %v1640
  %v1696 = vsel %vm261, %v1642, %v1644
  %v1697 = vsel %vm261, %v1646, %v1648
  %v1698 = vsel %vm261, %v1650, %v1652
  %v1699 = vsel %vm261, %v1654, %v1656
  %v1700 = vsel %vm261, %v1658, %v1660
  %v1701 = vsel %vm261, %v1662, %v1664
  %v1702 = vsel %vm261, %v1666, %v1668
  %v1703 = vsel %vm261, %v1670, %v1672
  %v1704 = vsel %vm261, %v1674, %v1676
  %v1705 = vsel %vm261, %v1678, %v1680
  %v1706 = vsel %vm261, %v1682, %v1684
  %v1707 = vsel %vm261, %v1686, %v1688
  %v1708 = vsel %vm261, %v1690, %v1692
  %v1741 = vpack.c.bf16 %v1411, %v1407
  %v1742 = vpack.c.bf16 %v1413, %v1409
  %v1743 = vpack.c.bf16 %v1421, %v1417
  %v1744 = vpack.c.bf16 %v1423, %v1419
  %v1745 = vpack.c.bf16 %v1431, %v1427
  %v1746 = vpack.c.bf16 %v1433, %v1429
  %v1747 = vpack.c.bf16 %v1441, %v1437
  %v1748 = vpack.c.bf16 %v1443, %v1439
  %v1749 = vpack.c.bf16 %v1451, %v1447
  %v1750 = vpack.c.bf16 %v1453, %v1449
  %v1751 = vpack.c.bf16 %v1461, %v1457
  %v1752 = vpack.c.bf16 %v1463, %v1459
  %v1753 = vpack.c.bf16 %v1471, %v1467
  %v1754 = vpack.c.bf16 %v1473, %v1469
  %v1755 = vpack.c.bf16 %v1481, %v1477
  %v1756 = vpack.c.bf16 %v1483, %v1479
  %v1757 = vpack.c.bf16 %v1582, %v1581
  %v1758 = vpack.c.bf16 %v1524, %v1520
  %v1759 = vpack.c.bf16 %v1584, %v1583
  %v1760 = vpack.c.bf16 %v1532, %v1528
  %v1761 = vpack.c.bf16 %v1586, %v1585
  %v1762 = vpack.c.bf16 %v1540, %v1536
  %v1763 = vpack.c.bf16 %v1588, %v1587
  %v1764 = vpack.c.bf16 %v1548, %v1544
  %v1765 = vpack.c.bf16 %v1590, %v1589
  %v1766 = vpack.c.bf16 %v1556, %v1552
  %v1767 = vpack.c.bf16 %v1592, %v1591
  %v1768 = vpack.c.bf16 %v1564, %v1560
  %v1769 = vpack.c.bf16 %v1594, %v1593
  %v1770 = vpack.c.bf16 %v1572, %v1568
  %v1771 = vpack.c.bf16 %v1596, %v1595
  %v1772 = vpack.c.bf16 %v1580, %v1576
  %v1773 = vpack.c.bf16 %v1694, %v1693
  %v1774 = vpack.c.bf16 %v1636, %v1632
  %v1775 = vpack.c.bf16 %v1696, %v1695
  %v1776 = vpack.c.bf16 %v1644, %v1640
  %v1777 = vpack.c.bf16 %v1698, %v1697
  %v1778 = vpack.c.bf16 %v1652, %v1648
  %v1779 = vpack.c.bf16 %v1700, %v1699
  %v1780 = vpack.c.bf16 %v1660, %v1656
  %v1781 = vpack.c.bf16 %v1702, %v1701
  %v1782 = vpack.c.bf16 %v1668, %v1664
  %v1783 = vpack.c.bf16 %v1704, %v1703
  %v1784 = vpack.c.bf16 %v1676, %v1672
  %v1785 = vpack.c.bf16 %v1706, %v1705
  %v1786 = vpack.c.bf16 %v1684, %v1680
  %v1787 = vpack.c.bf16 %v1708, %v1707
  %v1788 = vpack.c.bf16 %v1692, %v1688
  %1790 = vset.pattern.permute.xlu0 0
  %1791 = vperm.xlu0 %1790, %v150
  %v1792 = vpop.permute.xlu0 %1791
  %1795 = vset.pattern.permute.xlu0 0
  %1796 = vperm.xlu0 %1795, %v151
  %v1797 = vpop.permute.xlu0 %1796
  %1800 = vset.pattern.permute.xlu0 0
  %1801 = vperm.xlu0 %1800, %v152
  %v1802 = vpop.permute.xlu0 %1801
  %1805 = vset.pattern.permute.xlu0 0
  %1806 = vperm.xlu0 %1805, %v153
  %v1807 = vpop.permute.xlu0 %1806
  %1810 = vset.pattern.permute.xlu0 0
  %1811 = vperm.xlu0 %1810, %v154
  %v1812 = vpop.permute.xlu0 %1811
  %1815 = vset.pattern.permute.xlu0 0
  %1816 = vperm.xlu0 %1815, %v155
  %v1817 = vpop.permute.xlu0 %1816
  %1820 = vset.pattern.permute.xlu0 0
  %1821 = vperm.xlu0 %1820, %v156
  %v1822 = vpop.permute.xlu0 %1821
  %1825 = vset.pattern.permute.xlu0 0
  %1826 = vperm.xlu0 %1825, %v157
  %v1827 = vpop.permute.xlu0 %1826
  %1830 = vset.pattern.permute.xlu0 0
  %1831 = vperm.xlu0 %1830, %v158
  %v1832 = vpop.permute.xlu0 %1831
  %1835 = vset.pattern.permute.xlu0 0
  %1836 = vperm.xlu0 %1835, %v159
  %v1837 = vpop.permute.xlu0 %1836
  %1840 = vset.pattern.permute.xlu0 0
  %1841 = vperm.xlu0 %1840, %v160
  %v1842 = vpop.permute.xlu0 %1841
  %1845 = vset.pattern.permute.xlu0 0
  %1846 = vperm.xlu0 %1845, %v161
  %v1847 = vpop.permute.xlu0 %1846
  %1850 = vset.pattern.permute.xlu0 0
  %1851 = vperm.xlu0 %1850, %v162
  %v1852 = vpop.permute.xlu0 %1851
  %1855 = vset.pattern.permute.xlu0 0
  %1856 = vperm.xlu0 %1855, %v163
  %v1857 = vpop.permute.xlu0 %1856
  %1860 = vset.pattern.permute.xlu0 0
  %1861 = vperm.xlu0 %1860, %v164
  %v1862 = vpop.permute.xlu0 %1861
  %1865 = vset.pattern.permute.xlu0 0
  %1866 = vperm.xlu0 %1865, %v165
  %v1867 = vpop.permute.xlu0 %1866
  %v1901 = vunpack.c.l.b16 %v52
  %v1902 = vunpack.c.h.b16 %v52
  %v1903 = vunpack.c.l.b16 %v53
  %v1904 = vunpack.c.l.b16 %v54
  %v1905 = vunpack.c.h.b16 %v54
  %v1906 = vunpack.c.l.b16 %v55
  %v1907 = vunpack.c.l.b16 %v56
  %v1908 = vunpack.c.h.b16 %v56
  %v1909 = vunpack.c.l.b16 %v57
  %v1910 = vunpack.c.l.b16 %v58
  %v1911 = vunpack.c.h.b16 %v58
  %v1912 = vunpack.c.l.b16 %v59
  %v1913 = vunpack.c.l.b16 %v60
  %v1914 = vunpack.c.h.b16 %v60
  %v1915 = vunpack.c.l.b16 %v61
  %v1916 = vunpack.c.l.b16 %v62
  %v1917 = vunpack.c.h.b16 %v62
  %v1918 = vunpack.c.l.b16 %v63
  %v1919 = vunpack.c.l.b16 %v64
  %v1920 = vunpack.c.h.b16 %v64
  %v1921 = vunpack.c.l.b16 %v65
  %v1922 = vunpack.c.l.b16 %v66
  %v1923 = vunpack.c.h.b16 %v66
  %v1924 = vunpack.c.l.b16 %v67
  %v1925 = vunpack.c.l.b16 %v68
  %v1926 = vunpack.c.h.b16 %v68
  %v1927 = vunpack.c.l.b16 %v69
  %v1928 = vunpack.c.l.b16 %v70
  %v1929 = vunpack.c.h.b16 %v70
  %v1930 = vunpack.c.l.b16 %v71
  %v1931 = vunpack.c.l.b16 %v72
  %v1932 = vunpack.c.h.b16 %v72
  %v1933 = vunpack.c.l.b16 %v73
  %v1934 = vunpack.c.l.b16 %v74
  %v1935 = vunpack.c.h.b16 %v74
  %v1936 = vunpack.c.l.b16 %v75
  %v1937 = vunpack.c.l.b16 %v76
  %v1938 = vunpack.c.h.b16 %v76
  %v1939 = vunpack.c.l.b16 %v77
  %v1940 = vunpack.c.l.b16 %v78
  %v1941 = vunpack.c.h.b16 %v78
  %v1942 = vunpack.c.l.b16 %v79
  %v1943 = vunpack.c.l.b16 %v80
  %v1944 = vunpack.c.h.b16 %v80
  %v1945 = vunpack.c.l.b16 %v81
  %v1946 = vunpack.c.l.b16 %v82
  %v1947 = vunpack.c.h.b16 %v82
  %v1948 = vunpack.c.l.b16 %v83
  %v1949 = vpack.c.b16 %v1904, %v1901
  %v1950 = vpack.c.b16 %v1905, %v1902
  %v1951 = vpack.c.b16 %v1906, %v1903
  %v1952 = vpack.c.b16 %v1910, %v1907
  %v1953 = vpack.c.b16 %v1911, %v1908
  %v1954 = vpack.c.b16 %v1912, %v1909
  %v1955 = vpack.c.b16 %v1916, %v1913
  %v1956 = vpack.c.b16 %v1917, %v1914
  %v1957 = vpack.c.b16 %v1918, %v1915
  %v1958 = vpack.c.b16 %v1922, %v1919
  %v1959 = vpack.c.b16 %v1923, %v1920
  %v1960 = vpack.c.b16 %v1924, %v1921
  %v1961 = vpack.c.b16 %v1928, %v1925
  %v1962 = vpack.c.b16 %v1929, %v1926
  %v1963 = vpack.c.b16 %v1930, %v1927
  %v1964 = vpack.c.b16 %v1934, %v1931
  %v1965 = vpack.c.b16 %v1935, %v1932
  %v1966 = vpack.c.b16 %v1936, %v1933
  %v1967 = vpack.c.b16 %v1940, %v1937
  %v1968 = vpack.c.b16 %v1941, %v1938
  %v1969 = vpack.c.b16 %v1942, %v1939
  %v1970 = vpack.c.b16 %v1946, %v1943
  %v1971 = vpack.c.b16 %v1947, %v1944
  %v1972 = vpack.c.b16 %v1948, %v1945
  %1997 = vmatprep.subr.bf16.mxu0 %v1756
  %1998 = vmatpush1.bf16.msra.mxu0 %v1755
  %1999 = vmatprep.subr.bf16.mxu0 %v1754
  %2000 = vmatpush1.bf16.msra.mxu0 %v1753
  %2001 = vmatprep.subr.bf16.mxu0 %v1752
  %2002 = vmatpush1.bf16.msra.mxu0 %v1751
  %2003 = vmatprep.subr.bf16.mxu0 %v1750
  %2004 = vmatpush1.bf16.msra.mxu0 %v1749
  %2005 = vmatprep.subr.bf16.mxu0 %v1748
  %2006 = vmatpush1.bf16.msra.mxu0 %v1747
  %2007 = vmatprep.subr.bf16.mxu0 %v1746
  %2008 = vmatpush1.bf16.msra.mxu0 %v1745
  %2009 = vmatprep.subr.bf16.mxu0 %v1744
  %2010 = vmatpush1.bf16.msra.mxu0 %v1743
  %2011 = vmatprep.subr.bf16.mxu0 %v1742
  %2012 = vmatpush1.bf16.msra.mxu0 %v1741
  %2013 = vmatprep.subr.bf16.mxu0 %v1772
  %2014 = vmatpush2.bf16.msra.mxu0 %v1771
  %2015 = vmatprep.subr.bf16.mxu0 %v1770
  %2016 = vmatpush2.bf16.msra.mxu0 %v1769
  %2017 = vmatprep.subr.bf16.mxu0 %v1768
  %2018 = vmatpush2.bf16.msra.mxu0 %v1767
  %2019 = vmatprep.subr.bf16.mxu0 %v1766
  %2020 = vmatpush2.bf16.msra.mxu0 %v1765
  %2021 = vmatprep.subr.bf16.mxu0 %v1764
  %2022 = vmatpush2.bf16.msra.mxu0 %v1763
  %2023 = vmatprep.subr.bf16.mxu0 %v1762
  %2024 = vmatpush2.bf16.msra.mxu0 %v1761
  %2025 = vmatprep.subr.bf16.mxu0 %v1760
  %2026 = vmatpush2.bf16.msra.mxu0 %v1759
  %2027 = vmatprep.subr.bf16.mxu0 %v1758
  %2028 = vmatpush2.bf16.msra.mxu0 %v1757
  %2029 = vmatprep.mubr.bf16.mxu0 %v1950
  %2030 = vmatmul.mubr.bf16.gmra.mxu0 %v1949
  %v2031 = vpop.f32.mrf.mxu0
  %v2032 = vadd.f32 %v1792, %v2031
  %v2033 = vpop.f32.mrf.mxu0
  %v2034 = vadd.f32 %v1792, %v2033
  %v2035 = vpop.f32.mrf.mxu0
  %v2036 = vadd.f32 %v1797, %v2035
  %v2037 = vpop.f32.mrf.mxu0
  %v2038 = vadd.f32 %v1797, %v2037
  %2039 = vmatprep.mubr.bf16.mxu0 %v1953
  %2040 = vmatmul.mubr.bf16.gmra.mxu0 %v1952
  %v2041 = vpop.f32.mrf.mxu0
  %v2042 = vadd.f32 %v1802, %v2041
  %v2043 = vpop.f32.mrf.mxu0
  %v2044 = vadd.f32 %v1802, %v2043
  %v2045 = vpop.f32.mrf.mxu0
  %v2046 = vadd.f32 %v1807, %v2045
  %v2047 = vpop.f32.mrf.mxu0
  %v2048 = vadd.f32 %v1807, %v2047
  %2049 = vmatprep.mubr.bf16.mxu0 %v1956
  %2050 = vmatmul.mubr.bf16.gmra.mxu0 %v1955
  %v2051 = vpop.f32.mrf.mxu0
  %v2052 = vadd.f32 %v1812, %v2051
  %v2053 = vpop.f32.mrf.mxu0
  %v2054 = vadd.f32 %v1812, %v2053
  %v2055 = vpop.f32.mrf.mxu0
  %v2056 = vadd.f32 %v1817, %v2055
  %v2057 = vpop.f32.mrf.mxu0
  %v2058 = vadd.f32 %v1817, %v2057
  %2059 = vmatprep.mubr.bf16.mxu0 %v1959
  %2060 = vmatmul.mubr.bf16.gmra.mxu0 %v1958
  %v2061 = vpop.f32.mrf.mxu0
  %v2062 = vadd.f32 %v1822, %v2061
  %v2063 = vpop.f32.mrf.mxu0
  %v2064 = vadd.f32 %v1822, %v2063
  %v2065 = vpop.f32.mrf.mxu0
  %v2066 = vadd.f32 %v1827, %v2065
  %v2067 = vpop.f32.mrf.mxu0
  %v2068 = vadd.f32 %v1827, %v2067
  %2069 = vmatprep.mubr.bf16.mxu0 %v1962
  %2070 = vmatmul.mubr.bf16.gmra.mxu0 %v1961
  %v2071 = vpop.f32.mrf.mxu0
  %v2072 = vadd.f32 %v1832, %v2071
  %v2073 = vpop.f32.mrf.mxu0
  %v2074 = vadd.f32 %v1832, %v2073
  %v2075 = vpop.f32.mrf.mxu0
  %v2076 = vadd.f32 %v1837, %v2075
  %v2077 = vpop.f32.mrf.mxu0
  %v2078 = vadd.f32 %v1837, %v2077
  %2079 = vmatprep.mubr.bf16.mxu0 %v1965
  %2080 = vmatmul.mubr.bf16.gmra.mxu0 %v1964
  %v2081 = vpop.f32.mrf.mxu0
  %v2082 = vadd.f32 %v1842, %v2081
  %v2083 = vpop.f32.mrf.mxu0
  %v2084 = vadd.f32 %v1842, %v2083
  %v2085 = vpop.f32.mrf.mxu0
  %v2086 = vadd.f32 %v1847, %v2085
  %v2087 = vpop.f32.mrf.mxu0
  %v2088 = vadd.f32 %v1847, %v2087
  %2089 = vmatprep.mubr.bf16.mxu0 %v1968
  %2090 = vmatmul.mubr.bf16.gmra.mxu0 %v1967
  %v2091 = vpop.f32.mrf.mxu0
  %v2092 = vadd.f32 %v1852, %v2091
  %v2093 = vpop.f32.mrf.mxu0
  %v2094 = vadd.f32 %v1852, %v2093
  %v2095 = vpop.f32.mrf.mxu0
  %v2096 = vadd.f32 %v1857, %v2095
  %v2097 = vpop.f32.mrf.mxu0
  %v2098 = vadd.f32 %v1857, %v2097
  %2099 = vmatprep.mubr.bf16.mxu0 %v1971
  %2100 = vmatmul.mubr.bf16.gmra.mxu0 %v1970
  %v2101 = vpop.f32.mrf.mxu0
  %v2102 = vadd.f32 %v1862, %v2101
  %v2103 = vpop.f32.mrf.mxu0
  %v2104 = vadd.f32 %v1862, %v2103
  %v2105 = vpop.f32.mrf.mxu0
  %v2106 = vadd.f32 %v1867, %v2105
  %v2107 = vpop.f32.mrf.mxu0
  %v2108 = vadd.f32 %v1867, %v2107
  %2109 = vdwg.mxu0
  %2110 = vmatprep.subr.bf16.mxu0 %v1788
  %2111 = vmatpush1.bf16.msra.mxu0 %v1787
  %2112 = vmatprep.subr.bf16.mxu0 %v1786
  %2113 = vmatpush1.bf16.msra.mxu0 %v1785
  %2114 = vmatprep.subr.bf16.mxu0 %v1784
  %2115 = vmatpush1.bf16.msra.mxu0 %v1783
  %2116 = vmatprep.subr.bf16.mxu0 %v1782
  %2117 = vmatpush1.bf16.msra.mxu0 %v1781
  %2118 = vmatprep.subr.bf16.mxu0 %v1780
  %2119 = vmatpush1.bf16.msra.mxu0 %v1779
  %2120 = vmatprep.subr.bf16.mxu0 %v1778
  %2121 = vmatpush1.bf16.msra.mxu0 %v1777
  %2122 = vmatprep.subr.bf16.mxu0 %v1776
  %2123 = vmatpush1.bf16.msra.mxu0 %v1775
  %2124 = vmatprep.subr.bf16.mxu0 %v1774
  %2125 = vmatpush1.bf16.msra.mxu0 %v1773
  %2126 = vmatprep.subr.bf16.mxu0 0
  %2127 = vmatpush2.bf16.msra.mxu0 0
  %2128 = vmatprep.subr.bf16.mxu0 0
  %2129 = vmatpush2.bf16.msra.mxu0 0
  %2130 = vmatprep.subr.bf16.mxu0 0
  %2131 = vmatpush2.bf16.msra.mxu0 0
  %2132 = vmatprep.subr.bf16.mxu0 0
  %2133 = vmatpush2.bf16.msra.mxu0 0
  %2134 = vmatprep.subr.bf16.mxu0 0
  %2135 = vmatpush2.bf16.msra.mxu0 0
  %2136 = vmatprep.subr.bf16.mxu0 0
  %2137 = vmatpush2.bf16.msra.mxu0 0
  %2138 = vmatprep.subr.bf16.mxu0 0
  %2139 = vmatpush2.bf16.msra.mxu0 0
  %2140 = vmatprep.subr.bf16.mxu0 0
  %2141 = vmatpush2.bf16.msra.mxu0 0
  %2142 = vmatprep.mubr.bf16.mxu0 0
  %2143 = vmatmul.mubr.bf16.gmra.mxu0 %v1951
  %v2144 = vpop.f32.mrf.mxu0
  %v2145 = vadd.f32 %v2032, %v2144
  %v2146 = vpop.f32.mrf.mxu0
  %v2147 = vadd.f32 %v2034, %v2146
  %v2148 = vpop.f32.mrf.mxu0
  %v2149 = vadd.f32 %v2036, %v2148
  %v2150 = vpop.f32.mrf.mxu0
  %v2151 = vadd.f32 %v2038, %v2150
  %2152 = vmatprep.mubr.bf16.mxu0 0
  %2153 = vmatmul.mubr.bf16.gmra.mxu0 %v1954
  %v2154 = vpop.f32.mrf.mxu0
  %v2155 = vadd.f32 %v2042, %v2154
  %v2156 = vpop.f32.mrf.mxu0
  %v2157 = vadd.f32 %v2044, %v2156
  %v2158 = vpop.f32.mrf.mxu0
  %v2159 = vadd.f32 %v2046, %v2158
  %v2160 = vpop.f32.mrf.mxu0
  %v2161 = vadd.f32 %v2048, %v2160
  %2162 = vmatprep.mubr.bf16.mxu0 0
  %2163 = vmatmul.mubr.bf16.gmra.mxu0 %v1957
  %v2164 = vpop.f32.mrf.mxu0
  %v2165 = vadd.f32 %v2052, %v2164
  %v2166 = vpop.f32.mrf.mxu0
  %v2167 = vadd.f32 %v2054, %v2166
  %v2168 = vpop.f32.mrf.mxu0
  %v2169 = vadd.f32 %v2056, %v2168
  %v2170 = vpop.f32.mrf.mxu0
  %v2171 = vadd.f32 %v2058, %v2170
  %2172 = vmatprep.mubr.bf16.mxu0 0
  %2173 = vmatmul.mubr.bf16.gmra.mxu0 %v1960
  %v2174 = vpop.f32.mrf.mxu0
  %v2175 = vadd.f32 %v2062, %v2174
  %v2176 = vpop.f32.mrf.mxu0
  %v2177 = vadd.f32 %v2064, %v2176
  %v2178 = vpop.f32.mrf.mxu0
  %v2179 = vadd.f32 %v2066, %v2178
  %v2180 = vpop.f32.mrf.mxu0
  %v2181 = vadd.f32 %v2068, %v2180
  %2182 = vmatprep.mubr.bf16.mxu0 0
  %2183 = vmatmul.mubr.bf16.gmra.mxu0 %v1963
  %v2184 = vpop.f32.mrf.mxu0
  %v2185 = vadd.f32 %v2072, %v2184
  %v2186 = vpop.f32.mrf.mxu0
  %v2187 = vadd.f32 %v2074, %v2186
  %v2188 = vpop.f32.mrf.mxu0
  %v2189 = vadd.f32 %v2076, %v2188
  %v2190 = vpop.f32.mrf.mxu0
  %v2191 = vadd.f32 %v2078, %v2190
  %2192 = vmatprep.mubr.bf16.mxu0 0
  %2193 = vmatmul.mubr.bf16.gmra.mxu0 %v1966
  %v2194 = vpop.f32.mrf.mxu0
  %v2195 = vadd.f32 %v2082, %v2194
  %v2196 = vpop.f32.mrf.mxu0
  %v2197 = vadd.f32 %v2084, %v2196
  %v2198 = vpop.f32.mrf.mxu0
  %v2199 = vadd.f32 %v2086, %v2198
  %v2200 = vpop.f32.mrf.mxu0
  %v2201 = vadd.f32 %v2088, %v2200
  %2202 = vmatprep.mubr.bf16.mxu0 0
  %2203 = vmatmul.mubr.bf16.gmra.mxu0 %v1969
  %v2204 = vpop.f32.mrf.mxu0
  %v2205 = vadd.f32 %v2092, %v2204
  %v2206 = vpop.f32.mrf.mxu0
  %v2207 = vadd.f32 %v2094, %v2206
  %v2208 = vpop.f32.mrf.mxu0
  %v2209 = vadd.f32 %v2096, %v2208
  %v2210 = vpop.f32.mrf.mxu0
  %v2211 = vadd.f32 %v2098, %v2210
  %2212 = vmatprep.mubr.bf16.mxu0 0
  %2213 = vmatmul.mubr.bf16.gmra.mxu0 %v1972
  %v2214 = vpop.f32.mrf.mxu0
  %v2215 = vadd.f32 %v2102, %v2214
  %v2216 = vpop.f32.mrf.mxu0
  %v2217 = vadd.f32 %v2104, %v2216
  %v2218 = vpop.f32.mrf.mxu0
  %v2219 = vadd.f32 %v2106, %v2218
  %v2220 = vpop.f32.mrf.mxu0
  %v2221 = vadd.f32 %v2108, %v2220
  %2222 = vdwg.mxu0
  %v2223 = vmax.f32 %v2145, 0.0
  %v2224 = vmax.f32 %v2147, 0.0
  %v2225 = vmax.f32 %v2149, 0.0
  %v2226 = vmax.f32 %v2151, 0.0
  %v2227 = vmax.f32 %v2155, 0.0
  %v2228 = vmax.f32 %v2157, 0.0
  %v2229 = vmax.f32 %v2159, 0.0
  %v2230 = vmax.f32 %v2161, 0.0
  %v2231 = vmax.f32 %v2165, 0.0
  %v2232 = vmax.f32 %v2167, 0.0
  %v2233 = vmax.f32 %v2169, 0.0
  %v2234 = vmax.f32 %v2171, 0.0
  %v2235 = vmax.f32 %v2175, 0.0
  %v2236 = vmax.f32 %v2177, 0.0
  %v2237 = vmax.f32 %v2179, 0.0
  %v2238 = vmax.f32 %v2181, 0.0
  %v2239 = vmax.f32 %v2185, 0.0
  %v2240 = vmax.f32 %v2187, 0.0
  %v2241 = vmax.f32 %v2189, 0.0
  %v2242 = vmax.f32 %v2191, 0.0
  %v2243 = vmax.f32 %v2195, 0.0
  %v2244 = vmax.f32 %v2197, 0.0
  %v2245 = vmax.f32 %v2199, 0.0
  %v2246 = vmax.f32 %v2201, 0.0
  %v2247 = vmax.f32 %v2205, 0.0
  %v2248 = vmax.f32 %v2207, 0.0
  %v2249 = vmax.f32 %v2209, 0.0
  %v2250 = vmax.f32 %v2211, 0.0
  %v2251 = vmax.f32 %v2215, 0.0
  %v2252 = vmax.f32 %v2217, 0.0
  %v2253 = vmax.f32 %v2219, 0.0
  %v2254 = vmax.f32 %v2221, 0.0
  %2287 = vrot.lane.b32.xlu0 %v2223, 127
  %v2288 = vpop.permute.xlu0 %2287
  %2289 = vrot.lane.b32.xlu0 %v2224, 127
  %v2290 = vpop.permute.xlu0 %2289
  %2291 = vrot.lane.b32.xlu0 %v2225, 127
  %v2292 = vpop.permute.xlu0 %2291
  %2293 = vrot.lane.b32.xlu0 %v2226, 127
  %v2294 = vpop.permute.xlu0 %2293
  %2295 = vrot.lane.b32.xlu0 %v2227, 127
  %v2296 = vpop.permute.xlu0 %2295
  %2297 = vrot.lane.b32.xlu0 %v2228, 127
  %v2298 = vpop.permute.xlu0 %2297
  %2299 = vrot.lane.b32.xlu0 %v2229, 127
  %v2300 = vpop.permute.xlu0 %2299
  %2301 = vrot.lane.b32.xlu0 %v2230, 127
  %v2302 = vpop.permute.xlu0 %2301
  %2303 = vrot.lane.b32.xlu0 %v2231, 127
  %v2304 = vpop.permute.xlu0 %2303
  %2305 = vrot.lane.b32.xlu0 %v2232, 127
  %v2306 = vpop.permute.xlu0 %2305
  %2307 = vrot.lane.b32.xlu0 %v2233, 127
  %v2308 = vpop.permute.xlu0 %2307
  %2309 = vrot.lane.b32.xlu0 %v2234, 127
  %v2310 = vpop.permute.xlu0 %2309
  %2311 = vrot.lane.b32.xlu0 %v2235, 127
  %v2312 = vpop.permute.xlu0 %2311
  %2313 = vrot.lane.b32.xlu0 %v2236, 127
  %v2314 = vpop.permute.xlu0 %2313
  %2315 = vrot.lane.b32.xlu0 %v2237, 127
  %v2316 = vpop.permute.xlu0 %2315
  %2317 = vrot.lane.b32.xlu0 %v2238, 127
  %v2318 = vpop.permute.xlu0 %2317
  %2319 = vrot.lane.b32.xlu0 %v2239, 127
  %v2320 = vpop.permute.xlu0 %2319
  %2321 = vrot.lane.b32.xlu0 %v2240, 127
  %v2322 = vpop.permute.xlu0 %2321
  %2323 = vrot.lane.b32.xlu0 %v2241, 127
  %v2324 = vpop.permute.xlu0 %2323
  %2325 = vrot.lane.b32.xlu0 %v2242, 127
  %v2326 = vpop.permute.xlu0 %2325
  %2327 = vrot.lane.b32.xlu0 %v2243, 127
  %v2328 = vpop.permute.xlu0 %2327
  %2329 = vrot.lane.b32.xlu0 %v2244, 127
  %v2330 = vpop.permute.xlu0 %2329
  %2331 = vrot.lane.b32.xlu0 %v2245, 127
  %v2332 = vpop.permute.xlu0 %2331
  %2333 = vrot.lane.b32.xlu0 %v2246, 127
  %v2334 = vpop.permute.xlu0 %2333
  %2335 = vrot.lane.b32.xlu0 %v2247, 127
  %v2336 = vpop.permute.xlu0 %2335
  %2337 = vrot.lane.b32.xlu0 %v2248, 127
  %v2338 = vpop.permute.xlu0 %2337
  %2339 = vrot.lane.b32.xlu0 %v2249, 127
  %v2340 = vpop.permute.xlu0 %2339
  %2341 = vrot.lane.b32.xlu0 %v2250, 127
  %v2342 = vpop.permute.xlu0 %2341
  %2343 = vrot.lane.b32.xlu0 %v2251, 127
  %v2344 = vpop.permute.xlu0 %2343
  %2345 = vrot.lane.b32.xlu0 %v2252, 127
  %v2346 = vpop.permute.xlu0 %2345
  %2347 = vrot.lane.b32.xlu0 %v2253, 127
  %v2348 = vpop.permute.xlu0 %2347
  %2349 = vrot.lane.b32.xlu0 %v2254, 127
  %v2350 = vpop.permute.xlu0 %2349
  %v2351 = vsel %vm216, %v2288, %v2290
  %v2352 = vsel %vm216, %v2292, %v2294
  %v2353 = vsel %vm216, %v2296, %v2298
  %v2354 = vsel %vm216, %v2300, %v2302
  %v2355 = vsel %vm216, %v2304, %v2306
  %v2356 = vsel %vm216, %v2308, %v2310
  %v2357 = vsel %vm216, %v2312, %v2314
  %v2358 = vsel %vm216, %v2316, %v2318
  %v2359 = vsel %vm216, %v2320, %v2322
  %v2360 = vsel %vm216, %v2324, %v2326
  %v2361 = vsel %vm216, %v2328, %v2330
  %v2362 = vsel %vm216, %v2332, %v2334
  %v2363 = vsel %vm216, %v2336, %v2338
  %v2364 = vsel %vm216, %v2340, %v2342
  %v2365 = vsel %vm216, %v2344, %v2346
  %v2366 = vsel %vm216, %v2348, %v2350
  %v2399 = vmax.f32 %v2223, %v2351
  %v2400 = vmax.f32 %v2224, %v2290
  %v2401 = vmax.f32 %v2225, %v2352
  %v2402 = vmax.f32 %v2226, %v2294
  %v2403 = vmax.f32 %v2227, %v2353
  %v2404 = vmax.f32 %v2228, %v2298
  %v2405 = vmax.f32 %v2229, %v2354
  %v2406 = vmax.f32 %v2230, %v2302
  %v2407 = vmax.f32 %v2231, %v2355
  %v2408 = vmax.f32 %v2232, %v2306
  %v2409 = vmax.f32 %v2233, %v2356
  %v2410 = vmax.f32 %v2234, %v2310
  %v2411 = vmax.f32 %v2235, %v2357
  %v2412 = vmax.f32 %v2236, %v2314
  %v2413 = vmax.f32 %v2237, %v2358
  %v2414 = vmax.f32 %v2238, %v2318
  %v2415 = vmax.f32 %v2239, %v2359
  %v2416 = vmax.f32 %v2240, %v2322
  %v2417 = vmax.f32 %v2241, %v2360
  %v2418 = vmax.f32 %v2242, %v2326
  %v2419 = vmax.f32 %v2243, %v2361
  %v2420 = vmax.f32 %v2244, %v2330
  %v2421 = vmax.f32 %v2245, %v2362
  %v2422 = vmax.f32 %v2246, %v2334
  %v2423 = vmax.f32 %v2247, %v2363
  %v2424 = vmax.f32 %v2248, %v2338
  %v2425 = vmax.f32 %v2249, %v2364
  %v2426 = vmax.f32 %v2250, %v2342
  %v2427 = vmax.f32 %v2251, %v2365
  %v2428 = vmax.f32 %v2252, %v2346
  %v2429 = vmax.f32 %v2253, %v2366
  %v2430 = vmax.f32 %v2254, %v2350
  %v2431 = vpack.c.bf16 %v2399, %v2399
  %v2432 = vpack.c.bf16 %v2400, %v2400
  %v2433 = vld [vmem:[%s6] sm:$0xf]
  %v2434 = vld [vmem:[%s6 + $0x4] sm:$0xf]
  %v2435 = vld [vmem:[%s6 + $0x8] sm:$0xf]
  %v2436 = vld [vmem:[%s6 + $0xc] sm:$0xf]
  %v2437 = vld [vmem:[%s6 + $0x10] sm:$0xf]
  %v2438 = vld [vmem:[%s6 + $0x14] sm:$0xf]
  %v2439 = vld [vmem:[%s6 + $0x18] sm:$0xf]
  %v2440 = vld [vmem:[%s6 + $0x1c] sm:$0xf]
  %v2441 = vld [vmem:[%s6 + $0x20] sm:$0xf]
  %v2442 = vld [vmem:[%s6 + $0x24] sm:$0xf]
  %v2443 = vld [vmem:[%s6 + $0x28] sm:$0xf]
  %v2444 = vld [vmem:[%s6 + $0x2c] sm:$0xf]
  %v2445 = vld [vmem:[%s6 + $0x30] sm:$0xf]
  %v2446 = vld [vmem:[%s6 + $0x34] sm:$0xf]
  %v2447 = vld [vmem:[%s6 + $0x38] sm:$0xf]
  %v2448 = vld [vmem:[%s6 + $0x3c] sm:$0xf]
  %v2449 = vld [vmem:[%s6 + $0x40] sm:$0xf]
  %v2450 = vld [vmem:[%s6 + $0x44] sm:$0xf]
  %v2451 = vld [vmem:[%s6 + $0x48] sm:$0xf]
  %v2452 = vld [vmem:[%s6 + $0x4c] sm:$0xf]
  %v2453 = vld [vmem:[%s6 + $0x50] sm:$0xf]
  %v2454 = vld [vmem:[%s6 + $0x54] sm:$0xf]
  %v2455 = vpack.c.bf16 %v2401, %v2401
  %v2456 = vpack.c.bf16 %v2402, %v2402
  %s2457 = scalar_lea.vmem %s6, 88
  %v2458 = vld [vmem:[%s2457] sm:$0xf]
  %v2459 = vld [vmem:[%s2457 + $0x4] sm:$0xf]
  %v2460 = vld [vmem:[%s2457 + $0x8] sm:$0xf]
  %v2461 = vld [vmem:[%s2457 + $0xc] sm:$0xf]
  %v2462 = vld [vmem:[%s2457 + $0x10] sm:$0xf]
  %v2463 = vld [vmem:[%s2457 + $0x14] sm:$0xf]
  %v2464 = vld [vmem:[%s2457 + $0x18] sm:$0xf]
  %v2465 = vld [vmem:[%s2457 + $0x1c] sm:$0xf]
  %v2466 = vld [vmem:[%s2457 + $0x20] sm:$0xf]
  %v2467 = vld [vmem:[%s2457 + $0x24] sm:$0xf]
  %v2468 = vld [vmem:[%s2457 + $0x28] sm:$0xf]
  %v2469 = vld [vmem:[%s2457 + $0x2c] sm:$0xf]
  %v2470 = vld [vmem:[%s2457 + $0x30] sm:$0xf]
  %v2471 = vld [vmem:[%s2457 + $0x34] sm:$0xf]
  %v2472 = vld [vmem:[%s2457 + $0x38] sm:$0xf]
  %v2473 = vld [vmem:[%s2457 + $0x3c] sm:$0xf]
  %v2474 = vld [vmem:[%s2457 + $0x40] sm:$0xf]
  %v2475 = vld [vmem:[%s2457 + $0x44] sm:$0xf]
  %v2476 = vld [vmem:[%s2457 + $0x48] sm:$0xf]
  %v2477 = vld [vmem:[%s2457 + $0x4c] sm:$0xf]
  %v2478 = vld [vmem:[%s2457 + $0x50] sm:$0xf]
  %v2479 = vld [vmem:[%s2457 + $0x54] sm:$0xf]
  %v2502 = vunpack.c.l.b16 %v2458
  %v2503 = vunpack.c.l.b16 %v2459
  %v2504 = vunpack.c.l.b16 %v2460
  %v2505 = vunpack.c.l.b16 %v2461
  %v2506 = vunpack.c.l.b16 %v2462
  %v2507 = vunpack.c.l.b16 %v2463
  %v2508 = vunpack.c.l.b16 %v2464
  %v2509 = vunpack.c.l.b16 %v2465
  %v2510 = vunpack.c.l.b16 %v2466
  %v2511 = vunpack.c.l.b16 %v2467
  %v2512 = vunpack.c.l.b16 %v2468
  %v2513 = vunpack.c.l.b16 %v2469
  %v2514 = vunpack.c.l.b16 %v2470
  %v2515 = vunpack.c.l.b16 %v2471
  %v2516 = vunpack.c.l.b16 %v2472
  %v2517 = vunpack.c.l.b16 %v2473
  %v2518 = vunpack.c.l.b16 %v2474
  %v2519 = vunpack.c.l.b16 %v2475
  %v2520 = vunpack.c.l.b16 %v2476
  %v2521 = vunpack.c.l.b16 %v2477
  %v2522 = vunpack.c.l.b16 %v2478
  %v2523 = vunpack.c.l.b16 %v2479
  %v2524 = vpack.c.b16 %v2503, %v2502
  %v2525 = vpack.c.b16 %v2505, %v2504
  %v2526 = vpack.c.b16 %v2507, %v2506
  %v2527 = vpack.c.b16 %v2509, %v2508
  %v2528 = vpack.c.b16 %v2511, %v2510
  %v2529 = vpack.c.b16 %v2513, %v2512
  %v2530 = vpack.c.b16 %v2515, %v2514
  %v2531 = vpack.c.b16 %v2517, %v2516
  %v2532 = vpack.c.b16 %v2519, %v2518
  %v2533 = vpack.c.b16 %v2521, %v2520
  %v2534 = vpack.c.b16 %v2523, %v2522
  %vm2545 = vcmask 384000
  %v2547 = vsel %vm2545, %v2456, 0
  %vm2549 = vcmask 1046528
  %vm2550 = vcmask 1047552
  %v2551 = vsel %vm2549, 4294967295, 65535
  %v2552 = vsel %vm2550, %v2551, 0
  %v2554 = vand.u32 %v2534, %v2552
  %2556 = vmatprep.subr.bf16.mxu0 0
  %2557 = vmatpush1.bf16.msra.mxu0 %v2531
  %2558 = vmatprep.subr.bf16.mxu0 0
  %2559 = vmatpush1.bf16.msra.mxu0 %v2530
  %2560 = vmatprep.subr.bf16.mxu0 0
  %2561 = vmatpush1.bf16.msra.mxu0 %v2529
  %2562 = vmatprep.subr.bf16.mxu0 0
  %2563 = vmatpush1.bf16.msra.mxu0 %v2528
  %2564 = vmatprep.subr.bf16.mxu0 0
  %2565 = vmatpush1.bf16.msra.mxu0 %v2527
  %2566 = vmatprep.subr.bf16.mxu0 0
  %2567 = vmatpush1.bf16.msra.mxu0 %v2526
  %2568 = vmatprep.subr.bf16.mxu0 0
  %2569 = vmatpush1.bf16.msra.mxu0 %v2525
  %2570 = vmatprep.subr.bf16.mxu0 0
  %2571 = vmatpush1.bf16.msra.mxu0 %v2524
  %2572 = vmatprep.subr.bf16.mxu0 0
  %2573 = vmatpush2.bf16.msra.mxu0 0
  %2574 = vmatprep.subr.bf16.mxu0 0
  %2575 = vmatpush2.bf16.msra.mxu0 0
  %2576 = vmatprep.subr.bf16.mxu0 0
  %2577 = vmatpush2.bf16.msra.mxu0 0
  %2578 = vmatprep.subr.bf16.mxu0 0
  %2579 = vmatpush2.bf16.msra.mxu0 0
  %2580 = vmatprep.subr.bf16.mxu0 0
  %2581 = vmatpush2.bf16.msra.mxu0 0
  %2582 = vmatprep.subr.bf16.mxu0 0
  %2583 = vmatpush2.bf16.msra.mxu0 %v2554
  %2584 = vmatprep.subr.bf16.mxu0 0
  %2585 = vmatpush2.bf16.msra.mxu0 %v2533
  %2586 = vmatprep.subr.bf16.mxu0 0
  %2587 = vmatpush2.bf16.msra.mxu0 %v2532
  %2588 = vmatprep.mubr.bf16.mxu0 %v2547
  %2589 = vmatmul.mubr.bf16.gmra.mxu0 %v2455
  %v2590 = vpop.f32.mrf.mxu0
  %v2591 = vadd.f32 0.0, %v2590
  %v2592 = vpop.f32.mrf.mxu0
  %v2593 = vpop.f32.mrf.mxu0
  %v2594 = vpop.f32.mrf.mxu0
  %2595 = vdwg.mxu0
  %v2618 = vunpack.c.l.b16 %v2433
  %v2619 = vunpack.c.l.b16 %v2434
  %v2620 = vunpack.c.l.b16 %v2435
  %v2621 = vunpack.c.l.b16 %v2436
  %v2622 = vunpack.c.l.b16 %v2437
  %v2623 = vunpack.c.l.b16 %v2438
  %v2624 = vunpack.c.l.b16 %v2439
  %v2625 = vunpack.c.l.b16 %v2440
  %v2626 = vunpack.c.l.b16 %v2441
  %v2627 = vunpack.c.l.b16 %v2442
  %v2628 = vunpack.c.l.b16 %v2443
  %v2629 = vunpack.c.l.b16 %v2444
  %v2630 = vunpack.c.l.b16 %v2445
  %v2631 = vunpack.c.l.b16 %v2446
  %v2632 = vunpack.c.l.b16 %v2447
  %v2633 = vunpack.c.l.b16 %v2448
  %v2634 = vunpack.c.l.b16 %v2449
  %v2635 = vunpack.c.l.b16 %v2450
  %v2636 = vunpack.c.l.b16 %v2451
  %v2637 = vunpack.c.l.b16 %v2452
  %v2638 = vunpack.c.l.b16 %v2453
  %v2639 = vunpack.c.l.b16 %v2454
  %v2640 = vpack.c.b16 %v2619, %v2618
  %v2641 = vpack.c.b16 %v2621, %v2620
  %v2642 = vpack.c.b16 %v2623, %v2622
  %v2643 = vpack.c.b16 %v2625, %v2624
  %v2644 = vpack.c.b16 %v2627, %v2626
  %v2645 = vpack.c.b16 %v2629, %v2628
  %v2646 = vpack.c.b16 %v2631, %v2630
  %v2647 = vpack.c.b16 %v2633, %v2632
  %v2648 = vpack.c.b16 %v2635, %v2634
  %v2649 = vpack.c.b16 %v2637, %v2636
  %v2650 = vpack.c.b16 %v2639, %v2638
  %v2662 = vsel %vm2545, %v2432, 0
  %v2665 = vand.u32 %v2650, %v2552
  %2667 = vmatprep.subr.bf16.mxu0 0
  %2668 = vmatpush1.bf16.msra.mxu0 %v2647
  %2669 = vmatprep.subr.bf16.mxu0 0
  %2670 = vmatpush1.bf16.msra.mxu0 %v2646
  %2671 = vmatprep.subr.bf16.mxu0 0
  %2672 = vmatpush1.bf16.msra.mxu0 %v2645
  %2673 = vmatprep.subr.bf16.mxu0 0
  %2674 = vmatpush1.bf16.msra.mxu0 %v2644
  %2675 = vmatprep.subr.bf16.mxu0 0
  %2676 = vmatpush1.bf16.msra.mxu0 %v2643
  %2677 = vmatprep.subr.bf16.mxu0 0
  %2678 = vmatpush1.bf16.msra.mxu0 %v2642
  %2679 = vmatprep.subr.bf16.mxu0 0
  %2680 = vmatpush1.bf16.msra.mxu0 %v2641
  %2681 = vmatprep.subr.bf16.mxu0 0
  %2682 = vmatpush1.bf16.msra.mxu0 %v2640
  %2683 = vmatprep.subr.bf16.mxu0 0
  %2684 = vmatpush2.bf16.msra.mxu0 0
  %2685 = vmatprep.subr.bf16.mxu0 0
  %2686 = vmatpush2.bf16.msra.mxu0 0
  %2687 = vmatprep.subr.bf16.mxu0 0
  %2688 = vmatpush2.bf16.msra.mxu0 0
  %2689 = vmatprep.subr.bf16.mxu0 0
  %2690 = vmatpush2.bf16.msra.mxu0 0
  %2691 = vmatprep.subr.bf16.mxu0 0
  %2692 = vmatpush2.bf16.msra.mxu0 0
  %2693 = vmatprep.subr.bf16.mxu0 0
  %2694 = vmatpush2.bf16.msra.mxu0 %v2665
  %2695 = vmatprep.subr.bf16.mxu0 0
  %2696 = vmatpush2.bf16.msra.mxu0 %v2649
  %2697 = vmatprep.subr.bf16.mxu0 0
  %2698 = vmatpush2.bf16.msra.mxu0 %v2648
  %2699 = vmatprep.mubr.bf16.mxu0 %v2662
  %2700 = vmatmul.mubr.bf16.gmra.mxu0 %v2431
  %v2701 = vpop.f32.mrf.mxu0
  %v2702 = vadd.f32 %v2591, %v2701
  %v2703 = vpop.f32.mrf.mxu0
  %v2704 = vpop.f32.mrf.mxu0
  %v2705 = vpop.f32.mrf.mxu0
  %2706 = vdwg.mxu0
  %v2707 = vpack.c.bf16 %v2403, %v2403
  %v2708 = vpack.c.bf16 %v2404, %v2404
  %s2709 = scalar_lea.vmem %s6, 176
  %v2710 = vld [vmem:[%s2709] sm:$0xf]
  %v2711 = vld [vmem:[%s2709 + $0x4] sm:$0xf]
  %v2712 = vld [vmem:[%s2709 + $0x8] sm:$0xf]
  %v2713 = vld [vmem:[%s2709 + $0xc] sm:$0xf]
  %v2714 = vld [vmem:[%s2709 + $0x10] sm:$0xf]
  %v2715 = vld [vmem:[%s2709 + $0x14] sm:$0xf]
  %v2716 = vld [vmem:[%s2709 + $0x18] sm:$0xf]
  %v2717 = vld [vmem:[%s2709 + $0x1c] sm:$0xf]
  %v2718 = vld [vmem:[%s2709 + $0x20] sm:$0xf]
  %v2719 = vld [vmem:[%s2709 + $0x24] sm:$0xf]
  %v2720 = vld [vmem:[%s2709 + $0x28] sm:$0xf]
  %v2721 = vld [vmem:[%s2709 + $0x2c] sm:$0xf]
  %v2722 = vld [vmem:[%s2709 + $0x30] sm:$0xf]
  %v2723 = vld [vmem:[%s2709 + $0x34] sm:$0xf]
  %v2724 = vld [vmem:[%s2709 + $0x38] sm:$0xf]
  %v2725 = vld [vmem:[%s2709 + $0x3c] sm:$0xf]
  %v2726 = vld [vmem:[%s2709 + $0x40] sm:$0xf]
  %v2727 = vld [vmem:[%s2709 + $0x44] sm:$0xf]
  %v2728 = vld [vmem:[%s2709 + $0x48] sm:$0xf]
  %v2729 = vld [vmem:[%s2709 + $0x4c] sm:$0xf]
  %v2730 = vld [vmem:[%s2709 + $0x50] sm:$0xf]
  %v2731 = vld [vmem:[%s2709 + $0x54] sm:$0xf]
  %v2754 = vunpack.c.l.b16 %v2710
  %v2755 = vunpack.c.l.b16 %v2711
  %v2756 = vunpack.c.l.b16 %v2712
  %v2757 = vunpack.c.l.b16 %v2713
  %v2758 = vunpack.c.l.b16 %v2714
  %v2759 = vunpack.c.l.b16 %v2715
  %v2760 = vunpack.c.l.b16 %v2716
  %v2761 = vunpack.c.l.b16 %v2717
  %v2762 = vunpack.c.l.b16 %v2718
  %v2763 = vunpack.c.l.b16 %v2719
  %v2764 = vunpack.c.l.b16 %v2720
  %v2765 = vunpack.c.l.b16 %v2721
  %v2766 = vunpack.c.l.b16 %v2722
  %v2767 = vunpack.c.l.b16 %v2723
  %v2768 = vunpack.c.l.b16 %v2724
  %v2769 = vunpack.c.l.b16 %v2725
  %v2770 = vunpack.c.l.b16 %v2726
  %v2771 = vunpack.c.l.b16 %v2727
  %v2772 = vunpack.c.l.b16 %v2728
  %v2773 = vunpack.c.l.b16 %v2729
  %v2774 = vunpack.c.l.b16 %v2730
  %v2775 = vunpack.c.l.b16 %v2731
  %v2776 = vpack.c.b16 %v2755, %v2754
  %v2777 = vpack.c.b16 %v2757, %v2756
  %v2778 = vpack.c.b16 %v2759, %v2758
  %v2779 = vpack.c.b16 %v2761, %v2760
  %v2780 = vpack.c.b16 %v2763, %v2762
  %v2781 = vpack.c.b16 %v2765, %v2764
  %v2782 = vpack.c.b16 %v2767, %v2766
  %v2783 = vpack.c.b16 %v2769, %v2768
  %v2784 = vpack.c.b16 %v2771, %v2770
  %v2785 = vpack.c.b16 %v2773, %v2772
  %v2786 = vpack.c.b16 %v2775, %v2774
  %v2798 = vsel %vm2545, %v2708, 0
  %v2801 = vand.u32 %v2786, %v2552
  %2803 = vmatprep.subr.bf16.mxu0 0
  %2804 = vmatpush1.bf16.msra.mxu0 %v2783
  %2805 = vmatprep.subr.bf16.mxu0 0
  %2806 = vmatpush1.bf16.msra.mxu0 %v2782
  %2807 = vmatprep.subr.bf16.mxu0 0
  %2808 = vmatpush1.bf16.msra.mxu0 %v2781
  %2809 = vmatprep.subr.bf16.mxu0 0
  %2810 = vmatpush1.bf16.msra.mxu0 %v2780
  %2811 = vmatprep.subr.bf16.mxu0 0
  %2812 = vmatpush1.bf16.msra.mxu0 %v2779
  %2813 = vmatprep.subr.bf16.mxu0 0
  %2814 = vmatpush1.bf16.msra.mxu0 %v2778
  %2815 = vmatprep.subr.bf16.mxu0 0
  %2816 = vmatpush1.bf16.msra.mxu0 %v2777
  %2817 = vmatprep.subr.bf16.mxu0 0
  %2818 = vmatpush1.bf16.msra.mxu0 %v2776
  %2819 = vmatprep.subr.bf16.mxu0 0
  %2820 = vmatpush2.bf16.msra.mxu0 0
  %2821 = vmatprep.subr.bf16.mxu0 0
  %2822 = vmatpush2.bf16.msra.mxu0 0
  %2823 = vmatprep.subr.bf16.mxu0 0
  %2824 = vmatpush2.bf16.msra.mxu0 0
  %2825 = vmatprep.subr.bf16.mxu0 0
  %2826 = vmatpush2.bf16.msra.mxu0 0
  %2827 = vmatprep.subr.bf16.mxu0 0
  %2828 = vmatpush2.bf16.msra.mxu0 0
  %2829 = vmatprep.subr.bf16.mxu0 0
  %2830 = vmatpush2.bf16.msra.mxu0 %v2801
  %2831 = vmatprep.subr.bf16.mxu0 0
  %2832 = vmatpush2.bf16.msra.mxu0 %v2785
  %2833 = vmatprep.subr.bf16.mxu0 0
  %2834 = vmatpush2.bf16.msra.mxu0 %v2784
  %2835 = vmatprep.mubr.bf16.mxu0 %v2798
  %2836 = vmatmul.mubr.bf16.gmra.mxu0 %v2707
  %v2837 = vpop.f32.mrf.mxu0
  %v2838 = vadd.f32 0.0, %v2837
  %v2839 = vpop.f32.mrf.mxu0
  %v2840 = vpop.f32.mrf.mxu0
  %v2841 = vpop.f32.mrf.mxu0
  %2842 = vdwg.mxu0
  %v2843 = vadd.f32 %v2702, %v2838
  %v2844 = vpack.c.bf16 %v2405, %v2405
  %v2845 = vpack.c.bf16 %v2406, %v2406
  %s2846 = scalar_lea.vmem %s6, 264
  %v2847 = vld [vmem:[%s2846] sm:$0xf]
  %v2848 = vld [vmem:[%s2846 + $0x4] sm:$0xf]
  %v2849 = vld [vmem:[%s2846 + $0x8] sm:$0xf]
  %v2850 = vld [vmem:[%s2846 + $0xc] sm:$0xf]
  %v2851 = vld [vmem:[%s2846 + $0x10] sm:$0xf]
  %v2852 = vld [vmem:[%s2846 + $0x14] sm:$0xf]
  %v2853 = vld [vmem:[%s2846 + $0x18] sm:$0xf]
  %v2854 = vld [vmem:[%s2846 + $0x1c] sm:$0xf]
  %v2855 = vld [vmem:[%s2846 + $0x20] sm:$0xf]
  %v2856 = vld [vmem:[%s2846 + $0x24] sm:$0xf]
  %v2857 = vld [vmem:[%s2846 + $0x28] sm:$0xf]
  %v2858 = vld [vmem:[%s2846 + $0x2c] sm:$0xf]
  %v2859 = vld [vmem:[%s2846 + $0x30] sm:$0xf]
  %v2860 = vld [vmem:[%s2846 + $0x34] sm:$0xf]
  %v2861 = vld [vmem:[%s2846 + $0x38] sm:$0xf]
  %v2862 = vld [vmem:[%s2846 + $0x3c] sm:$0xf]
  %v2863 = vld [vmem:[%s2846 + $0x40] sm:$0xf]
  %v2864 = vld [vmem:[%s2846 + $0x44] sm:$0xf]
  %v2865 = vld [vmem:[%s2846 + $0x48] sm:$0xf]
  %v2866 = vld [vmem:[%s2846 + $0x4c] sm:$0xf]
  %v2867 = vld [vmem:[%s2846 + $0x50] sm:$0xf]
  %v2868 = vld [vmem:[%s2846 + $0x54] sm:$0xf]
  %v2891 = vunpack.c.l.b16 %v2847
  %v2892 = vunpack.c.l.b16 %v2848
  %v2893 = vunpack.c.l.b16 %v2849
  %v2894 = vunpack.c.l.b16 %v2850
  %v2895 = vunpack.c.l.b16 %v2851
  %v2896 = vunpack.c.l.b16 %v2852
  %v2897 = vunpack.c.l.b16 %v2853
  %v2898 = vunpack.c.l.b16 %v2854
  %v2899 = vunpack.c.l.b16 %v2855
  %v2900 = vunpack.c.l.b16 %v2856
  %v2901 = vunpack.c.l.b16 %v2857
  %v2902 = vunpack.c.l.b16 %v2858
  %v2903 = vunpack.c.l.b16 %v2859
  %v2904 = vunpack.c.l.b16 %v2860
  %v2905 = vunpack.c.l.b16 %v2861
  %v2906 = vunpack.c.l.b16 %v2862
  %v2907 = vunpack.c.l.b16 %v2863
  %v2908 = vunpack.c.l.b16 %v2864
  %v2909 = vunpack.c.l.b16 %v2865
  %v2910 = vunpack.c.l.b16 %v2866
  %v2911 = vunpack.c.l.b16 %v2867
  %v2912 = vunpack.c.l.b16 %v2868
  %v2913 = vpack.c.b16 %v2892, %v2891
  %v2914 = vpack.c.b16 %v2894, %v2893
  %v2915 = vpack.c.b16 %v2896, %v2895
  %v2916 = vpack.c.b16 %v2898, %v2897
  %v2917 = vpack.c.b16 %v2900, %v2899
  %v2918 = vpack.c.b16 %v2902, %v2901
  %v2919 = vpack.c.b16 %v2904, %v2903
  %v2920 = vpack.c.b16 %v2906, %v2905
  %v2921 = vpack.c.b16 %v2908, %v2907
  %v2922 = vpack.c.b16 %v2910, %v2909
  %v2923 = vpack.c.b16 %v2912, %v2911
  %v2935 = vsel %vm2545, %v2845, 0
  %v2938 = vand.u32 %v2923, %v2552
  %2940 = vmatprep.subr.bf16.mxu0 0
  %2941 = vmatpush1.bf16.msra.mxu0 %v2920
  %2942 = vmatprep.subr.bf16.mxu0 0
  %2943 = vmatpush1.bf16.msra.mxu0 %v2919
  %2944 = vmatprep.subr.bf16.mxu0 0
  %2945 = vmatpush1.bf16.msra.mxu0 %v2918
  %2946 = vmatprep.subr.bf16.mxu0 0
  %2947 = vmatpush1.bf16.msra.mxu0 %v2917
  %2948 = vmatprep.subr.bf16.mxu0 0
  %2949 = vmatpush1.bf16.msra.mxu0 %v2916
  %2950 = vmatprep.subr.bf16.mxu0 0
  %2951 = vmatpush1.bf16.msra.mxu0 %v2915
  %2952 = vmatprep.subr.bf16.mxu0 0
  %2953 = vmatpush1.bf16.msra.mxu0 %v2914
  %2954 = vmatprep.subr.bf16.mxu0 0
  %2955 = vmatpush1.bf16.msra.mxu0 %v2913
  %2956 = vmatprep.subr.bf16.mxu0 0
  %2957 = vmatpush2.bf16.msra.mxu0 0
  %2958 = vmatprep.subr.bf16.mxu0 0
  %2959 = vmatpush2.bf16.msra.mxu0 0
  %2960 = vmatprep.subr.bf16.mxu0 0
  %2961 = vmatpush2.bf16.msra.mxu0 0
  %2962 = vmatprep.subr.bf16.mxu0 0
  %2963 = vmatpush2.bf16.msra.mxu0 0
  %2964 = vmatprep.subr.bf16.mxu0 0
  %2965 = vmatpush2.bf16.msra.mxu0 0
  %2966 = vmatprep.subr.bf16.mxu0 0
  %2967 = vmatpush2.bf16.msra.mxu0 %v2938
  %2968 = vmatprep.subr.bf16.mxu0 0
  %2969 = vmatpush2.bf16.msra.mxu0 %v2922
  %2970 = vmatprep.subr.bf16.mxu0 0
  %2971 = vmatpush2.bf16.msra.mxu0 %v2921
  %2972 = vmatprep.mubr.bf16.mxu0 %v2935
  %2973 = vmatmul.mubr.bf16.gmra.mxu0 %v2844
  %v2974 = vpop.f32.mrf.mxu0
  %v2975 = vadd.f32 0.0, %v2974
  %v2976 = vpop.f32.mrf.mxu0
  %v2977 = vpop.f32.mrf.mxu0
  %v2978 = vpop.f32.mrf.mxu0
  %2979 = vdwg.mxu0
  %v2980 = vadd.f32 %v2843, %v2975
  %v2981 = vpack.c.bf16 %v2407, %v2407
  %v2982 = vpack.c.bf16 %v2408, %v2408
  %s2983 = scalar_lea.vmem %s6, 352
  %v2984 = vld [vmem:[%s2983] sm:$0xf]
  %v2985 = vld [vmem:[%s2983 + $0x4] sm:$0xf]
  %v2986 = vld [vmem:[%s2983 + $0x8] sm:$0xf]
  %v2987 = vld [vmem:[%s2983 + $0xc] sm:$0xf]
  %v2988 = vld [vmem:[%s2983 + $0x10] sm:$0xf]
  %v2989 = vld [vmem:[%s2983 + $0x14] sm:$0xf]
  %v2990 = vld [vmem:[%s2983 + $0x18] sm:$0xf]
  %v2991 = vld [vmem:[%s2983 + $0x1c] sm:$0xf]
  %v2992 = vld [vmem:[%s2983 + $0x20] sm:$0xf]
  %v2993 = vld [vmem:[%s2983 + $0x24] sm:$0xf]
  %v2994 = vld [vmem:[%s2983 + $0x28] sm:$0xf]
  %v2995 = vld [vmem:[%s2983 + $0x2c] sm:$0xf]
  %v2996 = vld [vmem:[%s2983 + $0x30] sm:$0xf]
  %v2997 = vld [vmem:[%s2983 + $0x34] sm:$0xf]
  %v2998 = vld [vmem:[%s2983 + $0x38] sm:$0xf]
  %v2999 = vld [vmem:[%s2983 + $0x3c] sm:$0xf]
  %v3000 = vld [vmem:[%s2983 + $0x40] sm:$0xf]
  %v3001 = vld [vmem:[%s2983 + $0x44] sm:$0xf]
  %v3002 = vld [vmem:[%s2983 + $0x48] sm:$0xf]
  %v3003 = vld [vmem:[%s2983 + $0x4c] sm:$0xf]
  %v3004 = vld [vmem:[%s2983 + $0x50] sm:$0xf]
  %v3005 = vld [vmem:[%s2983 + $0x54] sm:$0xf]
  %v3028 = vunpack.c.l.b16 %v2984
  %v3029 = vunpack.c.l.b16 %v2985
  %v3030 = vunpack.c.l.b16 %v2986
  %v3031 = vunpack.c.l.b16 %v2987
  %v3032 = vunpack.c.l.b16 %v2988
  %v3033 = vunpack.c.l.b16 %v2989
  %v3034 = vunpack.c.l.b16 %v2990
  %v3035 = vunpack.c.l.b16 %v2991
  %v3036 = vunpack.c.l.b16 %v2992
  %v3037 = vunpack.c.l.b16 %v2993
  %v3038 = vunpack.c.l.b16 %v2994
  %v3039 = vunpack.c.l.b16 %v2995
  %v3040 = vunpack.c.l.b16 %v2996
  %v3041 = vunpack.c.l.b16 %v2997
  %v3042 = vunpack.c.l.b16 %v2998
  %v3043 = vunpack.c.l.b16 %v2999
  %v3044 = vunpack.c.l.b16 %v3000
  %v3045 = vunpack.c.l.b16 %v3001
  %v3046 = vunpack.c.l.b16 %v3002
  %v3047 = vunpack.c.l.b16 %v3003
  %v3048 = vunpack.c.l.b16 %v3004
  %v3049 = vunpack.c.l.b16 %v3005
  %v3050 = vpack.c.b16 %v3029, %v3028
  %v3051 = vpack.c.b16 %v3031, %v3030
  %v3052 = vpack.c.b16 %v3033, %v3032
  %v3053 = vpack.c.b16 %v3035, %v3034
  %v3054 = vpack.c.b16 %v3037, %v3036
  %v3055 = vpack.c.b16 %v3039, %v3038
  %v3056 = vpack.c.b16 %v3041, %v3040
  %v3057 = vpack.c.b16 %v3043, %v3042
  %v3058 = vpack.c.b16 %v3045, %v3044
  %v3059 = vpack.c.b16 %v3047, %v3046
  %v3060 = vpack.c.b16 %v3049, %v3048
  %v3072 = vsel %vm2545, %v2982, 0
  %v3075 = vand.u32 %v3060, %v2552
  %3077 = vmatprep.subr.bf16.mxu0 0
  %3078 = vmatpush1.bf16.msra.mxu0 %v3057
  %3079 = vmatprep.subr.bf16.mxu0 0
  %3080 = vmatpush1.bf16.msra.mxu0 %v3056
  %3081 = vmatprep.subr.bf16.mxu0 0
  %3082 = vmatpush1.bf16.msra.mxu0 %v3055
  %3083 = vmatprep.subr.bf16.mxu0 0
  %3084 = vmatpush1.bf16.msra.mxu0 %v3054
  %3085 = vmatprep.subr.bf16.mxu0 0
  %3086 = vmatpush1.bf16.msra.mxu0 %v3053
  %3087 = vmatprep.subr.bf16.mxu0 0
  %3088 = vmatpush1.bf16.msra.mxu0 %v3052
  %3089 = vmatprep.subr.bf16.mxu0 0
  %3090 = vmatpush1.bf16.msra.mxu0 %v3051
  %3091 = vmatprep.subr.bf16.mxu0 0
  %3092 = vmatpush1.bf16.msra.mxu0 %v3050
  %3093 = vmatprep.subr.bf16.mxu0 0
  %3094 = vmatpush2.bf16.msra.mxu0 0
  %3095 = vmatprep.subr.bf16.mxu0 0
  %3096 = vmatpush2.bf16.msra.mxu0 0
  %3097 = vmatprep.subr.bf16.mxu0 0
  %3098 = vmatpush2.bf16.msra.mxu0 0
  %3099 = vmatprep.subr.bf16.mxu0 0
  %3100 = vmatpush2.bf16.msra.mxu0 0
  %3101 = vmatprep.subr.bf16.mxu0 0
  %3102 = vmatpush2.bf16.msra.mxu0 0
  %3103 = vmatprep.subr.bf16.mxu0 0
  %3104 = vmatpush2.bf16.msra.mxu0 %v3075
  %3105 = vmatprep.subr.bf16.mxu0 0
  %3106 = vmatpush2.bf16.msra.mxu0 %v3059
  %3107 = vmatprep.subr.bf16.mxu0 0
  %3108 = vmatpush2.bf16.msra.mxu0 %v3058
  %3109 = vmatprep.mubr.bf16.mxu0 %v3072
  %3110 = vmatmul.mubr.bf16.gmra.mxu0 %v2981
  %v3111 = vpop.f32.mrf.mxu0
  %v3112 = vadd.f32 0.0, %v3111
  %v3113 = vpop.f32.mrf.mxu0
  %v3114 = vpop.f32.mrf.mxu0
  %v3115 = vpop.f32.mrf.mxu0
  %3116 = vdwg.mxu0
  %v3117 = vadd.f32 %v2980, %v3112
  %v3118 = vpack.c.bf16 %v2409, %v2409
  %v3119 = vpack.c.bf16 %v2410, %v2410
  %s3120 = scalar_lea.vmem %s6, 440
  %v3121 = vld [vmem:[%s3120] sm:$0xf]
  %v3122 = vld [vmem:[%s3120 + $0x4] sm:$0xf]
  %v3123 = vld [vmem:[%s3120 + $0x8] sm:$0xf]
  %v3124 = vld [vmem:[%s3120 + $0xc] sm:$0xf]
  %v3125 = vld [vmem:[%s3120 + $0x10] sm:$0xf]
  %v3126 = vld [vmem:[%s3120 + $0x14] sm:$0xf]
  %v3127 = vld [vmem:[%s3120 + $0x18] sm:$0xf]
  %v3128 = vld [vmem:[%s3120 + $0x1c] sm:$0xf]
  %v3129 = vld [vmem:[%s3120 + $0x20] sm:$0xf]
  %v3130 = vld [vmem:[%s3120 + $0x24] sm:$0xf]
  %v3131 = vld [vmem:[%s3120 + $0x28] sm:$0xf]
  %v3132 = vld [vmem:[%s3120 + $0x2c] sm:$0xf]
  %v3133 = vld [vmem:[%s3120 + $0x30] sm:$0xf]
  %v3134 = vld [vmem:[%s3120 + $0x34] sm:$0xf]
  %v3135 = vld [vmem:[%s3120 + $0x38] sm:$0xf]
  %v3136 = vld [vmem:[%s3120 + $0x3c] sm:$0xf]
  %v3137 = vld [vmem:[%s3120 + $0x40] sm:$0xf]
  %v3138 = vld [vmem:[%s3120 + $0x44] sm:$0xf]
  %v3139 = vld [vmem:[%s3120 + $0x48] sm:$0xf]
  %v3140 = vld [vmem:[%s3120 + $0x4c] sm:$0xf]
  %v3141 = vld [vmem:[%s3120 + $0x50] sm:$0xf]
  %v3142 = vld [vmem:[%s3120 + $0x54] sm:$0xf]
  %v3165 = vunpack.c.l.b16 %v3121
  %v3166 = vunpack.c.l.b16 %v3122
  %v3167 = vunpack.c.l.b16 %v3123
  %v3168 = vunpack.c.l.b16 %v3124
  %v3169 = vunpack.c.l.b16 %v3125
  %v3170 = vunpack.c.l.b16 %v3126
  %v3171 = vunpack.c.l.b16 %v3127
  %v3172 = vunpack.c.l.b16 %v3128
  %v3173 = vunpack.c.l.b16 %v3129
  %v3174 = vunpack.c.l.b16 %v3130
  %v3175 = vunpack.c.l.b16 %v3131
  %v3176 = vunpack.c.l.b16 %v3132
  %v3177 = vunpack.c.l.b16 %v3133
  %v3178 = vunpack.c.l.b16 %v3134
  %v3179 = vunpack.c.l.b16 %v3135
  %v3180 = vunpack.c.l.b16 %v3136
  %v3181 = vunpack.c.l.b16 %v3137
  %v3182 = vunpack.c.l.b16 %v3138
  %v3183 = vunpack.c.l.b16 %v3139
  %v3184 = vunpack.c.l.b16 %v3140
  %v3185 = vunpack.c.l.b16 %v3141
  %v3186 = vunpack.c.l.b16 %v3142
  %v3187 = vpack.c.b16 %v3166, %v3165
  %v3188 = vpack.c.b16 %v3168, %v3167
  %v3189 = vpack.c.b16 %v3170, %v3169
  %v3190 = vpack.c.b16 %v3172, %v3171
  %v3191 = vpack.c.b16 %v3174, %v3173
  %v3192 = vpack.c.b16 %v3176, %v3175
  %v3193 = vpack.c.b16 %v3178, %v3177
  %v3194 = vpack.c.b16 %v3180, %v3179
  %v3195 = vpack.c.b16 %v3182, %v3181
  %v3196 = vpack.c.b16 %v3184, %v3183
  %v3197 = vpack.c.b16 %v3186, %v3185
  %v3209 = vsel %vm2545, %v3119, 0
  %v3212 = vand.u32 %v3197, %v2552
  %3214 = vmatprep.subr.bf16.mxu0 0
  %3215 = vmatpush1.bf16.msra.mxu0 %v3194
  %3216 = vmatprep.subr.bf16.mxu0 0
  %3217 = vmatpush1.bf16.msra.mxu0 %v3193
  %3218 = vmatprep.subr.bf16.mxu0 0
  %3219 = vmatpush1.bf16.msra.mxu0 %v3192
  %3220 = vmatprep.subr.bf16.mxu0 0
  %3221 = vmatpush1.bf16.msra.mxu0 %v3191
  %3222 = vmatprep.subr.bf16.mxu0 0
  %3223 = vmatpush1.bf16.msra.mxu0 %v3190
  %3224 = vmatprep.subr.bf16.mxu0 0
  %3225 = vmatpush1.bf16.msra.mxu0 %v3189
  %3226 = vmatprep.subr.bf16.mxu0 0
  %3227 = vmatpush1.bf16.msra.mxu0 %v3188
  %3228 = vmatprep.subr.bf16.mxu0 0
  %3229 = vmatpush1.bf16.msra.mxu0 %v3187
  %3230 = vmatprep.subr.bf16.mxu0 0
  %3231 = vmatpush2.bf16.msra.mxu0 0
  %3232 = vmatprep.subr.bf16.mxu0 0
  %3233 = vmatpush2.bf16.msra.mxu0 0
  %3234 = vmatprep.subr.bf16.mxu0 0
  %3235 = vmatpush2.bf16.msra.mxu0 0
  %3236 = vmatprep.subr.bf16.mxu0 0
  %3237 = vmatpush2.bf16.msra.mxu0 0
  %3238 = vmatprep.subr.bf16.mxu0 0
  %3239 = vmatpush2.bf16.msra.mxu0 0
  %3240 = vmatprep.subr.bf16.mxu0 0
  %3241 = vmatpush2.bf16.msra.mxu0 %v3212
  %3242 = vmatprep.subr.bf16.mxu0 0
  %3243 = vmatpush2.bf16.msra.mxu0 %v3196
  %3244 = vmatprep.subr.bf16.mxu0 0
  %3245 = vmatpush2.bf16.msra.mxu0 %v3195
  %3246 = vmatprep.mubr.bf16.mxu0 %v3209
  %3247 = vmatmul.mubr.bf16.gmra.mxu0 %v3118
  %v3248 = vpop.f32.mrf.mxu0
  %v3249 = vadd.f32 0.0, %v3248
  %v3250 = vpop.f32.mrf.mxu0
  %v3251 = vpop.f32.mrf.mxu0
  %v3252 = vpop.f32.mrf.mxu0
  %3253 = vdwg.mxu0
  %v3254 = vadd.f32 %v3117, %v3249
  %v3255 = vpack.c.bf16 %v2411, %v2411
  %v3256 = vpack.c.bf16 %v2412, %v2412
  %s3257 = scalar_lea.vmem %s6, 528
  %v3258 = vld [vmem:[%s3257] sm:$0xf]
  %v3259 = vld [vmem:[%s3257 + $0x4] sm:$0xf]
  %v3260 = vld [vmem:[%s3257 + $0x8] sm:$0xf]
  %v3261 = vld [vmem:[%s3257 + $0xc] sm:$0xf]
  %v3262 = vld [vmem:[%s3257 + $0x10] sm:$0xf]
  %v3263 = vld [vmem:[%s3257 + $0x14] sm:$0xf]
  %v3264 = vld [vmem:[%s3257 + $0x18] sm:$0xf]
  %v3265 = vld [vmem:[%s3257 + $0x1c] sm:$0xf]
  %v3266 = vld [vmem:[%s3257 + $0x20] sm:$0xf]
  %v3267 = vld [vmem:[%s3257 + $0x24] sm:$0xf]
  %v3268 = vld [vmem:[%s3257 + $0x28] sm:$0xf]
  %v3269 = vld [vmem:[%s3257 + $0x2c] sm:$0xf]
  %v3270 = vld [vmem:[%s3257 + $0x30] sm:$0xf]
  %v3271 = vld [vmem:[%s3257 + $0x34] sm:$0xf]
  %v3272 = vld [vmem:[%s3257 + $0x38] sm:$0xf]
  %v3273 = vld [vmem:[%s3257 + $0x3c] sm:$0xf]
  %v3274 = vld [vmem:[%s3257 + $0x40] sm:$0xf]
  %v3275 = vld [vmem:[%s3257 + $0x44] sm:$0xf]
  %v3276 = vld [vmem:[%s3257 + $0x48] sm:$0xf]
  %v3277 = vld [vmem:[%s3257 + $0x4c] sm:$0xf]
  %v3278 = vld [vmem:[%s3257 + $0x50] sm:$0xf]
  %v3279 = vld [vmem:[%s3257 + $0x54] sm:$0xf]
  %v3302 = vunpack.c.l.b16 %v3258
  %v3303 = vunpack.c.l.b16 %v3259
  %v3304 = vunpack.c.l.b16 %v3260
  %v3305 = vunpack.c.l.b16 %v3261
  %v3306 = vunpack.c.l.b16 %v3262
  %v3307 = vunpack.c.l.b16 %v3263
  %v3308 = vunpack.c.l.b16 %v3264
  %v3309 = vunpack.c.l.b16 %v3265
  %v3310 = vunpack.c.l.b16 %v3266
  %v3311 = vunpack.c.l.b16 %v3267
  %v3312 = vunpack.c.l.b16 %v3268
  %v3313 = vunpack.c.l.b16 %v3269
  %v3314 = vunpack.c.l.b16 %v3270
  %v3315 = vunpack.c.l.b16 %v3271
  %v3316 = vunpack.c.l.b16 %v3272
  %v3317 = vunpack.c.l.b16 %v3273
  %v3318 = vunpack.c.l.b16 %v3274
  %v3319 = vunpack.c.l.b16 %v3275
  %v3320 = vunpack.c.l.b16 %v3276
  %v3321 = vunpack.c.l.b16 %v3277
  %v3322 = vunpack.c.l.b16 %v3278
  %v3323 = vunpack.c.l.b16 %v3279
  %v3324 = vpack.c.b16 %v3303, %v3302
  %v3325 = vpack.c.b16 %v3305, %v3304
  %v3326 = vpack.c.b16 %v3307, %v3306
  %v3327 = vpack.c.b16 %v3309, %v3308
  %v3328 = vpack.c.b16 %v3311, %v3310
  %v3329 = vpack.c.b16 %v3313, %v3312
  %v3330 = vpack.c.b16 %v3315, %v3314
  %v3331 = vpack.c.b16 %v3317, %v3316
  %v3332 = vpack.c.b16 %v3319, %v3318
  %v3333 = vpack.c.b16 %v3321, %v3320
  %v3334 = vpack.c.b16 %v3323, %v3322
  %v3346 = vsel %vm2545, %v3256, 0
  %v3349 = vand.u32 %v3334, %v2552
  %3351 = vmatprep.subr.bf16.mxu0 0
  %3352 = vmatpush1.bf16.msra.mxu0 %v3331
  %3353 = vmatprep.subr.bf16.mxu0 0
  %3354 = vmatpush1.bf16.msra.mxu0 %v3330
  %3355 = vmatprep.subr.bf16.mxu0 0
  %3356 = vmatpush1.bf16.msra.mxu0 %v3329
  %3357 = vmatprep.subr.bf16.mxu0 0
  %3358 = vmatpush1.bf16.msra.mxu0 %v3328
  %3359 = vmatprep.subr.bf16.mxu0 0
  %3360 = vmatpush1.bf16.msra.mxu0 %v3327
  %3361 = vmatprep.subr.bf16.mxu0 0
  %3362 = vmatpush1.bf16.msra.mxu0 %v3326
  %3363 = vmatprep.subr.bf16.mxu0 0
  %3364 = vmatpush1.bf16.msra.mxu0 %v3325
  %3365 = vmatprep.subr.bf16.mxu0 0
  %3366 = vmatpush1.bf16.msra.mxu0 %v3324
  %3367 = vmatprep.subr.bf16.mxu0 0
  %3368 = vmatpush2.bf16.msra.mxu0 0
  %3369 = vmatprep.subr.bf16.mxu0 0
  %3370 = vmatpush2.bf16.msra.mxu0 0
  %3371 = vmatprep.subr.bf16.mxu0 0
  %3372 = vmatpush2.bf16.msra.mxu0 0
  %3373 = vmatprep.subr.bf16.mxu0 0
  %3374 = vmatpush2.bf16.msra.mxu0 0
  %3375 = vmatprep.subr.bf16.mxu0 0
  %3376 = vmatpush2.bf16.msra.mxu0 0
  %3377 = vmatprep.subr.bf16.mxu0 0
  %3378 = vmatpush2.bf16.msra.mxu0 %v3349
  %3379 = vmatprep.subr.bf16.mxu0 0
  %3380 = vmatpush2.bf16.msra.mxu0 %v3333
  %3381 = vmatprep.subr.bf16.mxu0 0
  %3382 = vmatpush2.bf16.msra.mxu0 %v3332
  %3383 = vmatprep.mubr.bf16.mxu0 %v3346
  %3384 = vmatmul.mubr.bf16.gmra.mxu0 %v3255
  %v3385 = vpop.f32.mrf.mxu0
  %v3386 = vadd.f32 0.0, %v3385
  %v3387 = vpop.f32.mrf.mxu0
  %v3388 = vpop.f32.mrf.mxu0
  %v3389 = vpop.f32.mrf.mxu0
  %3390 = vdwg.mxu0
  %v3391 = vadd.f32 %v3254, %v3386
  %v3392 = vpack.c.bf16 %v2413, %v2413
  %v3393 = vpack.c.bf16 %v2414, %v2414
  %s3394 = scalar_lea.vmem %s6, 616
  %v3395 = vld [vmem:[%s3394] sm:$0xf]
  %v3396 = vld [vmem:[%s3394 + $0x4] sm:$0xf]
  %v3397 = vld [vmem:[%s3394 + $0x8] sm:$0xf]
  %v3398 = vld [vmem:[%s3394 + $0xc] sm:$0xf]
  %v3399 = vld [vmem:[%s3394 + $0x10] sm:$0xf]
  %v3400 = vld [vmem:[%s3394 + $0x14] sm:$0xf]
  %v3401 = vld [vmem:[%s3394 + $0x18] sm:$0xf]
  %v3402 = vld [vmem:[%s3394 + $0x1c] sm:$0xf]
  %v3403 = vld [vmem:[%s3394 + $0x20] sm:$0xf]
  %v3404 = vld [vmem:[%s3394 + $0x24] sm:$0xf]
  %v3405 = vld [vmem:[%s3394 + $0x28] sm:$0xf]
  %v3406 = vld [vmem:[%s3394 + $0x2c] sm:$0xf]
  %v3407 = vld [vmem:[%s3394 + $0x30] sm:$0xf]
  %v3408 = vld [vmem:[%s3394 + $0x34] sm:$0xf]
  %v3409 = vld [vmem:[%s3394 + $0x38] sm:$0xf]
  %v3410 = vld [vmem:[%s3394 + $0x3c] sm:$0xf]
  %v3411 = vld [vmem:[%s3394 + $0x40] sm:$0xf]
  %v3412 = vld [vmem:[%s3394 + $0x44] sm:$0xf]
  %v3413 = vld [vmem:[%s3394 + $0x48] sm:$0xf]
  %v3414 = vld [vmem:[%s3394 + $0x4c] sm:$0xf]
  %v3415 = vld [vmem:[%s3394 + $0x50] sm:$0xf]
  %v3416 = vld [vmem:[%s3394 + $0x54] sm:$0xf]
  %v3439 = vunpack.c.l.b16 %v3395
  %v3440 = vunpack.c.l.b16 %v3396
  %v3441 = vunpack.c.l.b16 %v3397
  %v3442 = vunpack.c.l.b16 %v3398
  %v3443 = vunpack.c.l.b16 %v3399
  %v3444 = vunpack.c.l.b16 %v3400
  %v3445 = vunpack.c.l.b16 %v3401
  %v3446 = vunpack.c.l.b16 %v3402
  %v3447 = vunpack.c.l.b16 %v3403
  %v3448 = vunpack.c.l.b16 %v3404
  %v3449 = vunpack.c.l.b16 %v3405
  %v3450 = vunpack.c.l.b16 %v3406
  %v3451 = vunpack.c.l.b16 %v3407
  %v3452 = vunpack.c.l.b16 %v3408
  %v3453 = vunpack.c.l.b16 %v3409
  %v3454 = vunpack.c.l.b16 %v3410
  %v3455 = vunpack.c.l.b16 %v3411
  %v3456 = vunpack.c.l.b16 %v3412
  %v3457 = vunpack.c.l.b16 %v3413
  %v3458 = vunpack.c.l.b16 %v3414
  %v3459 = vunpack.c.l.b16 %v3415
  %v3460 = vunpack.c.l.b16 %v3416
  %v3461 = vpack.c.b16 %v3440, %v3439
  %v3462 = vpack.c.b16 %v3442, %v3441
  %v3463 = vpack.c.b16 %v3444, %v3443
  %v3464 = vpack.c.b16 %v3446, %v3445
  %v3465 = vpack.c.b16 %v3448, %v3447
  %v3466 = vpack.c.b16 %v3450, %v3449
  %v3467 = vpack.c.b16 %v3452, %v3451
  %v3468 = vpack.c.b16 %v3454, %v3453
  %v3469 = vpack.c.b16 %v3456, %v3455
  %v3470 = vpack.c.b16 %v3458, %v3457
  %v3471 = vpack.c.b16 %v3460, %v3459
  %v3483 = vsel %vm2545, %v3393, 0
  %v3486 = vand.u32 %v3471, %v2552
  %3488 = vmatprep.subr.bf16.mxu0 0
  %3489 = vmatpush1.bf16.msra.mxu0 %v3468
  %3490 = vmatprep.subr.bf16.mxu0 0
  %3491 = vmatpush1.bf16.msra.mxu0 %v3467
  %3492 = vmatprep.subr.bf16.mxu0 0
  %3493 = vmatpush1.bf16.msra.mxu0 %v3466
  %3494 = vmatprep.subr.bf16.mxu0 0
  %3495 = vmatpush1.bf16.msra.mxu0 %v3465
  %3496 = vmatprep.subr.bf16.mxu0 0
  %3497 = vmatpush1.bf16.msra.mxu0 %v3464
  %3498 = vmatprep.subr.bf16.mxu0 0
  %3499 = vmatpush1.bf16.msra.mxu0 %v3463
  %3500 = vmatprep.subr.bf16.mxu0 0
  %3501 = vmatpush1.bf16.msra.mxu0 %v3462
  %3502 = vmatprep.subr.bf16.mxu0 0
  %3503 = vmatpush1.bf16.msra.mxu0 %v3461
  %3504 = vmatprep.subr.bf16.mxu0 0
  %3505 = vmatpush2.bf16.msra.mxu0 0
  %3506 = vmatprep.subr.bf16.mxu0 0
  %3507 = vmatpush2.bf16.msra.mxu0 0
  %3508 = vmatprep.subr.bf16.mxu0 0
  %3509 = vmatpush2.bf16.msra.mxu0 0
  %3510 = vmatprep.subr.bf16.mxu0 0
  %3511 = vmatpush2.bf16.msra.mxu0 0
  %3512 = vmatprep.subr.bf16.mxu0 0
  %3513 = vmatpush2.bf16.msra.mxu0 0
  %3514 = vmatprep.subr.bf16.mxu0 0
  %3515 = vmatpush2.bf16.msra.mxu0 %v3486
  %3516 = vmatprep.subr.bf16.mxu0 0
  %3517 = vmatpush2.bf16.msra.mxu0 %v3470
  %3518 = vmatprep.subr.bf16.mxu0 0
  %3519 = vmatpush2.bf16.msra.mxu0 %v3469
  %3520 = vmatprep.mubr.bf16.mxu0 %v3483
  %3521 = vmatmul.mubr.bf16.gmra.mxu0 %v3392
  %v3522 = vpop.f32.mrf.mxu0
  %v3523 = vadd.f32 0.0, %v3522
  %v3524 = vpop.f32.mrf.mxu0
  %v3525 = vpop.f32.mrf.mxu0
  %v3526 = vpop.f32.mrf.mxu0
  %3527 = vdwg.mxu0
  %v3528 = vadd.f32 %v3391, %v3523
  %v3529 = vpack.c.bf16 %v2415, %v2415
  %v3530 = vpack.c.bf16 %v2416, %v2416
  %s3531 = scalar_lea.vmem %s6, 704
  %v3532 = vld [vmem:[%s3531] sm:$0xf]
  %v3533 = vld [vmem:[%s3531 + $0x4] sm:$0xf]
  %v3534 = vld [vmem:[%s3531 + $0x8] sm:$0xf]
  %v3535 = vld [vmem:[%s3531 + $0xc] sm:$0xf]
  %v3536 = vld [vmem:[%s3531 + $0x10] sm:$0xf]
  %v3537 = vld [vmem:[%s3531 + $0x14] sm:$0xf]
  %v3538 = vld [vmem:[%s3531 + $0x18] sm:$0xf]
  %v3539 = vld [vmem:[%s3531 + $0x1c] sm:$0xf]
  %v3540 = vld [vmem:[%s3531 + $0x20] sm:$0xf]
  %v3541 = vld [vmem:[%s3531 + $0x24] sm:$0xf]
  %v3542 = vld [vmem:[%s3531 + $0x28] sm:$0xf]
  %v3543 = vld [vmem:[%s3531 + $0x2c] sm:$0xf]
  %v3544 = vld [vmem:[%s3531 + $0x30] sm:$0xf]
  %v3545 = vld [vmem:[%s3531 + $0x34] sm:$0xf]
  %v3546 = vld [vmem:[%s3531 + $0x38] sm:$0xf]
  %v3547 = vld [vmem:[%s3531 + $0x3c] sm:$0xf]
  %v3548 = vld [vmem:[%s3531 + $0x40] sm:$0xf]
  %v3549 = vld [vmem:[%s3531 + $0x44] sm:$0xf]
  %v3550 = vld [vmem:[%s3531 + $0x48] sm:$0xf]
  %v3551 = vld [vmem:[%s3531 + $0x4c] sm:$0xf]
  %v3552 = vld [vmem:[%s3531 + $0x50] sm:$0xf]
  %v3553 = vld [vmem:[%s3531 + $0x54] sm:$0xf]
  %v3576 = vunpack.c.l.b16 %v3532
  %v3577 = vunpack.c.l.b16 %v3533
  %v3578 = vunpack.c.l.b16 %v3534
  %v3579 = vunpack.c.l.b16 %v3535
  %v3580 = vunpack.c.l.b16 %v3536
  %v3581 = vunpack.c.l.b16 %v3537
  %v3582 = vunpack.c.l.b16 %v3538
  %v3583 = vunpack.c.l.b16 %v3539
  %v3584 = vunpack.c.l.b16 %v3540
  %v3585 = vunpack.c.l.b16 %v3541
  %v3586 = vunpack.c.l.b16 %v3542
  %v3587 = vunpack.c.l.b16 %v3543
  %v3588 = vunpack.c.l.b16 %v3544
  %v3589 = vunpack.c.l.b16 %v3545
  %v3590 = vunpack.c.l.b16 %v3546
  %v3591 = vunpack.c.l.b16 %v3547
  %v3592 = vunpack.c.l.b16 %v3548
  %v3593 = vunpack.c.l.b16 %v3549
  %v3594 = vunpack.c.l.b16 %v3550
  %v3595 = vunpack.c.l.b16 %v3551
  %v3596 = vunpack.c.l.b16 %v3552
  %v3597 = vunpack.c.l.b16 %v3553
  %v3598 = vpack.c.b16 %v3577, %v3576
  %v3599 = vpack.c.b16 %v3579, %v3578
  %v3600 = vpack.c.b16 %v3581, %v3580
  %v3601 = vpack.c.b16 %v3583, %v3582
  %v3602 = vpack.c.b16 %v3585, %v3584
  %v3603 = vpack.c.b16 %v3587, %v3586
  %v3604 = vpack.c.b16 %v3589, %v3588
  %v3605 = vpack.c.b16 %v3591, %v3590
  %v3606 = vpack.c.b16 %v3593, %v3592
  %v3607 = vpack.c.b16 %v3595, %v3594
  %v3608 = vpack.c.b16 %v3597, %v3596
  %v3620 = vsel %vm2545, %v3530, 0
  %v3623 = vand.u32 %v3608, %v2552
  %3625 = vmatprep.subr.bf16.mxu0 0
  %3626 = vmatpush1.bf16.msra.mxu0 %v3605
  %3627 = vmatprep.subr.bf16.mxu0 0
  %3628 = vmatpush1.bf16.msra.mxu0 %v3604
  %3629 = vmatprep.subr.bf16.mxu0 0
  %3630 = vmatpush1.bf16.msra.mxu0 %v3603
  %3631 = vmatprep.subr.bf16.mxu0 0
  %3632 = vmatpush1.bf16.msra.mxu0 %v3602
  %3633 = vmatprep.subr.bf16.mxu0 0
  %3634 = vmatpush1.bf16.msra.mxu0 %v3601
  %3635 = vmatprep.subr.bf16.mxu0 0
  %3636 = vmatpush1.bf16.msra.mxu0 %v3600
  %3637 = vmatprep.subr.bf16.mxu0 0
  %3638 = vmatpush1.bf16.msra.mxu0 %v3599
  %3639 = vmatprep.subr.bf16.mxu0 0
  %3640 = vmatpush1.bf16.msra.mxu0 %v3598
  %3641 = vmatprep.subr.bf16.mxu0 0
  %3642 = vmatpush2.bf16.msra.mxu0 0
  %3643 = vmatprep.subr.bf16.mxu0 0
  %3644 = vmatpush2.bf16.msra.mxu0 0
  %3645 = vmatprep.subr.bf16.mxu0 0
  %3646 = vmatpush2.bf16.msra.mxu0 0
  %3647 = vmatprep.subr.bf16.mxu0 0
  %3648 = vmatpush2.bf16.msra.mxu0 0
  %3649 = vmatprep.subr.bf16.mxu0 0
  %3650 = vmatpush2.bf16.msra.mxu0 0
  %3651 = vmatprep.subr.bf16.mxu0 0
  %3652 = vmatpush2.bf16.msra.mxu0 %v3623
  %3653 = vmatprep.subr.bf16.mxu0 0
  %3654 = vmatpush2.bf16.msra.mxu0 %v3607
  %3655 = vmatprep.subr.bf16.mxu0 0
  %3656 = vmatpush2.bf16.msra.mxu0 %v3606
  %3657 = vmatprep.mubr.bf16.mxu0 %v3620
  %3658 = vmatmul.mubr.bf16.gmra.mxu0 %v3529
  %v3659 = vpop.f32.mrf.mxu0
  %v3660 = vadd.f32 0.0, %v3659
  %v3661 = vpop.f32.mrf.mxu0
  %v3662 = vpop.f32.mrf.mxu0
  %v3663 = vpop.f32.mrf.mxu0
  %3664 = vdwg.mxu0
  %v3665 = vadd.f32 %v3528, %v3660
  %v3666 = vpack.c.bf16 %v2417, %v2417
  %v3667 = vpack.c.bf16 %v2418, %v2418
  %s3668 = scalar_lea.vmem %s6, 792
  %v3669 = vld [vmem:[%s3668] sm:$0xf]
  %v3670 = vld [vmem:[%s3668 + $0x4] sm:$0xf]
  %v3671 = vld [vmem:[%s3668 + $0x8] sm:$0xf]
  %v3672 = vld [vmem:[%s3668 + $0xc] sm:$0xf]
  %v3673 = vld [vmem:[%s3668 + $0x10] sm:$0xf]
  %v3674 = vld [vmem:[%s3668 + $0x14] sm:$0xf]
  %v3675 = vld [vmem:[%s3668 + $0x18] sm:$0xf]
  %v3676 = vld [vmem:[%s3668 + $0x1c] sm:$0xf]
  %v3677 = vld [vmem:[%s3668 + $0x20] sm:$0xf]
  %v3678 = vld [vmem:[%s3668 + $0x24] sm:$0xf]
  %v3679 = vld [vmem:[%s3668 + $0x28] sm:$0xf]
  %v3680 = vld [vmem:[%s3668 + $0x2c] sm:$0xf]
  %v3681 = vld [vmem:[%s3668 + $0x30] sm:$0xf]
  %v3682 = vld [vmem:[%s3668 + $0x34] sm:$0xf]
  %v3683 = vld [vmem:[%s3668 + $0x38] sm:$0xf]
  %v3684 = vld [vmem:[%s3668 + $0x3c] sm:$0xf]
  %v3685 = vld [vmem:[%s3668 + $0x40] sm:$0xf]
  %v3686 = vld [vmem:[%s3668 + $0x44] sm:$0xf]
  %v3687 = vld [vmem:[%s3668 + $0x48] sm:$0xf]
  %v3688 = vld [vmem:[%s3668 + $0x4c] sm:$0xf]
  %v3689 = vld [vmem:[%s3668 + $0x50] sm:$0xf]
  %v3690 = vld [vmem:[%s3668 + $0x54] sm:$0xf]
  %v3713 = vunpack.c.l.b16 %v3669
  %v3714 = vunpack.c.l.b16 %v3670
  %v3715 = vunpack.c.l.b16 %v3671
  %v3716 = vunpack.c.l.b16 %v3672
  %v3717 = vunpack.c.l.b16 %v3673
  %v3718 = vunpack.c.l.b16 %v3674
  %v3719 = vunpack.c.l.b16 %v3675
  %v3720 = vunpack.c.l.b16 %v3676
  %v3721 = vunpack.c.l.b16 %v3677
  %v3722 = vunpack.c.l.b16 %v3678
  %v3723 = vunpack.c.l.b16 %v3679
  %v3724 = vunpack.c.l.b16 %v3680
  %v3725 = vunpack.c.l.b16 %v3681
  %v3726 = vunpack.c.l.b16 %v3682
  %v3727 = vunpack.c.l.b16 %v3683
  %v3728 = vunpack.c.l.b16 %v3684
  %v3729 = vunpack.c.l.b16 %v3685
  %v3730 = vunpack.c.l.b16 %v3686
  %v3731 = vunpack.c.l.b16 %v3687
  %v3732 = vunpack.c.l.b16 %v3688
  %v3733 = vunpack.c.l.b16 %v3689
  %v3734 = vunpack.c.l.b16 %v3690
  %v3735 = vpack.c.b16 %v3714, %v3713
  %v3736 = vpack.c.b16 %v3716, %v3715
  %v3737 = vpack.c.b16 %v3718, %v3717
  %v3738 = vpack.c.b16 %v3720, %v3719
  %v3739 = vpack.c.b16 %v3722, %v3721
  %v3740 = vpack.c.b16 %v3724, %v3723
  %v3741 = vpack.c.b16 %v3726, %v3725
  %v3742 = vpack.c.b16 %v3728, %v3727
  %v3743 = vpack.c.b16 %v3730, %v3729
  %v3744 = vpack.c.b16 %v3732, %v3731
  %v3745 = vpack.c.b16 %v3734, %v3733
  %v3757 = vsel %vm2545, %v3667, 0
  %v3760 = vand.u32 %v3745, %v2552
  %3762 = vmatprep.subr.bf16.mxu0 0
  %3763 = vmatpush1.bf16.msra.mxu0 %v3742
  %3764 = vmatprep.subr.bf16.mxu0 0
  %3765 = vmatpush1.bf16.msra.mxu0 %v3741
  %3766 = vmatprep.subr.bf16.mxu0 0
  %3767 = vmatpush1.bf16.msra.mxu0 %v3740
  %3768 = vmatprep.subr.bf16.mxu0 0
  %3769 = vmatpush1.bf16.msra.mxu0 %v3739
  %3770 = vmatprep.subr.bf16.mxu0 0
  %3771 = vmatpush1.bf16.msra.mxu0 %v3738
  %3772 = vmatprep.subr.bf16.mxu0 0
  %3773 = vmatpush1.bf16.msra.mxu0 %v3737
  %3774 = vmatprep.subr.bf16.mxu0 0
  %3775 = vmatpush1.bf16.msra.mxu0 %v3736
  %3776 = vmatprep.subr.bf16.mxu0 0
  %3777 = vmatpush1.bf16.msra.mxu0 %v3735
  %3778 = vmatprep.subr.bf16.mxu0 0
  %3779 = vmatpush2.bf16.msra.mxu0 0
  %3780 = vmatprep.subr.bf16.mxu0 0
  %3781 = vmatpush2.bf16.msra.mxu0 0
  %3782 = vmatprep.subr.bf16.mxu0 0
  %3783 = vmatpush2.bf16.msra.mxu0 0
  %3784 = vmatprep.subr.bf16.mxu0 0
  %3785 = vmatpush2.bf16.msra.mxu0 0
  %3786 = vmatprep.subr.bf16.mxu0 0
  %3787 = vmatpush2.bf16.msra.mxu0 0
  %3788 = vmatprep.subr.bf16.mxu0 0
  %3789 = vmatpush2.bf16.msra.mxu0 %v3760
  %3790 = vmatprep.subr.bf16.mxu0 0
  %3791 = vmatpush2.bf16.msra.mxu0 %v3744
  %3792 = vmatprep.subr.bf16.mxu0 0
  %3793 = vmatpush2.bf16.msra.mxu0 %v3743
  %3794 = vmatprep.mubr.bf16.mxu0 %v3757
  %3795 = vmatmul.mubr.bf16.gmra.mxu0 %v3666
  %v3796 = vpop.f32.mrf.mxu0
  %v3797 = vadd.f32 0.0, %v3796
  %v3798 = vpop.f32.mrf.mxu0
  %v3799 = vpop.f32.mrf.mxu0
  %v3800 = vpop.f32.mrf.mxu0
  %3801 = vdwg.mxu0
  %v3802 = vadd.f32 %v3665, %v3797
  %v3803 = vpack.c.bf16 %v2419, %v2419
  %v3804 = vpack.c.bf16 %v2420, %v2420
  %s3805 = scalar_lea.vmem %s6, 880
  %v3806 = vld [vmem:[%s3805] sm:$0xf]
  %v3807 = vld [vmem:[%s3805 + $0x4] sm:$0xf]
  %v3808 = vld [vmem:[%s3805 + $0x8] sm:$0xf]
  %v3809 = vld [vmem:[%s3805 + $0xc] sm:$0xf]
  %v3810 = vld [vmem:[%s3805 + $0x10] sm:$0xf]
  %v3811 = vld [vmem:[%s3805 + $0x14] sm:$0xf]
  %v3812 = vld [vmem:[%s3805 + $0x18] sm:$0xf]
  %v3813 = vld [vmem:[%s3805 + $0x1c] sm:$0xf]
  %v3814 = vld [vmem:[%s3805 + $0x20] sm:$0xf]
  %v3815 = vld [vmem:[%s3805 + $0x24] sm:$0xf]
  %v3816 = vld [vmem:[%s3805 + $0x28] sm:$0xf]
  %v3817 = vld [vmem:[%s3805 + $0x2c] sm:$0xf]
  %v3818 = vld [vmem:[%s3805 + $0x30] sm:$0xf]
  %v3819 = vld [vmem:[%s3805 + $0x34] sm:$0xf]
  %v3820 = vld [vmem:[%s3805 + $0x38] sm:$0xf]
  %v3821 = vld [vmem:[%s3805 + $0x3c] sm:$0xf]
  %v3822 = vld [vmem:[%s3805 + $0x40] sm:$0xf]
  %v3823 = vld [vmem:[%s3805 + $0x44] sm:$0xf]
  %v3824 = vld [vmem:[%s3805 + $0x48] sm:$0xf]
  %v3825 = vld [vmem:[%s3805 + $0x4c] sm:$0xf]
  %v3826 = vld [vmem:[%s3805 + $0x50] sm:$0xf]
  %v3827 = vld [vmem:[%s3805 + $0x54] sm:$0xf]
  %v3850 = vunpack.c.l.b16 %v3806
  %v3851 = vunpack.c.l.b16 %v3807
  %v3852 = vunpack.c.l.b16 %v3808
  %v3853 = vunpack.c.l.b16 %v3809
  %v3854 = vunpack.c.l.b16 %v3810
  %v3855 = vunpack.c.l.b16 %v3811
  %v3856 = vunpack.c.l.b16 %v3812
  %v3857 = vunpack.c.l.b16 %v3813
  %v3858 = vunpack.c.l.b16 %v3814
  %v3859 = vunpack.c.l.b16 %v3815
  %v3860 = vunpack.c.l.b16 %v3816
  %v3861 = vunpack.c.l.b16 %v3817
  %v3862 = vunpack.c.l.b16 %v3818
  %v3863 = vunpack.c.l.b16 %v3819
  %v3864 = vunpack.c.l.b16 %v3820
  %v3865 = vunpack.c.l.b16 %v3821
  %v3866 = vunpack.c.l.b16 %v3822
  %v3867 = vunpack.c.l.b16 %v3823
  %v3868 = vunpack.c.l.b16 %v3824
  %v3869 = vunpack.c.l.b16 %v3825
  %v3870 = vunpack.c.l.b16 %v3826
  %v3871 = vunpack.c.l.b16 %v3827
  %v3872 = vpack.c.b16 %v3851, %v3850
  %v3873 = vpack.c.b16 %v3853, %v3852
  %v3874 = vpack.c.b16 %v3855, %v3854
  %v3875 = vpack.c.b16 %v3857, %v3856
  %v3876 = vpack.c.b16 %v3859, %v3858
  %v3877 = vpack.c.b16 %v3861, %v3860
  %v3878 = vpack.c.b16 %v3863, %v3862
  %v3879 = vpack.c.b16 %v3865, %v3864
  %v3880 = vpack.c.b16 %v3867, %v3866
  %v3881 = vpack.c.b16 %v3869, %v3868
  %v3882 = vpack.c.b16 %v3871, %v3870
  %v3894 = vsel %vm2545, %v3804, 0
  %v3897 = vand.u32 %v3882, %v2552
  %3899 = vmatprep.subr.bf16.mxu0 0
  %3900 = vmatpush1.bf16.msra.mxu0 %v3879
  %3901 = vmatprep.subr.bf16.mxu0 0
  %3902 = vmatpush1.bf16.msra.mxu0 %v3878
  %3903 = vmatprep.subr.bf16.mxu0 0
  %3904 = vmatpush1.bf16.msra.mxu0 %v3877
  %3905 = vmatprep.subr.bf16.mxu0 0
  %3906 = vmatpush1.bf16.msra.mxu0 %v3876
  %3907 = vmatprep.subr.bf16.mxu0 0
  %3908 = vmatpush1.bf16.msra.mxu0 %v3875
  %3909 = vmatprep.subr.bf16.mxu0 0
  %3910 = vmatpush1.bf16.msra.mxu0 %v3874
  %3911 = vmatprep.subr.bf16.mxu0 0
  %3912 = vmatpush1.bf16.msra.mxu0 %v3873
  %3913 = vmatprep.subr.bf16.mxu0 0
  %3914 = vmatpush1.bf16.msra.mxu0 %v3872
  %3915 = vmatprep.subr.bf16.mxu0 0
  %3916 = vmatpush2.bf16.msra.mxu0 0
  %3917 = vmatprep.subr.bf16.mxu0 0
  %3918 = vmatpush2.bf16.msra.mxu0 0
  %3919 = vmatprep.subr.bf16.mxu0 0
  %3920 = vmatpush2.bf16.msra.mxu0 0
  %3921 = vmatprep.subr.bf16.mxu0 0
  %3922 = vmatpush2.bf16.msra.mxu0 0
  %3923 = vmatprep.subr.bf16.mxu0 0
  %3924 = vmatpush2.bf16.msra.mxu0 0
  %3925 = vmatprep.subr.bf16.mxu0 0
  %3926 = vmatpush2.bf16.msra.mxu0 %v3897
  %3927 = vmatprep.subr.bf16.mxu0 0
  %3928 = vmatpush2.bf16.msra.mxu0 %v3881
  %3929 = vmatprep.subr.bf16.mxu0 0
  %3930 = vmatpush2.bf16.msra.mxu0 %v3880
  %3931 = vmatprep.mubr.bf16.mxu0 %v3894
  %3932 = vmatmul.mubr.bf16.gmra.mxu0 %v3803
  %v3933 = vpop.f32.mrf.mxu0
  %v3934 = vadd.f32 0.0, %v3933
  %v3935 = vpop.f32.mrf.mxu0
  %v3936 = vpop.f32.mrf.mxu0
  %v3937 = vpop.f32.mrf.mxu0
  %3938 = vdwg.mxu0
  %v3939 = vadd.f32 %v3802, %v3934
  %v3940 = vpack.c.bf16 %v2421, %v2421
  %v3941 = vpack.c.bf16 %v2422, %v2422
  %s3942 = scalar_lea.vmem %s6, 968
  %v3943 = vld [vmem:[%s3942] sm:$0xf]
  %v3944 = vld [vmem:[%s3942 + $0x4] sm:$0xf]
  %v3945 = vld [vmem:[%s3942 + $0x8] sm:$0xf]
  %v3946 = vld [vmem:[%s3942 + $0xc] sm:$0xf]
  %v3947 = vld [vmem:[%s3942 + $0x10] sm:$0xf]
  %v3948 = vld [vmem:[%s3942 + $0x14] sm:$0xf]
  %v3949 = vld [vmem:[%s3942 + $0x18] sm:$0xf]
  %v3950 = vld [vmem:[%s3942 + $0x1c] sm:$0xf]
  %v3951 = vld [vmem:[%s3942 + $0x20] sm:$0xf]
  %v3952 = vld [vmem:[%s3942 + $0x24] sm:$0xf]
  %v3953 = vld [vmem:[%s3942 + $0x28] sm:$0xf]
  %v3954 = vld [vmem:[%s3942 + $0x2c] sm:$0xf]
  %v3955 = vld [vmem:[%s3942 + $0x30] sm:$0xf]
  %v3956 = vld [vmem:[%s3942 + $0x34] sm:$0xf]
  %v3957 = vld [vmem:[%s3942 + $0x38] sm:$0xf]
  %v3958 = vld [vmem:[%s3942 + $0x3c] sm:$0xf]
  %v3959 = vld [vmem:[%s3942 + $0x40] sm:$0xf]
  %v3960 = vld [vmem:[%s3942 + $0x44] sm:$0xf]
  %v3961 = vld [vmem:[%s3942 + $0x48] sm:$0xf]
  %v3962 = vld [vmem:[%s3942 + $0x4c] sm:$0xf]
  %v3963 = vld [vmem:[%s3942 + $0x50] sm:$0xf]
  %v3964 = vld [vmem:[%s3942 + $0x54] sm:$0xf]
  %v3987 = vunpack.c.l.b16 %v3943
  %v3988 = vunpack.c.l.b16 %v3944
  %v3989 = vunpack.c.l.b16 %v3945
  %v3990 = vunpack.c.l.b16 %v3946
  %v3991 = vunpack.c.l.b16 %v3947
  %v3992 = vunpack.c.l.b16 %v3948
  %v3993 = vunpack.c.l.b16 %v3949
  %v3994 = vunpack.c.l.b16 %v3950
  %v3995 = vunpack.c.l.b16 %v3951
  %v3996 = vunpack.c.l.b16 %v3952
  %v3997 = vunpack.c.l.b16 %v3953
  %v3998 = vunpack.c.l.b16 %v3954
  %v3999 = vunpack.c.l.b16 %v3955
  %v4000 = vunpack.c.l.b16 %v3956
  %v4001 = vunpack.c.l.b16 %v3957
  %v4002 = vunpack.c.l.b16 %v3958
  %v4003 = vunpack.c.l.b16 %v3959
  %v4004 = vunpack.c.l.b16 %v3960
  %v4005 = vunpack.c.l.b16 %v3961
  %v4006 = vunpack.c.l.b16 %v3962
  %v4007 = vunpack.c.l.b16 %v3963
  %v4008 = vunpack.c.l.b16 %v3964
  %v4009 = vpack.c.b16 %v3988, %v3987
  %v4010 = vpack.c.b16 %v3990, %v3989
  %v4011 = vpack.c.b16 %v3992, %v3991
  %v4012 = vpack.c.b16 %v3994, %v3993
  %v4013 = vpack.c.b16 %v3996, %v3995
  %v4014 = vpack.c.b16 %v3998, %v3997
  %v4015 = vpack.c.b16 %v4000, %v3999
  %v4016 = vpack.c.b16 %v4002, %v4001
  %v4017 = vpack.c.b16 %v4004, %v4003
  %v4018 = vpack.c.b16 %v4006, %v4005
  %v4019 = vpack.c.b16 %v4008, %v4007
  %v4031 = vsel %vm2545, %v3941, 0
  %v4034 = vand.u32 %v4019, %v2552
  %4036 = vmatprep.subr.bf16.mxu0 0
  %4037 = vmatpush1.bf16.msra.mxu0 %v4016
  %4038 = vmatprep.subr.bf16.mxu0 0
  %4039 = vmatpush1.bf16.msra.mxu0 %v4015
  %4040 = vmatprep.subr.bf16.mxu0 0
  %4041 = vmatpush1.bf16.msra.mxu0 %v4014
  %4042 = vmatprep.subr.bf16.mxu0 0
  %4043 = vmatpush1.bf16.msra.mxu0 %v4013
  %4044 = vmatprep.subr.bf16.mxu0 0
  %4045 = vmatpush1.bf16.msra.mxu0 %v4012
  %4046 = vmatprep.subr.bf16.mxu0 0
  %4047 = vmatpush1.bf16.msra.mxu0 %v4011
  %4048 = vmatprep.subr.bf16.mxu0 0
  %4049 = vmatpush1.bf16.msra.mxu0 %v4010
  %4050 = vmatprep.subr.bf16.mxu0 0
  %4051 = vmatpush1.bf16.msra.mxu0 %v4009
  %4052 = vmatprep.subr.bf16.mxu0 0
  %4053 = vmatpush2.bf16.msra.mxu0 0
  %4054 = vmatprep.subr.bf16.mxu0 0
  %4055 = vmatpush2.bf16.msra.mxu0 0
  %4056 = vmatprep.subr.bf16.mxu0 0
  %4057 = vmatpush2.bf16.msra.mxu0 0
  %4058 = vmatprep.subr.bf16.mxu0 0
  %4059 = vmatpush2.bf16.msra.mxu0 0
  %4060 = vmatprep.subr.bf16.mxu0 0
  %4061 = vmatpush2.bf16.msra.mxu0 0
  %4062 = vmatprep.subr.bf16.mxu0 0
  %4063 = vmatpush2.bf16.msra.mxu0 %v4034
  %4064 = vmatprep.subr.bf16.mxu0 0
  %4065 = vmatpush2.bf16.msra.mxu0 %v4018
  %4066 = vmatprep.subr.bf16.mxu0 0
  %4067 = vmatpush2.bf16.msra.mxu0 %v4017
  %4068 = vmatprep.mubr.bf16.mxu0 %v4031
  %4069 = vmatmul.mubr.bf16.gmra.mxu0 %v3940
  %v4070 = vpop.f32.mrf.mxu0
  %v4071 = vadd.f32 0.0, %v4070
  %v4072 = vpop.f32.mrf.mxu0
  %v4073 = vpop.f32.mrf.mxu0
  %v4074 = vpop.f32.mrf.mxu0
  %4075 = vdwg.mxu0
  %v4076 = vadd.f32 %v3939, %v4071
  %v4077 = vpack.c.bf16 %v2423, %v2423
  %v4078 = vpack.c.bf16 %v2424, %v2424
  %s4079 = scalar_lea.vmem %s6, 1056
  %v4080 = vld [vmem:[%s4079] sm:$0xf]
  %v4081 = vld [vmem:[%s4079 + $0x4] sm:$0xf]
  %v4082 = vld [vmem:[%s4079 + $0x8] sm:$0xf]
  %v4083 = vld [vmem:[%s4079 + $0xc] sm:$0xf]
  %v4084 = vld [vmem:[%s4079 + $0x10] sm:$0xf]
  %v4085 = vld [vmem:[%s4079 + $0x14] sm:$0xf]
  %v4086 = vld [vmem:[%s4079 + $0x18] sm:$0xf]
  %v4087 = vld [vmem:[%s4079 + $0x1c] sm:$0xf]
  %v4088 = vld [vmem:[%s4079 + $0x20] sm:$0xf]
  %v4089 = vld [vmem:[%s4079 + $0x24] sm:$0xf]
  %v4090 = vld [vmem:[%s4079 + $0x28] sm:$0xf]
  %v4091 = vld [vmem:[%s4079 + $0x2c] sm:$0xf]
  %v4092 = vld [vmem:[%s4079 + $0x30] sm:$0xf]
  %v4093 = vld [vmem:[%s4079 + $0x34] sm:$0xf]
  %v4094 = vld [vmem:[%s4079 + $0x38] sm:$0xf]
  %v4095 = vld [vmem:[%s4079 + $0x3c] sm:$0xf]
  %v4096 = vld [vmem:[%s4079 + $0x40] sm:$0xf]
  %v4097 = vld [vmem:[%s4079 + $0x44] sm:$0xf]
  %v4098 = vld [vmem:[%s4079 + $0x48] sm:$0xf]
  %v4099 = vld [vmem:[%s4079 + $0x4c] sm:$0xf]
  %v4100 = vld [vmem:[%s4079 + $0x50] sm:$0xf]
  %v4101 = vld [vmem:[%s4079 + $0x54] sm:$0xf]
  %v4124 = vunpack.c.l.b16 %v4080
  %v4125 = vunpack.c.l.b16 %v4081
  %v4126 = vunpack.c.l.b16 %v4082
  %v4127 = vunpack.c.l.b16 %v4083
  %v4128 = vunpack.c.l.b16 %v4084
  %v4129 = vunpack.c.l.b16 %v4085
  %v4130 = vunpack.c.l.b16 %v4086
  %v4131 = vunpack.c.l.b16 %v4087
  %v4132 = vunpack.c.l.b16 %v4088
  %v4133 = vunpack.c.l.b16 %v4089
  %v4134 = vunpack.c.l.b16 %v4090
  %v4135 = vunpack.c.l.b16 %v4091
  %v4136 = vunpack.c.l.b16 %v4092
  %v4137 = vunpack.c.l.b16 %v4093
  %v4138 = vunpack.c.l.b16 %v4094
  %v4139 = vunpack.c.l.b16 %v4095
  %v4140 = vunpack.c.l.b16 %v4096
  %v4141 = vunpack.c.l.b16 %v4097
  %v4142 = vunpack.c.l.b16 %v4098
  %v4143 = vunpack.c.l.b16 %v4099
  %v4144 = vunpack.c.l.b16 %v4100
  %v4145 = vunpack.c.l.b16 %v4101
  %v4146 = vpack.c.b16 %v4125, %v4124
  %v4147 = vpack.c.b16 %v4127, %v4126
  %v4148 = vpack.c.b16 %v4129, %v4128
  %v4149 = vpack.c.b16 %v4131, %v4130
  %v4150 = vpack.c.b16 %v4133, %v4132
  %v4151 = vpack.c.b16 %v4135, %v4134
  %v4152 = vpack.c.b16 %v4137, %v4136
  %v4153 = vpack.c.b16 %v4139, %v4138
  %v4154 = vpack.c.b16 %v4141, %v4140
  %v4155 = vpack.c.b16 %v4143, %v4142
  %v4156 = vpack.c.b16 %v4145, %v4144
  %v4168 = vsel %vm2545, %v4078, 0
  %v4171 = vand.u32 %v4156, %v2552
  %4173 = vmatprep.subr.bf16.mxu0 0
  %4174 = vmatpush1.bf16.msra.mxu0 %v4153
  %4175 = vmatprep.subr.bf16.mxu0 0
  %4176 = vmatpush1.bf16.msra.mxu0 %v4152
  %4177 = vmatprep.subr.bf16.mxu0 0
  %4178 = vmatpush1.bf16.msra.mxu0 %v4151
  %4179 = vmatprep.subr.bf16.mxu0 0
  %4180 = vmatpush1.bf16.msra.mxu0 %v4150
  %4181 = vmatprep.subr.bf16.mxu0 0
  %4182 = vmatpush1.bf16.msra.mxu0 %v4149
  %4183 = vmatprep.subr.bf16.mxu0 0
  %4184 = vmatpush1.bf16.msra.mxu0 %v4148
  %4185 = vmatprep.subr.bf16.mxu0 0
  %4186 = vmatpush1.bf16.msra.mxu0 %v4147
  %4187 = vmatprep.subr.bf16.mxu0 0
  %4188 = vmatpush1.bf16.msra.mxu0 %v4146
  %4189 = vmatprep.subr.bf16.mxu0 0
  %4190 = vmatpush2.bf16.msra.mxu0 0
  %4191 = vmatprep.subr.bf16.mxu0 0
  %4192 = vmatpush2.bf16.msra.mxu0 0
  %4193 = vmatprep.subr.bf16.mxu0 0
  %4194 = vmatpush2.bf16.msra.mxu0 0
  %4195 = vmatprep.subr.bf16.mxu0 0
  %4196 = vmatpush2.bf16.msra.mxu0 0
  %4197 = vmatprep.subr.bf16.mxu0 0
  %4198 = vmatpush2.bf16.msra.mxu0 0
  %4199 = vmatprep.subr.bf16.mxu0 0
  %4200 = vmatpush2.bf16.msra.mxu0 %v4171
  %4201 = vmatprep.subr.bf16.mxu0 0
  %4202 = vmatpush2.bf16.msra.mxu0 %v4155
  %4203 = vmatprep.subr.bf16.mxu0 0
  %4204 = vmatpush2.bf16.msra.mxu0 %v4154
  %4205 = vmatprep.mubr.bf16.mxu0 %v4168
  %4206 = vmatmul.mubr.bf16.gmra.mxu0 %v4077
  %v4207 = vpop.f32.mrf.mxu0
  %v4208 = vadd.f32 0.0, %v4207
  %v4209 = vpop.f32.mrf.mxu0
  %v4210 = vpop.f32.mrf.mxu0
  %v4211 = vpop.f32.mrf.mxu0
  %4212 = vdwg.mxu0
  %v4213 = vadd.f32 %v4076, %v4208
  %v4214 = vpack.c.bf16 %v2425, %v2425
  %v4215 = vpack.c.bf16 %v2426, %v2426
  %s4216 = scalar_lea.vmem %s6, 1144
  %v4217 = vld [vmem:[%s4216] sm:$0xf]
  %v4218 = vld [vmem:[%s4216 + $0x4] sm:$0xf]
  %v4219 = vld [vmem:[%s4216 + $0x8] sm:$0xf]
  %v4220 = vld [vmem:[%s4216 + $0xc] sm:$0xf]
  %v4221 = vld [vmem:[%s4216 + $0x10] sm:$0xf]
  %v4222 = vld [vmem:[%s4216 + $0x14] sm:$0xf]
  %v4223 = vld [vmem:[%s4216 + $0x18] sm:$0xf]
  %v4224 = vld [vmem:[%s4216 + $0x1c] sm:$0xf]
  %v4225 = vld [vmem:[%s4216 + $0x20] sm:$0xf]
  %v4226 = vld [vmem:[%s4216 + $0x24] sm:$0xf]
  %v4227 = vld [vmem:[%s4216 + $0x28] sm:$0xf]
  %v4228 = vld [vmem:[%s4216 + $0x2c] sm:$0xf]
  %v4229 = vld [vmem:[%s4216 + $0x30] sm:$0xf]
  %v4230 = vld [vmem:[%s4216 + $0x34] sm:$0xf]
  %v4231 = vld [vmem:[%s4216 + $0x38] sm:$0xf]
  %v4232 = vld [vmem:[%s4216 + $0x3c] sm:$0xf]
  %v4233 = vld [vmem:[%s4216 + $0x40] sm:$0xf]
  %v4234 = vld [vmem:[%s4216 + $0x44] sm:$0xf]
  %v4235 = vld [vmem:[%s4216 + $0x48] sm:$0xf]
  %v4236 = vld [vmem:[%s4216 + $0x4c] sm:$0xf]
  %v4237 = vld [vmem:[%s4216 + $0x50] sm:$0xf]
  %v4238 = vld [vmem:[%s4216 + $0x54] sm:$0xf]
  %v4261 = vunpack.c.l.b16 %v4217
  %v4262 = vunpack.c.l.b16 %v4218
  %v4263 = vunpack.c.l.b16 %v4219
  %v4264 = vunpack.c.l.b16 %v4220
  %v4265 = vunpack.c.l.b16 %v4221
  %v4266 = vunpack.c.l.b16 %v4222
  %v4267 = vunpack.c.l.b16 %v4223
  %v4268 = vunpack.c.l.b16 %v4224
  %v4269 = vunpack.c.l.b16 %v4225
  %v4270 = vunpack.c.l.b16 %v4226
  %v4271 = vunpack.c.l.b16 %v4227
  %v4272 = vunpack.c.l.b16 %v4228
  %v4273 = vunpack.c.l.b16 %v4229
  %v4274 = vunpack.c.l.b16 %v4230
  %v4275 = vunpack.c.l.b16 %v4231
  %v4276 = vunpack.c.l.b16 %v4232
  %v4277 = vunpack.c.l.b16 %v4233
  %v4278 = vunpack.c.l.b16 %v4234
  %v4279 = vunpack.c.l.b16 %v4235
  %v4280 = vunpack.c.l.b16 %v4236
  %v4281 = vunpack.c.l.b16 %v4237
  %v4282 = vunpack.c.l.b16 %v4238
  %v4283 = vpack.c.b16 %v4262, %v4261
  %v4284 = vpack.c.b16 %v4264, %v4263
  %v4285 = vpack.c.b16 %v4266, %v4265
  %v4286 = vpack.c.b16 %v4268, %v4267
  %v4287 = vpack.c.b16 %v4270, %v4269
  %v4288 = vpack.c.b16 %v4272, %v4271
  %v4289 = vpack.c.b16 %v4274, %v4273
  %v4290 = vpack.c.b16 %v4276, %v4275
  %v4291 = vpack.c.b16 %v4278, %v4277
  %v4292 = vpack.c.b16 %v4280, %v4279
  %v4293 = vpack.c.b16 %v4282, %v4281
  %v4305 = vsel %vm2545, %v4215, 0
  %v4308 = vand.u32 %v4293, %v2552
  %4310 = vmatprep.subr.bf16.mxu0 0
  %4311 = vmatpush1.bf16.msra.mxu0 %v4290
  %4312 = vmatprep.subr.bf16.mxu0 0
  %4313 = vmatpush1.bf16.msra.mxu0 %v4289
  %4314 = vmatprep.subr.bf16.mxu0 0
  %4315 = vmatpush1.bf16.msra.mxu0 %v4288
  %4316 = vmatprep.subr.bf16.mxu0 0
  %4317 = vmatpush1.bf16.msra.mxu0 %v4287
  %4318 = vmatprep.subr.bf16.mxu0 0
  %4319 = vmatpush1.bf16.msra.mxu0 %v4286
  %4320 = vmatprep.subr.bf16.mxu0 0
  %4321 = vmatpush1.bf16.msra.mxu0 %v4285
  %4322 = vmatprep.subr.bf16.mxu0 0
  %4323 = vmatpush1.bf16.msra.mxu0 %v4284
  %4324 = vmatprep.subr.bf16.mxu0 0
  %4325 = vmatpush1.bf16.msra.mxu0 %v4283
  %4326 = vmatprep.subr.bf16.mxu0 0
  %4327 = vmatpush2.bf16.msra.mxu0 0
  %4328 = vmatprep.subr.bf16.mxu0 0
  %4329 = vmatpush2.bf16.msra.mxu0 0
  %4330 = vmatprep.subr.bf16.mxu0 0
  %4331 = vmatpush2.bf16.msra.mxu0 0
  %4332 = vmatprep.subr.bf16.mxu0 0
  %4333 = vmatpush2.bf16.msra.mxu0 0
  %4334 = vmatprep.subr.bf16.mxu0 0
  %4335 = vmatpush2.bf16.msra.mxu0 0
  %4336 = vmatprep.subr.bf16.mxu0 0
  %4337 = vmatpush2.bf16.msra.mxu0 %v4308
  %4338 = vmatprep.subr.bf16.mxu0 0
  %4339 = vmatpush2.bf16.msra.mxu0 %v4292
  %4340 = vmatprep.subr.bf16.mxu0 0
  %4341 = vmatpush2.bf16.msra.mxu0 %v4291
  %4342 = vmatprep.mubr.bf16.mxu0 %v4305
  %4343 = vmatmul.mubr.bf16.gmra.mxu0 %v4214
  %v4344 = vpop.f32.mrf.mxu0
  %v4345 = vadd.f32 0.0, %v4344
  %v4346 = vpop.f32.mrf.mxu0
  %v4347 = vpop.f32.mrf.mxu0
  %v4348 = vpop.f32.mrf.mxu0
  %4349 = vdwg.mxu0
  %v4350 = vadd.f32 %v4213, %v4345
  %v4351 = vpack.c.bf16 %v2427, %v2427
  %v4352 = vpack.c.bf16 %v2428, %v2428
  %s4353 = scalar_lea.vmem %s6, 1232
  %v4354 = vld [vmem:[%s4353] sm:$0xf]
  %v4355 = vld [vmem:[%s4353 + $0x4] sm:$0xf]
  %v4356 = vld [vmem:[%s4353 + $0x8] sm:$0xf]
  %v4357 = vld [vmem:[%s4353 + $0xc] sm:$0xf]
  %v4358 = vld [vmem:[%s4353 + $0x10] sm:$0xf]
  %v4359 = vld [vmem:[%s4353 + $0x14] sm:$0xf]
  %v4360 = vld [vmem:[%s4353 + $0x18] sm:$0xf]
  %v4361 = vld [vmem:[%s4353 + $0x1c] sm:$0xf]
  %v4362 = vld [vmem:[%s4353 + $0x20] sm:$0xf]
  %v4363 = vld [vmem:[%s4353 + $0x24] sm:$0xf]
  %v4364 = vld [vmem:[%s4353 + $0x28] sm:$0xf]
  %v4365 = vld [vmem:[%s4353 + $0x2c] sm:$0xf]
  %v4366 = vld [vmem:[%s4353 + $0x30] sm:$0xf]
  %v4367 = vld [vmem:[%s4353 + $0x34] sm:$0xf]
  %v4368 = vld [vmem:[%s4353 + $0x38] sm:$0xf]
  %v4369 = vld [vmem:[%s4353 + $0x3c] sm:$0xf]
  %v4370 = vld [vmem:[%s4353 + $0x40] sm:$0xf]
  %v4371 = vld [vmem:[%s4353 + $0x44] sm:$0xf]
  %v4372 = vld [vmem:[%s4353 + $0x48] sm:$0xf]
  %v4373 = vld [vmem:[%s4353 + $0x4c] sm:$0xf]
  %v4374 = vld [vmem:[%s4353 + $0x50] sm:$0xf]
  %v4375 = vld [vmem:[%s4353 + $0x54] sm:$0xf]
  %v4398 = vunpack.c.l.b16 %v4354
  %v4399 = vunpack.c.l.b16 %v4355
  %v4400 = vunpack.c.l.b16 %v4356
  %v4401 = vunpack.c.l.b16 %v4357
  %v4402 = vunpack.c.l.b16 %v4358
  %v4403 = vunpack.c.l.b16 %v4359
  %v4404 = vunpack.c.l.b16 %v4360
  %v4405 = vunpack.c.l.b16 %v4361
  %v4406 = vunpack.c.l.b16 %v4362
  %v4407 = vunpack.c.l.b16 %v4363
  %v4408 = vunpack.c.l.b16 %v4364
  %v4409 = vunpack.c.l.b16 %v4365
  %v4410 = vunpack.c.l.b16 %v4366
  %v4411 = vunpack.c.l.b16 %v4367
  %v4412 = vunpack.c.l.b16 %v4368
  %v4413 = vunpack.c.l.b16 %v4369
  %v4414 = vunpack.c.l.b16 %v4370
  %v4415 = vunpack.c.l.b16 %v4371
  %v4416 = vunpack.c.l.b16 %v4372
  %v4417 = vunpack.c.l.b16 %v4373
  %v4418 = vunpack.c.l.b16 %v4374
  %v4419 = vunpack.c.l.b16 %v4375
  %v4420 = vpack.c.b16 %v4399, %v4398
  %v4421 = vpack.c.b16 %v4401, %v4400
  %v4422 = vpack.c.b16 %v4403, %v4402
  %v4423 = vpack.c.b16 %v4405, %v4404
  %v4424 = vpack.c.b16 %v4407, %v4406
  %v4425 = vpack.c.b16 %v4409, %v4408
  %v4426 = vpack.c.b16 %v4411, %v4410
  %v4427 = vpack.c.b16 %v4413, %v4412
  %v4428 = vpack.c.b16 %v4415, %v4414
  %v4429 = vpack.c.b16 %v4417, %v4416
  %v4430 = vpack.c.b16 %v4419, %v4418
  %v4442 = vsel %vm2545, %v4352, 0
  %v4445 = vand.u32 %v4430, %v2552
  %4447 = vmatprep.subr.bf16.mxu0 0
  %4448 = vmatpush1.bf16.msra.mxu0 %v4427
  %4449 = vmatprep.subr.bf16.mxu0 0
  %4450 = vmatpush1.bf16.msra.mxu0 %v4426
  %4451 = vmatprep.subr.bf16.mxu0 0
  %4452 = vmatpush1.bf16.msra.mxu0 %v4425
  %4453 = vmatprep.subr.bf16.mxu0 0
  %4454 = vmatpush1.bf16.msra.mxu0 %v4424
  %4455 = vmatprep.subr.bf16.mxu0 0
  %4456 = vmatpush1.bf16.msra.mxu0 %v4423
  %4457 = vmatprep.subr.bf16.mxu0 0
  %4458 = vmatpush1.bf16.msra.mxu0 %v4422
  %4459 = vmatprep.subr.bf16.mxu0 0
  %4460 = vmatpush1.bf16.msra.mxu0 %v4421
  %4461 = vmatprep.subr.bf16.mxu0 0
  %4462 = vmatpush1.bf16.msra.mxu0 %v4420
  %4463 = vmatprep.subr.bf16.mxu0 0
  %4464 = vmatpush2.bf16.msra.mxu0 0
  %4465 = vmatprep.subr.bf16.mxu0 0
  %4466 = vmatpush2.bf16.msra.mxu0 0
  %4467 = vmatprep.subr.bf16.mxu0 0
  %4468 = vmatpush2.bf16.msra.mxu0 0
  %4469 = vmatprep.subr.bf16.mxu0 0
  %4470 = vmatpush2.bf16.msra.mxu0 0
  %4471 = vmatprep.subr.bf16.mxu0 0
  %4472 = vmatpush2.bf16.msra.mxu0 0
  %4473 = vmatprep.subr.bf16.mxu0 0
  %4474 = vmatpush2.bf16.msra.mxu0 %v4445
  %4475 = vmatprep.subr.bf16.mxu0 0
  %4476 = vmatpush2.bf16.msra.mxu0 %v4429
  %4477 = vmatprep.subr.bf16.mxu0 0
  %4478 = vmatpush2.bf16.msra.mxu0 %v4428
  %4479 = vmatprep.mubr.bf16.mxu0 %v4442
  %4480 = vmatmul.mubr.bf16.gmra.mxu0 %v4351
  %v4481 = vpop.f32.mrf.mxu0
  %v4482 = vadd.f32 0.0, %v4481
  %v4483 = vpop.f32.mrf.mxu0
  %v4484 = vpop.f32.mrf.mxu0
  %v4485 = vpop.f32.mrf.mxu0
  %4486 = vdwg.mxu0
  %v4487 = vadd.f32 %v4350, %v4482
  %v4488 = vpack.c.bf16 %v2429, %v2429
  %v4489 = vpack.c.bf16 %v2430, %v2430
  %s4490 = scalar_lea.vmem %s6, 1320
  %v4491 = vld [vmem:[%s4490] sm:$0xf]
  %v4492 = vld [vmem:[%s4490 + $0x4] sm:$0xf]
  %v4493 = vld [vmem:[%s4490 + $0x8] sm:$0xf]
  %v4494 = vld [vmem:[%s4490 + $0xc] sm:$0xf]
  %v4495 = vld [vmem:[%s4490 + $0x10] sm:$0xf]
  %v4496 = vld [vmem:[%s4490 + $0x14] sm:$0xf]
  %v4497 = vld [vmem:[%s4490 + $0x18] sm:$0xf]
  %v4498 = vld [vmem:[%s4490 + $0x1c] sm:$0xf]
  %v4499 = vld [vmem:[%s4490 + $0x20] sm:$0xf]
  %v4500 = vld [vmem:[%s4490 + $0x24] sm:$0xf]
  %v4501 = vld [vmem:[%s4490 + $0x28] sm:$0xf]
  %v4502 = vld [vmem:[%s4490 + $0x2c] sm:$0xf]
  %v4503 = vld [vmem:[%s4490 + $0x30] sm:$0xf]
  %v4504 = vld [vmem:[%s4490 + $0x34] sm:$0xf]
  %v4505 = vld [vmem:[%s4490 + $0x38] sm:$0xf]
  %v4506 = vld [vmem:[%s4490 + $0x3c] sm:$0xf]
  %v4507 = vld [vmem:[%s4490 + $0x40] sm:$0xf]
  %v4508 = vld [vmem:[%s4490 + $0x44] sm:$0xf]
  %v4509 = vld [vmem:[%s4490 + $0x48] sm:$0xf]
  %v4510 = vld [vmem:[%s4490 + $0x4c] sm:$0xf]
  %v4511 = vld [vmem:[%s4490 + $0x50] sm:$0xf]
  %v4512 = vld [vmem:[%s4490 + $0x54] sm:$0xf]
  %v4535 = vunpack.c.l.b16 %v4491
  %v4536 = vunpack.c.l.b16 %v4492
  %v4537 = vunpack.c.l.b16 %v4493
  %v4538 = vunpack.c.l.b16 %v4494
  %v4539 = vunpack.c.l.b16 %v4495
  %v4540 = vunpack.c.l.b16 %v4496
  %v4541 = vunpack.c.l.b16 %v4497
  %v4542 = vunpack.c.l.b16 %v4498
  %v4543 = vunpack.c.l.b16 %v4499
  %v4544 = vunpack.c.l.b16 %v4500
  %v4545 = vunpack.c.l.b16 %v4501
  %v4546 = vunpack.c.l.b16 %v4502
  %v4547 = vunpack.c.l.b16 %v4503
  %v4548 = vunpack.c.l.b16 %v4504
  %v4549 = vunpack.c.l.b16 %v4505
  %v4550 = vunpack.c.l.b16 %v4506
  %v4551 = vunpack.c.l.b16 %v4507
  %v4552 = vunpack.c.l.b16 %v4508
  %v4553 = vunpack.c.l.b16 %v4509
  %v4554 = vunpack.c.l.b16 %v4510
  %v4555 = vunpack.c.l.b16 %v4511
  %v4556 = vunpack.c.l.b16 %v4512
  %v4557 = vpack.c.b16 %v4536, %v4535
  %v4558 = vpack.c.b16 %v4538, %v4537
  %v4559 = vpack.c.b16 %v4540, %v4539
  %v4560 = vpack.c.b16 %v4542, %v4541
  %v4561 = vpack.c.b16 %v4544, %v4543
  %v4562 = vpack.c.b16 %v4546, %v4545
  %v4563 = vpack.c.b16 %v4548, %v4547
  %v4564 = vpack.c.b16 %v4550, %v4549
  %v4565 = vpack.c.b16 %v4552, %v4551
  %v4566 = vpack.c.b16 %v4554, %v4553
  %v4567 = vpack.c.b16 %v4556, %v4555
  %v4579 = vsel %vm2545, %v4489, 0
  %v4582 = vand.u32 %v4567, %v2552
  %4584 = vmatprep.subr.bf16.mxu0 0
  %4585 = vmatpush1.bf16.msra.mxu0 %v4564
  %4586 = vmatprep.subr.bf16.mxu0 0
  %4587 = vmatpush1.bf16.msra.mxu0 %v4563
  %4588 = vmatprep.subr.bf16.mxu0 0
  %4589 = vmatpush1.bf16.msra.mxu0 %v4562
  %4590 = vmatprep.subr.bf16.mxu0 0
  %4591 = vmatpush1.bf16.msra.mxu0 %v4561
  %4592 = vmatprep.subr.bf16.mxu0 0
  %4593 = vmatpush1.bf16.msra.mxu0 %v4560
  %4594 = vmatprep.subr.bf16.mxu0 0
  %4595 = vmatpush1.bf16.msra.mxu0 %v4559
  %4596 = vmatprep.subr.bf16.mxu0 0
  %4597 = vmatpush1.bf16.msra.mxu0 %v4558
  %4598 = vmatprep.subr.bf16.mxu0 0
  %4599 = vmatpush1.bf16.msra.mxu0 %v4557
  %4600 = vmatprep.subr.bf16.mxu0 0
  %4601 = vmatpush2.bf16.msra.mxu0 0
  %4602 = vmatprep.subr.bf16.mxu0 0
  %4603 = vmatpush2.bf16.msra.mxu0 0
  %4604 = vmatprep.subr.bf16.mxu0 0
  %4605 = vmatpush2.bf16.msra.mxu0 0
  %4606 = vmatprep.subr.bf16.mxu0 0
  %4607 = vmatpush2.bf16.msra.mxu0 0
  %4608 = vmatprep.subr.bf16.mxu0 0
  %4609 = vmatpush2.bf16.msra.mxu0 0
  %4610 = vmatprep.subr.bf16.mxu0 0
  %4611 = vmatpush2.bf16.msra.mxu0 %v4582
  %4612 = vmatprep.subr.bf16.mxu0 0
  %4613 = vmatpush2.bf16.msra.mxu0 %v4566
  %4614 = vmatprep.subr.bf16.mxu0 0
  %4615 = vmatpush2.bf16.msra.mxu0 %v4565
  %4616 = vmatprep.mubr.bf16.mxu0 %v4579
  %4617 = vmatmul.mubr.bf16.gmra.mxu0 %v4488
  %v4618 = vpop.f32.mrf.mxu0
  %v4619 = vadd.f32 0.0, %v4618
  %v4620 = vpop.f32.mrf.mxu0
  %v4621 = vpop.f32.mrf.mxu0
  %v4622 = vpop.f32.mrf.mxu0
  %4623 = vdwg.mxu0
  %v4624 = vadd.f32 %v4487, %v4619
  %v4626 = vlaneseq
  %v4627 = vshrl.u32 %v4626, 7
  %v4628 = vsub.s32 0, %v4627
  %v4629 = vrot.slane %v166, %v4628
  %v4631 = vadd.f32 %v4624, %v4629
  %v4632 = vmax.f32 %v4631, 0.0
  %v4633 = vpack.c.bf16 %v4632, %v4632
  %v4635 = vlaneseq
  %v4636 = vshrl.u32 %v4635, 7
  %v4637 = vsub.s32 0, %v4636
  %v4638 = vrot.slane %v167, %v4637
  %v4645 = vunpack.c.l.b16 %v129
  %v4646 = vunpack.c.l.b16 %v130
  %v4647 = vunpack.c.l.b16 %v131
  %v4648 = vunpack.c.l.b16 %v132
  %v4649 = vunpack.c.l.b16 %v133
  %v4650 = vpack.c.b16 %v4646, %v4645
  %v4651 = vpack.c.b16 %v4648, %v4647
  %v4652 = vpack.c.b16 %v4649, %v4649
  %vm4655 = vcmask 326656
  %v4657 = vsel %vm4655, %v4633, 0
  %vm4659 = vcmask 1043456
  %v4661 = vsel %vm4659, %v4652, 0
  %4663 = vmatprep.subr.bf16.mxu0 0
  %4664 = vmatpush1.bf16.msra.mxu0 0
  %4665 = vmatprep.subr.bf16.mxu0 0
  %4666 = vmatpush1.bf16.msra.mxu0 0
  %4667 = vmatprep.subr.bf16.mxu0 0
  %4668 = vmatpush1.bf16.msra.mxu0 0
  %4669 = vmatprep.subr.bf16.mxu0 0
  %4670 = vmatpush1.bf16.msra.mxu0 0
  %4671 = vmatprep.subr.bf16.mxu0 0
  %4672 = vmatpush1.bf16.msra.mxu0 0
  %4673 = vmatprep.subr.bf16.mxu0 0
  %4674 = vmatpush1.bf16.msra.mxu0 %v4661
  %4675 = vmatprep.subr.bf16.mxu0 0
  %4676 = vmatpush1.bf16.msra.mxu0 %v4651
  %4677 = vmatprep.subr.bf16.mxu0 0
  %4678 = vmatpush1.bf16.msra.mxu0 %v4650
  %4679 = vmatprep.subr.bf16.mxu0 0
  %4680 = vmatpush2.bf16.msra.mxu0 0
  %4681 = vmatprep.subr.bf16.mxu0 0
  %4682 = vmatpush2.bf16.msra.mxu0 0
  %4683 = vmatprep.subr.bf16.mxu0 0
  %4684 = vmatpush2.bf16.msra.mxu0 0
  %4685 = vmatprep.subr.bf16.mxu0 0
  %4686 = vmatpush2.bf16.msra.mxu0 0
  %4687 = vmatprep.subr.bf16.mxu0 0
  %4688 = vmatpush2.bf16.msra.mxu0 0
  %4689 = vmatprep.subr.bf16.mxu0 0
  %4690 = vmatpush2.bf16.msra.mxu0 0
  %4691 = vmatprep.subr.bf16.mxu0 0
  %4692 = vmatpush2.bf16.msra.mxu0 0
  %4693 = vmatprep.subr.bf16.mxu0 0
  %4694 = vmatpush2.bf16.msra.mxu0 0
  %4695 = vmatprep.mubr.bf16.mxu0 0
  %4696 = vmatmul.mubr.bf16.gmra.mxu0 %v4657
  %v4697 = vpop.f32.mrf.mxu0
  %v4698 = vadd.f32 %v4638, %v4697
  %v4699 = vpop.f32.mrf.mxu0
  %v4700 = vpop.f32.mrf.mxu0
  %v4701 = vpop.f32.mrf.mxu0
  %4702 = vdwg.mxu0
  %vm4703 = vcmask 31744
  %4704 = vst.msk [vmem:[%s10] sm:$0xff] %vm4703, %v4698
  %s4705 = scalar_lea.vmem %s0, 96
  %v4706 = vld [vmem:[%s4705] sm:$0xff]
  %v4707 = vld [vmem:[%s4705 + $0x8] sm:$0xff]
  %v4708 = vld [vmem:[%s4705 + $0x10] sm:$0xff]
  %v4709 = vld [vmem:[%s4705 + $0x18] sm:$0xff]
  %v4710 = vld [vmem:[%s4705 + $0x20] sm:$0xff]
  %v4711 = vld [vmem:[%s4705 + $0x28] sm:$0xff]
  %v4712 = vld [vmem:[%s4705 + $0x30] sm:$0xff]
  %v4713 = vld [vmem:[%s4705 + $0x38] sm:$0xff]
  %v4714 = vld [vmem:[%s4705 + $0x40] sm:$0xff]
  %v4715 = vld [vmem:[%s4705 + $0x48] sm:$0xff]
  %v4716 = vld [vmem:[%s4705 + $0x50] sm:$0xff]
  %v4717 = vld [vmem:[%s4705 + $0x58] sm:$0xff]
  %4730 = vrot.lane.b32.xlu0 %v4706, 127
  %v4731 = vpop.permute.xlu0 %4730
  %4732 = vrot.lane.b32.xlu0 %v4707, 127
  %v4733 = vpop.permute.xlu0 %4732
  %4734 = vrot.lane.b32.xlu0 %v4708, 127
  %v4735 = vpop.permute.xlu0 %4734
  %4736 = vrot.lane.b32.xlu0 %v4709, 127
  %v4737 = vpop.permute.xlu0 %4736
  %4738 = vrot.lane.b32.xlu0 %v4710, 127
  %v4739 = vpop.permute.xlu0 %4738
  %4740 = vrot.lane.b32.xlu0 %v4711, 127
  %v4741 = vpop.permute.xlu0 %4740
  %4742 = vrot.lane.b32.xlu0 %v4712, 127
  %v4743 = vpop.permute.xlu0 %4742
  %4744 = vrot.lane.b32.xlu0 %v4713, 127
  %v4745 = vpop.permute.xlu0 %4744
  %4746 = vrot.lane.b32.xlu0 %v4714, 127
  %v4747 = vpop.permute.xlu0 %4746
  %4748 = vrot.lane.b32.xlu0 %v4715, 127
  %v4749 = vpop.permute.xlu0 %4748
  %4750 = vrot.lane.b32.xlu0 %v4716, 127
  %v4751 = vpop.permute.xlu0 %4750
  %4752 = vrot.lane.b32.xlu0 %v4717, 127
  %v4753 = vpop.permute.xlu0 %4752
  %v4754 = vsel %vm216, %v4731, %v4733
  %v4755 = vsel %vm216, %v4733, %v4735
  %v4756 = vsel %vm216, %v4737, %v4739
  %v4757 = vsel %vm216, %v4739, %v4741
  %v4758 = vsel %vm216, %v4743, %v4745
  %v4759 = vsel %vm216, %v4745, %v4747
  %v4760 = vsel %vm216, %v4749, %v4751
  %v4761 = vsel %vm216, %v4751, %v4753
  %4774 = vrot.lane.b32.xlu0 %v4706, 126
  %v4775 = vpop.permute.xlu0 %4774
  %4776 = vrot.lane.b32.xlu0 %v4707, 126
  %v4777 = vpop.permute.xlu0 %4776
  %4778 = vrot.lane.b32.xlu0 %v4708, 126
  %v4779 = vpop.permute.xlu0 %4778
  %4780 = vrot.lane.b32.xlu0 %v4709, 126
  %v4781 = vpop.permute.xlu0 %4780
  %4782 = vrot.lane.b32.xlu0 %v4710, 126
  %v4783 = vpop.permute.xlu0 %4782
  %4784 = vrot.lane.b32.xlu0 %v4711, 126
  %v4785 = vpop.permute.xlu0 %4784
  %4786 = vrot.lane.b32.xlu0 %v4712, 126
  %v4787 = vpop.permute.xlu0 %4786
  %4788 = vrot.lane.b32.xlu0 %v4713, 126
  %v4789 = vpop.permute.xlu0 %4788
  %4790 = vrot.lane.b32.xlu0 %v4714, 126
  %v4791 = vpop.permute.xlu0 %4790
  %4792 = vrot.lane.b32.xlu0 %v4715, 126
  %v4793 = vpop.permute.xlu0 %4792
  %4794 = vrot.lane.b32.xlu0 %v4716, 126
  %v4795 = vpop.permute.xlu0 %4794
  %4796 = vrot.lane.b32.xlu0 %v4717, 126
  %v4797 = vpop.permute.xlu0 %4796
  %v4798 = vsel %vm261, %v4775, %v4777
  %v4799 = vsel %vm261, %v4777, %v4779
  %v4800 = vsel %vm261, %v4781, %v4783
  %v4801 = vsel %vm261, %v4783, %v4785
  %v4802 = vsel %vm261, %v4787, %v4789
  %v4803 = vsel %vm261, %v4789, %v4791
  %v4804 = vsel %vm261, %v4793, %v4795
  %v4805 = vsel %vm261, %v4795, %v4797
  %v4818 = vpack.c.bf16 %v4709, %v4706
  %v4819 = vpack.c.bf16 %v4710, %v4707
  %v4820 = vpack.c.bf16 %v4711, %v4708
  %v4821 = vpack.c.bf16 %v4715, %v4712
  %v4822 = vpack.c.bf16 %v4716, %v4713
  %v4823 = vpack.c.bf16 %v4717, %v4714
  %v4824 = vpack.c.bf16 %v4756, %v4754
  %v4825 = vpack.c.bf16 %v4757, %v4755
  %v4826 = vpack.c.bf16 %v4741, %v4735
  %v4827 = vpack.c.bf16 %v4760, %v4758
  %v4828 = vpack.c.bf16 %v4761, %v4759
  %v4829 = vpack.c.bf16 %v4753, %v4747
  %v4830 = vpack.c.bf16 %v4800, %v4798
  %v4831 = vpack.c.bf16 %v4801, %v4799
  %v4832 = vpack.c.bf16 %v4785, %v4779
  %v4833 = vpack.c.bf16 %v4804, %v4802
  %v4834 = vpack.c.bf16 %v4805, %v4803
  %v4835 = vpack.c.bf16 %v4797, %v4791
  %4836 = vmatprep.subr.bf16.mxu0 0
  %4837 = vmatpush1.bf16.msra.mxu0 0
  %4838 = vmatprep.subr.bf16.mxu0 0
  %4839 = vmatpush1.bf16.msra.mxu0 0
  %4840 = vmatprep.subr.bf16.mxu0 %v4834
  %4841 = vmatpush1.bf16.msra.mxu0 %v4833
  %4842 = vmatprep.subr.bf16.mxu0 %v4831
  %4843 = vmatpush1.bf16.msra.mxu0 %v4830
  %4844 = vmatprep.subr.bf16.mxu0 %v4828
  %4845 = vmatpush1.bf16.msra.mxu0 %v4827
  %4846 = vmatprep.subr.bf16.mxu0 %v4825
  %4847 = vmatpush1.bf16.msra.mxu0 %v4824
  %4848 = vmatprep.subr.bf16.mxu0 %v4822
  %4849 = vmatpush1.bf16.msra.mxu0 %v4821
  %4850 = vmatprep.subr.bf16.mxu0 %v4819
  %4851 = vmatpush1.bf16.msra.mxu0 %v4818
  %4852 = vmatprep.subr.bf16.mxu0 0
  %4853 = vmatpush2.bf16.msra.mxu0 0
  %4854 = vmatprep.subr.bf16.mxu0 0
  %4855 = vmatpush2.bf16.msra.mxu0 0
  %4856 = vmatprep.subr.bf16.mxu0 0
  %4857 = vmatpush2.bf16.msra.mxu0 0
  %4858 = vmatprep.subr.bf16.mxu0 0
  %4859 = vmatpush2.bf16.msra.mxu0 0
  %4860 = vmatprep.subr.bf16.mxu0 0
  %4861 = vmatpush2.bf16.msra.mxu0 0
  %4862 = vmatprep.subr.bf16.mxu0 0
  %4863 = vmatpush2.bf16.msra.mxu0 0
  %4864 = vmatprep.subr.bf16.mxu0 0
  %4865 = vmatpush2.bf16.msra.mxu0 0
  %4866 = vmatprep.subr.bf16.mxu0 0
  %4867 = vmatpush2.bf16.msra.mxu0 0
  %4868 = vmatprep.mubr.bf16.mxu0 0
  %4869 = vmatmul.mubr.bf16.gmra.mxu0 %v422
  %v4870 = vpop.f32.mrf.mxu0
  %v4871 = vadd.f32 %v303, %v4870
  %v4872 = vpop.f32.mrf.mxu0
  %v4873 = vadd.f32 %v303, %v4872
  %v4874 = vpop.f32.mrf.mxu0
  %v4875 = vadd.f32 %v308, %v4874
  %v4876 = vpop.f32.mrf.mxu0
  %v4877 = vadd.f32 %v308, %v4876
  %4878 = vmatprep.mubr.bf16.mxu0 0
  %4879 = vmatmul.mubr.bf16.gmra.mxu0 %v425
  %v4880 = vpop.f32.mrf.mxu0
  %v4881 = vadd.f32 %v313, %v4880
  %v4882 = vpop.f32.mrf.mxu0
  %v4883 = vadd.f32 %v313, %v4882
  %v4884 = vpop.f32.mrf.mxu0
  %v4885 = vadd.f32 %v318, %v4884
  %v4886 = vpop.f32.mrf.mxu0
  %v4887 = vadd.f32 %v318, %v4886
  %4888 = vmatprep.mubr.bf16.mxu0 0
  %4889 = vmatmul.mubr.bf16.gmra.mxu0 %v428
  %v4890 = vpop.f32.mrf.mxu0
  %v4891 = vadd.f32 %v323, %v4890
  %v4892 = vpop.f32.mrf.mxu0
  %v4893 = vadd.f32 %v323, %v4892
  %v4894 = vpop.f32.mrf.mxu0
  %v4895 = vadd.f32 %v328, %v4894
  %v4896 = vpop.f32.mrf.mxu0
  %v4897 = vadd.f32 %v328, %v4896
  %4898 = vmatprep.mubr.bf16.mxu0 0
  %4899 = vmatmul.mubr.bf16.gmra.mxu0 %v431
  %v4900 = vpop.f32.mrf.mxu0
  %v4901 = vadd.f32 %v333, %v4900
  %v4902 = vpop.f32.mrf.mxu0
  %v4903 = vadd.f32 %v333, %v4902
  %v4904 = vpop.f32.mrf.mxu0
  %v4905 = vadd.f32 %v338, %v4904
  %v4906 = vpop.f32.mrf.mxu0
  %v4907 = vadd.f32 %v338, %v4906
  %4908 = vmatprep.mubr.bf16.mxu0 0
  %4909 = vmatmul.mubr.bf16.gmra.mxu0 %v434
  %v4910 = vpop.f32.mrf.mxu0
  %v4911 = vadd.f32 %v343, %v4910
  %v4912 = vpop.f32.mrf.mxu0
  %v4913 = vadd.f32 %v343, %v4912
  %v4914 = vpop.f32.mrf.mxu0
  %v4915 = vadd.f32 %v348, %v4914
  %v4916 = vpop.f32.mrf.mxu0
  %v4917 = vadd.f32 %v348, %v4916
  %4918 = vmatprep.mubr.bf16.mxu0 0
  %4919 = vmatmul.mubr.bf16.gmra.mxu0 %v437
  %v4920 = vpop.f32.mrf.mxu0
  %v4921 = vadd.f32 %v353, %v4920
  %v4922 = vpop.f32.mrf.mxu0
  %v4923 = vadd.f32 %v353, %v4922
  %v4924 = vpop.f32.mrf.mxu0
  %v4925 = vadd.f32 %v358, %v4924
  %v4926 = vpop.f32.mrf.mxu0
  %v4927 = vadd.f32 %v358, %v4926
  %4928 = vmatprep.mubr.bf16.mxu0 0
  %4929 = vmatmul.mubr.bf16.gmra.mxu0 %v440
  %v4930 = vpop.f32.mrf.mxu0
  %v4931 = vadd.f32 %v363, %v4930
  %v4932 = vpop.f32.mrf.mxu0
  %v4933 = vadd.f32 %v363, %v4932
  %v4934 = vpop.f32.mrf.mxu0
  %v4935 = vadd.f32 %v368, %v4934
  %v4936 = vpop.f32.mrf.mxu0
  %v4937 = vadd.f32 %v368, %v4936
  %4938 = vmatprep.mubr.bf16.mxu0 0
  %4939 = vmatmul.mubr.bf16.gmra.mxu0 %v443
  %v4940 = vpop.f32.mrf.mxu0
  %v4941 = vadd.f32 %v373, %v4940
  %v4942 = vpop.f32.mrf.mxu0
  %v4943 = vadd.f32 %v373, %v4942
  %v4944 = vpop.f32.mrf.mxu0
  %v4945 = vadd.f32 %v378, %v4944
  %v4946 = vpop.f32.mrf.mxu0
  %v4947 = vadd.f32 %v378, %v4946
  %4948 = vdwg.mxu0
  %4949 = vmatprep.subr.bf16.mxu0 0
  %4950 = vmatpush1.bf16.msra.mxu0 0
  %4951 = vmatprep.subr.bf16.mxu0 0
  %4952 = vmatpush1.bf16.msra.mxu0 0
  %4953 = vmatprep.subr.bf16.mxu0 0
  %4954 = vmatpush1.bf16.msra.mxu0 %v4835
  %4955 = vmatprep.subr.bf16.mxu0 0
  %4956 = vmatpush1.bf16.msra.mxu0 %v4832
  %4957 = vmatprep.subr.bf16.mxu0 0
  %4958 = vmatpush1.bf16.msra.mxu0 %v4829
  %4959 = vmatprep.subr.bf16.mxu0 0
  %4960 = vmatpush1.bf16.msra.mxu0 %v4826
  %4961 = vmatprep.subr.bf16.mxu0 0
  %4962 = vmatpush1.bf16.msra.mxu0 %v4823
  %4963 = vmatprep.subr.bf16.mxu0 0
  %4964 = vmatpush1.bf16.msra.mxu0 %v4820
  %4965 = vmatprep.subr.bf16.mxu0 0
  %4966 = vmatpush2.bf16.msra.mxu0 0
  %4967 = vmatprep.subr.bf16.mxu0 0
  %4968 = vmatpush2.bf16.msra.mxu0 0
  %4969 = vmatprep.subr.bf16.mxu0 0
  %4970 = vmatpush2.bf16.msra.mxu0 0
  %4971 = vmatprep.subr.bf16.mxu0 0
  %4972 = vmatpush2.bf16.msra.mxu0 0
  %4973 = vmatprep.subr.bf16.mxu0 0
  %4974 = vmatpush2.bf16.msra.mxu0 0
  %4975 = vmatprep.subr.bf16.mxu0 0
  %4976 = vmatpush2.bf16.msra.mxu0 0
  %4977 = vmatprep.subr.bf16.mxu0 0
  %4978 = vmatpush2.bf16.msra.mxu0 0
  %4979 = vmatprep.subr.bf16.mxu0 0
  %4980 = vmatpush2.bf16.msra.mxu0 0
  %4981 = vmatprep.mubr.bf16.mxu0 0
  %4982 = vmatmul.mubr.bf16.gmra.mxu0 %v422
  %v4983 = vpop.f32.mrf.mxu0
  %v4984 = vadd.f32 %v303, %v4983
  %v4985 = vpop.f32.mrf.mxu0
  %v4986 = vpop.f32.mrf.mxu0
  %v4987 = vadd.f32 %v308, %v4986
  %v4988 = vpop.f32.mrf.mxu0
  %4989 = vmatprep.mubr.bf16.mxu0 0
  %4990 = vmatmul.mubr.bf16.gmra.mxu0 %v425
  %v4991 = vpop.f32.mrf.mxu0
  %v4992 = vadd.f32 %v313, %v4991
  %v4993 = vpop.f32.mrf.mxu0
  %v4994 = vpop.f32.mrf.mxu0
  %v4995 = vadd.f32 %v318, %v4994
  %v4996 = vpop.f32.mrf.mxu0
  %4997 = vmatprep.mubr.bf16.mxu0 0
  %4998 = vmatmul.mubr.bf16.gmra.mxu0 %v428
  %v4999 = vpop.f32.mrf.mxu0
  %v5000 = vadd.f32 %v323, %v4999
  %v5001 = vpop.f32.mrf.mxu0
  %v5002 = vpop.f32.mrf.mxu0
  %v5003 = vadd.f32 %v328, %v5002
  %v5004 = vpop.f32.mrf.mxu0
  %5005 = vmatprep.mubr.bf16.mxu0 0
  %5006 = vmatmul.mubr.bf16.gmra.mxu0 %v431
  %v5007 = vpop.f32.mrf.mxu0
  %v5008 = vadd.f32 %v333, %v5007
  %v5009 = vpop.f32.mrf.mxu0
  %v5010 = vpop.f32.mrf.mxu0
  %v5011 = vadd.f32 %v338, %v5010
  %v5012 = vpop.f32.mrf.mxu0
  %5013 = vmatprep.mubr.bf16.mxu0 0
  %5014 = vmatmul.mubr.bf16.gmra.mxu0 %v434
  %v5015 = vpop.f32.mrf.mxu0
  %v5016 = vadd.f32 %v343, %v5015
  %v5017 = vpop.f32.mrf.mxu0
  %v5018 = vpop.f32.mrf.mxu0
  %v5019 = vadd.f32 %v348, %v5018
  %v5020 = vpop.f32.mrf.mxu0
  %5021 = vmatprep.mubr.bf16.mxu0 0
  %5022 = vmatmul.mubr.bf16.gmra.mxu0 %v437
  %v5023 = vpop.f32.mrf.mxu0
  %v5024 = vadd.f32 %v353, %v5023
  %v5025 = vpop.f32.mrf.mxu0
  %v5026 = vpop.f32.mrf.mxu0
  %v5027 = vadd.f32 %v358, %v5026
  %v5028 = vpop.f32.mrf.mxu0
  %5029 = vmatprep.mubr.bf16.mxu0 0
  %5030 = vmatmul.mubr.bf16.gmra.mxu0 %v440
  %v5031 = vpop.f32.mrf.mxu0
  %v5032 = vadd.f32 %v363, %v5031
  %v5033 = vpop.f32.mrf.mxu0
  %v5034 = vpop.f32.mrf.mxu0
  %v5035 = vadd.f32 %v368, %v5034
  %v5036 = vpop.f32.mrf.mxu0
  %5037 = vmatprep.mubr.bf16.mxu0 0
  %5038 = vmatmul.mubr.bf16.gmra.mxu0 %v443
  %v5039 = vpop.f32.mrf.mxu0
  %v5040 = vadd.f32 %v373, %v5039
  %v5041 = vpop.f32.mrf.mxu0
  %v5042 = vpop.f32.mrf.mxu0
  %v5043 = vadd.f32 %v378, %v5042
  %v5044 = vpop.f32.mrf.mxu0
  %5045 = vdwg.mxu0
  %v5046 = vmax.f32 %v4871, 0.0
  %v5047 = vmax.f32 %v4873, 0.0
  %v5048 = vmax.f32 %v4984, 0.0
  %v5049 = vmax.f32 %v4875, 0.0
  %v5050 = vmax.f32 %v4877, 0.0
  %v5051 = vmax.f32 %v4987, 0.0
  %v5052 = vmax.f32 %v4881, 0.0
  %v5053 = vmax.f32 %v4883, 0.0
  %v5054 = vmax.f32 %v4992, 0.0
  %v5055 = vmax.f32 %v4885, 0.0
  %v5056 = vmax.f32 %v4887, 0.0
  %v5057 = vmax.f32 %v4995, 0.0
  %v5058 = vmax.f32 %v4891, 0.0
  %v5059 = vmax.f32 %v4893, 0.0
  %v5060 = vmax.f32 %v5000, 0.0
  %v5061 = vmax.f32 %v4895, 0.0
  %v5062 = vmax.f32 %v4897, 0.0
  %v5063 = vmax.f32 %v5003, 0.0
  %v5064 = vmax.f32 %v4901, 0.0
  %v5065 = vmax.f32 %v4903, 0.0
  %v5066 = vmax.f32 %v5008, 0.0
  %v5067 = vmax.f32 %v4905, 0.0
  %v5068 = vmax.f32 %v4907, 0.0
  %v5069 = vmax.f32 %v5011, 0.0
  %v5070 = vmax.f32 %v4911, 0.0
  %v5071 = vmax.f32 %v4913, 0.0
  %v5072 = vmax.f32 %v5016, 0.0
  %v5073 = vmax.f32 %v4915, 0.0
  %v5074 = vmax.f32 %v4917, 0.0
  %v5075 = vmax.f32 %v5019, 0.0
  %v5076 = vmax.f32 %v4921, 0.0
  %v5077 = vmax.f32 %v4923, 0.0
  %v5078 = vmax.f32 %v5024, 0.0
  %v5079 = vmax.f32 %v4925, 0.0
  %v5080 = vmax.f32 %v4927, 0.0
  %v5081 = vmax.f32 %v5027, 0.0
  %v5082 = vmax.f32 %v4931, 0.0
  %v5083 = vmax.f32 %v4933, 0.0
  %v5084 = vmax.f32 %v5032, 0.0
  %v5085 = vmax.f32 %v4935, 0.0
  %v5086 = vmax.f32 %v4937, 0.0
  %v5087 = vmax.f32 %v5035, 0.0
  %v5088 = vmax.f32 %v4941, 0.0
  %v5089 = vmax.f32 %v4943, 0.0
  %v5090 = vmax.f32 %v5040, 0.0
  %v5091 = vmax.f32 %v4945, 0.0
  %v5092 = vmax.f32 %v4947, 0.0
  %v5093 = vmax.f32 %v5043, 0.0
  %5142 = vrot.lane.b32.xlu0 %v5046, 127
  %v5143 = vpop.permute.xlu0 %5142
  %5144 = vrot.lane.b32.xlu0 %v5047, 127
  %v5145 = vpop.permute.xlu0 %5144
  %5146 = vrot.lane.b32.xlu0 %v5048, 127
  %v5147 = vpop.permute.xlu0 %5146
  %5148 = vrot.lane.b32.xlu0 %v5049, 127
  %v5149 = vpop.permute.xlu0 %5148
  %5150 = vrot.lane.b32.xlu0 %v5050, 127
  %v5151 = vpop.permute.xlu0 %5150
  %5152 = vrot.lane.b32.xlu0 %v5051, 127
  %v5153 = vpop.permute.xlu0 %5152
  %5154 = vrot.lane.b32.xlu0 %v5052, 127
  %v5155 = vpop.permute.xlu0 %5154
  %5156 = vrot.lane.b32.xlu0 %v5053, 127
  %v5157 = vpop.permute.xlu0 %5156
  %5158 = vrot.lane.b32.xlu0 %v5054, 127
  %v5159 = vpop.permute.xlu0 %5158
  %5160 = vrot.lane.b32.xlu0 %v5055, 127
  %v5161 = vpop.permute.xlu0 %5160
  %5162 = vrot.lane.b32.xlu0 %v5056, 127
  %v5163 = vpop.permute.xlu0 %5162
  %5164 = vrot.lane.b32.xlu0 %v5057, 127
  %v5165 = vpop.permute.xlu0 %5164
  %5166 = vrot.lane.b32.xlu0 %v5058, 127
  %v5167 = vpop.permute.xlu0 %5166
  %5168 = vrot.lane.b32.xlu0 %v5059, 127
  %v5169 = vpop.permute.xlu0 %5168
  %5170 = vrot.lane.b32.xlu0 %v5060, 127
  %v5171 = vpop.permute.xlu0 %5170
  %5172 = vrot.lane.b32.xlu0 %v5061, 127
  %v5173 = vpop.permute.xlu0 %5172
  %5174 = vrot.lane.b32.xlu0 %v5062, 127
  %v5175 = vpop.permute.xlu0 %5174
  %5176 = vrot.lane.b32.xlu0 %v5063, 127
  %v5177 = vpop.permute.xlu0 %5176
  %5178 = vrot.lane.b32.xlu0 %v5064, 127
  %v5179 = vpop.permute.xlu0 %5178
  %5180 = vrot.lane.b32.xlu0 %v5065, 127
  %v5181 = vpop.permute.xlu0 %5180
  %5182 = vrot.lane.b32.xlu0 %v5066, 127
  %v5183 = vpop.permute.xlu0 %5182
  %5184 = vrot.lane.b32.xlu0 %v5067, 127
  %v5185 = vpop.permute.xlu0 %5184
  %5186 = vrot.lane.b32.xlu0 %v5068, 127
  %v5187 = vpop.permute.xlu0 %5186
  %5188 = vrot.lane.b32.xlu0 %v5069, 127
  %v5189 = vpop.permute.xlu0 %5188
  %5190 = vrot.lane.b32.xlu0 %v5070, 127
  %v5191 = vpop.permute.xlu0 %5190
  %5192 = vrot.lane.b32.xlu0 %v5071, 127
  %v5193 = vpop.permute.xlu0 %5192
  %5194 = vrot.lane.b32.xlu0 %v5072, 127
  %v5195 = vpop.permute.xlu0 %5194
  %5196 = vrot.lane.b32.xlu0 %v5073, 127
  %v5197 = vpop.permute.xlu0 %5196
  %5198 = vrot.lane.b32.xlu0 %v5074, 127
  %v5199 = vpop.permute.xlu0 %5198
  %5200 = vrot.lane.b32.xlu0 %v5075, 127
  %v5201 = vpop.permute.xlu0 %5200
  %5202 = vrot.lane.b32.xlu0 %v5076, 127
  %v5203 = vpop.permute.xlu0 %5202
  %5204 = vrot.lane.b32.xlu0 %v5077, 127
  %v5205 = vpop.permute.xlu0 %5204
  %5206 = vrot.lane.b32.xlu0 %v5078, 127
  %v5207 = vpop.permute.xlu0 %5206
  %5208 = vrot.lane.b32.xlu0 %v5079, 127
  %v5209 = vpop.permute.xlu0 %5208
  %5210 = vrot.lane.b32.xlu0 %v5080, 127
  %v5211 = vpop.permute.xlu0 %5210
  %5212 = vrot.lane.b32.xlu0 %v5081, 127
  %v5213 = vpop.permute.xlu0 %5212
  %5214 = vrot.lane.b32.xlu0 %v5082, 127
  %v5215 = vpop.permute.xlu0 %5214
  %5216 = vrot.lane.b32.xlu0 %v5083, 127
  %v5217 = vpop.permute.xlu0 %5216
  %5218 = vrot.lane.b32.xlu0 %v5084, 127
  %v5219 = vpop.permute.xlu0 %5218
  %5220 = vrot.lane.b32.xlu0 %v5085, 127
  %v5221 = vpop.permute.xlu0 %5220
  %5222 = vrot.lane.b32.xlu0 %v5086, 127
  %v5223 = vpop.permute.xlu0 %5222
  %5224 = vrot.lane.b32.xlu0 %v5087, 127
  %v5225 = vpop.permute.xlu0 %5224
  %5226 = vrot.lane.b32.xlu0 %v5088, 127
  %v5227 = vpop.permute.xlu0 %5226
  %5228 = vrot.lane.b32.xlu0 %v5089, 127
  %v5229 = vpop.permute.xlu0 %5228
  %5230 = vrot.lane.b32.xlu0 %v5090, 127
  %v5231 = vpop.permute.xlu0 %5230
  %5232 = vrot.lane.b32.xlu0 %v5091, 127
  %v5233 = vpop.permute.xlu0 %5232
  %5234 = vrot.lane.b32.xlu0 %v5092, 127
  %v5235 = vpop.permute.xlu0 %5234
  %5236 = vrot.lane.b32.xlu0 %v5093, 127
  %v5237 = vpop.permute.xlu0 %5236
  %v5238 = vsel %vm216, %v5143, %v5145
  %v5239 = vsel %vm216, %v5145, %v5147
  %v5240 = vsel %vm216, %v5149, %v5151
  %v5241 = vsel %vm216, %v5151, %v5153
  %v5242 = vsel %vm216, %v5155, %v5157
  %v5243 = vsel %vm216, %v5157, %v5159
  %v5244 = vsel %vm216, %v5161, %v5163
  %v5245 = vsel %vm216, %v5163, %v5165
  %v5246 = vsel %vm216, %v5167, %v5169
  %v5247 = vsel %vm216, %v5169, %v5171
  %v5248 = vsel %vm216, %v5173, %v5175
  %v5249 = vsel %vm216, %v5175, %v5177
  %v5250 = vsel %vm216, %v5179, %v5181
  %v5251 = vsel %vm216, %v5181, %v5183
  %v5252 = vsel %vm216, %v5185, %v5187
  %v5253 = vsel %vm216, %v5187, %v5189
  %v5254 = vsel %vm216, %v5191, %v5193
  %v5255 = vsel %vm216, %v5193, %v5195
  %v5256 = vsel %vm216, %v5197, %v5199
  %v5257 = vsel %vm216, %v5199, %v5201
  %v5258 = vsel %vm216, %v5203, %v5205
  %v5259 = vsel %vm216, %v5205, %v5207
  %v5260 = vsel %vm216, %v5209, %v5211
  %v5261 = vsel %vm216, %v5211, %v5213
  %v5262 = vsel %vm216, %v5215, %v5217
  %v5263 = vsel %vm216, %v5217, %v5219
  %v5264 = vsel %vm216, %v5221, %v5223
  %v5265 = vsel %vm216, %v5223, %v5225
  %v5266 = vsel %vm216, %v5227, %v5229
  %v5267 = vsel %vm216, %v5229, %v5231
  %v5268 = vsel %vm216, %v5233, %v5235
  %v5269 = vsel %vm216, %v5235, %v5237
  %v5318 = vmax.f32 %v5046, %v5238
  %v5319 = vmax.f32 %v5047, %v5239
  %v5320 = vmax.f32 %v5048, %v5147
  %v5321 = vmax.f32 %v5049, %v5240
  %v5322 = vmax.f32 %v5050, %v5241
  %v5323 = vmax.f32 %v5051, %v5153
  %v5324 = vmax.f32 %v5052, %v5242
  %v5325 = vmax.f32 %v5053, %v5243
  %v5326 = vmax.f32 %v5054, %v5159
  %v5327 = vmax.f32 %v5055, %v5244
  %v5328 = vmax.f32 %v5056, %v5245
  %v5329 = vmax.f32 %v5057, %v5165
  %v5330 = vmax.f32 %v5058, %v5246
  %v5331 = vmax.f32 %v5059, %v5247
  %v5332 = vmax.f32 %v5060, %v5171
  %v5333 = vmax.f32 %v5061, %v5248
  %v5334 = vmax.f32 %v5062, %v5249
  %v5335 = vmax.f32 %v5063, %v5177
  %v5336 = vmax.f32 %v5064, %v5250
  %v5337 = vmax.f32 %v5065, %v5251
  %v5338 = vmax.f32 %v5066, %v5183
  %v5339 = vmax.f32 %v5067, %v5252
  %v5340 = vmax.f32 %v5068, %v5253
  %v5341 = vmax.f32 %v5069, %v5189
  %v5342 = vmax.f32 %v5070, %v5254
  %v5343 = vmax.f32 %v5071, %v5255
  %v5344 = vmax.f32 %v5072, %v5195
  %v5345 = vmax.f32 %v5073, %v5256
  %v5346 = vmax.f32 %v5074, %v5257
  %v5347 = vmax.f32 %v5075, %v5201
  %v5348 = vmax.f32 %v5076, %v5258
  %v5349 = vmax.f32 %v5077, %v5259
  %v5350 = vmax.f32 %v5078, %v5207
  %v5351 = vmax.f32 %v5079, %v5260
  %v5352 = vmax.f32 %v5080, %v5261
  %v5353 = vmax.f32 %v5081, %v5213
  %v5354 = vmax.f32 %v5082, %v5262
  %v5355 = vmax.f32 %v5083, %v5263
  %v5356 = vmax.f32 %v5084, %v5219
  %v5357 = vmax.f32 %v5085, %v5264
  %v5358 = vmax.f32 %v5086, %v5265
  %v5359 = vmax.f32 %v5087, %v5225
  %v5360 = vmax.f32 %v5088, %v5266
  %v5361 = vmax.f32 %v5089, %v5267
  %v5362 = vmax.f32 %v5090, %v5231
  %v5363 = vmax.f32 %v5091, %v5268
  %v5364 = vmax.f32 %v5092, %v5269
  %v5365 = vmax.f32 %v5093, %v5237
  %v5366 = vpack.c.bf16 %v5321, %v5318
  %v5367 = vpack.c.bf16 %v5322, %v5319
  %v5368 = vpack.c.bf16 %v5323, %v5320
  %v5369 = vpack.c.bf16 %v5327, %v5324
  %v5370 = vpack.c.bf16 %v5328, %v5325
  %v5371 = vpack.c.bf16 %v5329, %v5326
  %v5372 = vpack.c.bf16 %v5333, %v5330
  %v5373 = vpack.c.bf16 %v5334, %v5331
  %v5374 = vpack.c.bf16 %v5335, %v5332
  %v5375 = vpack.c.bf16 %v5339, %v5336
  %v5376 = vpack.c.bf16 %v5340, %v5337
  %v5377 = vpack.c.bf16 %v5341, %v5338
  %v5378 = vpack.c.bf16 %v5345, %v5342
  %v5379 = vpack.c.bf16 %v5346, %v5343
  %v5380 = vpack.c.bf16 %v5347, %v5344
  %v5381 = vpack.c.bf16 %v5351, %v5348
  %v5382 = vpack.c.bf16 %v5352, %v5349
  %v5383 = vpack.c.bf16 %v5353, %v5350
  %v5384 = vpack.c.bf16 %v5357, %v5354
  %v5385 = vpack.c.bf16 %v5358, %v5355
  %v5386 = vpack.c.bf16 %v5359, %v5356
  %v5387 = vpack.c.bf16 %v5363, %v5360
  %v5388 = vpack.c.bf16 %v5364, %v5361
  %v5389 = vpack.c.bf16 %v5365, %v5362
  %v5391 = vsel %vm1224, %v5368, 0
  %v5394 = vsel %vm1224, %v5371, 0
  %v5397 = vsel %vm1224, %v5374, 0
  %v5400 = vsel %vm1224, %v5377, 0
  %v5403 = vsel %vm1224, %v5380, 0
  %v5406 = vsel %vm1224, %v5383, 0
  %v5409 = vsel %vm1224, %v5386, 0
  %v5412 = vsel %vm1224, %v5389, 0
  %5414 = vmatprep.subr.bf16.mxu0 %v1149
  %5415 = vmatpush1.bf16.msra.mxu0 %v1148
  %5416 = vmatprep.subr.bf16.mxu0 %v1147
  %5417 = vmatpush1.bf16.msra.mxu0 %v1146
  %5418 = vmatprep.subr.bf16.mxu0 %v1145
  %5419 = vmatpush1.bf16.msra.mxu0 %v1144
  %5420 = vmatprep.subr.bf16.mxu0 %v1143
  %5421 = vmatpush1.bf16.msra.mxu0 %v1142
  %5422 = vmatprep.subr.bf16.mxu0 %v1141
  %5423 = vmatpush1.bf16.msra.mxu0 %v1140
  %5424 = vmatprep.subr.bf16.mxu0 %v1139
  %5425 = vmatpush1.bf16.msra.mxu0 %v1138
  %5426 = vmatprep.subr.bf16.mxu0 %v1137
  %5427 = vmatpush1.bf16.msra.mxu0 %v1136
  %5428 = vmatprep.subr.bf16.mxu0 %v1135
  %5429 = vmatpush1.bf16.msra.mxu0 %v1134
  %5430 = vmatprep.subr.bf16.mxu0 %v1165
  %5431 = vmatpush2.bf16.msra.mxu0 %v1164
  %5432 = vmatprep.subr.bf16.mxu0 %v1163
  %5433 = vmatpush2.bf16.msra.mxu0 %v1162
  %5434 = vmatprep.subr.bf16.mxu0 %v1161
  %5435 = vmatpush2.bf16.msra.mxu0 %v1160
  %5436 = vmatprep.subr.bf16.mxu0 %v1159
  %5437 = vmatpush2.bf16.msra.mxu0 %v1158
  %5438 = vmatprep.subr.bf16.mxu0 %v1157
  %5439 = vmatpush2.bf16.msra.mxu0 %v1156
  %5440 = vmatprep.subr.bf16.mxu0 %v1155
  %5441 = vmatpush2.bf16.msra.mxu0 %v1154
  %5442 = vmatprep.subr.bf16.mxu0 %v1153
  %5443 = vmatpush2.bf16.msra.mxu0 %v1152
  %5444 = vmatprep.subr.bf16.mxu0 %v1151
  %5445 = vmatpush2.bf16.msra.mxu0 %v1150
  %5446 = vmatprep.mubr.bf16.mxu0 %v5367
  %5447 = vmatmul.mubr.bf16.gmra.mxu0 %v5366
  %v5448 = vpop.f32.mrf.mxu0
  %v5449 = vadd.f32 0.0, %v5448
  %v5450 = vpop.f32.mrf.mxu0
  %v5451 = vadd.f32 0.0, %v5450
  %v5452 = vpop.f32.mrf.mxu0
  %v5453 = vadd.f32 0.0, %v5452
  %v5454 = vpop.f32.mrf.mxu0
  %v5455 = vadd.f32 0.0, %v5454
  %5456 = vmatprep.mubr.bf16.mxu0 %v5370
  %5457 = vmatmul.mubr.bf16.gmra.mxu0 %v5369
  %v5458 = vpop.f32.mrf.mxu0
  %v5459 = vadd.f32 0.0, %v5458
  %v5460 = vpop.f32.mrf.mxu0
  %v5461 = vadd.f32 0.0, %v5460
  %v5462 = vpop.f32.mrf.mxu0
  %v5463 = vadd.f32 0.0, %v5462
  %v5464 = vpop.f32.mrf.mxu0
  %v5465 = vadd.f32 0.0, %v5464
  %5466 = vmatprep.mubr.bf16.mxu0 %v5373
  %5467 = vmatmul.mubr.bf16.gmra.mxu0 %v5372
  %v5468 = vpop.f32.mrf.mxu0
  %v5469 = vadd.f32 0.0, %v5468
  %v5470 = vpop.f32.mrf.mxu0
  %v5471 = vadd.f32 0.0, %v5470
  %v5472 = vpop.f32.mrf.mxu0
  %v5473 = vadd.f32 0.0, %v5472
  %v5474 = vpop.f32.mrf.mxu0
  %v5475 = vadd.f32 0.0, %v5474
  %5476 = vmatprep.mubr.bf16.mxu0 %v5376
  %5477 = vmatmul.mubr.bf16.gmra.mxu0 %v5375
  %v5478 = vpop.f32.mrf.mxu0
  %v5479 = vadd.f32 0.0, %v5478
  %v5480 = vpop.f32.mrf.mxu0
  %v5481 = vadd.f32 0.0, %v5480
  %v5482 = vpop.f32.mrf.mxu0
  %v5483 = vadd.f32 0.0, %v5482
  %v5484 = vpop.f32.mrf.mxu0
  %v5485 = vadd.f32 0.0, %v5484
  %5486 = vmatprep.mubr.bf16.mxu0 %v5379
  %5487 = vmatmul.mubr.bf16.gmra.mxu0 %v5378
  %v5488 = vpop.f32.mrf.mxu0
  %v5489 = vadd.f32 0.0, %v5488
  %v5490 = vpop.f32.mrf.mxu0
  %v5491 = vadd.f32 0.0, %v5490
  %v5492 = vpop.f32.mrf.mxu0
  %v5493 = vadd.f32 0.0, %v5492
  %v5494 = vpop.f32.mrf.mxu0
  %v5495 = vadd.f32 0.0, %v5494
  %5496 = vmatprep.mubr.bf16.mxu0 %v5382
  %5497 = vmatmul.mubr.bf16.gmra.mxu0 %v5381
  %v5498 = vpop.f32.mrf.mxu0
  %v5499 = vadd.f32 0.0, %v5498
  %v5500 = vpop.f32.mrf.mxu0
  %v5501 = vadd.f32 0.0, %v5500
  %v5502 = vpop.f32.mrf.mxu0
  %v5503 = vadd.f32 0.0, %v5502
  %v5504 = vpop.f32.mrf.mxu0
  %v5505 = vadd.f32 0.0, %v5504
  %5506 = vmatprep.mubr.bf16.mxu0 %v5385
  %5507 = vmatmul.mubr.bf16.gmra.mxu0 %v5384
  %v5508 = vpop.f32.mrf.mxu0
  %v5509 = vadd.f32 0.0, %v5508
  %v5510 = vpop.f32.mrf.mxu0
  %v5511 = vadd.f32 0.0, %v5510
  %v5512 = vpop.f32.mrf.mxu0
  %v5513 = vadd.f32 0.0, %v5512
  %v5514 = vpop.f32.mrf.mxu0
  %v5515 = vadd.f32 0.0, %v5514
  %5516 = vmatprep.mubr.bf16.mxu0 %v5388
  %5517 = vmatmul.mubr.bf16.gmra.mxu0 %v5387
  %v5518 = vpop.f32.mrf.mxu0
  %v5519 = vadd.f32 0.0, %v5518
  %v5520 = vpop.f32.mrf.mxu0
  %v5521 = vadd.f32 0.0, %v5520
  %v5522 = vpop.f32.mrf.mxu0
  %v5523 = vadd.f32 0.0, %v5522
  %v5524 = vpop.f32.mrf.mxu0
  %v5525 = vadd.f32 0.0, %v5524
  %5526 = vdwg.mxu0
  %5527 = vmatprep.subr.bf16.mxu0 0
  %5528 = vmatpush1.bf16.msra.mxu0 0
  %5529 = vmatprep.subr.bf16.mxu0 %v1257
  %5530 = vmatpush1.bf16.msra.mxu0 %v1254
  %5531 = vmatprep.subr.bf16.mxu0 %v1177
  %5532 = vmatpush1.bf16.msra.mxu0 %v1176
  %5533 = vmatprep.subr.bf16.mxu0 %v1175
  %5534 = vmatpush1.bf16.msra.mxu0 %v1174
  %5535 = vmatprep.subr.bf16.mxu0 %v1173
  %5536 = vmatpush1.bf16.msra.mxu0 %v1172
  %5537 = vmatprep.subr.bf16.mxu0 %v1171
  %5538 = vmatpush1.bf16.msra.mxu0 %v1170
  %5539 = vmatprep.subr.bf16.mxu0 %v1169
  %5540 = vmatpush1.bf16.msra.mxu0 %v1168
  %5541 = vmatprep.subr.bf16.mxu0 %v1167
  %5542 = vmatpush1.bf16.msra.mxu0 %v1166
  %5543 = vmatprep.subr.bf16.mxu0 0
  %5544 = vmatpush2.bf16.msra.mxu0 0
  %5545 = vmatprep.subr.bf16.mxu0 0
  %5546 = vmatpush2.bf16.msra.mxu0 0
  %5547 = vmatprep.subr.bf16.mxu0 0
  %5548 = vmatpush2.bf16.msra.mxu0 0
  %5549 = vmatprep.subr.bf16.mxu0 0
  %5550 = vmatpush2.bf16.msra.mxu0 0
  %5551 = vmatprep.subr.bf16.mxu0 0
  %5552 = vmatpush2.bf16.msra.mxu0 0
  %5553 = vmatprep.subr.bf16.mxu0 0
  %5554 = vmatpush2.bf16.msra.mxu0 0
  %5555 = vmatprep.subr.bf16.mxu0 0
  %5556 = vmatpush2.bf16.msra.mxu0 0
  %5557 = vmatprep.subr.bf16.mxu0 0
  %5558 = vmatpush2.bf16.msra.mxu0 0
  %5559 = vmatprep.mubr.bf16.mxu0 0
  %5560 = vmatmul.mubr.bf16.gmra.mxu0 %v5391
  %v5561 = vpop.f32.mrf.mxu0
  %v5562 = vadd.f32 %v5449, %v5561
  %v5563 = vpop.f32.mrf.mxu0
  %v5564 = vadd.f32 %v5451, %v5563
  %v5565 = vpop.f32.mrf.mxu0
  %v5566 = vadd.f32 %v5453, %v5565
  %v5567 = vpop.f32.mrf.mxu0
  %v5568 = vadd.f32 %v5455, %v5567
  %5569 = vmatprep.mubr.bf16.mxu0 0
  %5570 = vmatmul.mubr.bf16.gmra.mxu0 %v5394
  %v5571 = vpop.f32.mrf.mxu0
  %v5572 = vadd.f32 %v5459, %v5571
  %v5573 = vpop.f32.mrf.mxu0
  %v5574 = vadd.f32 %v5461, %v5573
  %v5575 = vpop.f32.mrf.mxu0
  %v5576 = vadd.f32 %v5463, %v5575
  %v5577 = vpop.f32.mrf.mxu0
  %v5578 = vadd.f32 %v5465, %v5577
  %5579 = vmatprep.mubr.bf16.mxu0 0
  %5580 = vmatmul.mubr.bf16.gmra.mxu0 %v5397
  %v5581 = vpop.f32.mrf.mxu0
  %v5582 = vadd.f32 %v5469, %v5581
  %v5583 = vpop.f32.mrf.mxu0
  %v5584 = vadd.f32 %v5471, %v5583
  %v5585 = vpop.f32.mrf.mxu0
  %v5586 = vadd.f32 %v5473, %v5585
  %v5587 = vpop.f32.mrf.mxu0
  %v5588 = vadd.f32 %v5475, %v5587
  %5589 = vmatprep.mubr.bf16.mxu0 0
  %5590 = vmatmul.mubr.bf16.gmra.mxu0 %v5400
  %v5591 = vpop.f32.mrf.mxu0
  %v5592 = vadd.f32 %v5479, %v5591
  %v5593 = vpop.f32.mrf.mxu0
  %v5594 = vadd.f32 %v5481, %v5593
  %v5595 = vpop.f32.mrf.mxu0
  %v5596 = vadd.f32 %v5483, %v5595
  %v5597 = vpop.f32.mrf.mxu0
  %v5598 = vadd.f32 %v5485, %v5597
  %5599 = vmatprep.mubr.bf16.mxu0 0
  %5600 = vmatmul.mubr.bf16.gmra.mxu0 %v5403
  %v5601 = vpop.f32.mrf.mxu0
  %v5602 = vadd.f32 %v5489, %v5601
  %v5603 = vpop.f32.mrf.mxu0
  %v5604 = vadd.f32 %v5491, %v5603
  %v5605 = vpop.f32.mrf.mxu0
  %v5606 = vadd.f32 %v5493, %v5605
  %v5607 = vpop.f32.mrf.mxu0
  %v5608 = vadd.f32 %v5495, %v5607
  %5609 = vmatprep.mubr.bf16.mxu0 0
  %5610 = vmatmul.mubr.bf16.gmra.mxu0 %v5406
  %v5611 = vpop.f32.mrf.mxu0
  %v5612 = vadd.f32 %v5499, %v5611
  %v5613 = vpop.f32.mrf.mxu0
  %v5614 = vadd.f32 %v5501, %v5613
  %v5615 = vpop.f32.mrf.mxu0
  %v5616 = vadd.f32 %v5503, %v5615
  %v5617 = vpop.f32.mrf.mxu0
  %v5618 = vadd.f32 %v5505, %v5617
  %5619 = vmatprep.mubr.bf16.mxu0 0
  %5620 = vmatmul.mubr.bf16.gmra.mxu0 %v5409
  %v5621 = vpop.f32.mrf.mxu0
  %v5622 = vadd.f32 %v5509, %v5621
  %v5623 = vpop.f32.mrf.mxu0
  %v5624 = vadd.f32 %v5511, %v5623
  %v5625 = vpop.f32.mrf.mxu0
  %v5626 = vadd.f32 %v5513, %v5625
  %v5627 = vpop.f32.mrf.mxu0
  %v5628 = vadd.f32 %v5515, %v5627
  %5629 = vmatprep.mubr.bf16.mxu0 0
  %5630 = vmatmul.mubr.bf16.gmra.mxu0 %v5412
  %v5631 = vpop.f32.mrf.mxu0
  %v5632 = vadd.f32 %v5519, %v5631
  %v5633 = vpop.f32.mrf.mxu0
  %v5634 = vadd.f32 %v5521, %v5633
  %v5635 = vpop.f32.mrf.mxu0
  %v5636 = vadd.f32 %v5523, %v5635
  %v5637 = vpop.f32.mrf.mxu0
  %v5638 = vadd.f32 %v5525, %v5637
  %5639 = vdwg.mxu0
  %5672 = vrot.lane.b32.xlu0 %v5562, 127
  %v5673 = vpop.permute.xlu0 %5672
  %5674 = vrot.lane.b32.xlu0 %v5564, 127
  %v5675 = vpop.permute.xlu0 %5674
  %5676 = vrot.lane.b32.xlu0 %v5566, 127
  %v5677 = vpop.permute.xlu0 %5676
  %5678 = vrot.lane.b32.xlu0 %v5568, 127
  %v5679 = vpop.permute.xlu0 %5678
  %5680 = vrot.lane.b32.xlu0 %v5572, 127
  %v5681 = vpop.permute.xlu0 %5680
  %5682 = vrot.lane.b32.xlu0 %v5574, 127
  %v5683 = vpop.permute.xlu0 %5682
  %5684 = vrot.lane.b32.xlu0 %v5576, 127
  %v5685 = vpop.permute.xlu0 %5684
  %5686 = vrot.lane.b32.xlu0 %v5578, 127
  %v5687 = vpop.permute.xlu0 %5686
  %5688 = vrot.lane.b32.xlu0 %v5582, 127
  %v5689 = vpop.permute.xlu0 %5688
  %5690 = vrot.lane.b32.xlu0 %v5584, 127
  %v5691 = vpop.permute.xlu0 %5690
  %5692 = vrot.lane.b32.xlu0 %v5586, 127
  %v5693 = vpop.permute.xlu0 %5692
  %5694 = vrot.lane.b32.xlu0 %v5588, 127
  %v5695 = vpop.permute.xlu0 %5694
  %5696 = vrot.lane.b32.xlu0 %v5592, 127
  %v5697 = vpop.permute.xlu0 %5696
  %5698 = vrot.lane.b32.xlu0 %v5594, 127
  %v5699 = vpop.permute.xlu0 %5698
  %5700 = vrot.lane.b32.xlu0 %v5596, 127
  %v5701 = vpop.permute.xlu0 %5700
  %5702 = vrot.lane.b32.xlu0 %v5598, 127
  %v5703 = vpop.permute.xlu0 %5702
  %5704 = vrot.lane.b32.xlu0 %v5602, 127
  %v5705 = vpop.permute.xlu0 %5704
  %5706 = vrot.lane.b32.xlu0 %v5604, 127
  %v5707 = vpop.permute.xlu0 %5706
  %5708 = vrot.lane.b32.xlu0 %v5606, 127
  %v5709 = vpop.permute.xlu0 %5708
  %5710 = vrot.lane.b32.xlu0 %v5608, 127
  %v5711 = vpop.permute.xlu0 %5710
  %5712 = vrot.lane.b32.xlu0 %v5612, 127
  %v5713 = vpop.permute.xlu0 %5712
  %5714 = vrot.lane.b32.xlu0 %v5614, 127
  %v5715 = vpop.permute.xlu0 %5714
  %5716 = vrot.lane.b32.xlu0 %v5616, 127
  %v5717 = vpop.permute.xlu0 %5716
  %5718 = vrot.lane.b32.xlu0 %v5618, 127
  %v5719 = vpop.permute.xlu0 %5718
  %5720 = vrot.lane.b32.xlu0 %v5622, 127
  %v5721 = vpop.permute.xlu0 %5720
  %5722 = vrot.lane.b32.xlu0 %v5624, 127
  %v5723 = vpop.permute.xlu0 %5722
  %5724 = vrot.lane.b32.xlu0 %v5626, 127
  %v5725 = vpop.permute.xlu0 %5724
  %5726 = vrot.lane.b32.xlu0 %v5628, 127
  %v5727 = vpop.permute.xlu0 %5726
  %5728 = vrot.lane.b32.xlu0 %v5632, 127
  %v5729 = vpop.permute.xlu0 %5728
  %5730 = vrot.lane.b32.xlu0 %v5634, 127
  %v5731 = vpop.permute.xlu0 %5730
  %5732 = vrot.lane.b32.xlu0 %v5636, 127
  %v5733 = vpop.permute.xlu0 %5732
  %5734 = vrot.lane.b32.xlu0 %v5638, 127
  %v5735 = vpop.permute.xlu0 %5734
  %v5736 = vsel %vm216, %v5673, %v5675
  %v5737 = vsel %vm216, %v5677, %v5679
  %v5738 = vsel %vm216, %v5681, %v5683
  %v5739 = vsel %vm216, %v5685, %v5687
  %v5740 = vsel %vm216, %v5689, %v5691
  %v5741 = vsel %vm216, %v5693, %v5695
  %v5742 = vsel %vm216, %v5697, %v5699
  %v5743 = vsel %vm216, %v5701, %v5703
  %v5744 = vsel %vm216, %v5705, %v5707
  %v5745 = vsel %vm216, %v5709, %v5711
  %v5746 = vsel %vm216, %v5713, %v5715
  %v5747 = vsel %vm216, %v5717, %v5719
  %v5748 = vsel %vm216, %v5721, %v5723
  %v5749 = vsel %vm216, %v5725, %v5727
  %v5750 = vsel %vm216, %v5729, %v5731
  %v5751 = vsel %vm216, %v5733, %v5735
  %5784 = vrot.lane.b32.xlu0 %v5562, 126
  %v5785 = vpop.permute.xlu0 %5784
  %5786 = vrot.lane.b32.xlu0 %v5564, 126
  %v5787 = vpop.permute.xlu0 %5786
  %5788 = vrot.lane.b32.xlu0 %v5566, 126
  %v5789 = vpop.permute.xlu0 %5788
  %5790 = vrot.lane.b32.xlu0 %v5568, 126
  %v5791 = vpop.permute.xlu0 %5790
  %5792 = vrot.lane.b32.xlu0 %v5572, 126
  %v5793 = vpop.permute.xlu0 %5792
  %5794 = vrot.lane.b32.xlu0 %v5574, 126
  %v5795 = vpop.permute.xlu0 %5794
  %5796 = vrot.lane.b32.xlu0 %v5576, 126
  %v5797 = vpop.permute.xlu0 %5796
  %5798 = vrot.lane.b32.xlu0 %v5578, 126
  %v5799 = vpop.permute.xlu0 %5798
  %5800 = vrot.lane.b32.xlu0 %v5582, 126
  %v5801 = vpop.permute.xlu0 %5800
  %5802 = vrot.lane.b32.xlu0 %v5584, 126
  %v5803 = vpop.permute.xlu0 %5802
  %5804 = vrot.lane.b32.xlu0 %v5586, 126
  %v5805 = vpop.permute.xlu0 %5804
  %5806 = vrot.lane.b32.xlu0 %v5588, 126
  %v5807 = vpop.permute.xlu0 %5806
  %5808 = vrot.lane.b32.xlu0 %v5592, 126
  %v5809 = vpop.permute.xlu0 %5808
  %5810 = vrot.lane.b32.xlu0 %v5594, 126
  %v5811 = vpop.permute.xlu0 %5810
  %5812 = vrot.lane.b32.xlu0 %v5596, 126
  %v5813 = vpop.permute.xlu0 %5812
  %5814 = vrot.lane.b32.xlu0 %v5598, 126
  %v5815 = vpop.permute.xlu0 %5814
  %5816 = vrot.lane.b32.xlu0 %v5602, 126
  %v5817 = vpop.permute.xlu0 %5816
  %5818 = vrot.lane.b32.xlu0 %v5604, 126
  %v5819 = vpop.permute.xlu0 %5818
  %5820 = vrot.lane.b32.xlu0 %v5606, 126
  %v5821 = vpop.permute.xlu0 %5820
  %5822 = vrot.lane.b32.xlu0 %v5608, 126
  %v5823 = vpop.permute.xlu0 %5822
  %5824 = vrot.lane.b32.xlu0 %v5612, 126
  %v5825 = vpop.permute.xlu0 %5824
  %5826 = vrot.lane.b32.xlu0 %v5614, 126
  %v5827 = vpop.permute.xlu0 %5826
  %5828 = vrot.lane.b32.xlu0 %v5616, 126
  %v5829 = vpop.permute.xlu0 %5828
  %5830 = vrot.lane.b32.xlu0 %v5618, 126
  %v5831 = vpop.permute.xlu0 %5830
  %5832 = vrot.lane.b32.xlu0 %v5622, 126
  %v5833 = vpop.permute.xlu0 %5832
  %5834 = vrot.lane.b32.xlu0 %v5624, 126
  %v5835 = vpop.permute.xlu0 %5834
  %5836 = vrot.lane.b32.xlu0 %v5626, 126
  %v5837 = vpop.permute.xlu0 %5836
  %5838 = vrot.lane.b32.xlu0 %v5628, 126
  %v5839 = vpop.permute.xlu0 %5838
  %5840 = vrot.lane.b32.xlu0 %v5632, 126
  %v5841 = vpop.permute.xlu0 %5840
  %5842 = vrot.lane.b32.xlu0 %v5634, 126
  %v5843 = vpop.permute.xlu0 %5842
  %5844 = vrot.lane.b32.xlu0 %v5636, 126
  %v5845 = vpop.permute.xlu0 %5844
  %5846 = vrot.lane.b32.xlu0 %v5638, 126
  %v5847 = vpop.permute.xlu0 %5846
  %v5848 = vsel %vm261, %v5785, %v5787
  %v5849 = vsel %vm261, %v5789, %v5791
  %v5850 = vsel %vm261, %v5793, %v5795
  %v5851 = vsel %vm261, %v5797, %v5799
  %v5852 = vsel %vm261, %v5801, %v5803
  %v5853 = vsel %vm261, %v5805, %v5807
  %v5854 = vsel %vm261, %v5809, %v5811
  %v5855 = vsel %vm261, %v5813, %v5815
  %v5856 = vsel %vm261, %v5817, %v5819
  %v5857 = vsel %vm261, %v5821, %v5823
  %v5858 = vsel %vm261, %v5825, %v5827
  %v5859 = vsel %vm261, %v5829, %v5831
  %v5860 = vsel %vm261, %v5833, %v5835
  %v5861 = vsel %vm261, %v5837, %v5839
  %v5862 = vsel %vm261, %v5841, %v5843
  %v5863 = vsel %vm261, %v5845, %v5847
  %v5896 = vpack.c.bf16 %v5566, %v5562
  %v5897 = vpack.c.bf16 %v5568, %v5564
  %v5898 = vpack.c.bf16 %v5576, %v5572
  %v5899 = vpack.c.bf16 %v5578, %v5574
  %v5900 = vpack.c.bf16 %v5586, %v5582
  %v5901 = vpack.c.bf16 %v5588, %v5584
  %v5902 = vpack.c.bf16 %v5596, %v5592
  %v5903 = vpack.c.bf16 %v5598, %v5594
  %v5904 = vpack.c.bf16 %v5606, %v5602
  %v5905 = vpack.c.bf16 %v5608, %v5604
  %v5906 = vpack.c.bf16 %v5616, %v5612
  %v5907 = vpack.c.bf16 %v5618, %v5614
  %v5908 = vpack.c.bf16 %v5626, %v5622
  %v5909 = vpack.c.bf16 %v5628, %v5624
  %v5910 = vpack.c.bf16 %v5636, %v5632
  %v5911 = vpack.c.bf16 %v5638, %v5634
  %v5912 = vpack.c.bf16 %v5737, %v5736
  %v5913 = vpack.c.bf16 %v5679, %v5675
  %v5914 = vpack.c.bf16 %v5739, %v5738
  %v5915 = vpack.c.bf16 %v5687, %v5683
  %v5916 = vpack.c.bf16 %v5741, %v5740
  %v5917 = vpack.c.bf16 %v5695, %v5691
  %v5918 = vpack.c.bf16 %v5743, %v5742
  %v5919 = vpack.c.bf16 %v5703, %v5699
  %v5920 = vpack.c.bf16 %v5745, %v5744
  %v5921 = vpack.c.bf16 %v5711, %v5707
  %v5922 = vpack.c.bf16 %v5747, %v5746
  %v5923 = vpack.c.bf16 %v5719, %v5715
  %v5924 = vpack.c.bf16 %v5749, %v5748
  %v5925 = vpack.c.bf16 %v5727, %v5723
  %v5926 = vpack.c.bf16 %v5751, %v5750
  %v5927 = vpack.c.bf16 %v5735, %v5731
  %v5928 = vpack.c.bf16 %v5849, %v5848
  %v5929 = vpack.c.bf16 %v5791, %v5787
  %v5930 = vpack.c.bf16 %v5851, %v5850
  %v5931 = vpack.c.bf16 %v5799, %v5795
  %v5932 = vpack.c.bf16 %v5853, %v5852
  %v5933 = vpack.c.bf16 %v5807, %v5803
  %v5934 = vpack.c.bf16 %v5855, %v5854
  %v5935 = vpack.c.bf16 %v5815, %v5811
  %v5936 = vpack.c.bf16 %v5857, %v5856
  %v5937 = vpack.c.bf16 %v5823, %v5819
  %v5938 = vpack.c.bf16 %v5859, %v5858
  %v5939 = vpack.c.bf16 %v5831, %v5827
  %v5940 = vpack.c.bf16 %v5861, %v5860
  %v5941 = vpack.c.bf16 %v5839, %v5835
  %v5942 = vpack.c.bf16 %v5863, %v5862
  %v5943 = vpack.c.bf16 %v5847, %v5843
  %5944 = vmatprep.subr.bf16.mxu0 %v5911
  %5945 = vmatpush1.bf16.msra.mxu0 %v5910
  %5946 = vmatprep.subr.bf16.mxu0 %v5909
  %5947 = vmatpush1.bf16.msra.mxu0 %v5908
  %5948 = vmatprep.subr.bf16.mxu0 %v5907
  %5949 = vmatpush1.bf16.msra.mxu0 %v5906
  %5950 = vmatprep.subr.bf16.mxu0 %v5905
  %5951 = vmatpush1.bf16.msra.mxu0 %v5904
  %5952 = vmatprep.subr.bf16.mxu0 %v5903
  %5953 = vmatpush1.bf16.msra.mxu0 %v5902
  %5954 = vmatprep.subr.bf16.mxu0 %v5901
  %5955 = vmatpush1.bf16.msra.mxu0 %v5900
  %5956 = vmatprep.subr.bf16.mxu0 %v5899
  %5957 = vmatpush1.bf16.msra.mxu0 %v5898
  %5958 = vmatprep.subr.bf16.mxu0 %v5897
  %5959 = vmatpush1.bf16.msra.mxu0 %v5896
  %5960 = vmatprep.subr.bf16.mxu0 %v5927
  %5961 = vmatpush2.bf16.msra.mxu0 %v5926
  %5962 = vmatprep.subr.bf16.mxu0 %v5925
  %5963 = vmatpush2.bf16.msra.mxu0 %v5924
  %5964 = vmatprep.subr.bf16.mxu0 %v5923
  %5965 = vmatpush2.bf16.msra.mxu0 %v5922
  %5966 = vmatprep.subr.bf16.mxu0 %v5921
  %5967 = vmatpush2.bf16.msra.mxu0 %v5920
  %5968 = vmatprep.subr.bf16.mxu0 %v5919
  %5969 = vmatpush2.bf16.msra.mxu0 %v5918
  %5970 = vmatprep.subr.bf16.mxu0 %v5917
  %5971 = vmatpush2.bf16.msra.mxu0 %v5916
  %5972 = vmatprep.subr.bf16.mxu0 %v5915
  %5973 = vmatpush2.bf16.msra.mxu0 %v5914
  %5974 = vmatprep.subr.bf16.mxu0 %v5913
  %5975 = vmatpush2.bf16.msra.mxu0 %v5912
  %5976 = vmatprep.mubr.bf16.mxu0 %v1950
  %5977 = vmatmul.mubr.bf16.gmra.mxu0 %v1949
  %v5978 = vpop.f32.mrf.mxu0
  %v5979 = vadd.f32 %v1792, %v5978
  %v5980 = vpop.f32.mrf.mxu0
  %v5981 = vadd.f32 %v1792, %v5980
  %v5982 = vpop.f32.mrf.mxu0
  %v5983 = vadd.f32 %v1797, %v5982
  %v5984 = vpop.f32.mrf.mxu0
  %v5985 = vadd.f32 %v1797, %v5984
  %5986 = vmatprep.mubr.bf16.mxu0 %v1953
  %5987 = vmatmul.mubr.bf16.gmra.mxu0 %v1952
  %v5988 = vpop.f32.mrf.mxu0
  %v5989 = vadd.f32 %v1802, %v5988
  %v5990 = vpop.f32.mrf.mxu0
  %v5991 = vadd.f32 %v1802, %v5990
  %v5992 = vpop.f32.mrf.mxu0
  %v5993 = vadd.f32 %v1807, %v5992
  %v5994 = vpop.f32.mrf.mxu0
  %v5995 = vadd.f32 %v1807, %v5994
  %5996 = vmatprep.mubr.bf16.mxu0 %v1956
  %5997 = vmatmul.mubr.bf16.gmra.mxu0 %v1955
  %v5998 = vpop.f32.mrf.mxu0
  %v5999 = vadd.f32 %v1812, %v5998
  %v6000 = vpop.f32.mrf.mxu0
  %v6001 = vadd.f32 %v1812, %v6000
  %v6002 = vpop.f32.mrf.mxu0
  %v6003 = vadd.f32 %v1817, %v6002
  %v6004 = vpop.f32.mrf.mxu0
  %v6005 = vadd.f32 %v1817, %v6004
  %6006 = vmatprep.mubr.bf16.mxu0 %v1959
  %6007 = vmatmul.mubr.bf16.gmra.mxu0 %v1958
  %v6008 = vpop.f32.mrf.mxu0
  %v6009 = vadd.f32 %v1822, %v6008
  %v6010 = vpop.f32.mrf.mxu0
  %v6011 = vadd.f32 %v1822, %v6010
  %v6012 = vpop.f32.mrf.mxu0
  %v6013 = vadd.f32 %v1827, %v6012
  %v6014 = vpop.f32.mrf.mxu0
  %v6015 = vadd.f32 %v1827, %v6014
  %6016 = vmatprep.mubr.bf16.mxu0 %v1962
  %6017 = vmatmul.mubr.bf16.gmra.mxu0 %v1961
  %v6018 = vpop.f32.mrf.mxu0
  %v6019 = vadd.f32 %v1832, %v6018
  %v6020 = vpop.f32.mrf.mxu0
  %v6021 = vadd.f32 %v1832, %v6020
  %v6022 = vpop.f32.mrf.mxu0
  %v6023 = vadd.f32 %v1837, %v6022
  %v6024 = vpop.f32.mrf.mxu0
  %v6025 = vadd.f32 %v1837, %v6024
  %6026 = vmatprep.mubr.bf16.mxu0 %v1965
  %6027 = vmatmul.mubr.bf16.gmra.mxu0 %v1964
  %v6028 = vpop.f32.mrf.mxu0
  %v6029 = vadd.f32 %v1842, %v6028
  %v6030 = vpop.f32.mrf.mxu0
  %v6031 = vadd.f32 %v1842, %v6030
  %v6032 = vpop.f32.mrf.mxu0
  %v6033 = vadd.f32 %v1847, %v6032
  %v6034 = vpop.f32.mrf.mxu0
  %v6035 = vadd.f32 %v1847, %v6034
  %6036 = vmatprep.mubr.bf16.mxu0 %v1968
  %6037 = vmatmul.mubr.bf16.gmra.mxu0 %v1967
  %v6038 = vpop.f32.mrf.mxu0
  %v6039 = vadd.f32 %v1852, %v6038
  %v6040 = vpop.f32.mrf.mxu0
  %v6041 = vadd.f32 %v1852, %v6040
  %v6042 = vpop.f32.mrf.mxu0
  %v6043 = vadd.f32 %v1857, %v6042
  %v6044 = vpop.f32.mrf.mxu0
  %v6045 = vadd.f32 %v1857, %v6044
  %6046 = vmatprep.mubr.bf16.mxu0 %v1971
  %6047 = vmatmul.mubr.bf16.gmra.mxu0 %v1970
  %v6048 = vpop.f32.mrf.mxu0
  %v6049 = vadd.f32 %v1862, %v6048
  %v6050 = vpop.f32.mrf.mxu0
  %v6051 = vadd.f32 %v1862, %v6050
  %v6052 = vpop.f32.mrf.mxu0
  %v6053 = vadd.f32 %v1867, %v6052
  %v6054 = vpop.f32.mrf.mxu0
  %v6055 = vadd.f32 %v1867, %v6054
  %6056 = vdwg.mxu0
  %6057 = vmatprep.subr.bf16.mxu0 %v5943
  %6058 = vmatpush1.bf16.msra.mxu0 %v5942
  %6059 = vmatprep.subr.bf16.mxu0 %v5941
  %6060 = vmatpush1.bf16.msra.mxu0 %v5940
  %6061 = vmatprep.subr.bf16.mxu0 %v5939
  %6062 = vmatpush1.bf16.msra.mxu0 %v5938
  %6063 = vmatprep.subr.bf16.mxu0 %v5937
  %6064 = vmatpush1.bf16.msra.mxu0 %v5936
  %6065 = vmatprep.subr.bf16.mxu0 %v5935
  %6066 = vmatpush1.bf16.msra.mxu0 %v5934
  %6067 = vmatprep.subr.bf16.mxu0 %v5933
  %6068 = vmatpush1.bf16.msra.mxu0 %v5932
  %6069 = vmatprep.subr.bf16.mxu0 %v5931
  %6070 = vmatpush1.bf16.msra.mxu0 %v5930
  %6071 = vmatprep.subr.bf16.mxu0 %v5929
  %6072 = vmatpush1.bf16.msra.mxu0 %v5928
  %6073 = vmatprep.subr.bf16.mxu0 0
  %6074 = vmatpush2.bf16.msra.mxu0 0
  %6075 = vmatprep.subr.bf16.mxu0 0
  %6076 = vmatpush2.bf16.msra.mxu0 0
  %6077 = vmatprep.subr.bf16.mxu0 0
  %6078 = vmatpush2.bf16.msra.mxu0 0
  %6079 = vmatprep.subr.bf16.mxu0 0
  %6080 = vmatpush2.bf16.msra.mxu0 0
  %6081 = vmatprep.subr.bf16.mxu0 0
  %6082 = vmatpush2.bf16.msra.mxu0 0
  %6083 = vmatprep.subr.bf16.mxu0 0
  %6084 = vmatpush2.bf16.msra.mxu0 0
  %6085 = vmatprep.subr.bf16.mxu0 0
  %6086 = vmatpush2.bf16.msra.mxu0 0
  %6087 = vmatprep.subr.bf16.mxu0 0
  %6088 = vmatpush2.bf16.msra.mxu0 0
  %6089 = vmatprep.mubr.bf16.mxu0 0
  %6090 = vmatmul.mubr.bf16.gmra.mxu0 %v1951
  %v6091 = vpop.f32.mrf.mxu0
  %v6092 = vadd.f32 %v5979, %v6091
  %v6093 = vpop.f32.mrf.mxu0
  %v6094 = vadd.f32 %v5981, %v6093
  %v6095 = vpop.f32.mrf.mxu0
  %v6096 = vadd.f32 %v5983, %v6095
  %v6097 = vpop.f32.mrf.mxu0
  %v6098 = vadd.f32 %v5985, %v6097
  %6099 = vmatprep.mubr.bf16.mxu0 0
  %6100 = vmatmul.mubr.bf16.gmra.mxu0 %v1954
  %v6101 = vpop.f32.mrf.mxu0
  %v6102 = vadd.f32 %v5989, %v6101
  %v6103 = vpop.f32.mrf.mxu0
  %v6104 = vadd.f32 %v5991, %v6103
  %v6105 = vpop.f32.mrf.mxu0
  %v6106 = vadd.f32 %v5993, %v6105
  %v6107 = vpop.f32.mrf.mxu0
  %v6108 = vadd.f32 %v5995, %v6107
  %6109 = vmatprep.mubr.bf16.mxu0 0
  %6110 = vmatmul.mubr.bf16.gmra.mxu0 %v1957
  %v6111 = vpop.f32.mrf.mxu0
  %v6112 = vadd.f32 %v5999, %v6111
  %v6113 = vpop.f32.mrf.mxu0
  %v6114 = vadd.f32 %v6001, %v6113
  %v6115 = vpop.f32.mrf.mxu0
  %v6116 = vadd.f32 %v6003, %v6115
  %v6117 = vpop.f32.mrf.mxu0
  %v6118 = vadd.f32 %v6005, %v6117
  %6119 = vmatprep.mubr.bf16.mxu0 0
  %6120 = vmatmul.mubr.bf16.gmra.mxu0 %v1960
  %v6121 = vpop.f32.mrf.mxu0
  %v6122 = vadd.f32 %v6009, %v6121
  %v6123 = vpop.f32.mrf.mxu0
  %v6124 = vadd.f32 %v6011, %v6123
  %v6125 = vpop.f32.mrf.mxu0
  %v6126 = vadd.f32 %v6013, %v6125
  %v6127 = vpop.f32.mrf.mxu0
  %v6128 = vadd.f32 %v6015, %v6127
  %6129 = vmatprep.mubr.bf16.mxu0 0
  %6130 = vmatmul.mubr.bf16.gmra.mxu0 %v1963
  %v6131 = vpop.f32.mrf.mxu0
  %v6132 = vadd.f32 %v6019, %v6131
  %v6133 = vpop.f32.mrf.mxu0
  %v6134 = vadd.f32 %v6021, %v6133
  %v6135 = vpop.f32.mrf.mxu0
  %v6136 = vadd.f32 %v6023, %v6135
  %v6137 = vpop.f32.mrf.mxu0
  %v6138 = vadd.f32 %v6025, %v6137
  %6139 = vmatprep.mubr.bf16.mxu0 0
  %6140 = vmatmul.mubr.bf16.gmra.mxu0 %v1966
  %v6141 = vpop.f32.mrf.mxu0
  %v6142 = vadd.f32 %v6029, %v6141
  %v6143 = vpop.f32.mrf.mxu0
  %v6144 = vadd.f32 %v6031, %v6143
  %v6145 = vpop.f32.mrf.mxu0
  %v6146 = vadd.f32 %v6033, %v6145
  %v6147 = vpop.f32.mrf.mxu0
  %v6148 = vadd.f32 %v6035, %v6147
  %6149 = vmatprep.mubr.bf16.mxu0 0
  %6150 = vmatmul.mubr.bf16.gmra.mxu0 %v1969
  %v6151 = vpop.f32.mrf.mxu0
  %v6152 = vadd.f32 %v6039, %v6151
  %v6153 = vpop.f32.mrf.mxu0
  %v6154 = vadd.f32 %v6041, %v6153
  %v6155 = vpop.f32.mrf.mxu0
  %v6156 = vadd.f32 %v6043, %v6155
  %v6157 = vpop.f32.mrf.mxu0
  %v6158 = vadd.f32 %v6045, %v6157
  %6159 = vmatprep.mubr.bf16.mxu0 0
  %6160 = vmatmul.mubr.bf16.gmra.mxu0 %v1972
  %v6161 = vpop.f32.mrf.mxu0
  %v6162 = vadd.f32 %v6049, %v6161
  %v6163 = vpop.f32.mrf.mxu0
  %v6164 = vadd.f32 %v6051, %v6163
  %v6165 = vpop.f32.mrf.mxu0
  %v6166 = vadd.f32 %v6053, %v6165
  %v6167 = vpop.f32.mrf.mxu0
  %v6168 = vadd.f32 %v6055, %v6167
  %6169 = vdwg.mxu0
  %v6170 = vmax.f32 %v6092, 0.0
  %v6171 = vmax.f32 %v6094, 0.0
  %v6172 = vmax.f32 %v6096, 0.0
  %v6173 = vmax.f32 %v6098, 0.0
  %v6174 = vmax.f32 %v6102, 0.0
  %v6175 = vmax.f32 %v6104, 0.0
  %v6176 = vmax.f32 %v6106, 0.0
  %v6177 = vmax.f32 %v6108, 0.0
  %v6178 = vmax.f32 %v6112, 0.0
  %v6179 = vmax.f32 %v6114, 0.0
  %v6180 = vmax.f32 %v6116, 0.0
  %v6181 = vmax.f32 %v6118, 0.0
  %v6182 = vmax.f32 %v6122, 0.0
  %v6183 = vmax.f32 %v6124, 0.0
  %v6184 = vmax.f32 %v6126, 0.0
  %v6185 = vmax.f32 %v6128, 0.0
  %v6186 = vmax.f32 %v6132, 0.0
  %v6187 = vmax.f32 %v6134, 0.0
  %v6188 = vmax.f32 %v6136, 0.0
  %v6189 = vmax.f32 %v6138, 0.0
  %v6190 = vmax.f32 %v6142, 0.0
  %v6191 = vmax.f32 %v6144, 0.0
  %v6192 = vmax.f32 %v6146, 0.0
  %v6193 = vmax.f32 %v6148, 0.0
  %v6194 = vmax.f32 %v6152, 0.0
  %v6195 = vmax.f32 %v6154, 0.0
  %v6196 = vmax.f32 %v6156, 0.0
  %v6197 = vmax.f32 %v6158, 0.0
  %v6198 = vmax.f32 %v6162, 0.0
  %v6199 = vmax.f32 %v6164, 0.0
  %v6200 = vmax.f32 %v6166, 0.0
  %v6201 = vmax.f32 %v6168, 0.0
  %6234 = vrot.lane.b32.xlu0 %v6170, 127
  %v6235 = vpop.permute.xlu0 %6234
  %6236 = vrot.lane.b32.xlu0 %v6171, 127
  %v6237 = vpop.permute.xlu0 %6236
  %6238 = vrot.lane.b32.xlu0 %v6172, 127
  %v6239 = vpop.permute.xlu0 %6238
  %6240 = vrot.lane.b32.xlu0 %v6173, 127
  %v6241 = vpop.permute.xlu0 %6240
  %6242 = vrot.lane.b32.xlu0 %v6174, 127
  %v6243 = vpop.permute.xlu0 %6242
  %6244 = vrot.lane.b32.xlu0 %v6175, 127
  %v6245 = vpop.permute.xlu0 %6244
  %6246 = vrot.lane.b32.xlu0 %v6176, 127
  %v6247 = vpop.permute.xlu0 %6246
  %6248 = vrot.lane.b32.xlu0 %v6177, 127
  %v6249 = vpop.permute.xlu0 %6248
  %6250 = vrot.lane.b32.xlu0 %v6178, 127
  %v6251 = vpop.permute.xlu0 %6250
  %6252 = vrot.lane.b32.xlu0 %v6179, 127
  %v6253 = vpop.permute.xlu0 %6252
  %6254 = vrot.lane.b32.xlu0 %v6180, 127
  %v6255 = vpop.permute.xlu0 %6254
  %6256 = vrot.lane.b32.xlu0 %v6181, 127
  %v6257 = vpop.permute.xlu0 %6256
  %6258 = vrot.lane.b32.xlu0 %v6182, 127
  %v6259 = vpop.permute.xlu0 %6258
  %6260 = vrot.lane.b32.xlu0 %v6183, 127
  %v6261 = vpop.permute.xlu0 %6260
  %6262 = vrot.lane.b32.xlu0 %v6184, 127
  %v6263 = vpop.permute.xlu0 %6262
  %6264 = vrot.lane.b32.xlu0 %v6185, 127
  %v6265 = vpop.permute.xlu0 %6264
  %6266 = vrot.lane.b32.xlu0 %v6186, 127
  %v6267 = vpop.permute.xlu0 %6266
  %6268 = vrot.lane.b32.xlu0 %v6187, 127
  %v6269 = vpop.permute.xlu0 %6268
  %6270 = vrot.lane.b32.xlu0 %v6188, 127
  %v6271 = vpop.permute.xlu0 %6270
  %6272 = vrot.lane.b32.xlu0 %v6189, 127
  %v6273 = vpop.permute.xlu0 %6272
  %6274 = vrot.lane.b32.xlu0 %v6190, 127
  %v6275 = vpop.permute.xlu0 %6274
  %6276 = vrot.lane.b32.xlu0 %v6191, 127
  %v6277 = vpop.permute.xlu0 %6276
  %6278 = vrot.lane.b32.xlu0 %v6192, 127
  %v6279 = vpop.permute.xlu0 %6278
  %6280 = vrot.lane.b32.xlu0 %v6193, 127
  %v6281 = vpop.permute.xlu0 %6280
  %6282 = vrot.lane.b32.xlu0 %v6194, 127
  %v6283 = vpop.permute.xlu0 %6282
  %6284 = vrot.lane.b32.xlu0 %v6195, 127
  %v6285 = vpop.permute.xlu0 %6284
  %6286 = vrot.lane.b32.xlu0 %v6196, 127
  %v6287 = vpop.permute.xlu0 %6286
  %6288 = vrot.lane.b32.xlu0 %v6197, 127
  %v6289 = vpop.permute.xlu0 %6288
  %6290 = vrot.lane.b32.xlu0 %v6198, 127
  %v6291 = vpop.permute.xlu0 %6290
  %6292 = vrot.lane.b32.xlu0 %v6199, 127
  %v6293 = vpop.permute.xlu0 %6292
  %6294 = vrot.lane.b32.xlu0 %v6200, 127
  %v6295 = vpop.permute.xlu0 %6294
  %6296 = vrot.lane.b32.xlu0 %v6201, 127
  %v6297 = vpop.permute.xlu0 %6296
  %v6298 = vsel %vm216, %v6235, %v6237
  %v6299 = vsel %vm216, %v6239, %v6241
  %v6300 = vsel %vm216, %v6243, %v6245
  %v6301 = vsel %vm216, %v6247, %v6249
  %v6302 = vsel %vm216, %v6251, %v6253
  %v6303 = vsel %vm216, %v6255, %v6257
  %v6304 = vsel %vm216, %v6259, %v6261
  %v6305 = vsel %vm216, %v6263, %v6265
  %v6306 = vsel %vm216, %v6267, %v6269
  %v6307 = vsel %vm216, %v6271, %v6273
  %v6308 = vsel %vm216, %v6275, %v6277
  %v6309 = vsel %vm216, %v6279, %v6281
  %v6310 = vsel %vm216, %v6283, %v6285
  %v6311 = vsel %vm216, %v6287, %v6289
  %v6312 = vsel %vm216, %v6291, %v6293
  %v6313 = vsel %vm216, %v6295, %v6297
  %v6346 = vmax.f32 %v6170, %v6298
  %v6347 = vmax.f32 %v6171, %v6237
  %v6348 = vmax.f32 %v6172, %v6299
  %v6349 = vmax.f32 %v6173, %v6241
  %v6350 = vmax.f32 %v6174, %v6300
  %v6351 = vmax.f32 %v6175, %v6245
  %v6352 = vmax.f32 %v6176, %v6301
  %v6353 = vmax.f32 %v6177, %v6249
  %v6354 = vmax.f32 %v6178, %v6302
  %v6355 = vmax.f32 %v6179, %v6253
  %v6356 = vmax.f32 %v6180, %v6303
  %v6357 = vmax.f32 %v6181, %v6257
  %v6358 = vmax.f32 %v6182, %v6304
  %v6359 = vmax.f32 %v6183, %v6261
  %v6360 = vmax.f32 %v6184, %v6305
  %v6361 = vmax.f32 %v6185, %v6265
  %v6362 = vmax.f32 %v6186, %v6306
  %v6363 = vmax.f32 %v6187, %v6269
  %v6364 = vmax.f32 %v6188, %v6307
  %v6365 = vmax.f32 %v6189, %v6273
  %v6366 = vmax.f32 %v6190, %v6308
  %v6367 = vmax.f32 %v6191, %v6277
  %v6368 = vmax.f32 %v6192, %v6309
  %v6369 = vmax.f32 %v6193, %v6281
  %v6370 = vmax.f32 %v6194, %v6310
  %v6371 = vmax.f32 %v6195, %v6285
  %v6372 = vmax.f32 %v6196, %v6311
  %v6373 = vmax.f32 %v6197, %v6289
  %v6374 = vmax.f32 %v6198, %v6312
  %v6375 = vmax.f32 %v6199, %v6293
  %v6376 = vmax.f32 %v6200, %v6313
  %v6377 = vmax.f32 %v6201, %v6297
  %v6378 = vpack.c.bf16 %v6346, %v6346
  %v6379 = vpack.c.bf16 %v6347, %v6347
  %v6380 = vld [vmem:[%s6] sm:$0xf]
  %v6381 = vld [vmem:[%s6 + $0x4] sm:$0xf]
  %v6382 = vld [vmem:[%s6 + $0x8] sm:$0xf]
  %v6383 = vld [vmem:[%s6 + $0xc] sm:$0xf]
  %v6384 = vld [vmem:[%s6 + $0x10] sm:$0xf]
  %v6385 = vld [vmem:[%s6 + $0x14] sm:$0xf]
  %v6386 = vld [vmem:[%s6 + $0x18] sm:$0xf]
  %v6387 = vld [vmem:[%s6 + $0x1c] sm:$0xf]
  %v6388 = vld [vmem:[%s6 + $0x20] sm:$0xf]
  %v6389 = vld [vmem:[%s6 + $0x24] sm:$0xf]
  %v6390 = vld [vmem:[%s6 + $0x28] sm:$0xf]
  %v6391 = vld [vmem:[%s6 + $0x2c] sm:$0xf]
  %v6392 = vld [vmem:[%s6 + $0x30] sm:$0xf]
  %v6393 = vld [vmem:[%s6 + $0x34] sm:$0xf]
  %v6394 = vld [vmem:[%s6 + $0x38] sm:$0xf]
  %v6395 = vld [vmem:[%s6 + $0x3c] sm:$0xf]
  %v6396 = vld [vmem:[%s6 + $0x40] sm:$0xf]
  %v6397 = vld [vmem:[%s6 + $0x44] sm:$0xf]
  %v6398 = vld [vmem:[%s6 + $0x48] sm:$0xf]
  %v6399 = vld [vmem:[%s6 + $0x4c] sm:$0xf]
  %v6400 = vld [vmem:[%s6 + $0x50] sm:$0xf]
  %v6401 = vld [vmem:[%s6 + $0x54] sm:$0xf]
  %v6402 = vpack.c.bf16 %v6348, %v6348
  %v6403 = vpack.c.bf16 %v6349, %v6349
  %v6404 = vld [vmem:[%s2457] sm:$0xf]
  %v6405 = vld [vmem:[%s2457 + $0x4] sm:$0xf]
  %v6406 = vld [vmem:[%s2457 + $0x8] sm:$0xf]
  %v6407 = vld [vmem:[%s2457 + $0xc] sm:$0xf]
  %v6408 = vld [vmem:[%s2457 + $0x10] sm:$0xf]
  %v6409 = vld [vmem:[%s2457 + $0x14] sm:$0xf]
  %v6410 = vld [vmem:[%s2457 + $0x18] sm:$0xf]
  %v6411 = vld [vmem:[%s2457 + $0x1c] sm:$0xf]
  %v6412 = vld [vmem:[%s2457 + $0x20] sm:$0xf]
  %v6413 = vld [vmem:[%s2457 + $0x24] sm:$0xf]
  %v6414 = vld [vmem:[%s2457 + $0x28] sm:$0xf]
  %v6415 = vld [vmem:[%s2457 + $0x2c] sm:$0xf]
  %v6416 = vld [vmem:[%s2457 + $0x30] sm:$0xf]
  %v6417 = vld [vmem:[%s2457 + $0x34] sm:$0xf]
  %v6418 = vld [vmem:[%s2457 + $0x38] sm:$0xf]
  %v6419 = vld [vmem:[%s2457 + $0x3c] sm:$0xf]
  %v6420 = vld [vmem:[%s2457 + $0x40] sm:$0xf]
  %v6421 = vld [vmem:[%s2457 + $0x44] sm:$0xf]
  %v6422 = vld [vmem:[%s2457 + $0x48] sm:$0xf]
  %v6423 = vld [vmem:[%s2457 + $0x4c] sm:$0xf]
  %v6424 = vld [vmem:[%s2457 + $0x50] sm:$0xf]
  %v6425 = vld [vmem:[%s2457 + $0x54] sm:$0xf]
  %v6448 = vunpack.c.l.b16 %v6404
  %v6449 = vunpack.c.l.b16 %v6405
  %v6450 = vunpack.c.l.b16 %v6406
  %v6451 = vunpack.c.l.b16 %v6407
  %v6452 = vunpack.c.l.b16 %v6408
  %v6453 = vunpack.c.l.b16 %v6409
  %v6454 = vunpack.c.l.b16 %v6410
  %v6455 = vunpack.c.l.b16 %v6411
  %v6456 = vunpack.c.l.b16 %v6412
  %v6457 = vunpack.c.l.b16 %v6413
  %v6458 = vunpack.c.l.b16 %v6414
  %v6459 = vunpack.c.l.b16 %v6415
  %v6460 = vunpack.c.l.b16 %v6416
  %v6461 = vunpack.c.l.b16 %v6417
  %v6462 = vunpack.c.l.b16 %v6418
  %v6463 = vunpack.c.l.b16 %v6419
  %v6464 = vunpack.c.l.b16 %v6420
  %v6465 = vunpack.c.l.b16 %v6421
  %v6466 = vunpack.c.l.b16 %v6422
  %v6467 = vunpack.c.l.b16 %v6423
  %v6468 = vunpack.c.l.b16 %v6424
  %v6469 = vunpack.c.l.b16 %v6425
  %v6470 = vpack.c.b16 %v6449, %v6448
  %v6471 = vpack.c.b16 %v6451, %v6450
  %v6472 = vpack.c.b16 %v6453, %v6452
  %v6473 = vpack.c.b16 %v6455, %v6454
  %v6474 = vpack.c.b16 %v6457, %v6456
  %v6475 = vpack.c.b16 %v6459, %v6458
  %v6476 = vpack.c.b16 %v6461, %v6460
  %v6477 = vpack.c.b16 %v6463, %v6462
  %v6478 = vpack.c.b16 %v6465, %v6464
  %v6479 = vpack.c.b16 %v6467, %v6466
  %v6480 = vpack.c.b16 %v6469, %v6468
  %v6492 = vsel %vm2545, %v6403, 0
  %v6495 = vand.u32 %v6480, %v2552
  %6497 = vmatprep.subr.bf16.mxu0 0
  %6498 = vmatpush1.bf16.msra.mxu0 %v6477
  %6499 = vmatprep.subr.bf16.mxu0 0
  %6500 = vmatpush1.bf16.msra.mxu0 %v6476
  %6501 = vmatprep.subr.bf16.mxu0 0
  %6502 = vmatpush1.bf16.msra.mxu0 %v6475
  %6503 = vmatprep.subr.bf16.mxu0 0
  %6504 = vmatpush1.bf16.msra.mxu0 %v6474
  %6505 = vmatprep.subr.bf16.mxu0 0
  %6506 = vmatpush1.bf16.msra.mxu0 %v6473
  %6507 = vmatprep.subr.bf16.mxu0 0
  %6508 = vmatpush1.bf16.msra.mxu0 %v6472
  %6509 = vmatprep.subr.bf16.mxu0 0
  %6510 = vmatpush1.bf16.msra.mxu0 %v6471
  %6511 = vmatprep.subr.bf16.mxu0 0
  %6512 = vmatpush1.bf16.msra.mxu0 %v6470
  %6513 = vmatprep.subr.bf16.mxu0 0
  %6514 = vmatpush2.bf16.msra.mxu0 0
  %6515 = vmatprep.subr.bf16.mxu0 0
  %6516 = vmatpush2.bf16.msra.mxu0 0
  %6517 = vmatprep.subr.bf16.mxu0 0
  %6518 = vmatpush2.bf16.msra.mxu0 0
  %6519 = vmatprep.subr.bf16.mxu0 0
  %6520 = vmatpush2.bf16.msra.mxu0 0
  %6521 = vmatprep.subr.bf16.mxu0 0
  %6522 = vmatpush2.bf16.msra.mxu0 0
  %6523 = vmatprep.subr.bf16.mxu0 0
  %6524 = vmatpush2.bf16.msra.mxu0 %v6495
  %6525 = vmatprep.subr.bf16.mxu0 0
  %6526 = vmatpush2.bf16.msra.mxu0 %v6479
  %6527 = vmatprep.subr.bf16.mxu0 0
  %6528 = vmatpush2.bf16.msra.mxu0 %v6478
  %6529 = vmatprep.mubr.bf16.mxu0 %v6492
  %6530 = vmatmul.mubr.bf16.gmra.mxu0 %v6402
  %v6531 = vpop.f32.mrf.mxu0
  %v6532 = vadd.f32 0.0, %v6531
  %v6533 = vpop.f32.mrf.mxu0
  %v6534 = vpop.f32.mrf.mxu0
  %v6535 = vpop.f32.mrf.mxu0
  %6536 = vdwg.mxu0
  %v6559 = vunpack.c.l.b16 %v6380
  %v6560 = vunpack.c.l.b16 %v6381
  %v6561 = vunpack.c.l.b16 %v6382
  %v6562 = vunpack.c.l.b16 %v6383
  %v6563 = vunpack.c.l.b16 %v6384
  %v6564 = vunpack.c.l.b16 %v6385
  %v6565 = vunpack.c.l.b16 %v6386
  %v6566 = vunpack.c.l.b16 %v6387
  %v6567 = vunpack.c.l.b16 %v6388
  %v6568 = vunpack.c.l.b16 %v6389
  %v6569 = vunpack.c.l.b16 %v6390
  %v6570 = vunpack.c.l.b16 %v6391
  %v6571 = vunpack.c.l.b16 %v6392
  %v6572 = vunpack.c.l.b16 %v6393
  %v6573 = vunpack.c.l.b16 %v6394
  %v6574 = vunpack.c.l.b16 %v6395
  %v6575 = vunpack.c.l.b16 %v6396
  %v6576 = vunpack.c.l.b16 %v6397
  %v6577 = vunpack.c.l.b16 %v6398
  %v6578 = vunpack.c.l.b16 %v6399
  %v6579 = vunpack.c.l.b16 %v6400
  %v6580 = vunpack.c.l.b16 %v6401
  %v6581 = vpack.c.b16 %v6560, %v6559
  %v6582 = vpack.c.b16 %v6562, %v6561
  %v6583 = vpack.c.b16 %v6564, %v6563
  %v6584 = vpack.c.b16 %v6566, %v6565
  %v6585 = vpack.c.b16 %v6568, %v6567
  %v6586 = vpack.c.b16 %v6570, %v6569
  %v6587 = vpack.c.b16 %v6572, %v6571
  %v6588 = vpack.c.b16 %v6574, %v6573
  %v6589 = vpack.c.b16 %v6576, %v6575
  %v6590 = vpack.c.b16 %v6578, %v6577
  %v6591 = vpack.c.b16 %v6580, %v6579
  %v6603 = vsel %vm2545, %v6379, 0
  %v6606 = vand.u32 %v6591, %v2552
  %6608 = vmatprep.subr.bf16.mxu0 0
  %6609 = vmatpush1.bf16.msra.mxu0 %v6588
  %6610 = vmatprep.subr.bf16.mxu0 0
  %6611 = vmatpush1.bf16.msra.mxu0 %v6587
  %6612 = vmatprep.subr.bf16.mxu0 0
  %6613 = vmatpush1.bf16.msra.mxu0 %v6586
  %6614 = vmatprep.subr.bf16.mxu0 0
  %6615 = vmatpush1.bf16.msra.mxu0 %v6585
  %6616 = vmatprep.subr.bf16.mxu0 0
  %6617 = vmatpush1.bf16.msra.mxu0 %v6584
  %6618 = vmatprep.subr.bf16.mxu0 0
  %6619 = vmatpush1.bf16.msra.mxu0 %v6583
  %6620 = vmatprep.subr.bf16.mxu0 0
  %6621 = vmatpush1.bf16.msra.mxu0 %v6582
  %6622 = vmatprep.subr.bf16.mxu0 0
  %6623 = vmatpush1.bf16.msra.mxu0 %v6581
  %6624 = vmatprep.subr.bf16.mxu0 0
  %6625 = vmatpush2.bf16.msra.mxu0 0
  %6626 = vmatprep.subr.bf16.mxu0 0
  %6627 = vmatpush2.bf16.msra.mxu0 0
  %6628 = vmatprep.subr.bf16.mxu0 0
  %6629 = vmatpush2.bf16.msra.mxu0 0
  %6630 = vmatprep.subr.bf16.mxu0 0
  %6631 = vmatpush2.bf16.msra.mxu0 0
  %6632 = vmatprep.subr.bf16.mxu0 0
  %6633 = vmatpush2.bf16.msra.mxu0 0
  %6634 = vmatprep.subr.bf16.mxu0 0
  %6635 = vmatpush2.bf16.msra.mxu0 %v6606
  %6636 = vmatprep.subr.bf16.mxu0 0
  %6637 = vmatpush2.bf16.msra.mxu0 %v6590
  %6638 = vmatprep.subr.bf16.mxu0 0
  %6639 = vmatpush2.bf16.msra.mxu0 %v6589
  %6640 = vmatprep.mubr.bf16.mxu0 %v6603
  %6641 = vmatmul.mubr.bf16.gmra.mxu0 %v6378
  %v6642 = vpop.f32.mrf.mxu0
  %v6643 = vadd.f32 %v6532, %v6642
  %v6644 = vpop.f32.mrf.mxu0
  %v6645 = vpop.f32.mrf.mxu0
  %v6646 = vpop.f32.mrf.mxu0
  %6647 = vdwg.mxu0
  %v6648 = vpack.c.bf16 %v6350, %v6350
  %v6649 = vpack.c.bf16 %v6351, %v6351
  %v6650 = vld [vmem:[%s2709] sm:$0xf]
  %v6651 = vld [vmem:[%s2709 + $0x4] sm:$0xf]
  %v6652 = vld [vmem:[%s2709 + $0x8] sm:$0xf]
  %v6653 = vld [vmem:[%s2709 + $0xc] sm:$0xf]
  %v6654 = vld [vmem:[%s2709 + $0x10] sm:$0xf]
  %v6655 = vld [vmem:[%s2709 + $0x14] sm:$0xf]
  %v6656 = vld [vmem:[%s2709 + $0x18] sm:$0xf]
  %v6657 = vld [vmem:[%s2709 + $0x1c] sm:$0xf]
  %v6658 = vld [vmem:[%s2709 + $0x20] sm:$0xf]
  %v6659 = vld [vmem:[%s2709 + $0x24] sm:$0xf]
  %v6660 = vld [vmem:[%s2709 + $0x28] sm:$0xf]
  %v6661 = vld [vmem:[%s2709 + $0x2c] sm:$0xf]
  %v6662 = vld [vmem:[%s2709 + $0x30] sm:$0xf]
  %v6663 = vld [vmem:[%s2709 + $0x34] sm:$0xf]
  %v6664 = vld [vmem:[%s2709 + $0x38] sm:$0xf]
  %v6665 = vld [vmem:[%s2709 + $0x3c] sm:$0xf]
  %v6666 = vld [vmem:[%s2709 + $0x40] sm:$0xf]
  %v6667 = vld [vmem:[%s2709 + $0x44] sm:$0xf]
  %v6668 = vld [vmem:[%s2709 + $0x48] sm:$0xf]
  %v6669 = vld [vmem:[%s2709 + $0x4c] sm:$0xf]
  %v6670 = vld [vmem:[%s2709 + $0x50] sm:$0xf]
  %v6671 = vld [vmem:[%s2709 + $0x54] sm:$0xf]
  %v6694 = vunpack.c.l.b16 %v6650
  %v6695 = vunpack.c.l.b16 %v6651
  %v6696 = vunpack.c.l.b16 %v6652
  %v6697 = vunpack.c.l.b16 %v6653
  %v6698 = vunpack.c.l.b16 %v6654
  %v6699 = vunpack.c.l.b16 %v6655
  %v6700 = vunpack.c.l.b16 %v6656
  %v6701 = vunpack.c.l.b16 %v6657
  %v6702 = vunpack.c.l.b16 %v6658
  %v6703 = vunpack.c.l.b16 %v6659
  %v6704 = vunpack.c.l.b16 %v6660
  %v6705 = vunpack.c.l.b16 %v6661
  %v6706 = vunpack.c.l.b16 %v6662
  %v6707 = vunpack.c.l.b16 %v6663
  %v6708 = vunpack.c.l.b16 %v6664
  %v6709 = vunpack.c.l.b16 %v6665
  %v6710 = vunpack.c.l.b16 %v6666
  %v6711 = vunpack.c.l.b16 %v6667
  %v6712 = vunpack.c.l.b16 %v6668
  %v6713 = vunpack.c.l.b16 %v6669
  %v6714 = vunpack.c.l.b16 %v6670
  %v6715 = vunpack.c.l.b16 %v6671
  %v6716 = vpack.c.b16 %v6695, %v6694
  %v6717 = vpack.c.b16 %v6697, %v6696
  %v6718 = vpack.c.b16 %v6699, %v6698
  %v6719 = vpack.c.b16 %v6701, %v6700
  %v6720 = vpack.c.b16 %v6703, %v6702
  %v6721 = vpack.c.b16 %v6705, %v6704
  %v6722 = vpack.c.b16 %v6707, %v6706
  %v6723 = vpack.c.b16 %v6709, %v6708
  %v6724 = vpack.c.b16 %v6711, %v6710
  %v6725 = vpack.c.b16 %v6713, %v6712
  %v6726 = vpack.c.b16 %v6715, %v6714
  %v6738 = vsel %vm2545, %v6649, 0
  %v6741 = vand.u32 %v6726, %v2552
  %6743 = vmatprep.subr.bf16.mxu0 0
  %6744 = vmatpush1.bf16.msra.mxu0 %v6723
  %6745 = vmatprep.subr.bf16.mxu0 0
  %6746 = vmatpush1.bf16.msra.mxu0 %v6722
  %6747 = vmatprep.subr.bf16.mxu0 0
  %6748 = vmatpush1.bf16.msra.mxu0 %v6721
  %6749 = vmatprep.subr.bf16.mxu0 0
  %6750 = vmatpush1.bf16.msra.mxu0 %v6720
  %6751 = vmatprep.subr.bf16.mxu0 0
  %6752 = vmatpush1.bf16.msra.mxu0 %v6719
  %6753 = vmatprep.subr.bf16.mxu0 0
  %6754 = vmatpush1.bf16.msra.mxu0 %v6718
  %6755 = vmatprep.subr.bf16.mxu0 0
  %6756 = vmatpush1.bf16.msra.mxu0 %v6717
  %6757 = vmatprep.subr.bf16.mxu0 0
  %6758 = vmatpush1.bf16.msra.mxu0 %v6716
  %6759 = vmatprep.subr.bf16.mxu0 0
  %6760 = vmatpush2.bf16.msra.mxu0 0
  %6761 = vmatprep.subr.bf16.mxu0 0
  %6762 = vmatpush2.bf16.msra.mxu0 0
  %6763 = vmatprep.subr.bf16.mxu0 0
  %6764 = vmatpush2.bf16.msra.mxu0 0
  %6765 = vmatprep.subr.bf16.mxu0 0
  %6766 = vmatpush2.bf16.msra.mxu0 0
  %6767 = vmatprep.subr.bf16.mxu0 0
  %6768 = vmatpush2.bf16.msra.mxu0 0
  %6769 = vmatprep.subr.bf16.mxu0 0
  %6770 = vmatpush2.bf16.msra.mxu0 %v6741
  %6771 = vmatprep.subr.bf16.mxu0 0
  %6772 = vmatpush2.bf16.msra.mxu0 %v6725
  %6773 = vmatprep.subr.bf16.mxu0 0
  %6774 = vmatpush2.bf16.msra.mxu0 %v6724
  %6775 = vmatprep.mubr.bf16.mxu0 %v6738
  %6776 = vmatmul.mubr.bf16.gmra.mxu0 %v6648
  %v6777 = vpop.f32.mrf.mxu0
  %v6778 = vadd.f32 0.0, %v6777
  %v6779 = vpop.f32.mrf.mxu0
  %v6780 = vpop.f32.mrf.mxu0
  %v6781 = vpop.f32.mrf.mxu0
  %6782 = vdwg.mxu0
  %v6783 = vadd.f32 %v6643, %v6778
  %v6784 = vpack.c.bf16 %v6352, %v6352
  %v6785 = vpack.c.bf16 %v6353, %v6353
  %v6786 = vld [vmem:[%s2846] sm:$0xf]
  %v6787 = vld [vmem:[%s2846 + $0x4] sm:$0xf]
  %v6788 = vld [vmem:[%s2846 + $0x8] sm:$0xf]
  %v6789 = vld [vmem:[%s2846 + $0xc] sm:$0xf]
  %v6790 = vld [vmem:[%s2846 + $0x10] sm:$0xf]
  %v6791 = vld [vmem:[%s2846 + $0x14] sm:$0xf]
  %v6792 = vld [vmem:[%s2846 + $0x18] sm:$0xf]
  %v6793 = vld [vmem:[%s2846 + $0x1c] sm:$0xf]
  %v6794 = vld [vmem:[%s2846 + $0x20] sm:$0xf]
  %v6795 = vld [vmem:[%s2846 + $0x24] sm:$0xf]
  %v6796 = vld [vmem:[%s2846 + $0x28] sm:$0xf]
  %v6797 = vld [vmem:[%s2846 + $0x2c] sm:$0xf]
  %v6798 = vld [vmem:[%s2846 + $0x30] sm:$0xf]
  %v6799 = vld [vmem:[%s2846 + $0x34] sm:$0xf]
  %v6800 = vld [vmem:[%s2846 + $0x38] sm:$0xf]
  %v6801 = vld [vmem:[%s2846 + $0x3c] sm:$0xf]
  %v6802 = vld [vmem:[%s2846 + $0x40] sm:$0xf]
  %v6803 = vld [vmem:[%s2846 + $0x44] sm:$0xf]
  %v6804 = vld [vmem:[%s2846 + $0x48] sm:$0xf]
  %v6805 = vld [vmem:[%s2846 + $0x4c] sm:$0xf]
  %v6806 = vld [vmem:[%s2846 + $0x50] sm:$0xf]
  %v6807 = vld [vmem:[%s2846 + $0x54] sm:$0xf]
  %v6830 = vunpack.c.l.b16 %v6786
  %v6831 = vunpack.c.l.b16 %v6787
  %v6832 = vunpack.c.l.b16 %v6788
  %v6833 = vunpack.c.l.b16 %v6789
  %v6834 = vunpack.c.l.b16 %v6790
  %v6835 = vunpack.c.l.b16 %v6791
  %v6836 = vunpack.c.l.b16 %v6792
  %v6837 = vunpack.c.l.b16 %v6793
  %v6838 = vunpack.c.l.b16 %v6794
  %v6839 = vunpack.c.l.b16 %v6795
  %v6840 = vunpack.c.l.b16 %v6796
  %v6841 = vunpack.c.l.b16 %v6797
  %v6842 = vunpack.c.l.b16 %v6798
  %v6843 = vunpack.c.l.b16 %v6799
  %v6844 = vunpack.c.l.b16 %v6800
  %v6845 = vunpack.c.l.b16 %v6801
  %v6846 = vunpack.c.l.b16 %v6802
  %v6847 = vunpack.c.l.b16 %v6803
  %v6848 = vunpack.c.l.b16 %v6804
  %v6849 = vunpack.c.l.b16 %v6805
  %v6850 = vunpack.c.l.b16 %v6806
  %v6851 = vunpack.c.l.b16 %v6807
  %v6852 = vpack.c.b16 %v6831, %v6830
  %v6853 = vpack.c.b16 %v6833, %v6832
  %v6854 = vpack.c.b16 %v6835, %v6834
  %v6855 = vpack.c.b16 %v6837, %v6836
  %v6856 = vpack.c.b16 %v6839, %v6838
  %v6857 = vpack.c.b16 %v6841, %v6840
  %v6858 = vpack.c.b16 %v6843, %v6842
  %v6859 = vpack.c.b16 %v6845, %v6844
  %v6860 = vpack.c.b16 %v6847, %v6846
  %v6861 = vpack.c.b16 %v6849, %v6848
  %v6862 = vpack.c.b16 %v6851, %v6850
  %v6874 = vsel %vm2545, %v6785, 0
  %v6877 = vand.u32 %v6862, %v2552
  %6879 = vmatprep.subr.bf16.mxu0 0
  %6880 = vmatpush1.bf16.msra.mxu0 %v6859
  %6881 = vmatprep.subr.bf16.mxu0 0
  %6882 = vmatpush1.bf16.msra.mxu0 %v6858
  %6883 = vmatprep.subr.bf16.mxu0 0
  %6884 = vmatpush1.bf16.msra.mxu0 %v6857
  %6885 = vmatprep.subr.bf16.mxu0 0
  %6886 = vmatpush1.bf16.msra.mxu0 %v6856
  %6887 = vmatprep.subr.bf16.mxu0 0
  %6888 = vmatpush1.bf16.msra.mxu0 %v6855
  %6889 = vmatprep.subr.bf16.mxu0 0
  %6890 = vmatpush1.bf16.msra.mxu0 %v6854
  %6891 = vmatprep.subr.bf16.mxu0 0
  %6892 = vmatpush1.bf16.msra.mxu0 %v6853
  %6893 = vmatprep.subr.bf16.mxu0 0
  %6894 = vmatpush1.bf16.msra.mxu0 %v6852
  %6895 = vmatprep.subr.bf16.mxu0 0
  %6896 = vmatpush2.bf16.msra.mxu0 0
  %6897 = vmatprep.subr.bf16.mxu0 0
  %6898 = vmatpush2.bf16.msra.mxu0 0
  %6899 = vmatprep.subr.bf16.mxu0 0
  %6900 = vmatpush2.bf16.msra.mxu0 0
  %6901 = vmatprep.subr.bf16.mxu0 0
  %6902 = vmatpush2.bf16.msra.mxu0 0
  %6903 = vmatprep.subr.bf16.mxu0 0
  %6904 = vmatpush2.bf16.msra.mxu0 0
  %6905 = vmatprep.subr.bf16.mxu0 0
  %6906 = vmatpush2.bf16.msra.mxu0 %v6877
  %6907 = vmatprep.subr.bf16.mxu0 0
  %6908 = vmatpush2.bf16.msra.mxu0 %v6861
  %6909 = vmatprep.subr.bf16.mxu0 0
  %6910 = vmatpush2.bf16.msra.mxu0 %v6860
  %6911 = vmatprep.mubr.bf16.mxu0 %v6874
  %6912 = vmatmul.mubr.bf16.gmra.mxu0 %v6784
  %v6913 = vpop.f32.mrf.mxu0
  %v6914 = vadd.f32 0.0, %v6913
  %v6915 = vpop.f32.mrf.mxu0
  %v6916 = vpop.f32.mrf.mxu0
  %v6917 = vpop.f32.mrf.mxu0
  %6918 = vdwg.mxu0
  %v6919 = vadd.f32 %v6783, %v6914
  %v6920 = vpack.c.bf16 %v6354, %v6354
  %v6921 = vpack.c.bf16 %v6355, %v6355
  %v6922 = vld [vmem:[%s2983] sm:$0xf]
  %v6923 = vld [vmem:[%s2983 + $0x4] sm:$0xf]
  %v6924 = vld [vmem:[%s2983 + $0x8] sm:$0xf]
  %v6925 = vld [vmem:[%s2983 + $0xc] sm:$0xf]
  %v6926 = vld [vmem:[%s2983 + $0x10] sm:$0xf]
  %v6927 = vld [vmem:[%s2983 + $0x14] sm:$0xf]
  %v6928 = vld [vmem:[%s2983 + $0x18] sm:$0xf]
  %v6929 = vld [vmem:[%s2983 + $0x1c] sm:$0xf]
  %v6930 = vld [vmem:[%s2983 + $0x20] sm:$0xf]
  %v6931 = vld [vmem:[%s2983 + $0x24] sm:$0xf]
  %v6932 = vld [vmem:[%s2983 + $0x28] sm:$0xf]
  %v6933 = vld [vmem:[%s2983 + $0x2c] sm:$0xf]
  %v6934 = vld [vmem:[%s2983 + $0x30] sm:$0xf]
  %v6935 = vld [vmem:[%s2983 + $0x34] sm:$0xf]
  %v6936 = vld [vmem:[%s2983 + $0x38] sm:$0xf]
  %v6937 = vld [vmem:[%s2983 + $0x3c] sm:$0xf]
  %v6938 = vld [vmem:[%s2983 + $0x40] sm:$0xf]
  %v6939 = vld [vmem:[%s2983 + $0x44] sm:$0xf]
  %v6940 = vld [vmem:[%s2983 + $0x48] sm:$0xf]
  %v6941 = vld [vmem:[%s2983 + $0x4c] sm:$0xf]
  %v6942 = vld [vmem:[%s2983 + $0x50] sm:$0xf]
  %v6943 = vld [vmem:[%s2983 + $0x54] sm:$0xf]
  %v6966 = vunpack.c.l.b16 %v6922
  %v6967 = vunpack.c.l.b16 %v6923
  %v6968 = vunpack.c.l.b16 %v6924
  %v6969 = vunpack.c.l.b16 %v6925
  %v6970 = vunpack.c.l.b16 %v6926
  %v6971 = vunpack.c.l.b16 %v6927
  %v6972 = vunpack.c.l.b16 %v6928
  %v6973 = vunpack.c.l.b16 %v6929
  %v6974 = vunpack.c.l.b16 %v6930
  %v6975 = vunpack.c.l.b16 %v6931
  %v6976 = vunpack.c.l.b16 %v6932
  %v6977 = vunpack.c.l.b16 %v6933
  %v6978 = vunpack.c.l.b16 %v6934
  %v6979 = vunpack.c.l.b16 %v6935
  %v6980 = vunpack.c.l.b16 %v6936
  %v6981 = vunpack.c.l.b16 %v6937
  %v6982 = vunpack.c.l.b16 %v6938
  %v6983 = vunpack.c.l.b16 %v6939
  %v6984 = vunpack.c.l.b16 %v6940
  %v6985 = vunpack.c.l.b16 %v6941
  %v6986 = vunpack.c.l.b16 %v6942
  %v6987 = vunpack.c.l.b16 %v6943
  %v6988 = vpack.c.b16 %v6967, %v6966
  %v6989 = vpack.c.b16 %v6969, %v6968
  %v6990 = vpack.c.b16 %v6971, %v6970
  %v6991 = vpack.c.b16 %v6973, %v6972
  %v6992 = vpack.c.b16 %v6975, %v6974
  %v6993 = vpack.c.b16 %v6977, %v6976
  %v6994 = vpack.c.b16 %v6979, %v6978
  %v6995 = vpack.c.b16 %v6981, %v6980
  %v6996 = vpack.c.b16 %v6983, %v6982
  %v6997 = vpack.c.b16 %v6985, %v6984
  %v6998 = vpack.c.b16 %v6987, %v6986
  %v7010 = vsel %vm2545, %v6921, 0
  %v7013 = vand.u32 %v6998, %v2552
  %7015 = vmatprep.subr.bf16.mxu0 0
  %7016 = vmatpush1.bf16.msra.mxu0 %v6995
  %7017 = vmatprep.subr.bf16.mxu0 0
  %7018 = vmatpush1.bf16.msra.mxu0 %v6994
  %7019 = vmatprep.subr.bf16.mxu0 0
  %7020 = vmatpush1.bf16.msra.mxu0 %v6993
  %7021 = vmatprep.subr.bf16.mxu0 0
  %7022 = vmatpush1.bf16.msra.mxu0 %v6992
  %7023 = vmatprep.subr.bf16.mxu0 0
  %7024 = vmatpush1.bf16.msra.mxu0 %v6991
  %7025 = vmatprep.subr.bf16.mxu0 0
  %7026 = vmatpush1.bf16.msra.mxu0 %v6990
  %7027 = vmatprep.subr.bf16.mxu0 0
  %7028 = vmatpush1.bf16.msra.mxu0 %v6989
  %7029 = vmatprep.subr.bf16.mxu0 0
  %7030 = vmatpush1.bf16.msra.mxu0 %v6988
  %7031 = vmatprep.subr.bf16.mxu0 0
  %7032 = vmatpush2.bf16.msra.mxu0 0
  %7033 = vmatprep.subr.bf16.mxu0 0
  %7034 = vmatpush2.bf16.msra.mxu0 0
  %7035 = vmatprep.subr.bf16.mxu0 0
  %7036 = vmatpush2.bf16.msra.mxu0 0
  %7037 = vmatprep.subr.bf16.mxu0 0
  %7038 = vmatpush2.bf16.msra.mxu0 0
  %7039 = vmatprep.subr.bf16.mxu0 0
  %7040 = vmatpush2.bf16.msra.mxu0 0
  %7041 = vmatprep.subr.bf16.mxu0 0
  %7042 = vmatpush2.bf16.msra.mxu0 %v7013
  %7043 = vmatprep.subr.bf16.mxu0 0
  %7044 = vmatpush2.bf16.msra.mxu0 %v6997
  %7045 = vmatprep.subr.bf16.mxu0 0
  %7046 = vmatpush2.bf16.msra.mxu0 %v6996
  %7047 = vmatprep.mubr.bf16.mxu0 %v7010
  %7048 = vmatmul.mubr.bf16.gmra.mxu0 %v6920
  %v7049 = vpop.f32.mrf.mxu0
  %v7050 = vadd.f32 0.0, %v7049
  %v7051 = vpop.f32.mrf.mxu0
  %v7052 = vpop.f32.mrf.mxu0
  %v7053 = vpop.f32.mrf.mxu0
  %7054 = vdwg.mxu0
  %v7055 = vadd.f32 %v6919, %v7050
  %v7056 = vpack.c.bf16 %v6356, %v6356
  %v7057 = vpack.c.bf16 %v6357, %v6357
  %v7058 = vld [vmem:[%s3120] sm:$0xf]
  %v7059 = vld [vmem:[%s3120 + $0x4] sm:$0xf]
  %v7060 = vld [vmem:[%s3120 + $0x8] sm:$0xf]
  %v7061 = vld [vmem:[%s3120 + $0xc] sm:$0xf]
  %v7062 = vld [vmem:[%s3120 + $0x10] sm:$0xf]
  %v7063 = vld [vmem:[%s3120 + $0x14] sm:$0xf]
  %v7064 = vld [vmem:[%s3120 + $0x18] sm:$0xf]
  %v7065 = vld [vmem:[%s3120 + $0x1c] sm:$0xf]
  %v7066 = vld [vmem:[%s3120 + $0x20] sm:$0xf]
  %v7067 = vld [vmem:[%s3120 + $0x24] sm:$0xf]
  %v7068 = vld [vmem:[%s3120 + $0x28] sm:$0xf]
  %v7069 = vld [vmem:[%s3120 + $0x2c] sm:$0xf]
  %v7070 = vld [vmem:[%s3120 + $0x30] sm:$0xf]
  %v7071 = vld [vmem:[%s3120 + $0x34] sm:$0xf]
  %v7072 = vld [vmem:[%s3120 + $0x38] sm:$0xf]
  %v7073 = vld [vmem:[%s3120 + $0x3c] sm:$0xf]
  %v7074 = vld [vmem:[%s3120 + $0x40] sm:$0xf]
  %v7075 = vld [vmem:[%s3120 + $0x44] sm:$0xf]
  %v7076 = vld [vmem:[%s3120 + $0x48] sm:$0xf]
  %v7077 = vld [vmem:[%s3120 + $0x4c] sm:$0xf]
  %v7078 = vld [vmem:[%s3120 + $0x50] sm:$0xf]
  %v7079 = vld [vmem:[%s3120 + $0x54] sm:$0xf]
  %v7102 = vunpack.c.l.b16 %v7058
  %v7103 = vunpack.c.l.b16 %v7059
  %v7104 = vunpack.c.l.b16 %v7060
  %v7105 = vunpack.c.l.b16 %v7061
  %v7106 = vunpack.c.l.b16 %v7062
  %v7107 = vunpack.c.l.b16 %v7063
  %v7108 = vunpack.c.l.b16 %v7064
  %v7109 = vunpack.c.l.b16 %v7065
  %v7110 = vunpack.c.l.b16 %v7066
  %v7111 = vunpack.c.l.b16 %v7067
  %v7112 = vunpack.c.l.b16 %v7068
  %v7113 = vunpack.c.l.b16 %v7069
  %v7114 = vunpack.c.l.b16 %v7070
  %v7115 = vunpack.c.l.b16 %v7071
  %v7116 = vunpack.c.l.b16 %v7072
  %v7117 = vunpack.c.l.b16 %v7073
  %v7118 = vunpack.c.l.b16 %v7074
  %v7119 = vunpack.c.l.b16 %v7075
  %v7120 = vunpack.c.l.b16 %v7076
  %v7121 = vunpack.c.l.b16 %v7077
  %v7122 = vunpack.c.l.b16 %v7078
  %v7123 = vunpack.c.l.b16 %v7079
  %v7124 = vpack.c.b16 %v7103, %v7102
  %v7125 = vpack.c.b16 %v7105, %v7104
  %v7126 = vpack.c.b16 %v7107, %v7106
  %v7127 = vpack.c.b16 %v7109, %v7108
  %v7128 = vpack.c.b16 %v7111, %v7110
  %v7129 = vpack.c.b16 %v7113, %v7112
  %v7130 = vpack.c.b16 %v7115, %v7114
  %v7131 = vpack.c.b16 %v7117, %v7116
  %v7132 = vpack.c.b16 %v7119, %v7118
  %v7133 = vpack.c.b16 %v7121, %v7120
  %v7134 = vpack.c.b16 %v7123, %v7122
  %v7146 = vsel %vm2545, %v7057, 0
  %v7149 = vand.u32 %v7134, %v2552
  %7151 = vmatprep.subr.bf16.mxu0 0
  %7152 = vmatpush1.bf16.msra.mxu0 %v7131
  %7153 = vmatprep.subr.bf16.mxu0 0
  %7154 = vmatpush1.bf16.msra.mxu0 %v7130
  %7155 = vmatprep.subr.bf16.mxu0 0
  %7156 = vmatpush1.bf16.msra.mxu0 %v7129
  %7157 = vmatprep.subr.bf16.mxu0 0
  %7158 = vmatpush1.bf16.msra.mxu0 %v7128
  %7159 = vmatprep.subr.bf16.mxu0 0
  %7160 = vmatpush1.bf16.msra.mxu0 %v7127
  %7161 = vmatprep.subr.bf16.mxu0 0
  %7162 = vmatpush1.bf16.msra.mxu0 %v7126
  %7163 = vmatprep.subr.bf16.mxu0 0
  %7164 = vmatpush1.bf16.msra.mxu0 %v7125
  %7165 = vmatprep.subr.bf16.mxu0 0
  %7166 = vmatpush1.bf16.msra.mxu0 %v7124
  %7167 = vmatprep.subr.bf16.mxu0 0
  %7168 = vmatpush2.bf16.msra.mxu0 0
  %7169 = vmatprep.subr.bf16.mxu0 0
  %7170 = vmatpush2.bf16.msra.mxu0 0
  %7171 = vmatprep.subr.bf16.mxu0 0
  %7172 = vmatpush2.bf16.msra.mxu0 0
  %7173 = vmatprep.subr.bf16.mxu0 0
  %7174 = vmatpush2.bf16.msra.mxu0 0
  %7175 = vmatprep.subr.bf16.mxu0 0
  %7176 = vmatpush2.bf16.msra.mxu0 0
  %7177 = vmatprep.subr.bf16.mxu0 0
  %7178 = vmatpush2.bf16.msra.mxu0 %v7149
  %7179 = vmatprep.subr.bf16.mxu0 0
  %7180 = vmatpush2.bf16.msra.mxu0 %v7133
  %7181 = vmatprep.subr.bf16.mxu0 0
  %7182 = vmatpush2.bf16.msra.mxu0 %v7132
  %7183 = vmatprep.mubr.bf16.mxu0 %v7146
  %7184 = vmatmul.mubr.bf16.gmra.mxu0 %v7056
  %v7185 = vpop.f32.mrf.mxu0
  %v7186 = vadd.f32 0.0, %v7185
  %v7187 = vpop.f32.mrf.mxu0
  %v7188 = vpop.f32.mrf.mxu0
  %v7189 = vpop.f32.mrf.mxu0
  %7190 = vdwg.mxu0
  %v7191 = vadd.f32 %v7055, %v7186
  %v7192 = vpack.c.bf16 %v6358, %v6358
  %v7193 = vpack.c.bf16 %v6359, %v6359
  %v7194 = vld [vmem:[%s3257] sm:$0xf]
  %v7195 = vld [vmem:[%s3257 + $0x4] sm:$0xf]
  %v7196 = vld [vmem:[%s3257 + $0x8] sm:$0xf]
  %v7197 = vld [vmem:[%s3257 + $0xc] sm:$0xf]
  %v7198 = vld [vmem:[%s3257 + $0x10] sm:$0xf]
  %v7199 = vld [vmem:[%s3257 + $0x14] sm:$0xf]
  %v7200 = vld [vmem:[%s3257 + $0x18] sm:$0xf]
  %v7201 = vld [vmem:[%s3257 + $0x1c] sm:$0xf]
  %v7202 = vld [vmem:[%s3257 + $0x20] sm:$0xf]
  %v7203 = vld [vmem:[%s3257 + $0x24] sm:$0xf]
  %v7204 = vld [vmem:[%s3257 + $0x28] sm:$0xf]
  %v7205 = vld [vmem:[%s3257 + $0x2c] sm:$0xf]
  %v7206 = vld [vmem:[%s3257 + $0x30] sm:$0xf]
  %v7207 = vld [vmem:[%s3257 + $0x34] sm:$0xf]
  %v7208 = vld [vmem:[%s3257 + $0x38] sm:$0xf]
  %v7209 = vld [vmem:[%s3257 + $0x3c] sm:$0xf]
  %v7210 = vld [vmem:[%s3257 + $0x40] sm:$0xf]
  %v7211 = vld [vmem:[%s3257 + $0x44] sm:$0xf]
  %v7212 = vld [vmem:[%s3257 + $0x48] sm:$0xf]
  %v7213 = vld [vmem:[%s3257 + $0x4c] sm:$0xf]
  %v7214 = vld [vmem:[%s3257 + $0x50] sm:$0xf]
  %v7215 = vld [vmem:[%s3257 + $0x54] sm:$0xf]
  %v7238 = vunpack.c.l.b16 %v7194
  %v7239 = vunpack.c.l.b16 %v7195
  %v7240 = vunpack.c.l.b16 %v7196
  %v7241 = vunpack.c.l.b16 %v7197
  %v7242 = vunpack.c.l.b16 %v7198
  %v7243 = vunpack.c.l.b16 %v7199
  %v7244 = vunpack.c.l.b16 %v7200
  %v7245 = vunpack.c.l.b16 %v7201
  %v7246 = vunpack.c.l.b16 %v7202
  %v7247 = vunpack.c.l.b16 %v7203
  %v7248 = vunpack.c.l.b16 %v7204
  %v7249 = vunpack.c.l.b16 %v7205
  %v7250 = vunpack.c.l.b16 %v7206
  %v7251 = vunpack.c.l.b16 %v7207
  %v7252 = vunpack.c.l.b16 %v7208
  %v7253 = vunpack.c.l.b16 %v7209
  %v7254 = vunpack.c.l.b16 %v7210
  %v7255 = vunpack.c.l.b16 %v7211
  %v7256 = vunpack.c.l.b16 %v7212
  %v7257 = vunpack.c.l.b16 %v7213
  %v7258 = vunpack.c.l.b16 %v7214
  %v7259 = vunpack.c.l.b16 %v7215
  %v7260 = vpack.c.b16 %v7239, %v7238
  %v7261 = vpack.c.b16 %v7241, %v7240
  %v7262 = vpack.c.b16 %v7243, %v7242
  %v7263 = vpack.c.b16 %v7245, %v7244
  %v7264 = vpack.c.b16 %v7247, %v7246
  %v7265 = vpack.c.b16 %v7249, %v7248
  %v7266 = vpack.c.b16 %v7251, %v7250
  %v7267 = vpack.c.b16 %v7253, %v7252
  %v7268 = vpack.c.b16 %v7255, %v7254
  %v7269 = vpack.c.b16 %v7257, %v7256
  %v7270 = vpack.c.b16 %v7259, %v7258
  %v7282 = vsel %vm2545, %v7193, 0
  %v7285 = vand.u32 %v7270, %v2552
  %7287 = vmatprep.subr.bf16.mxu0 0
  %7288 = vmatpush1.bf16.msra.mxu0 %v7267
  %7289 = vmatprep.subr.bf16.mxu0 0
  %7290 = vmatpush1.bf16.msra.mxu0 %v7266
  %7291 = vmatprep.subr.bf16.mxu0 0
  %7292 = vmatpush1.bf16.msra.mxu0 %v7265
  %7293 = vmatprep.subr.bf16.mxu0 0
  %7294 = vmatpush1.bf16.msra.mxu0 %v7264
  %7295 = vmatprep.subr.bf16.mxu0 0
  %7296 = vmatpush1.bf16.msra.mxu0 %v7263
  %7297 = vmatprep.subr.bf16.mxu0 0
  %7298 = vmatpush1.bf16.msra.mxu0 %v7262
  %7299 = vmatprep.subr.bf16.mxu0 0
  %7300 = vmatpush1.bf16.msra.mxu0 %v7261
  %7301 = vmatprep.subr.bf16.mxu0 0
  %7302 = vmatpush1.bf16.msra.mxu0 %v7260
  %7303 = vmatprep.subr.bf16.mxu0 0
  %7304 = vmatpush2.bf16.msra.mxu0 0
  %7305 = vmatprep.subr.bf16.mxu0 0
  %7306 = vmatpush2.bf16.msra.mxu0 0
  %7307 = vmatprep.subr.bf16.mxu0 0
  %7308 = vmatpush2.bf16.msra.mxu0 0
  %7309 = vmatprep.subr.bf16.mxu0 0
  %7310 = vmatpush2.bf16.msra.mxu0 0
  %7311 = vmatprep.subr.bf16.mxu0 0
  %7312 = vmatpush2.bf16.msra.mxu0 0
  %7313 = vmatprep.subr.bf16.mxu0 0
  %7314 = vmatpush2.bf16.msra.mxu0 %v7285
  %7315 = vmatprep.subr.bf16.mxu0 0
  %7316 = vmatpush2.bf16.msra.mxu0 %v7269
  %7317 = vmatprep.subr.bf16.mxu0 0
  %7318 = vmatpush2.bf16.msra.mxu0 %v7268
  %7319 = vmatprep.mubr.bf16.mxu0 %v7282
  %7320 = vmatmul.mubr.bf16.gmra.mxu0 %v7192
  %v7321 = vpop.f32.mrf.mxu0
  %v7322 = vadd.f32 0.0, %v7321
  %v7323 = vpop.f32.mrf.mxu0
  %v7324 = vpop.f32.mrf.mxu0
  %v7325 = vpop.f32.mrf.mxu0
  %7326 = vdwg.mxu0
  %v7327 = vadd.f32 %v7191, %v7322
  %v7328 = vpack.c.bf16 %v6360, %v6360
  %v7329 = vpack.c.bf16 %v6361, %v6361
  %v7330 = vld [vmem:[%s3394] sm:$0xf]
  %v7331 = vld [vmem:[%s3394 + $0x4] sm:$0xf]
  %v7332 = vld [vmem:[%s3394 + $0x8] sm:$0xf]
  %v7333 = vld [vmem:[%s3394 + $0xc] sm:$0xf]
  %v7334 = vld [vmem:[%s3394 + $0x10] sm:$0xf]
  %v7335 = vld [vmem:[%s3394 + $0x14] sm:$0xf]
  %v7336 = vld [vmem:[%s3394 + $0x18] sm:$0xf]
  %v7337 = vld [vmem:[%s3394 + $0x1c] sm:$0xf]
  %v7338 = vld [vmem:[%s3394 + $0x20] sm:$0xf]
  %v7339 = vld [vmem:[%s3394 + $0x24] sm:$0xf]
  %v7340 = vld [vmem:[%s3394 + $0x28] sm:$0xf]
  %v7341 = vld [vmem:[%s3394 + $0x2c] sm:$0xf]
  %v7342 = vld [vmem:[%s3394 + $0x30] sm:$0xf]
  %v7343 = vld [vmem:[%s3394 + $0x34] sm:$0xf]
  %v7344 = vld [vmem:[%s3394 + $0x38] sm:$0xf]
  %v7345 = vld [vmem:[%s3394 + $0x3c] sm:$0xf]
  %v7346 = vld [vmem:[%s3394 + $0x40] sm:$0xf]
  %v7347 = vld [vmem:[%s3394 + $0x44] sm:$0xf]
  %v7348 = vld [vmem:[%s3394 + $0x48] sm:$0xf]
  %v7349 = vld [vmem:[%s3394 + $0x4c] sm:$0xf]
  %v7350 = vld [vmem:[%s3394 + $0x50] sm:$0xf]
  %v7351 = vld [vmem:[%s3394 + $0x54] sm:$0xf]
  %v7374 = vunpack.c.l.b16 %v7330
  %v7375 = vunpack.c.l.b16 %v7331
  %v7376 = vunpack.c.l.b16 %v7332
  %v7377 = vunpack.c.l.b16 %v7333
  %v7378 = vunpack.c.l.b16 %v7334
  %v7379 = vunpack.c.l.b16 %v7335
  %v7380 = vunpack.c.l.b16 %v7336
  %v7381 = vunpack.c.l.b16 %v7337
  %v7382 = vunpack.c.l.b16 %v7338
  %v7383 = vunpack.c.l.b16 %v7339
  %v7384 = vunpack.c.l.b16 %v7340
  %v7385 = vunpack.c.l.b16 %v7341
  %v7386 = vunpack.c.l.b16 %v7342
  %v7387 = vunpack.c.l.b16 %v7343
  %v7388 = vunpack.c.l.b16 %v7344
  %v7389 = vunpack.c.l.b16 %v7345
  %v7390 = vunpack.c.l.b16 %v7346
  %v7391 = vunpack.c.l.b16 %v7347
  %v7392 = vunpack.c.l.b16 %v7348
  %v7393 = vunpack.c.l.b16 %v7349
  %v7394 = vunpack.c.l.b16 %v7350
  %v7395 = vunpack.c.l.b16 %v7351
  %v7396 = vpack.c.b16 %v7375, %v7374
  %v7397 = vpack.c.b16 %v7377, %v7376
  %v7398 = vpack.c.b16 %v7379, %v7378
  %v7399 = vpack.c.b16 %v7381, %v7380
  %v7400 = vpack.c.b16 %v7383, %v7382
  %v7401 = vpack.c.b16 %v7385, %v7384
  %v7402 = vpack.c.b16 %v7387, %v7386
  %v7403 = vpack.c.b16 %v7389, %v7388
  %v7404 = vpack.c.b16 %v7391, %v7390
  %v7405 = vpack.c.b16 %v7393, %v7392
  %v7406 = vpack.c.b16 %v7395, %v7394
  %v7418 = vsel %vm2545, %v7329, 0
  %v7421 = vand.u32 %v7406, %v2552
  %7423 = vmatprep.subr.bf16.mxu0 0
  %7424 = vmatpush1.bf16.msra.mxu0 %v7403
  %7425 = vmatprep.subr.bf16.mxu0 0
  %7426 = vmatpush1.bf16.msra.mxu0 %v7402
  %7427 = vmatprep.subr.bf16.mxu0 0
  %7428 = vmatpush1.bf16.msra.mxu0 %v7401
  %7429 = vmatprep.subr.bf16.mxu0 0
  %7430 = vmatpush1.bf16.msra.mxu0 %v7400
  %7431 = vmatprep.subr.bf16.mxu0 0
  %7432 = vmatpush1.bf16.msra.mxu0 %v7399
  %7433 = vmatprep.subr.bf16.mxu0 0
  %7434 = vmatpush1.bf16.msra.mxu0 %v7398
  %7435 = vmatprep.subr.bf16.mxu0 0
  %7436 = vmatpush1.bf16.msra.mxu0 %v7397
  %7437 = vmatprep.subr.bf16.mxu0 0
  %7438 = vmatpush1.bf16.msra.mxu0 %v7396
  %7439 = vmatprep.subr.bf16.mxu0 0
  %7440 = vmatpush2.bf16.msra.mxu0 0
  %7441 = vmatprep.subr.bf16.mxu0 0
  %7442 = vmatpush2.bf16.msra.mxu0 0
  %7443 = vmatprep.subr.bf16.mxu0 0
  %7444 = vmatpush2.bf16.msra.mxu0 0
  %7445 = vmatprep.subr.bf16.mxu0 0
  %7446 = vmatpush2.bf16.msra.mxu0 0
  %7447 = vmatprep.subr.bf16.mxu0 0
  %7448 = vmatpush2.bf16.msra.mxu0 0
  %7449 = vmatprep.subr.bf16.mxu0 0
  %7450 = vmatpush2.bf16.msra.mxu0 %v7421
  %7451 = vmatprep.subr.bf16.mxu0 0
  %7452 = vmatpush2.bf16.msra.mxu0 %v7405
  %7453 = vmatprep.subr.bf16.mxu0 0
  %7454 = vmatpush2.bf16.msra.mxu0 %v7404
  %7455 = vmatprep.mubr.bf16.mxu0 %v7418
  %7456 = vmatmul.mubr.bf16.gmra.mxu0 %v7328
  %v7457 = vpop.f32.mrf.mxu0
  %v7458 = vadd.f32 0.0, %v7457
  %v7459 = vpop.f32.mrf.mxu0
  %v7460 = vpop.f32.mrf.mxu0
  %v7461 = vpop.f32.mrf.mxu0
  %7462 = vdwg.mxu0
  %v7463 = vadd.f32 %v7327, %v7458
  %v7464 = vpack.c.bf16 %v6362, %v6362
  %v7465 = vpack.c.bf16 %v6363, %v6363
  %v7466 = vld [vmem:[%s3531] sm:$0xf]
  %v7467 = vld [vmem:[%s3531 + $0x4] sm:$0xf]
  %v7468 = vld [vmem:[%s3531 + $0x8] sm:$0xf]
  %v7469 = vld [vmem:[%s3531 + $0xc] sm:$0xf]
  %v7470 = vld [vmem:[%s3531 + $0x10] sm:$0xf]
  %v7471 = vld [vmem:[%s3531 + $0x14] sm:$0xf]
  %v7472 = vld [vmem:[%s3531 + $0x18] sm:$0xf]
  %v7473 = vld [vmem:[%s3531 + $0x1c] sm:$0xf]
  %v7474 = vld [vmem:[%s3531 + $0x20] sm:$0xf]
  %v7475 = vld [vmem:[%s3531 + $0x24] sm:$0xf]
  %v7476 = vld [vmem:[%s3531 + $0x28] sm:$0xf]
  %v7477 = vld [vmem:[%s3531 + $0x2c] sm:$0xf]
  %v7478 = vld [vmem:[%s3531 + $0x30] sm:$0xf]
  %v7479 = vld [vmem:[%s3531 + $0x34] sm:$0xf]
  %v7480 = vld [vmem:[%s3531 + $0x38] sm:$0xf]
  %v7481 = vld [vmem:[%s3531 + $0x3c] sm:$0xf]
  %v7482 = vld [vmem:[%s3531 + $0x40] sm:$0xf]
  %v7483 = vld [vmem:[%s3531 + $0x44] sm:$0xf]
  %v7484 = vld [vmem:[%s3531 + $0x48] sm:$0xf]
  %v7485 = vld [vmem:[%s3531 + $0x4c] sm:$0xf]
  %v7486 = vld [vmem:[%s3531 + $0x50] sm:$0xf]
  %v7487 = vld [vmem:[%s3531 + $0x54] sm:$0xf]
  %v7510 = vunpack.c.l.b16 %v7466
  %v7511 = vunpack.c.l.b16 %v7467
  %v7512 = vunpack.c.l.b16 %v7468
  %v7513 = vunpack.c.l.b16 %v7469
  %v7514 = vunpack.c.l.b16 %v7470
  %v7515 = vunpack.c.l.b16 %v7471
  %v7516 = vunpack.c.l.b16 %v7472
  %v7517 = vunpack.c.l.b16 %v7473
  %v7518 = vunpack.c.l.b16 %v7474
  %v7519 = vunpack.c.l.b16 %v7475
  %v7520 = vunpack.c.l.b16 %v7476
  %v7521 = vunpack.c.l.b16 %v7477
  %v7522 = vunpack.c.l.b16 %v7478
  %v7523 = vunpack.c.l.b16 %v7479
  %v7524 = vunpack.c.l.b16 %v7480
  %v7525 = vunpack.c.l.b16 %v7481
  %v7526 = vunpack.c.l.b16 %v7482
  %v7527 = vunpack.c.l.b16 %v7483
  %v7528 = vunpack.c.l.b16 %v7484
  %v7529 = vunpack.c.l.b16 %v7485
  %v7530 = vunpack.c.l.b16 %v7486
  %v7531 = vunpack.c.l.b16 %v7487
  %v7532 = vpack.c.b16 %v7511, %v7510
  %v7533 = vpack.c.b16 %v7513, %v7512
  %v7534 = vpack.c.b16 %v7515, %v7514
  %v7535 = vpack.c.b16 %v7517, %v7516
  %v7536 = vpack.c.b16 %v7519, %v7518
  %v7537 = vpack.c.b16 %v7521, %v7520
  %v7538 = vpack.c.b16 %v7523, %v7522
  %v7539 = vpack.c.b16 %v7525, %v7524
  %v7540 = vpack.c.b16 %v7527, %v7526
  %v7541 = vpack.c.b16 %v7529, %v7528
  %v7542 = vpack.c.b16 %v7531, %v7530
  %v7554 = vsel %vm2545, %v7465, 0
  %v7557 = vand.u32 %v7542, %v2552
  %7559 = vmatprep.subr.bf16.mxu0 0
  %7560 = vmatpush1.bf16.msra.mxu0 %v7539
  %7561 = vmatprep.subr.bf16.mxu0 0
  %7562 = vmatpush1.bf16.msra.mxu0 %v7538
  %7563 = vmatprep.subr.bf16.mxu0 0
  %7564 = vmatpush1.bf16.msra.mxu0 %v7537
  %7565 = vmatprep.subr.bf16.mxu0 0
  %7566 = vmatpush1.bf16.msra.mxu0 %v7536
  %7567 = vmatprep.subr.bf16.mxu0 0
  %7568 = vmatpush1.bf16.msra.mxu0 %v7535
  %7569 = vmatprep.subr.bf16.mxu0 0
  %7570 = vmatpush1.bf16.msra.mxu0 %v7534
  %7571 = vmatprep.subr.bf16.mxu0 0
  %7572 = vmatpush1.bf16.msra.mxu0 %v7533
  %7573 = vmatprep.subr.bf16.mxu0 0
  %7574 = vmatpush1.bf16.msra.mxu0 %v7532
  %7575 = vmatprep.subr.bf16.mxu0 0
  %7576 = vmatpush2.bf16.msra.mxu0 0
  %7577 = vmatprep.subr.bf16.mxu0 0
  %7578 = vmatpush2.bf16.msra.mxu0 0
  %7579 = vmatprep.subr.bf16.mxu0 0
  %7580 = vmatpush2.bf16.msra.mxu0 0
  %7581 = vmatprep.subr.bf16.mxu0 0
  %7582 = vmatpush2.bf16.msra.mxu0 0
  %7583 = vmatprep.subr.bf16.mxu0 0
  %7584 = vmatpush2.bf16.msra.mxu0 0
  %7585 = vmatprep.subr.bf16.mxu0 0
  %7586 = vmatpush2.bf16.msra.mxu0 %v7557
  %7587 = vmatprep.subr.bf16.mxu0 0
  %7588 = vmatpush2.bf16.msra.mxu0 %v7541
  %7589 = vmatprep.subr.bf16.mxu0 0
  %7590 = vmatpush2.bf16.msra.mxu0 %v7540
  %7591 = vmatprep.mubr.bf16.mxu0 %v7554
  %7592 = vmatmul.mubr.bf16.gmra.mxu0 %v7464
  %v7593 = vpop.f32.mrf.mxu0
  %v7594 = vadd.f32 0.0, %v7593
  %v7595 = vpop.f32.mrf.mxu0
  %v7596 = vpop.f32.mrf.mxu0
  %v7597 = vpop.f32.mrf.mxu0
  %7598 = vdwg.mxu0
  %v7599 = vadd.f32 %v7463, %v7594
  %v7600 = vpack.c.bf16 %v6364, %v6364
  %v7601 = vpack.c.bf16 %v6365, %v6365
  %v7602 = vld [vmem:[%s3668] sm:$0xf]
  %v7603 = vld [vmem:[%s3668 + $0x4] sm:$0xf]
  %v7604 = vld [vmem:[%s3668 + $0x8] sm:$0xf]
  %v7605 = vld [vmem:[%s3668 + $0xc] sm:$0xf]
  %v7606 = vld [vmem:[%s3668 + $0x10] sm:$0xf]
  %v7607 = vld [vmem:[%s3668 + $0x14] sm:$0xf]
  %v7608 = vld [vmem:[%s3668 + $0x18] sm:$0xf]
  %v7609 = vld [vmem:[%s3668 + $0x1c] sm:$0xf]
  %v7610 = vld [vmem:[%s3668 + $0x20] sm:$0xf]
  %v7611 = vld [vmem:[%s3668 + $0x24] sm:$0xf]
  %v7612 = vld [vmem:[%s3668 + $0x28] sm:$0xf]
  %v7613 = vld [vmem:[%s3668 + $0x2c] sm:$0xf]
  %v7614 = vld [vmem:[%s3668 + $0x30] sm:$0xf]
  %v7615 = vld [vmem:[%s3668 + $0x34] sm:$0xf]
  %v7616 = vld [vmem:[%s3668 + $0x38] sm:$0xf]
  %v7617 = vld [vmem:[%s3668 + $0x3c] sm:$0xf]
  %v7618 = vld [vmem:[%s3668 + $0x40] sm:$0xf]
  %v7619 = vld [vmem:[%s3668 + $0x44] sm:$0xf]
  %v7620 = vld [vmem:[%s3668 + $0x48] sm:$0xf]
  %v7621 = vld [vmem:[%s3668 + $0x4c] sm:$0xf]
  %v7622 = vld [vmem:[%s3668 + $0x50] sm:$0xf]
  %v7623 = vld [vmem:[%s3668 + $0x54] sm:$0xf]
  %v7646 = vunpack.c.l.b16 %v7602
  %v7647 = vunpack.c.l.b16 %v7603
  %v7648 = vunpack.c.l.b16 %v7604
  %v7649 = vunpack.c.l.b16 %v7605
  %v7650 = vunpack.c.l.b16 %v7606
  %v7651 = vunpack.c.l.b16 %v7607
  %v7652 = vunpack.c.l.b16 %v7608
  %v7653 = vunpack.c.l.b16 %v7609
  %v7654 = vunpack.c.l.b16 %v7610
  %v7655 = vunpack.c.l.b16 %v7611
  %v7656 = vunpack.c.l.b16 %v7612
  %v7657 = vunpack.c.l.b16 %v7613
  %v7658 = vunpack.c.l.b16 %v7614
  %v7659 = vunpack.c.l.b16 %v7615
  %v7660 = vunpack.c.l.b16 %v7616
  %v7661 = vunpack.c.l.b16 %v7617
  %v7662 = vunpack.c.l.b16 %v7618
  %v7663 = vunpack.c.l.b16 %v7619
  %v7664 = vunpack.c.l.b16 %v7620
  %v7665 = vunpack.c.l.b16 %v7621
  %v7666 = vunpack.c.l.b16 %v7622
  %v7667 = vunpack.c.l.b16 %v7623
  %v7668 = vpack.c.b16 %v7647, %v7646
  %v7669 = vpack.c.b16 %v7649, %v7648
  %v7670 = vpack.c.b16 %v7651, %v7650
  %v7671 = vpack.c.b16 %v7653, %v7652
  %v7672 = vpack.c.b16 %v7655, %v7654
  %v7673 = vpack.c.b16 %v7657, %v7656
  %v7674 = vpack.c.b16 %v7659, %v7658
  %v7675 = vpack.c.b16 %v7661, %v7660
  %v7676 = vpack.c.b16 %v7663, %v7662
  %v7677 = vpack.c.b16 %v7665, %v7664
  %v7678 = vpack.c.b16 %v7667, %v7666
  %v7690 = vsel %vm2545, %v7601, 0
  %v7693 = vand.u32 %v7678, %v2552
  %7695 = vmatprep.subr.bf16.mxu0 0
  %7696 = vmatpush1.bf16.msra.mxu0 %v7675
  %7697 = vmatprep.subr.bf16.mxu0 0
  %7698 = vmatpush1.bf16.msra.mxu0 %v7674
  %7699 = vmatprep.subr.bf16.mxu0 0
  %7700 = vmatpush1.bf16.msra.mxu0 %v7673
  %7701 = vmatprep.subr.bf16.mxu0 0
  %7702 = vmatpush1.bf16.msra.mxu0 %v7672
  %7703 = vmatprep.subr.bf16.mxu0 0
  %7704 = vmatpush1.bf16.msra.mxu0 %v7671
  %7705 = vmatprep.subr.bf16.mxu0 0
  %7706 = vmatpush1.bf16.msra.mxu0 %v7670
  %7707 = vmatprep.subr.bf16.mxu0 0
  %7708 = vmatpush1.bf16.msra.mxu0 %v7669
  %7709 = vmatprep.subr.bf16.mxu0 0
  %7710 = vmatpush1.bf16.msra.mxu0 %v7668
  %7711 = vmatprep.subr.bf16.mxu0 0
  %7712 = vmatpush2.bf16.msra.mxu0 0
  %7713 = vmatprep.subr.bf16.mxu0 0
  %7714 = vmatpush2.bf16.msra.mxu0 0
  %7715 = vmatprep.subr.bf16.mxu0 0
  %7716 = vmatpush2.bf16.msra.mxu0 0
  %7717 = vmatprep.subr.bf16.mxu0 0
  %7718 = vmatpush2.bf16.msra.mxu0 0
  %7719 = vmatprep.subr.bf16.mxu0 0
  %7720 = vmatpush2.bf16.msra.mxu0 0
  %7721 = vmatprep.subr.bf16.mxu0 0
  %7722 = vmatpush2.bf16.msra.mxu0 %v7693
  %7723 = vmatprep.subr.bf16.mxu0 0
  %7724 = vmatpush2.bf16.msra.mxu0 %v7677
  %7725 = vmatprep.subr.bf16.mxu0 0
  %7726 = vmatpush2.bf16.msra.mxu0 %v7676
  %7727 = vmatprep.mubr.bf16.mxu0 %v7690
  %7728 = vmatmul.mubr.bf16.gmra.mxu0 %v7600
  %v7729 = vpop.f32.mrf.mxu0
  %v7730 = vadd.f32 0.0, %v7729
  %v7731 = vpop.f32.mrf.mxu0
  %v7732 = vpop.f32.mrf.mxu0
  %v7733 = vpop.f32.mrf.mxu0
  %7734 = vdwg.mxu0
  %v7735 = vadd.f32 %v7599, %v7730
  %v7736 = vpack.c.bf16 %v6366, %v6366
  %v7737 = vpack.c.bf16 %v6367, %v6367
  %v7738 = vld [vmem:[%s3805] sm:$0xf]
  %v7739 = vld [vmem:[%s3805 + $0x4] sm:$0xf]
  %v7740 = vld [vmem:[%s3805 + $0x8] sm:$0xf]
  %v7741 = vld [vmem:[%s3805 + $0xc] sm:$0xf]
  %v7742 = vld [vmem:[%s3805 + $0x10] sm:$0xf]
  %v7743 = vld [vmem:[%s3805 + $0x14] sm:$0xf]
  %v7744 = vld [vmem:[%s3805 + $0x18] sm:$0xf]
  %v7745 = vld [vmem:[%s3805 + $0x1c] sm:$0xf]
  %v7746 = vld [vmem:[%s3805 + $0x20] sm:$0xf]
  %v7747 = vld [vmem:[%s3805 + $0x24] sm:$0xf]
  %v7748 = vld [vmem:[%s3805 + $0x28] sm:$0xf]
  %v7749 = vld [vmem:[%s3805 + $0x2c] sm:$0xf]
  %v7750 = vld [vmem:[%s3805 + $0x30] sm:$0xf]
  %v7751 = vld [vmem:[%s3805 + $0x34] sm:$0xf]
  %v7752 = vld [vmem:[%s3805 + $0x38] sm:$0xf]
  %v7753 = vld [vmem:[%s3805 + $0x3c] sm:$0xf]
  %v7754 = vld [vmem:[%s3805 + $0x40] sm:$0xf]
  %v7755 = vld [vmem:[%s3805 + $0x44] sm:$0xf]
  %v7756 = vld [vmem:[%s3805 + $0x48] sm:$0xf]
  %v7757 = vld [vmem:[%s3805 + $0x4c] sm:$0xf]
  %v7758 = vld [vmem:[%s3805 + $0x50] sm:$0xf]
  %v7759 = vld [vmem:[%s3805 + $0x54] sm:$0xf]
  %v7782 = vunpack.c.l.b16 %v7738
  %v7783 = vunpack.c.l.b16 %v7739
  %v7784 = vunpack.c.l.b16 %v7740
  %v7785 = vunpack.c.l.b16 %v7741
  %v7786 = vunpack.c.l.b16 %v7742
  %v7787 = vunpack.c.l.b16 %v7743
  %v7788 = vunpack.c.l.b16 %v7744
  %v7789 = vunpack.c.l.b16 %v7745
  %v7790 = vunpack.c.l.b16 %v7746
  %v7791 = vunpack.c.l.b16 %v7747
  %v7792 = vunpack.c.l.b16 %v7748
  %v7793 = vunpack.c.l.b16 %v7749
  %v7794 = vunpack.c.l.b16 %v7750
  %v7795 = vunpack.c.l.b16 %v7751
  %v7796 = vunpack.c.l.b16 %v7752
  %v7797 = vunpack.c.l.b16 %v7753
  %v7798 = vunpack.c.l.b16 %v7754
  %v7799 = vunpack.c.l.b16 %v7755
  %v7800 = vunpack.c.l.b16 %v7756
  %v7801 = vunpack.c.l.b16 %v7757
  %v7802 = vunpack.c.l.b16 %v7758
  %v7803 = vunpack.c.l.b16 %v7759
  %v7804 = vpack.c.b16 %v7783, %v7782
  %v7805 = vpack.c.b16 %v7785, %v7784
  %v7806 = vpack.c.b16 %v7787, %v7786
  %v7807 = vpack.c.b16 %v7789, %v7788
  %v7808 = vpack.c.b16 %v7791, %v7790
  %v7809 = vpack.c.b16 %v7793, %v7792
  %v7810 = vpack.c.b16 %v7795, %v7794
  %v7811 = vpack.c.b16 %v7797, %v7796
  %v7812 = vpack.c.b16 %v7799, %v7798
  %v7813 = vpack.c.b16 %v7801, %v7800
  %v7814 = vpack.c.b16 %v7803, %v7802
  %v7826 = vsel %vm2545, %v7737, 0
  %v7829 = vand.u32 %v7814, %v2552
  %7831 = vmatprep.subr.bf16.mxu0 0
  %7832 = vmatpush1.bf16.msra.mxu0 %v7811
  %7833 = vmatprep.subr.bf16.mxu0 0
  %7834 = vmatpush1.bf16.msra.mxu0 %v7810
  %7835 = vmatprep.subr.bf16.mxu0 0
  %7836 = vmatpush1.bf16.msra.mxu0 %v7809
  %7837 = vmatprep.subr.bf16.mxu0 0
  %7838 = vmatpush1.bf16.msra.mxu0 %v7808
  %7839 = vmatprep.subr.bf16.mxu0 0
  %7840 = vmatpush1.bf16.msra.mxu0 %v7807
  %7841 = vmatprep.subr.bf16.mxu0 0
  %7842 = vmatpush1.bf16.msra.mxu0 %v7806
  %7843 = vmatprep.subr.bf16.mxu0 0
  %7844 = vmatpush1.bf16.msra.mxu0 %v7805
  %7845 = vmatprep.subr.bf16.mxu0 0
  %7846 = vmatpush1.bf16.msra.mxu0 %v7804
  %7847 = vmatprep.subr.bf16.mxu0 0
  %7848 = vmatpush2.bf16.msra.mxu0 0
  %7849 = vmatprep.subr.bf16.mxu0 0
  %7850 = vmatpush2.bf16.msra.mxu0 0
  %7851 = vmatprep.subr.bf16.mxu0 0
  %7852 = vmatpush2.bf16.msra.mxu0 0
  %7853 = vmatprep.subr.bf16.mxu0 0
  %7854 = vmatpush2.bf16.msra.mxu0 0
  %7855 = vmatprep.subr.bf16.mxu0 0
  %7856 = vmatpush2.bf16.msra.mxu0 0
  %7857 = vmatprep.subr.bf16.mxu0 0
  %7858 = vmatpush2.bf16.msra.mxu0 %v7829
  %7859 = vmatprep.subr.bf16.mxu0 0
  %7860 = vmatpush2.bf16.msra.mxu0 %v7813
  %7861 = vmatprep.subr.bf16.mxu0 0
  %7862 = vmatpush2.bf16.msra.mxu0 %v7812
  %7863 = vmatprep.mubr.bf16.mxu0 %v7826
  %7864 = vmatmul.mubr.bf16.gmra.mxu0 %v7736
  %v7865 = vpop.f32.mrf.mxu0
  %v7866 = vadd.f32 0.0, %v7865
  %v7867 = vpop.f32.mrf.mxu0
  %v7868 = vpop.f32.mrf.mxu0
  %v7869 = vpop.f32.mrf.mxu0
  %7870 = vdwg.mxu0
  %v7871 = vadd.f32 %v7735, %v7866
  %v7872 = vpack.c.bf16 %v6368, %v6368
  %v7873 = vpack.c.bf16 %v6369, %v6369
  %v7874 = vld [vmem:[%s3942] sm:$0xf]
  %v7875 = vld [vmem:[%s3942 + $0x4] sm:$0xf]
  %v7876 = vld [vmem:[%s3942 + $0x8] sm:$0xf]
  %v7877 = vld [vmem:[%s3942 + $0xc] sm:$0xf]
  %v7878 = vld [vmem:[%s3942 + $0x10] sm:$0xf]
  %v7879 = vld [vmem:[%s3942 + $0x14] sm:$0xf]
  %v7880 = vld [vmem:[%s3942 + $0x18] sm:$0xf]
  %v7881 = vld [vmem:[%s3942 + $0x1c] sm:$0xf]
  %v7882 = vld [vmem:[%s3942 + $0x20] sm:$0xf]
  %v7883 = vld [vmem:[%s3942 + $0x24] sm:$0xf]
  %v7884 = vld [vmem:[%s3942 + $0x28] sm:$0xf]
  %v7885 = vld [vmem:[%s3942 + $0x2c] sm:$0xf]
  %v7886 = vld [vmem:[%s3942 + $0x30] sm:$0xf]
  %v7887 = vld [vmem:[%s3942 + $0x34] sm:$0xf]
  %v7888 = vld [vmem:[%s3942 + $0x38] sm:$0xf]
  %v7889 = vld [vmem:[%s3942 + $0x3c] sm:$0xf]
  %v7890 = vld [vmem:[%s3942 + $0x40] sm:$0xf]
  %v7891 = vld [vmem:[%s3942 + $0x44] sm:$0xf]
  %v7892 = vld [vmem:[%s3942 + $0x48] sm:$0xf]
  %v7893 = vld [vmem:[%s3942 + $0x4c] sm:$0xf]
  %v7894 = vld [vmem:[%s3942 + $0x50] sm:$0xf]
  %v7895 = vld [vmem:[%s3942 + $0x54] sm:$0xf]
  %v7918 = vunpack.c.l.b16 %v7874
  %v7919 = vunpack.c.l.b16 %v7875
  %v7920 = vunpack.c.l.b16 %v7876
  %v7921 = vunpack.c.l.b16 %v7877
  %v7922 = vunpack.c.l.b16 %v7878
  %v7923 = vunpack.c.l.b16 %v7879
  %v7924 = vunpack.c.l.b16 %v7880
  %v7925 = vunpack.c.l.b16 %v7881
  %v7926 = vunpack.c.l.b16 %v7882
  %v7927 = vunpack.c.l.b16 %v7883
  %v7928 = vunpack.c.l.b16 %v7884
  %v7929 = vunpack.c.l.b16 %v7885
  %v7930 = vunpack.c.l.b16 %v7886
  %v7931 = vunpack.c.l.b16 %v7887
  %v7932 = vunpack.c.l.b16 %v7888
  %v7933 = vunpack.c.l.b16 %v7889
  %v7934 = vunpack.c.l.b16 %v7890
  %v7935 = vunpack.c.l.b16 %v7891
  %v7936 = vunpack.c.l.b16 %v7892
  %v7937 = vunpack.c.l.b16 %v7893
  %v7938 = vunpack.c.l.b16 %v7894
  %v7939 = vunpack.c.l.b16 %v7895
  %v7940 = vpack.c.b16 %v7919, %v7918
  %v7941 = vpack.c.b16 %v7921, %v7920
  %v7942 = vpack.c.b16 %v7923, %v7922
  %v7943 = vpack.c.b16 %v7925, %v7924
  %v7944 = vpack.c.b16 %v7927, %v7926
  %v7945 = vpack.c.b16 %v7929, %v7928
  %v7946 = vpack.c.b16 %v7931, %v7930
  %v7947 = vpack.c.b16 %v7933, %v7932
  %v7948 = vpack.c.b16 %v7935, %v7934
  %v7949 = vpack.c.b16 %v7937, %v7936
  %v7950 = vpack.c.b16 %v7939, %v7938
  %v7962 = vsel %vm2545, %v7873, 0
  %v7965 = vand.u32 %v7950, %v2552
  %7967 = vmatprep.subr.bf16.mxu0 0
  %7968 = vmatpush1.bf16.msra.mxu0 %v7947
  %7969 = vmatprep.subr.bf16.mxu0 0
  %7970 = vmatpush1.bf16.msra.mxu0 %v7946
  %7971 = vmatprep.subr.bf16.mxu0 0
  %7972 = vmatpush1.bf16.msra.mxu0 %v7945
  %7973 = vmatprep.subr.bf16.mxu0 0
  %7974 = vmatpush1.bf16.msra.mxu0 %v7944
  %7975 = vmatprep.subr.bf16.mxu0 0
  %7976 = vmatpush1.bf16.msra.mxu0 %v7943
  %7977 = vmatprep.subr.bf16.mxu0 0
  %7978 = vmatpush1.bf16.msra.mxu0 %v7942
  %7979 = vmatprep.subr.bf16.mxu0 0
  %7980 = vmatpush1.bf16.msra.mxu0 %v7941
  %7981 = vmatprep.subr.bf16.mxu0 0
  %7982 = vmatpush1.bf16.msra.mxu0 %v7940
  %7983 = vmatprep.subr.bf16.mxu0 0
  %7984 = vmatpush2.bf16.msra.mxu0 0
  %7985 = vmatprep.subr.bf16.mxu0 0
  %7986 = vmatpush2.bf16.msra.mxu0 0
  %7987 = vmatprep.subr.bf16.mxu0 0
  %7988 = vmatpush2.bf16.msra.mxu0 0
  %7989 = vmatprep.subr.bf16.mxu0 0
  %7990 = vmatpush2.bf16.msra.mxu0 0
  %7991 = vmatprep.subr.bf16.mxu0 0
  %7992 = vmatpush2.bf16.msra.mxu0 0
  %7993 = vmatprep.subr.bf16.mxu0 0
  %7994 = vmatpush2.bf16.msra.mxu0 %v7965
  %7995 = vmatprep.subr.bf16.mxu0 0
  %7996 = vmatpush2.bf16.msra.mxu0 %v7949
  %7997 = vmatprep.subr.bf16.mxu0 0
  %7998 = vmatpush2.bf16.msra.mxu0 %v7948
  %7999 = vmatprep.mubr.bf16.mxu0 %v7962
  %8000 = vmatmul.mubr.bf16.gmra.mxu0 %v7872
  %v8001 = vpop.f32.mrf.mxu0
  %v8002 = vadd.f32 0.0, %v8001
  %v8003 = vpop.f32.mrf.mxu0
  %v8004 = vpop.f32.mrf.mxu0
  %v8005 = vpop.f32.mrf.mxu0
  %8006 = vdwg.mxu0
  %v8007 = vadd.f32 %v7871, %v8002
  %v8008 = vpack.c.bf16 %v6370, %v6370
  %v8009 = vpack.c.bf16 %v6371, %v6371
  %v8010 = vld [vmem:[%s4079] sm:$0xf]
  %v8011 = vld [vmem:[%s4079 + $0x4] sm:$0xf]
  %v8012 = vld [vmem:[%s4079 + $0x8] sm:$0xf]
  %v8013 = vld [vmem:[%s4079 + $0xc] sm:$0xf]
  %v8014 = vld [vmem:[%s4079 + $0x10] sm:$0xf]
  %v8015 = vld [vmem:[%s4079 + $0x14] sm:$0xf]
  %v8016 = vld [vmem:[%s4079 + $0x18] sm:$0xf]
  %v8017 = vld [vmem:[%s4079 + $0x1c] sm:$0xf]
  %v8018 = vld [vmem:[%s4079 + $0x20] sm:$0xf]
  %v8019 = vld [vmem:[%s4079 + $0x24] sm:$0xf]
  %v8020 = vld [vmem:[%s4079 + $0x28] sm:$0xf]
  %v8021 = vld [vmem:[%s4079 + $0x2c] sm:$0xf]
  %v8022 = vld [vmem:[%s4079 + $0x30] sm:$0xf]
  %v8023 = vld [vmem:[%s4079 + $0x34] sm:$0xf]
  %v8024 = vld [vmem:[%s4079 + $0x38] sm:$0xf]
  %v8025 = vld [vmem:[%s4079 + $0x3c] sm:$0xf]
  %v8026 = vld [vmem:[%s4079 + $0x40] sm:$0xf]
  %v8027 = vld [vmem:[%s4079 + $0x44] sm:$0xf]
  %v8028 = vld [vmem:[%s4079 + $0x48] sm:$0xf]
  %v8029 = vld [vmem:[%s4079 + $0x4c] sm:$0xf]
  %v8030 = vld [vmem:[%s4079 + $0x50] sm:$0xf]
  %v8031 = vld [vmem:[%s4079 + $0x54] sm:$0xf]
  %v8054 = vunpack.c.l.b16 %v8010
  %v8055 = vunpack.c.l.b16 %v8011
  %v8056 = vunpack.c.l.b16 %v8012
  %v8057 = vunpack.c.l.b16 %v8013
  %v8058 = vunpack.c.l.b16 %v8014
  %v8059 = vunpack.c.l.b16 %v8015
  %v8060 = vunpack.c.l.b16 %v8016
  %v8061 = vunpack.c.l.b16 %v8017
  %v8062 = vunpack.c.l.b16 %v8018
  %v8063 = vunpack.c.l.b16 %v8019
  %v8064 = vunpack.c.l.b16 %v8020
  %v8065 = vunpack.c.l.b16 %v8021
  %v8066 = vunpack.c.l.b16 %v8022
  %v8067 = vunpack.c.l.b16 %v8023
  %v8068 = vunpack.c.l.b16 %v8024
  %v8069 = vunpack.c.l.b16 %v8025
  %v8070 = vunpack.c.l.b16 %v8026
  %v8071 = vunpack.c.l.b16 %v8027
  %v8072 = vunpack.c.l.b16 %v8028
  %v8073 = vunpack.c.l.b16 %v8029
  %v8074 = vunpack.c.l.b16 %v8030
  %v8075 = vunpack.c.l.b16 %v8031
  %v8076 = vpack.c.b16 %v8055, %v8054
  %v8077 = vpack.c.b16 %v8057, %v8056
  %v8078 = vpack.c.b16 %v8059, %v8058
  %v8079 = vpack.c.b16 %v8061, %v8060
  %v8080 = vpack.c.b16 %v8063, %v8062
  %v8081 = vpack.c.b16 %v8065, %v8064
  %v8082 = vpack.c.b16 %v8067, %v8066
  %v8083 = vpack.c.b16 %v8069, %v8068
  %v8084 = vpack.c.b16 %v8071, %v8070
  %v8085 = vpack.c.b16 %v8073, %v8072
  %v8086 = vpack.c.b16 %v8075, %v8074
  %v8098 = vsel %vm2545, %v8009, 0
  %v8101 = vand.u32 %v8086, %v2552
  %8103 = vmatprep.subr.bf16.mxu0 0
  %8104 = vmatpush1.bf16.msra.mxu0 %v8083
  %8105 = vmatprep.subr.bf16.mxu0 0
  %8106 = vmatpush1.bf16.msra.mxu0 %v8082
  %8107 = vmatprep.subr.bf16.mxu0 0
  %8108 = vmatpush1.bf16.msra.mxu0 %v8081
  %8109 = vmatprep.subr.bf16.mxu0 0
  %8110 = vmatpush1.bf16.msra.mxu0 %v8080
  %8111 = vmatprep.subr.bf16.mxu0 0
  %8112 = vmatpush1.bf16.msra.mxu0 %v8079
  %8113 = vmatprep.subr.bf16.mxu0 0
  %8114 = vmatpush1.bf16.msra.mxu0 %v8078
  %8115 = vmatprep.subr.bf16.mxu0 0
  %8116 = vmatpush1.bf16.msra.mxu0 %v8077
  %8117 = vmatprep.subr.bf16.mxu0 0
  %8118 = vmatpush1.bf16.msra.mxu0 %v8076
  %8119 = vmatprep.subr.bf16.mxu0 0
  %8120 = vmatpush2.bf16.msra.mxu0 0
  %8121 = vmatprep.subr.bf16.mxu0 0
  %8122 = vmatpush2.bf16.msra.mxu0 0
  %8123 = vmatprep.subr.bf16.mxu0 0
  %8124 = vmatpush2.bf16.msra.mxu0 0
  %8125 = vmatprep.subr.bf16.mxu0 0
  %8126 = vmatpush2.bf16.msra.mxu0 0
  %8127 = vmatprep.subr.bf16.mxu0 0
  %8128 = vmatpush2.bf16.msra.mxu0 0
  %8129 = vmatprep.subr.bf16.mxu0 0
  %8130 = vmatpush2.bf16.msra.mxu0 %v8101
  %8131 = vmatprep.subr.bf16.mxu0 0
  %8132 = vmatpush2.bf16.msra.mxu0 %v8085
  %8133 = vmatprep.subr.bf16.mxu0 0
  %8134 = vmatpush2.bf16.msra.mxu0 %v8084
  %8135 = vmatprep.mubr.bf16.mxu0 %v8098
  %8136 = vmatmul.mubr.bf16.gmra.mxu0 %v8008
  %v8137 = vpop.f32.mrf.mxu0
  %v8138 = vadd.f32 0.0, %v8137
  %v8139 = vpop.f32.mrf.mxu0
  %v8140 = vpop.f32.mrf.mxu0
  %v8141 = vpop.f32.mrf.mxu0
  %8142 = vdwg.mxu0
  %v8143 = vadd.f32 %v8007, %v8138
  %v8144 = vpack.c.bf16 %v6372, %v6372
  %v8145 = vpack.c.bf16 %v6373, %v6373
  %v8146 = vld [vmem:[%s4216] sm:$0xf]
  %v8147 = vld [vmem:[%s4216 + $0x4] sm:$0xf]
  %v8148 = vld [vmem:[%s4216 + $0x8] sm:$0xf]
  %v8149 = vld [vmem:[%s4216 + $0xc] sm:$0xf]
  %v8150 = vld [vmem:[%s4216 + $0x10] sm:$0xf]
  %v8151 = vld [vmem:[%s4216 + $0x14] sm:$0xf]
  %v8152 = vld [vmem:[%s4216 + $0x18] sm:$0xf]
  %v8153 = vld [vmem:[%s4216 + $0x1c] sm:$0xf]
  %v8154 = vld [vmem:[%s4216 + $0x20] sm:$0xf]
  %v8155 = vld [vmem:[%s4216 + $0x24] sm:$0xf]
  %v8156 = vld [vmem:[%s4216 + $0x28] sm:$0xf]
  %v8157 = vld [vmem:[%s4216 + $0x2c] sm:$0xf]
  %v8158 = vld [vmem:[%s4216 + $0x30] sm:$0xf]
  %v8159 = vld [vmem:[%s4216 + $0x34] sm:$0xf]
  %v8160 = vld [vmem:[%s4216 + $0x38] sm:$0xf]
  %v8161 = vld [vmem:[%s4216 + $0x3c] sm:$0xf]
  %v8162 = vld [vmem:[%s4216 + $0x40] sm:$0xf]
  %v8163 = vld [vmem:[%s4216 + $0x44] sm:$0xf]
  %v8164 = vld [vmem:[%s4216 + $0x48] sm:$0xf]
  %v8165 = vld [vmem:[%s4216 + $0x4c] sm:$0xf]
  %v8166 = vld [vmem:[%s4216 + $0x50] sm:$0xf]
  %v8167 = vld [vmem:[%s4216 + $0x54] sm:$0xf]
  %v8190 = vunpack.c.l.b16 %v8146
  %v8191 = vunpack.c.l.b16 %v8147
  %v8192 = vunpack.c.l.b16 %v8148
  %v8193 = vunpack.c.l.b16 %v8149
  %v8194 = vunpack.c.l.b16 %v8150
  %v8195 = vunpack.c.l.b16 %v8151
  %v8196 = vunpack.c.l.b16 %v8152
  %v8197 = vunpack.c.l.b16 %v8153
  %v8198 = vunpack.c.l.b16 %v8154
  %v8199 = vunpack.c.l.b16 %v8155
  %v8200 = vunpack.c.l.b16 %v8156
  %v8201 = vunpack.c.l.b16 %v8157
  %v8202 = vunpack.c.l.b16 %v8158
  %v8203 = vunpack.c.l.b16 %v8159
  %v8204 = vunpack.c.l.b16 %v8160
  %v8205 = vunpack.c.l.b16 %v8161
  %v8206 = vunpack.c.l.b16 %v8162
  %v8207 = vunpack.c.l.b16 %v8163
  %v8208 = vunpack.c.l.b16 %v8164
  %v8209 = vunpack.c.l.b16 %v8165
  %v8210 = vunpack.c.l.b16 %v8166
  %v8211 = vunpack.c.l.b16 %v8167
  %v8212 = vpack.c.b16 %v8191, %v8190
  %v8213 = vpack.c.b16 %v8193, %v8192
  %v8214 = vpack.c.b16 %v8195, %v8194
  %v8215 = vpack.c.b16 %v8197, %v8196
  %v8216 = vpack.c.b16 %v8199, %v8198
  %v8217 = vpack.c.b16 %v8201, %v8200
  %v8218 = vpack.c.b16 %v8203, %v8202
  %v8219 = vpack.c.b16 %v8205, %v8204
  %v8220 = vpack.c.b16 %v8207, %v8206
  %v8221 = vpack.c.b16 %v8209, %v8208
  %v8222 = vpack.c.b16 %v8211, %v8210
  %v8234 = vsel %vm2545, %v8145, 0
  %v8237 = vand.u32 %v8222, %v2552
  %8239 = vmatprep.subr.bf16.mxu0 0
  %8240 = vmatpush1.bf16.msra.mxu0 %v8219
  %8241 = vmatprep.subr.bf16.mxu0 0
  %8242 = vmatpush1.bf16.msra.mxu0 %v8218
  %8243 = vmatprep.subr.bf16.mxu0 0
  %8244 = vmatpush1.bf16.msra.mxu0 %v8217
  %8245 = vmatprep.subr.bf16.mxu0 0
  %8246 = vmatpush1.bf16.msra.mxu0 %v8216
  %8247 = vmatprep.subr.bf16.mxu0 0
  %8248 = vmatpush1.bf16.msra.mxu0 %v8215
  %8249 = vmatprep.subr.bf16.mxu0 0
  %8250 = vmatpush1.bf16.msra.mxu0 %v8214
  %8251 = vmatprep.subr.bf16.mxu0 0
  %8252 = vmatpush1.bf16.msra.mxu0 %v8213
  %8253 = vmatprep.subr.bf16.mxu0 0
  %8254 = vmatpush1.bf16.msra.mxu0 %v8212
  %8255 = vmatprep.subr.bf16.mxu0 0
  %8256 = vmatpush2.bf16.msra.mxu0 0
  %8257 = vmatprep.subr.bf16.mxu0 0
  %8258 = vmatpush2.bf16.msra.mxu0 0
  %8259 = vmatprep.subr.bf16.mxu0 0
  %8260 = vmatpush2.bf16.msra.mxu0 0
  %8261 = vmatprep.subr.bf16.mxu0 0
  %8262 = vmatpush2.bf16.msra.mxu0 0
  %8263 = vmatprep.subr.bf16.mxu0 0
  %8264 = vmatpush2.bf16.msra.mxu0 0
  %8265 = vmatprep.subr.bf16.mxu0 0
  %8266 = vmatpush2.bf16.msra.mxu0 %v8237
  %8267 = vmatprep.subr.bf16.mxu0 0
  %8268 = vmatpush2.bf16.msra.mxu0 %v8221
  %8269 = vmatprep.subr.bf16.mxu0 0
  %8270 = vmatpush2.bf16.msra.mxu0 %v8220
  %8271 = vmatprep.mubr.bf16.mxu0 %v8234
  %8272 = vmatmul.mubr.bf16.gmra.mxu0 %v8144
  %v8273 = vpop.f32.mrf.mxu0
  %v8274 = vadd.f32 0.0, %v8273
  %v8275 = vpop.f32.mrf.mxu0
  %v8276 = vpop.f32.mrf.mxu0
  %v8277 = vpop.f32.mrf.mxu0
  %8278 = vdwg.mxu0
  %v8279 = vadd.f32 %v8143, %v8274
  %v8280 = vpack.c.bf16 %v6374, %v6374
  %v8281 = vpack.c.bf16 %v6375, %v6375
  %v8282 = vld [vmem:[%s4353] sm:$0xf]
  %v8283 = vld [vmem:[%s4353 + $0x4] sm:$0xf]
  %v8284 = vld [vmem:[%s4353 + $0x8] sm:$0xf]
  %v8285 = vld [vmem:[%s4353 + $0xc] sm:$0xf]
  %v8286 = vld [vmem:[%s4353 + $0x10] sm:$0xf]
  %v8287 = vld [vmem:[%s4353 + $0x14] sm:$0xf]
  %v8288 = vld [vmem:[%s4353 + $0x18] sm:$0xf]
  %v8289 = vld [vmem:[%s4353 + $0x1c] sm:$0xf]
  %v8290 = vld [vmem:[%s4353 + $0x20] sm:$0xf]
  %v8291 = vld [vmem:[%s4353 + $0x24] sm:$0xf]
  %v8292 = vld [vmem:[%s4353 + $0x28] sm:$0xf]
  %v8293 = vld [vmem:[%s4353 + $0x2c] sm:$0xf]
  %v8294 = vld [vmem:[%s4353 + $0x30] sm:$0xf]
  %v8295 = vld [vmem:[%s4353 + $0x34] sm:$0xf]
  %v8296 = vld [vmem:[%s4353 + $0x38] sm:$0xf]
  %v8297 = vld [vmem:[%s4353 + $0x3c] sm:$0xf]
  %v8298 = vld [vmem:[%s4353 + $0x40] sm:$0xf]
  %v8299 = vld [vmem:[%s4353 + $0x44] sm:$0xf]
  %v8300 = vld [vmem:[%s4353 + $0x48] sm:$0xf]
  %v8301 = vld [vmem:[%s4353 + $0x4c] sm:$0xf]
  %v8302 = vld [vmem:[%s4353 + $0x50] sm:$0xf]
  %v8303 = vld [vmem:[%s4353 + $0x54] sm:$0xf]
  %v8326 = vunpack.c.l.b16 %v8282
  %v8327 = vunpack.c.l.b16 %v8283
  %v8328 = vunpack.c.l.b16 %v8284
  %v8329 = vunpack.c.l.b16 %v8285
  %v8330 = vunpack.c.l.b16 %v8286
  %v8331 = vunpack.c.l.b16 %v8287
  %v8332 = vunpack.c.l.b16 %v8288
  %v8333 = vunpack.c.l.b16 %v8289
  %v8334 = vunpack.c.l.b16 %v8290
  %v8335 = vunpack.c.l.b16 %v8291
  %v8336 = vunpack.c.l.b16 %v8292
  %v8337 = vunpack.c.l.b16 %v8293
  %v8338 = vunpack.c.l.b16 %v8294
  %v8339 = vunpack.c.l.b16 %v8295
  %v8340 = vunpack.c.l.b16 %v8296
  %v8341 = vunpack.c.l.b16 %v8297
  %v8342 = vunpack.c.l.b16 %v8298
  %v8343 = vunpack.c.l.b16 %v8299
  %v8344 = vunpack.c.l.b16 %v8300
  %v8345 = vunpack.c.l.b16 %v8301
  %v8346 = vunpack.c.l.b16 %v8302
  %v8347 = vunpack.c.l.b16 %v8303
  %v8348 = vpack.c.b16 %v8327, %v8326
  %v8349 = vpack.c.b16 %v8329, %v8328
  %v8350 = vpack.c.b16 %v8331, %v8330
  %v8351 = vpack.c.b16 %v8333, %v8332
  %v8352 = vpack.c.b16 %v8335, %v8334
  %v8353 = vpack.c.b16 %v8337, %v8336
  %v8354 = vpack.c.b16 %v8339, %v8338
  %v8355 = vpack.c.b16 %v8341, %v8340
  %v8356 = vpack.c.b16 %v8343, %v8342
  %v8357 = vpack.c.b16 %v8345, %v8344
  %v8358 = vpack.c.b16 %v8347, %v8346
  %v8370 = vsel %vm2545, %v8281, 0
  %v8373 = vand.u32 %v8358, %v2552
  %8375 = vmatprep.subr.bf16.mxu0 0
  %8376 = vmatpush1.bf16.msra.mxu0 %v8355
  %8377 = vmatprep.subr.bf16.mxu0 0
  %8378 = vmatpush1.bf16.msra.mxu0 %v8354
  %8379 = vmatprep.subr.bf16.mxu0 0
  %8380 = vmatpush1.bf16.msra.mxu0 %v8353
  %8381 = vmatprep.subr.bf16.mxu0 0
  %8382 = vmatpush1.bf16.msra.mxu0 %v8352
  %8383 = vmatprep.subr.bf16.mxu0 0
  %8384 = vmatpush1.bf16.msra.mxu0 %v8351
  %8385 = vmatprep.subr.bf16.mxu0 0
  %8386 = vmatpush1.bf16.msra.mxu0 %v8350
  %8387 = vmatprep.subr.bf16.mxu0 0
  %8388 = vmatpush1.bf16.msra.mxu0 %v8349
  %8389 = vmatprep.subr.bf16.mxu0 0
  %8390 = vmatpush1.bf16.msra.mxu0 %v8348
  %8391 = vmatprep.subr.bf16.mxu0 0
  %8392 = vmatpush2.bf16.msra.mxu0 0
  %8393 = vmatprep.subr.bf16.mxu0 0
  %8394 = vmatpush2.bf16.msra.mxu0 0
  %8395 = vmatprep.subr.bf16.mxu0 0
  %8396 = vmatpush2.bf16.msra.mxu0 0
  %8397 = vmatprep.subr.bf16.mxu0 0
  %8398 = vmatpush2.bf16.msra.mxu0 0
  %8399 = vmatprep.subr.bf16.mxu0 0
  %8400 = vmatpush2.bf16.msra.mxu0 0
  %8401 = vmatprep.subr.bf16.mxu0 0
  %8402 = vmatpush2.bf16.msra.mxu0 %v8373
  %8403 = vmatprep.subr.bf16.mxu0 0
  %8404 = vmatpush2.bf16.msra.mxu0 %v8357
  %8405 = vmatprep.subr.bf16.mxu0 0
  %8406 = vmatpush2.bf16.msra.mxu0 %v8356
  %8407 = vmatprep.mubr.bf16.mxu0 %v8370
  %8408 = vmatmul.mubr.bf16.gmra.mxu0 %v8280
  %v8409 = vpop.f32.mrf.mxu0
  %v8410 = vadd.f32 0.0, %v8409
  %v8411 = vpop.f32.mrf.mxu0
  %v8412 = vpop.f32.mrf.mxu0
  %v8413 = vpop.f32.mrf.mxu0
  %8414 = vdwg.mxu0
  %v8415 = vadd.f32 %v8279, %v8410
  %v8416 = vpack.c.bf16 %v6376, %v6376
  %v8417 = vpack.c.bf16 %v6377, %v6377
  %v8418 = vld [vmem:[%s4490] sm:$0xf]
  %v8419 = vld [vmem:[%s4490 + $0x4] sm:$0xf]
  %v8420 = vld [vmem:[%s4490 + $0x8] sm:$0xf]
  %v8421 = vld [vmem:[%s4490 + $0xc] sm:$0xf]
  %v8422 = vld [vmem:[%s4490 + $0x10] sm:$0xf]
  %v8423 = vld [vmem:[%s4490 + $0x14] sm:$0xf]
  %v8424 = vld [vmem:[%s4490 + $0x18] sm:$0xf]
  %v8425 = vld [vmem:[%s4490 + $0x1c] sm:$0xf]
  %v8426 = vld [vmem:[%s4490 + $0x20] sm:$0xf]
  %v8427 = vld [vmem:[%s4490 + $0x24] sm:$0xf]
  %v8428 = vld [vmem:[%s4490 + $0x28] sm:$0xf]
  %v8429 = vld [vmem:[%s4490 + $0x2c] sm:$0xf]
  %v8430 = vld [vmem:[%s4490 + $0x30] sm:$0xf]
  %v8431 = vld [vmem:[%s4490 + $0x34] sm:$0xf]
  %v8432 = vld [vmem:[%s4490 + $0x38] sm:$0xf]
  %v8433 = vld [vmem:[%s4490 + $0x3c] sm:$0xf]
  %v8434 = vld [vmem:[%s4490 + $0x40] sm:$0xf]
  %v8435 = vld [vmem:[%s4490 + $0x44] sm:$0xf]
  %v8436 = vld [vmem:[%s4490 + $0x48] sm:$0xf]
  %v8437 = vld [vmem:[%s4490 + $0x4c] sm:$0xf]
  %v8438 = vld [vmem:[%s4490 + $0x50] sm:$0xf]
  %v8439 = vld [vmem:[%s4490 + $0x54] sm:$0xf]
  %v8462 = vunpack.c.l.b16 %v8418
  %v8463 = vunpack.c.l.b16 %v8419
  %v8464 = vunpack.c.l.b16 %v8420
  %v8465 = vunpack.c.l.b16 %v8421
  %v8466 = vunpack.c.l.b16 %v8422
  %v8467 = vunpack.c.l.b16 %v8423
  %v8468 = vunpack.c.l.b16 %v8424
  %v8469 = vunpack.c.l.b16 %v8425
  %v8470 = vunpack.c.l.b16 %v8426
  %v8471 = vunpack.c.l.b16 %v8427
  %v8472 = vunpack.c.l.b16 %v8428
  %v8473 = vunpack.c.l.b16 %v8429
  %v8474 = vunpack.c.l.b16 %v8430
  %v8475 = vunpack.c.l.b16 %v8431
  %v8476 = vunpack.c.l.b16 %v8432
  %v8477 = vunpack.c.l.b16 %v8433
  %v8478 = vunpack.c.l.b16 %v8434
  %v8479 = vunpack.c.l.b16 %v8435
  %v8480 = vunpack.c.l.b16 %v8436
  %v8481 = vunpack.c.l.b16 %v8437
  %v8482 = vunpack.c.l.b16 %v8438
  %v8483 = vunpack.c.l.b16 %v8439
  %v8484 = vpack.c.b16 %v8463, %v8462
  %v8485 = vpack.c.b16 %v8465, %v8464
  %v8486 = vpack.c.b16 %v8467, %v8466
  %v8487 = vpack.c.b16 %v8469, %v8468
  %v8488 = vpack.c.b16 %v8471, %v8470
  %v8489 = vpack.c.b16 %v8473, %v8472
  %v8490 = vpack.c.b16 %v8475, %v8474
  %v8491 = vpack.c.b16 %v8477, %v8476
  %v8492 = vpack.c.b16 %v8479, %v8478
  %v8493 = vpack.c.b16 %v8481, %v8480
  %v8494 = vpack.c.b16 %v8483, %v8482
  %v8506 = vsel %vm2545, %v8417, 0
  %v8509 = vand.u32 %v8494, %v2552
  %8511 = vmatprep.subr.bf16.mxu0 0
  %8512 = vmatpush1.bf16.msra.mxu0 %v8491
  %8513 = vmatprep.subr.bf16.mxu0 0
  %8514 = vmatpush1.bf16.msra.mxu0 %v8490
  %8515 = vmatprep.subr.bf16.mxu0 0
  %8516 = vmatpush1.bf16.msra.mxu0 %v8489
  %8517 = vmatprep.subr.bf16.mxu0 0
  %8518 = vmatpush1.bf16.msra.mxu0 %v8488
  %8519 = vmatprep.subr.bf16.mxu0 0
  %8520 = vmatpush1.bf16.msra.mxu0 %v8487
  %8521 = vmatprep.subr.bf16.mxu0 0
  %8522 = vmatpush1.bf16.msra.mxu0 %v8486
  %8523 = vmatprep.subr.bf16.mxu0 0
  %8524 = vmatpush1.bf16.msra.mxu0 %v8485
  %8525 = vmatprep.subr.bf16.mxu0 0
  %8526 = vmatpush1.bf16.msra.mxu0 %v8484
  %8527 = vmatprep.subr.bf16.mxu0 0
  %8528 = vmatpush2.bf16.msra.mxu0 0
  %8529 = vmatprep.subr.bf16.mxu0 0
  %8530 = vmatpush2.bf16.msra.mxu0 0
  %8531 = vmatprep.subr.bf16.mxu0 0
  %8532 = vmatpush2.bf16.msra.mxu0 0
  %8533 = vmatprep.subr.bf16.mxu0 0
  %8534 = vmatpush2.bf16.msra.mxu0 0
  %8535 = vmatprep.subr.bf16.mxu0 0
  %8536 = vmatpush2.bf16.msra.mxu0 0
  %8537 = vmatprep.subr.bf16.mxu0 0
  %8538 = vmatpush2.bf16.msra.mxu0 %v8509
  %8539 = vmatprep.subr.bf16.mxu0 0
  %8540 = vmatpush2.bf16.msra.mxu0 %v8493
  %8541 = vmatprep.subr.bf16.mxu0 0
  %8542 = vmatpush2.bf16.msra.mxu0 %v8492
  %8543 = vmatprep.mubr.bf16.mxu0 %v8506
  %8544 = vmatmul.mubr.bf16.gmra.mxu0 %v8416
  %v8545 = vpop.f32.mrf.mxu0
  %v8546 = vadd.f32 0.0, %v8545
  %v8547 = vpop.f32.mrf.mxu0
  %v8548 = vpop.f32.mrf.mxu0
  %v8549 = vpop.f32.mrf.mxu0
  %8550 = vdwg.mxu0
  %v8551 = vadd.f32 %v8415, %v8546
  %v8552 = vadd.f32 %v8551, %v4629
  %v8553 = vmax.f32 %v8552, 0.0
  %v8554 = vpack.c.bf16 %v8553, %v8553
  %v8556 = vsel %vm4655, %v8554, 0
  %8558 = vmatprep.subr.bf16.mxu0 0
  %8559 = vmatpush1.bf16.msra.mxu0 0
  %8560 = vmatprep.subr.bf16.mxu0 0
  %8561 = vmatpush1.bf16.msra.mxu0 0
  %8562 = vmatprep.subr.bf16.mxu0 0
  %8563 = vmatpush1.bf16.msra.mxu0 0
  %8564 = vmatprep.subr.bf16.mxu0 0
  %8565 = vmatpush1.bf16.msra.mxu0 0
  %8566 = vmatprep.subr.bf16.mxu0 0
  %8567 = vmatpush1.bf16.msra.mxu0 0
  %8568 = vmatprep.subr.bf16.mxu0 0
  %8569 = vmatpush1.bf16.msra.mxu0 %v4661
  %8570 = vmatprep.subr.bf16.mxu0 0
  %8571 = vmatpush1.bf16.msra.mxu0 %v4651
  %8572 = vmatprep.subr.bf16.mxu0 0
  %8573 = vmatpush1.bf16.msra.mxu0 %v4650
  %8574 = vmatprep.subr.bf16.mxu0 0
  %8575 = vmatpush2.bf16.msra.mxu0 0
  %8576 = vmatprep.subr.bf16.mxu0 0
  %8577 = vmatpush2.bf16.msra.mxu0 0
  %8578 = vmatprep.subr.bf16.mxu0 0
  %8579 = vmatpush2.bf16.msra.mxu0 0
  %8580 = vmatprep.subr.bf16.mxu0 0
  %8581 = vmatpush2.bf16.msra.mxu0 0
  %8582 = vmatprep.subr.bf16.mxu0 0
  %8583 = vmatpush2.bf16.msra.mxu0 0
  %8584 = vmatprep.subr.bf16.mxu0 0
  %8585 = vmatpush2.bf16.msra.mxu0 0
  %8586 = vmatprep.subr.bf16.mxu0 0
  %8587 = vmatpush2.bf16.msra.mxu0 0
  %8588 = vmatprep.subr.bf16.mxu0 0
  %8589 = vmatpush2.bf16.msra.mxu0 0
  %8590 = vmatprep.mubr.bf16.mxu0 0
  %8591 = vmatmul.mubr.bf16.gmra.mxu0 %v8556
  %v8592 = vpop.f32.mrf.mxu0
  %v8593 = vadd.f32 %v4638, %v8592
  %v8594 = vpop.f32.mrf.mxu0
  %v8595 = vpop.f32.mrf.mxu0
  %v8596 = vpop.f32.mrf.mxu0
  %8597 = vdwg.mxu0
  %8598 = vst.msk [vmem:[%s10 + $0x8] sm:$0xff] %vm4703, %v8593
  // Predicated region
  $region42: #{deepant_forward_pallas.1} parent=0 // pred_check
    _
  $region43: #{deepant_forward_pallas.1} parent=0 // pred_check_branch
    %8600 = sbr.rel (0) target = $region45
  $region44: #{deepant_forward_pallas.1} parent=0 // pred_region
    _
  $region45: #{deepant_forward_pallas.1} parent=0 // pred_fallthru
    _
  // Predicated region
  $region46: #{deepant_forward_pallas.1} parent=0 // pred_check
    _
  $region47: #{deepant_forward_pallas.1} parent=0 // pred_check_branch
    %8602 = sbr.rel (0) target = $region49
  $region48: #{deepant_forward_pallas.1} parent=0 // pred_region
    _
  $region49: #{deepant_forward_pallas.1} parent=0 // pred_fallthru
    _

</llo_original>
